<compile_context>
chip_gen: v7x
topology: tpu7x:2x2x1
jax: 0.10.0
libtpu: 0.0.40
codegen_flags: <defaults>
</compile_context>

<pallas_src>
import jax
import jax.numpy as jnp
from jax.experimental import pallas as pl
from jax.experimental.pallas import tpu as pltpu


# ------------------------------- geometry -------------------------------------

H = W = 16
HP, WP = H + 2, W + 2            # SAME-padded spatial extent
L = HP * WP                      # flattened padded image length (324)
MARG = 128                       # buffer margin (>= WP + 1 = 19, vreg-aligned)
CW = 384                         # compute window: multiple of 128, >= L
TB = MARG + CW + MARG            # 640: persistent activation-buffer lane width

CIN = 4
CIN0_PAD = 16                    # block0 input channels padded 4 -> 16 (bf16 tile)
F0_HID = 16                      # block0 hidden channels
FEAT = 32                        # block0 output features (out1)
HID = 32                         # per-branch hidden channels in each stage
CH_PAF, CH_HM = 8, 4
STAGE_OUT = CH_PAF + CH_HM       # 12
STAGE_OUT_PAD = 16               # padded so the cat layout is bf16-tile aligned
CAT_PAD = STAGE_OUT_PAD + FEAT   # 48 channels: [paf 8 | hm 4 | pad 4 | feat 32]
N_STAGES = 6


# --------------------------------- kernel --------------------------------------

def _pose_kernel(x_ref, mask_ref,
                 w01_ref, b01_ref, w02_ref, b02_ref,
                 w1s_ref, b1s_ref, w2s_ref, b2s_ref,
                 o_ref, cat_ref):
    """Whole pose_model forward for one batch element; activations live in VMEM.

    cat_ref layout (48, TB) bf16:
      rows  0..15 : current stage output (paf 8 | hm 4 | pad 4); block0 reuses
                    these rows for its 16-ch hidden (stage-1 weights are zero
                    for those input channels, so the stale content is inert).
      rows 16..47 : out1 (FEAT=32), written once by block0, resident afterwards.
    """
    mask = mask_ref[...]                                       # (1, CW) f32

    # Margins ([0, MARG) and [MARG+CW, TB)) must read as zero so the +/-1-row
    # taps see SAME zero padding; interior border / dead columns are re-zeroed
    # by `mask` at every store.  One tiny memset per grid step.
    cat_ref[...] = jnp.zeros_like(cat_ref)

    def taps(load):
        """3x3 tap windows -> (9*C, CW) bf16, rows ordered (kh, kw, cin)."""
        cols = []
        for dh in (-1, 0, 1):
            for dw in (-1, 0, 1):
                cols.append(load(MARG + dh * WP + dw))
        return jnp.concatenate(cols, axis=0)

    def masked_bf16(v):                                        # f32 -> bf16 store
        return (v * mask).astype(jnp.bfloat16)

    # ---- block0: 3x3 conv (4->16) ReLU, then 3x3 conv (16->32) ReLU ----------
    p = taps(lambda off: x_ref[0, :, pl.ds(off, CW)])          # (144, CW) bf16
    h = jnp.dot(w01_ref[...], p, preferred_element_type=jnp.float32)   # (16, CW)
    cat_ref[pl.ds(0, F0_HID), pl.ds(MARG, CW)] = masked_bf16(
        jnp.maximum(h + b01_ref[...], 0.0))

    p = taps(lambda off: cat_ref[pl.ds(0, F0_HID), pl.ds(off, CW)])     # (144, CW)
    h = jnp.dot(w02_ref[...], p, preferred_element_type=jnp.float32)    # (32, CW)
    cat_ref[pl.ds(STAGE_OUT_PAD, FEAT), pl.ds(MARG, CW)] = masked_bf16(
        jnp.maximum(h + b02_ref[...], 0.0))                    # out1 -> resident

    # ---- 6 refinement stages, both branches + both layers fused --------------
    for s in range(N_STAGES):
        p = taps(lambda off: cat_ref[:, pl.ds(off, CW)])       # (9*48=432, CW)
        h = jnp.dot(w1s_ref[s], p, preferred_element_type=jnp.float32)  # (64, CW)
        h = jnp.maximum(h + b1s_ref[s], 0.0)
        # block-diagonal 1x1: rows 0..7 paf, 8..11 heatmap, 12..15 zero pad
        out = jnp.dot(w2s_ref[s], h.astype(jnp.bfloat16),
                      preferred_element_type=jnp.float32) + b2s_ref[s]  # (16, CW)
        if s < N_STAGES - 1:
            cat_ref[pl.ds(0, STAGE_OUT_PAD), pl.ds(MARG, CW)] = masked_bf16(out)
        else:
            o_ref[0, :, :] = out * mask                        # final stage -> HBM


# ------------------------- parameters (deterministic) --------------------------

def _init_conv(key, kh, kw, cin, cout):
    wk, bk = jax.random.split(key)
    fan_in = kh * kw * cin
    w = jax.random.normal(wk, (kh, kw, cin, cout), jnp.float32) / jnp.sqrt(
        jnp.float32(fan_in))
    b = 0.01 * jax.random.normal(bk, (cout,), jnp.float32)
    return w, b


def build_params(key):
    keys = iter(jax.random.split(key, 64))
    params = {"block0": [
        (*_init_conv(next(keys), 3, 3, CIN, F0_HID), True),
        (*_init_conv(next(keys), 3, 3, F0_HID, FEAT), True),
    ]}
    cat_c = FEAT + CH_PAF + CH_HM
    for s in range(1, N_STAGES + 1):
        in_c = FEAT if s == 1 else cat_c
        params[f"block{s}_1"] = [
            (*_init_conv(next(keys), 3, 3, in_c, HID), True),
            (*_init_conv(next(keys), 1, 1, HID, CH_PAF), False),
        ]
        params[f"block{s}_2"] = [
            (*_init_conv(next(keys), 3, 3, in_c, HID), True),
            (*_init_conv(next(keys), 1, 1, HID, CH_HM), False),
        ]
    return params


# ------------------------------ weight packing ---------------------------------

def _flat_wt(w):
    """(KH,KW,Cin,Cout) -> (Cout, KH*KW*Cin) bf16, (kh,kw,cin) contraction order."""
    kh, kw, cin, cout = w.shape
    return w.reshape(kh * kw * cin, cout).T.astype(jnp.bfloat16)


def _col(b):
    return b.reshape(-1, 1).astype(jnp.float32)


def pack_params(params):
    """Fuse branches, pad channels to the [paf|hm|pad|feat] layout, stack stages."""
    packed = {}
    (w1, b1, _), (w2, b2, _) = params["block0"]
    w1p = jnp.concatenate(
        [w1, jnp.zeros((3, 3, CIN0_PAD - CIN, F0_HID), w1.dtype)], axis=2)
    packed["block0"] = (_flat_wt(w1p), _col(b1), _flat_wt(w2), _col(b2))

    w1s, b1s, w2s, b2s = [], [], [], []
    for s in range(1, N_STAGES + 1):
        (wa1, ba1, _), (wa2, ba2, _) = params[f"block{s}_1"]
        (wb1, bb1, _), (wb2, bb2, _) = params[f"block{s}_2"]
        # fuse both branches' 3x3 convs along Cout (32 + 32 = 64)
        w1 = jnp.concatenate([wa1, wb1], axis=3)
        b1 = jnp.concatenate([ba1, bb1], axis=0)
        if s == 1:
            # stage-1 input is out1 only -> zero weights over cat rows 0..15
            w1 = jnp.concatenate(
                [jnp.zeros((3, 3, STAGE_OUT_PAD, 2 * HID), w1.dtype), w1], axis=2)
        else:
            # cat layout: [paf 8 | hm 4 | zero 4 | feat 32] = 48 channels
            npad = STAGE_OUT_PAD - STAGE_OUT
            w1 = jnp.concatenate(
                [w1[:, :, :STAGE_OUT],
                 jnp.zeros((3, 3, npad, 2 * HID), w1.dtype),
                 w1[:, :, STAGE_OUT:]], axis=2)
        # fuse both branches' 1x1 convs into one block-diagonal matmul
        w2 = jnp.zeros((STAGE_OUT_PAD, 2 * HID), jnp.float32)
        w2 = w2.at[:CH_PAF, :HID].set(wa2[0, 0].T)
        w2 = w2.at[CH_PAF:STAGE_OUT, HID:].set(wb2[0, 0].T)
        b2 = jnp.zeros((STAGE_OUT_PAD,), jnp.float32)
        b2 = b2.at[:CH_PAF].set(ba2).at[CH_PAF:STAGE_OUT].set(bb2)
        w1s.append(_flat_wt(w1)); b1s.append(_col(b1))
        w2s.append(w2.astype(jnp.bfloat16)); b2s.append(_col(b2))
    packed["stages"] = (jnp.stack(w1s), jnp.stack(b1s),
                        jnp.stack(w2s), jnp.stack(b2s))
    return packed


# ------------------------------- layout glue ------------------------------------

def _interior_mask():
    """(1, CW) f32: 1 at true interior pixels, 0 on the pad ring / dead lanes."""
    c = jnp.arange(CW)
    ii, jj = c // WP, c % WP
    m = (c < L) & (ii >= 1) & (ii <= H) & (jj >= 1) & (jj <= W)
    return m.astype(jnp.float32).reshape(1, CW)


def _embed(x_nchw):
    """(N,C,H,W) f32 -> (N,CIN0_PAD,TB) bf16 flat padded-row buffer, zero margins."""
    n = x_nchw.shape[0]
    x = jnp.pad(x_nchw, ((0, 0), (0, CIN0_PAD - CIN), (1, 1), (1, 1)))
    x = jnp.pad(x.reshape(n, CIN0_PAD, L), ((0, 0), (0, 0), (MARG, TB - MARG - L)))
    return x.astype(jnp.bfloat16)
    # TODO(synk): the NCHW <-> flat-padded-row shuffle stays as tiny XLA ops; fold
    # into the kernel if the remaining launch count ever matters.


# ------------------------------- forward pass -----------------------------------

def _cost_estimate(n):
    layer_macs = (F0_HID * 9 * CIN0_PAD + FEAT * 9 * F0_HID
                  + N_STAGES * (2 * HID * 9 * CAT_PAD + STAGE_OUT_PAD * 2 * HID))
    flops = 2 * n * CW * layer_macs
    bytes_accessed = (n * CIN0_PAD * TB * 2            # bf16 input buffer
                      + n * STAGE_OUT_PAD * CW * 4     # f32 output
                      + 2 * layer_macs + CW * 4)       # bf16 weights + mask
    return pl.CostEstimate(flops=flops, transcendentals=0,
                           bytes_accessed=bytes_accessed)


def pose_forward_pallas(x_nchw, params):
    """Mirrors pose_model.forward (6x torch.cat([o_1, o_2, out1], 1)) in ONE call."""
    packed = pack_params(params)
    w01, b01, w02, b02 = packed["block0"]
    w1s, b1s, w2s, b2s = packed["stages"]
    mask = _interior_mask()
    xbuf = _embed(x_nchw)                                     # (N, 16, TB) bf16
    n = xbuf.shape[0]

    def full_spec(a):
        return pl.BlockSpec(a.shape, lambda i, nd=a.ndim: (0,) * nd)

    o = pl.pallas_call(
        _pose_kernel,
        out_shape=jax.ShapeDtypeStruct((n, STAGE_OUT_PAD, CW), jnp.float32),
        grid_spec=pltpu.PrefetchScalarGridSpec(
            num_scalar_prefetch=0,
            grid=(n,),
            in_specs=[
                pl.BlockSpec((1, CIN0_PAD, TB), lambda i: (i, 0, 0)),
                full_spec(mask),
                full_spec(w01), full_spec(b01), full_spec(w02), full_spec(b02),
                full_spec(w1s), full_spec(b1s), full_spec(w2s), full_spec(b2s),
            ],
            out_specs=pl.BlockSpec((1, STAGE_OUT_PAD, CW), lambda i: (i, 0, 0)),
            scratch_shapes=[pltpu.VMEM((CAT_PAD, TB), jnp.bfloat16)],
        ),
        compiler_params=pltpu.CompilerParams(
            # TODO(synk): for v6e fold the batch into the lane axis (one matmul
            # over N*CW columns); for v7x with N==1 add a parallel channel- or
            # row-split grid axis so the 2nd TensorCore is used.
            dimension_semantics=("parallel",),
            vmem_limit_bytes=32 * 1024 * 1024,
        ),
        cost_estimate=_cost_estimate(n),
    )(xbuf, mask, w01, b01, w02, b02, w1s, b1s, w2s, b2s)

    img = o[:, :, :L].reshape(n, STAGE_OUT_PAD, HP, WP)[:, :, 1:H + 1, 1:W + 1]
    return img[:, :CH_PAF], img[:, CH_PAF:STAGE_OUT]


# ------------------------- pure-JAX reference (check) ----------------------------

def _conv_ref(x, w, b, relu):
    # same precision policy as the kernel: bf16 operands, f32 accumulation.
    y = jax.lax.conv_general_dilated(
        x.astype(jnp.bfloat16), w.astype(jnp.bfloat16),
        window_strides=(1, 1), padding="SAME",
        dimension_numbers=("NCHW", "HWIO", "NCHW"),
        preferred_element_type=jnp.float32)
    y = y + b.reshape(1, -1, 1, 1)
    return jnp.maximum(y, 0.0) if relu else y


def _run_block_ref(x, layers):
    for w, b, relu in layers:
        x = _conv_ref(x, w, b, relu)
    return x


def pose_forward_ref(x_nchw, params):
    out1 = _run_block_ref(x_nchw, params["block0"])
    o1 = _run_block_ref(out1, params["block1_1"])
    o2 = _run_block_ref(out1, params["block1_2"])
    for s in range(2, N_STAGES + 1):
        cat = jnp.concatenate([o1, o2, out1], axis=1)
        o1 = _run_block_ref(cat, params[f"block{s}_1"])
        o2 = _run_block_ref(cat, params[f"block{s}_2"])
    return o1, o2


# ----------------------------------- main ----------------------------------------

if __name__ == "__main__":
    key = jax.random.PRNGKey(0)
    pkey, xkey = jax.random.split(key)

    N = 2
    params = build_params(pkey)
    x = jax.random.normal(xkey, (N, CIN, H, W), jnp.float32)   # NCHW, like PyTorch

    fwd = jax.jit(lambda xx: pose_forward_pallas(xx, params))
    paf, hm = jax.block_until_ready(fwd(x))
    assert paf.shape == (N, CH_PAF, H, W)
    assert hm.shape == (N, CH_HM, H, W)

    ref_fwd = jax.jit(lambda xx: pose_forward_ref(xx, params))
    rpaf, rhm = jax.block_until_ready(ref_fwd(x))
    # bf16-stored inter-stage activations (vs f32-carried reference rounded to
    # bf16 at each conv) can diverge by ~1 bf16 ulp per layer near rounding
    # boundaries -> compare at 5e-3.
    assert jnp.allclose(paf, rpaf, atol=5e-3, rtol=5e-3), \
        float(jnp.max(jnp.abs(paf - rpaf)))
    assert jnp.allclose(hm, rhm, atol=5e-3, rtol=5e-3), \
        float(jnp.max(jnp.abs(hm - rhm)))

    print("KERNEL_OK")
</pallas_src>

<mosaic_0001>
module attributes {stable_mosaic.version = 11 : i64} {
  func.func @_pose_kernel(%arg0: i32, %arg1: memref<1x16x640xbf16, #tpu.memory_space<vmem>>, %arg2: memref<1x384xf32, #tpu.memory_space<vmem>>, %arg3: memref<16x144xbf16, #tpu.memory_space<vmem>>, %arg4: memref<16x1xf32, #tpu.memory_space<vmem>>, %arg5: memref<32x144xbf16, #tpu.memory_space<vmem>>, %arg6: memref<32x1xf32, #tpu.memory_space<vmem>>, %arg7: memref<6x64x432xbf16, #tpu.memory_space<vmem>>, %arg8: memref<6x64x1xf32, #tpu.memory_space<vmem>>, %arg9: memref<6x16x64xbf16, #tpu.memory_space<vmem>>, %arg10: memref<6x16x1xf32, #tpu.memory_space<vmem>>, %arg11: memref<1x16x384xf32, #tpu.memory_space<vmem>>, %arg12: memref<48x640xbf16, #tpu.memory_space<vmem>>) attributes {dimension_semantics = [#tpu.dimension_semantics<parallel>], iteration_bounds = array<i64: 2>, scalar_prefetch = 0 : i64, scratch_operands = 1 : i64, tpu.core_type = #tpu.core_type<tc>, window_params = [{transform_indices = @transform_0, window_bounds = array<i64: 1, 16, 640>}, {pipeline_mode = #tpu.pipeline_mode<synchronous>, transform_indices = @transform_1, window_bounds = array<i64: 1, 384>}, {pipeline_mode = #tpu.pipeline_mode<synchronous>, transform_indices = @transform_2, window_bounds = array<i64: 16, 144>}, {pipeline_mode = #tpu.pipeline_mode<synchronous>, transform_indices = @transform_3, window_bounds = array<i64: 16, 1>}, {pipeline_mode = #tpu.pipeline_mode<synchronous>, transform_indices = @transform_4, window_bounds = array<i64: 32, 144>}, {pipeline_mode = #tpu.pipeline_mode<synchronous>, transform_indices = @transform_5, window_bounds = array<i64: 32, 1>}, {pipeline_mode = #tpu.pipeline_mode<synchronous>, transform_indices = @transform_6, window_bounds = array<i64: 6, 64, 432>}, {pipeline_mode = #tpu.pipeline_mode<synchronous>, transform_indices = @transform_7, window_bounds = array<i64: 6, 64, 1>}, {pipeline_mode = #tpu.pipeline_mode<synchronous>, transform_indices = @transform_8, window_bounds = array<i64: 6, 16, 64>}, {pipeline_mode = #tpu.pipeline_mode<synchronous>, transform_indices = @transform_9, window_bounds = array<i64: 6, 16, 1>}, {transform_indices = @transform_10, window_bounds = array<i64: 1, 16, 384>}]} {
    %c0 = arith.constant 0 : index
    %c0_0 = arith.constant 0 : index
    %0 = vector.load %arg2[%c0, %c0_0] : memref<1x384xf32, #tpu.memory_space<vmem>>, vector<1x384xf32>
    %cst = arith.constant 0.000000e+00 : bf16
    %1 = vector.broadcast %cst : bf16 to vector<48x640xbf16>
    %c0_1 = arith.constant 0 : index
    %c0_2 = arith.constant 0 : index
    %2 = vector.load %arg12[%c0_1, %c0_2] : memref<48x640xbf16, #tpu.memory_space<vmem>>, vector<48x640xbf16>
    tpu.vector_store %arg12[%c0_1, %c0_2], %1 {strides = array<i32>} : memref<48x640xbf16, #tpu.memory_space<vmem>>, vector<48x640xbf16>,
    %c0_3 = arith.constant 0 : index
    %c0_4 = arith.constant 0 : index
    %c109 = arith.constant 109 : index
    %3 = vector.load %arg1[%c0_3, %c0_4, %c109] : memref<1x16x640xbf16, #tpu.memory_space<vmem>>, vector<1x16x384xbf16>
    %4 = vector.shape_cast %3 : vector<1x16x384xbf16> to vector<16x384xbf16>
    %c0_5 = arith.constant 0 : index
    %c0_6 = arith.constant 0 : index
    %c110 = arith.constant 110 : index
    %5 = vector.load %arg1[%c0_5, %c0_6, %c110] : memref<1x16x640xbf16, #tpu.memory_space<vmem>>, vector<1x16x384xbf16>
    %6 = vector.shape_cast %5 : vector<1x16x384xbf16> to vector<16x384xbf16>
    %c0_7 = arith.constant 0 : index
    %c0_8 = arith.constant 0 : index
    %c111 = arith.constant 111 : index
    %7 = vector.load %arg1[%c0_7, %c0_8, %c111] : memref<1x16x640xbf16, #tpu.memory_space<vmem>>, vector<1x16x384xbf16>
    %8 = vector.shape_cast %7 : vector<1x16x384xbf16> to vector<16x384xbf16>
    %c0_9 = arith.constant 0 : index
    %c0_10 = arith.constant 0 : index
    %c127 = arith.constant 127 : index
    %9 = vector.load %arg1[%c0_9, %c0_10, %c127] : memref<1x16x640xbf16, #tpu.memory_space<vmem>>, vector<1x16x384xbf16>
    %10 = vector.shape_cast %9 : vector<1x16x384xbf16> to vector<16x384xbf16>
    %c0_11 = arith.constant 0 : index
    %c0_12 = arith.constant 0 : index
    %c128 = arith.constant 128 : index
    %11 = vector.load %arg1[%c0_11, %c0_12, %c128] : memref<1x16x640xbf16, #tpu.memory_space<vmem>>, vector<1x16x384xbf16>
    %12 = vector.shape_cast %11 : vector<1x16x384xbf16> to vector<16x384xbf16>
    %c0_13 = arith.constant 0 : index
    %c0_14 = arith.constant 0 : index
    %c129 = arith.constant 129 : index
    %13 = vector.load %arg1[%c0_13, %c0_14, %c129] : memref<1x16x640xbf16, #tpu.memory_space<vmem>>, vector<1x16x384xbf16>
    %14 = vector.shape_cast %13 : vector<1x16x384xbf16> to vector<16x384xbf16>
    %c0_15 = arith.constant 0 : index
    %c0_16 = arith.constant 0 : index
    %c145 = arith.constant 145 : index
    %15 = vector.load %arg1[%c0_15, %c0_16, %c145] : memref<1x16x640xbf16, #tpu.memory_space<vmem>>, vector<1x16x384xbf16>
    %16 = vector.shape_cast %15 : vector<1x16x384xbf16> to vector<16x384xbf16>
    %c0_17 = arith.constant 0 : index
    %c0_18 = arith.constant 0 : index
    %c146 = arith.constant 146 : index
    %17 = vector.load %arg1[%c0_17, %c0_18, %c146] : memref<1x16x640xbf16, #tpu.memory_space<vmem>>, vector<1x16x384xbf16>
    %18 = vector.shape_cast %17 : vector<1x16x384xbf16> to vector<16x384xbf16>
    %c0_19 = arith.constant 0 : index
    %c0_20 = arith.constant 0 : index
    %c147 = arith.constant 147 : index
    %19 = vector.load %arg1[%c0_19, %c0_20, %c147] : memref<1x16x640xbf16, #tpu.memory_space<vmem>>, vector<1x16x384xbf16>
    %20 = vector.shape_cast %19 : vector<1x16x384xbf16> to vector<16x384xbf16>
    %21 = tpu.concatenate %4, %6, %8, %10, %12, %14, %16, %18, %20 in 0 : vector<16x384xbf16>, vector<16x384xbf16>, vector<16x384xbf16>, vector<16x384xbf16>, vector<16x384xbf16>, vector<16x384xbf16>, vector<16x384xbf16>, vector<16x384xbf16>, vector<16x384xbf16> -> vector<144x384xbf16>
    %c0_21 = arith.constant 0 : index
    %c0_22 = arith.constant 0 : index
    %22 = vector.load %arg3[%c0_21, %c0_22] : memref<16x144xbf16, #tpu.memory_space<vmem>>, vector<16x144xbf16>
    %cst_23 = arith.constant dense<0.000000e+00> : vector<16x384xf32>
    %23 = tpu.matmul %22, %21, %cst_23 {dimension_numbers = #tpu.dot_dimension_numbers<[1], [0], [0], [1], [0, 0, 1, 1], [], []>} : vector<16x144xbf16>, vector<144x384xbf16>, vector<16x384xf32> -> vector<16x384xf32>
    %c0_24 = arith.constant 0 : index
    %c0_25 = arith.constant 0 : index
    %24 = vector.load %arg4[%c0_24, %c0_25] : memref<16x1xf32, #tpu.memory_space<vmem>>, vector<16x1xf32>
    %25 = vector.broadcast %24 : vector<16x1xf32> to vector<16x384xf32>
    %26 = arith.addf %23, %25 : vector<16x384xf32>
    %cst_26 = arith.constant 0.000000e+00 : f32
    %27 = vector.broadcast %cst_26 : f32 to vector<16x384xf32>
    %28 = arith.maximumf %26, %27 : vector<16x384xf32>
    %29 = vector.broadcast %0 : vector<1x384xf32> to vector<16x384xf32>
    %30 = arith.mulf %28, %29 : vector<16x384xf32>
    %31 = arith.truncf %30 : vector<16x384xf32> to vector<16x384xbf16>
    %c0_27 = arith.constant 0 : index
    %c128_28 = arith.constant 128 : index
    %32 = vector.load %arg12[%c0_27, %c128_28] : memref<48x640xbf16, #tpu.memory_space<vmem>>, vector<16x384xbf16>
    tpu.vector_store %arg12[%c0_27, %c128_28], %31 {strides = array<i32>} : memref<48x640xbf16, #tpu.memory_space<vmem>>, vector<16x384xbf16>,
    %c0_29 = arith.constant 0 : index
    %c109_30 = arith.constant 109 : index
    %33 = vector.load %arg12[%c0_29, %c109_30] : memref<48x640xbf16, #tpu.memory_space<vmem>>, vector<16x384xbf16>
    %c0_31 = arith.constant 0 : index
    %c110_32 = arith.constant 110 : index
    %34 = vector.load %arg12[%c0_31, %c110_32] : memref<48x640xbf16, #tpu.memory_space<vmem>>, vector<16x384xbf16>
    %c0_33 = arith.constant 0 : index
    %c111_34 = arith.constant 111 : index
    %35 = vector.load %arg12[%c0_33, %c111_34] : memref<48x640xbf16, #tpu.memory_space<vmem>>, vector<16x384xbf16>
    %c0_35 = arith.constant 0 : index
    %c127_36 = arith.constant 127 : index
    %36 = vector.load %arg12[%c0_35, %c127_36] : memref<48x640xbf16, #tpu.memory_space<vmem>>, vector<16x384xbf16>
    %c0_37 = arith.constant 0 : index
    %c128_38 = arith.constant 128 : index
    %37 = vector.load %arg12[%c0_37, %c128_38] : memref<48x640xbf16, #tpu.memory_space<vmem>>, vector<16x384xbf16>
    %c0_39 = arith.constant 0 : index
    %c129_40 = arith.constant 129 : index
    %38 = vector.load %arg12[%c0_39, %c129_40] : memref<48x640xbf16, #tpu.memory_space<vmem>>, vector<16x384xbf16>
    %c0_41 = arith.constant 0 : index
    %c145_42 = arith.constant 145 : index
    %39 = vector.load %arg12[%c0_41, %c145_42] : memref<48x640xbf16, #tpu.memory_space<vmem>>, vector<16x384xbf16>
    %c0_43 = arith.constant 0 : index
    %c146_44 = arith.constant 146 : index
    %40 = vector.load %arg12[%c0_43, %c146_44] : memref<48x640xbf16, #tpu.memory_space<vmem>>, vector<16x384xbf16>
    %c0_45 = arith.constant 0 : index
    %c147_46 = arith.constant 147 : index
    %41 = vector.load %arg12[%c0_45, %c147_46] : memref<48x640xbf16, #tpu.memory_space<vmem>>, vector<16x384xbf16>
    %42 = tpu.concatenate %33, %34, %35, %36, %37, %38, %39, %40, %41 in 0 : vector<16x384xbf16>, vector<16x384xbf16>, vector<16x384xbf16>, vector<16x384xbf16>, vector<16x384xbf16>, vector<16x384xbf16>, vector<16x384xbf16>, vector<16x384xbf16>, vector<16x384xbf16> -> vector<144x384xbf16>
    %c0_47 = arith.constant 0 : index
    %c0_48 = arith.constant 0 : index
    %43 = vector.load %arg5[%c0_47, %c0_48] : memref<32x144xbf16, #tpu.memory_space<vmem>>, vector<32x144xbf16>
    %cst_49 = arith.constant dense<0.000000e+00> : vector<32x384xf32>
    %44 = tpu.matmul %43, %42, %cst_49 {dimension_numbers = #tpu.dot_dimension_numbers<[1], [0], [0], [1], [0, 0, 1, 1], [], []>} : vector<32x144xbf16>, vector<144x384xbf16>, vector<32x384xf32> -> vector<32x384xf32>
    %c0_50 = arith.constant 0 : index
    %c0_51 = arith.constant 0 : index
    %45 = vector.load %arg6[%c0_50, %c0_51] : memref<32x1xf32, #tpu.memory_space<vmem>>, vector<32x1xf32>
    %46 = vector.broadcast %45 : vector<32x1xf32> to vector<32x384xf32>
    %47 = arith.addf %44, %46 : vector<32x384xf32>
    %cst_52 = arith.constant 0.000000e+00 : f32
    %48 = vector.broadcast %cst_52 : f32 to vector<32x384xf32>
    %49 = arith.maximumf %47, %48 : vector<32x384xf32>
    %50 = vector.broadcast %0 : vector<1x384xf32> to vector<32x384xf32>
    %51 = arith.mulf %49, %50 : vector<32x384xf32>
    %52 = arith.truncf %51 : vector<32x384xf32> to vector<32x384xbf16>
    %c16 = arith.constant 16 : index
    %c128_53 = arith.constant 128 : index
    %53 = vector.load %arg12[%c16, %c128_53] : memref<48x640xbf16, #tpu.memory_space<vmem>>, vector<32x384xbf16>
    tpu.vector_store %arg12[%c16, %c128_53], %52 {strides = array<i32>} : memref<48x640xbf16, #tpu.memory_space<vmem>>, vector<32x384xbf16>,
    %c0_54 = arith.constant 0 : index
    %c109_55 = arith.constant 109 : index
    %54 = vector.load %arg12[%c0_54, %c109_55] : memref<48x640xbf16, #tpu.memory_space<vmem>>, vector<48x384xbf16>
    %c0_56 = arith.constant 0 : index
    %c110_57 = arith.constant 110 : index
    %55 = vector.load %arg12[%c0_56, %c110_57] : memref<48x640xbf16, #tpu.memory_space<vmem>>, vector<48x384xbf16>
    %c0_58 = arith.constant 0 : index
    %c111_59 = arith.constant 111 : index
    %56 = vector.load %arg12[%c0_58, %c111_59] : memref<48x640xbf16, #tpu.memory_space<vmem>>, vector<48x384xbf16>
    %c0_60 = arith.constant 0 : index
    %c127_61 = arith.constant 127 : index
    %57 = vector.load %arg12[%c0_60, %c127_61] : memref<48x640xbf16, #tpu.memory_space<vmem>>, vector<48x384xbf16>
    %c0_62 = arith.constant 0 : index
    %c128_63 = arith.constant 128 : index
    %58 = vector.load %arg12[%c0_62, %c128_63] : memref<48x640xbf16, #tpu.memory_space<vmem>>, vector<48x384xbf16>
    %c0_64 = arith.constant 0 : index
    %c129_65 = arith.constant 129 : index
    %59 = vector.load %arg12[%c0_64, %c129_65] : memref<48x640xbf16, #tpu.memory_space<vmem>>, vector<48x384xbf16>
    %c0_66 = arith.constant 0 : index
    %c145_67 = arith.constant 145 : index
    %60 = vector.load %arg12[%c0_66, %c145_67] : memref<48x640xbf16, #tpu.memory_space<vmem>>, vector<48x384xbf16>
    %c0_68 = arith.constant 0 : index
    %c146_69 = arith.constant 146 : index
    %61 = vector.load %arg12[%c0_68, %c146_69] : memref<48x640xbf16, #tpu.memory_space<vmem>>, vector<48x384xbf16>
    %c0_70 = arith.constant 0 : index
    %c147_71 = arith.constant 147 : index
    %62 = vector.load %arg12[%c0_70, %c147_71] : memref<48x640xbf16, #tpu.memory_space<vmem>>, vector<48x384xbf16>
    %63 = tpu.concatenate %54, %55, %56, %57, %58, %59, %60, %61, %62 in 0 : vector<48x384xbf16>, vector<48x384xbf16>, vector<48x384xbf16>, vector<48x384xbf16>, vector<48x384xbf16>, vector<48x384xbf16>, vector<48x384xbf16>, vector<48x384xbf16>, vector<48x384xbf16> -> vector<432x384xbf16>
    %c0_72 = arith.constant 0 : index
    %c0_73 = arith.constant 0 : index
    %c0_74 = arith.constant 0 : index
    %64 = vector.load %arg7[%c0_72, %c0_73, %c0_74] : memref<6x64x432xbf16, #tpu.memory_space<vmem>>, vector<1x64x432xbf16>
    %65 = vector.shape_cast %64 : vector<1x64x432xbf16> to vector<64x432xbf16>
    %cst_75 = arith.constant dense<0.000000e+00> : vector<64x384xf32>
    %66 = tpu.matmul %65, %63, %cst_75 {dimension_numbers = #tpu.dot_dimension_numbers<[1], [0], [0], [1], [0, 0, 1, 1], [], []>} : vector<64x432xbf16>, vector<432x384xbf16>, vector<64x384xf32> -> vector<64x384xf32>
    %c0_76 = arith.constant 0 : index
    %c0_77 = arith.constant 0 : index
    %c0_78 = arith.constant 0 : index
    %67 = vector.load %arg8[%c0_76, %c0_77, %c0_78] : memref<6x64x1xf32, #tpu.memory_space<vmem>>, vector<1x64x1xf32>
    %68 = vector.shape_cast %67 : vector<1x64x1xf32> to vector<64x1xf32>
    %69 = vector.broadcast %68 : vector<64x1xf32> to vector<64x384xf32>
    %70 = arith.addf %66, %69 : vector<64x384xf32>
    %cst_79 = arith.constant 0.000000e+00 : f32
    %71 = vector.broadcast %cst_79 : f32 to vector<64x384xf32>
    %72 = arith.maximumf %70, %71 : vector<64x384xf32>
    %c0_80 = arith.constant 0 : index
    %c0_81 = arith.constant 0 : index
    %c0_82 = arith.constant 0 : index
    %73 = vector.load %arg9[%c0_80, %c0_81, %c0_82] : memref<6x16x64xbf16, #tpu.memory_space<vmem>>, vector<1x16x64xbf16>
    %74 = vector.shape_cast %73 : vector<1x16x64xbf16> to vector<16x64xbf16>
    %75 = arith.truncf %72 : vector<64x384xf32> to vector<64x384xbf16>
    %cst_83 = arith.constant dense<0.000000e+00> : vector<16x384xf32>
    %76 = tpu.matmul %74, %75, %cst_83 {dimension_numbers = #tpu.dot_dimension_numbers<[1], [0], [0], [1], [0, 0, 1, 1], [], []>} : vector<16x64xbf16>, vector<64x384xbf16>, vector<16x384xf32> -> vector<16x384xf32>
    %c0_84 = arith.constant 0 : index
    %c0_85 = arith.constant 0 : index
    %c0_86 = arith.constant 0 : index
    %77 = vector.load %arg10[%c0_84, %c0_85, %c0_86] : memref<6x16x1xf32, #tpu.memory_space<vmem>>, vector<1x16x1xf32>
    %78 = vector.shape_cast %77 : vector<1x16x1xf32> to vector<16x1xf32>
    %79 = vector.broadcast %78 : vector<16x1xf32> to vector<16x384xf32>
    %80 = arith.addf %76, %79 : vector<16x384xf32>
    %81 = vector.broadcast %0 : vector<1x384xf32> to vector<16x384xf32>
    %82 = arith.mulf %80, %81 : vector<16x384xf32>
    %83 = arith.truncf %82 : vector<16x384xf32> to vector<16x384xbf16>
    %c0_87 = arith.constant 0 : index
    %c128_88 = arith.constant 128 : index
    %84 = vector.load %arg12[%c0_87, %c128_88] : memref<48x640xbf16, #tpu.memory_space<vmem>>, vector<16x384xbf16>
    tpu.vector_store %arg12[%c0_87, %c128_88], %83 {strides = array<i32>} : memref<48x640xbf16, #tpu.memory_space<vmem>>, vector<16x384xbf16>,
    %c0_89 = arith.constant 0 : index
    %c109_90 = arith.constant 109 : index
    %85 = vector.load %arg12[%c0_89, %c109_90] : memref<48x640xbf16, #tpu.memory_space<vmem>>, vector<48x384xbf16>
    %c0_91 = arith.constant 0 : index
    %c110_92 = arith.constant 110 : index
    %86 = vector.load %arg12[%c0_91, %c110_92] : memref<48x640xbf16, #tpu.memory_space<vmem>>, vector<48x384xbf16>
    %c0_93 = arith.constant 0 : index
    %c111_94 = arith.constant 111 : index
    %87 = vector.load %arg12[%c0_93, %c111_94] : memref<48x640xbf16, #tpu.memory_space<vmem>>, vector<48x384xbf16>
    %c0_95 = arith.constant 0 : index
    %c127_96 = arith.constant 127 : index
    %88 = vector.load %arg12[%c0_95, %c127_96] : memref<48x640xbf16, #tpu.memory_space<vmem>>, vector<48x384xbf16>
    %c0_97 = arith.constant 0 : index
    %c128_98 = arith.constant 128 : index
    %89 = vector.load %arg12[%c0_97, %c128_98] : memref<48x640xbf16, #tpu.memory_space<vmem>>, vector<48x384xbf16>
    %c0_99 = arith.constant 0 : index
    %c129_100 = arith.constant 129 : index
    %90 = vector.load %arg12[%c0_99, %c129_100] : memref<48x640xbf16, #tpu.memory_space<vmem>>, vector<48x384xbf16>
    %c0_101 = arith.constant 0 : index
    %c145_102 = arith.constant 145 : index
    %91 = vector.load %arg12[%c0_101, %c145_102] : memref<48x640xbf16, #tpu.memory_space<vmem>>, vector<48x384xbf16>
    %c0_103 = arith.constant 0 : index
    %c146_104 = arith.constant 146 : index
    %92 = vector.load %arg12[%c0_103, %c146_104] : memref<48x640xbf16, #tpu.memory_space<vmem>>, vector<48x384xbf16>
    %c0_105 = arith.constant 0 : index
    %c147_106 = arith.constant 147 : index
    %93 = vector.load %arg12[%c0_105, %c147_106] : memref<48x640xbf16, #tpu.memory_space<vmem>>, vector<48x384xbf16>
    %94 = tpu.concatenate %85, %86, %87, %88, %89, %90, %91, %92, %93 in 0 : vector<48x384xbf16>, vector<48x384xbf16>, vector<48x384xbf16>, vector<48x384xbf16>, vector<48x384xbf16>, vector<48x384xbf16>, vector<48x384xbf16>, vector<48x384xbf16>, vector<48x384xbf16> -> vector<432x384xbf16>
    %c1 = arith.constant 1 : index
    %c0_107 = arith.constant 0 : index
    %c0_108 = arith.constant 0 : index
    %95 = vector.load %arg7[%c1, %c0_107, %c0_108] : memref<6x64x432xbf16, #tpu.memory_space<vmem>>, vector<1x64x432xbf16>
    %96 = vector.shape_cast %95 : vector<1x64x432xbf16> to vector<64x432xbf16>
    %cst_109 = arith.constant dense<0.000000e+00> : vector<64x384xf32>
    %97 = tpu.matmul %96, %94, %cst_109 {dimension_numbers = #tpu.dot_dimension_numbers<[1], [0], [0], [1], [0, 0, 1, 1], [], []>} : vector<64x432xbf16>, vector<432x384xbf16>, vector<64x384xf32> -> vector<64x384xf32>
    %c1_110 = arith.constant 1 : index
    %c0_111 = arith.constant 0 : index
    %c0_112 = arith.constant 0 : index
    %98 = vector.load %arg8[%c1_110, %c0_111, %c0_112] : memref<6x64x1xf32, #tpu.memory_space<vmem>>, vector<1x64x1xf32>
    %99 = vector.shape_cast %98 : vector<1x64x1xf32> to vector<64x1xf32>
    %100 = vector.broadcast %99 : vector<64x1xf32> to vector<64x384xf32>
    %101 = arith.addf %97, %100 : vector<64x384xf32>
    %cst_113 = arith.constant 0.000000e+00 : f32
    %102 = vector.broadcast %cst_113 : f32 to vector<64x384xf32>
    %103 = arith.maximumf %101, %102 : vector<64x384xf32>
    %c1_114 = arith.constant 1 : index
    %c0_115 = arith.constant 0 : index
    %c0_116 = arith.constant 0 : index
    %104 = vector.load %arg9[%c1_114, %c0_115, %c0_116] : memref<6x16x64xbf16, #tpu.memory_space<vmem>>, vector<1x16x64xbf16>
    %105 = vector.shape_cast %104 : vector<1x16x64xbf16> to vector<16x64xbf16>
    %106 = arith.truncf %103 : vector<64x384xf32> to vector<64x384xbf16>
    %cst_117 = arith.constant dense<0.000000e+00> : vector<16x384xf32>
    %107 = tpu.matmul %105, %106, %cst_117 {dimension_numbers = #tpu.dot_dimension_numbers<[1], [0], [0], [1], [0, 0, 1, 1], [], []>} : vector<16x64xbf16>, vector<64x384xbf16>, vector<16x384xf32> -> vector<16x384xf32>
    %c1_118 = arith.constant 1 : index
    %c0_119 = arith.constant 0 : index
    %c0_120 = arith.constant 0 : index
    %108 = vector.load %arg10[%c1_118, %c0_119, %c0_120] : memref<6x16x1xf32, #tpu.memory_space<vmem>>, vector<1x16x1xf32>
    %109 = vector.shape_cast %108 : vector<1x16x1xf32> to vector<16x1xf32>
    %110 = vector.broadcast %109 : vector<16x1xf32> to vector<16x384xf32>
    %111 = arith.addf %107, %110 : vector<16x384xf32>
    %112 = vector.broadcast %0 : vector<1x384xf32> to vector<16x384xf32>
    %113 = arith.mulf %111, %112 : vector<16x384xf32>
    %114 = arith.truncf %113 : vector<16x384xf32> to vector<16x384xbf16>
    %c0_121 = arith.constant 0 : index
    %c128_122 = arith.constant 128 : index
    %115 = vector.load %arg12[%c0_121, %c128_122] : memref<48x640xbf16, #tpu.memory_space<vmem>>, vector<16x384xbf16>
    tpu.vector_store %arg12[%c0_121, %c128_122], %114 {strides = array<i32>} : memref<48x640xbf16, #tpu.memory_space<vmem>>, vector<16x384xbf16>,
    %c0_123 = arith.constant 0 : index
    %c109_124 = arith.constant 109 : index
    %116 = vector.load %arg12[%c0_123, %c109_124] : memref<48x640xbf16, #tpu.memory_space<vmem>>, vector<48x384xbf16>
    %c0_125 = arith.constant 0 : index
    %c110_126 = arith.constant 110 : index
    %117 = vector.load %arg12[%c0_125, %c110_126] : memref<48x640xbf16, #tpu.memory_space<vmem>>, vector<48x384xbf16>
    %c0_127 = arith.constant 0 : index
    %c111_128 = arith.constant 111 : index
    %118 = vector.load %arg12[%c0_127, %c111_128] : memref<48x640xbf16, #tpu.memory_space<vmem>>, vector<48x384xbf16>
    %c0_129 = arith.constant 0 : index
    %c127_130 = arith.constant 127 : index
    %119 = vector.load %arg12[%c0_129, %c127_130] : memref<48x640xbf16, #tpu.memory_space<vmem>>, vector<48x384xbf16>
    %c0_131 = arith.constant 0 : index
    %c128_132 = arith.constant 128 : index
    %120 = vector.load %arg12[%c0_131, %c128_132] : memref<48x640xbf16, #tpu.memory_space<vmem>>, vector<48x384xbf16>
    %c0_133 = arith.constant 0 : index
    %c129_134 = arith.constant 129 : index
    %121 = vector.load %arg12[%c0_133, %c129_134] : memref<48x640xbf16, #tpu.memory_space<vmem>>, vector<48x384xbf16>
    %c0_135 = arith.constant 0 : index
    %c145_136 = arith.constant 145 : index
    %122 = vector.load %arg12[%c0_135, %c145_136] : memref<48x640xbf16, #tpu.memory_space<vmem>>, vector<48x384xbf16>
    %c0_137 = arith.constant 0 : index
    %c146_138 = arith.constant 146 : index
    %123 = vector.load %arg12[%c0_137, %c146_138] : memref<48x640xbf16, #tpu.memory_space<vmem>>, vector<48x384xbf16>
    %c0_139 = arith.constant 0 : index
    %c147_140 = arith.constant 147 : index
    %124 = vector.load %arg12[%c0_139, %c147_140] : memref<48x640xbf16, #tpu.memory_space<vmem>>, vector<48x384xbf16>
    %125 = tpu.concatenate %116, %117, %118, %119, %120, %121, %122, %123, %124 in 0 : vector<48x384xbf16>, vector<48x384xbf16>, vector<48x384xbf16>, vector<48x384xbf16>, vector<48x384xbf16>, vector<48x384xbf16>, vector<48x384xbf16>, vector<48x384xbf16>, vector<48x384xbf16> -> vector<432x384xbf16>
    %c2 = arith.constant 2 : index
    %c0_141 = arith.constant 0 : index
    %c0_142 = arith.constant 0 : index
    %126 = vector.load %arg7[%c2, %c0_141, %c0_142] : memref<6x64x432xbf16, #tpu.memory_space<vmem>>, vector<1x64x432xbf16>
    %127 = vector.shape_cast %126 : vector<1x64x432xbf16> to vector<64x432xbf16>
    %cst_143 = arith.constant dense<0.000000e+00> : vector<64x384xf32>
    %128 = tpu.matmul %127, %125, %cst_143 {dimension_numbers = #tpu.dot_dimension_numbers<[1], [0], [0], [1], [0, 0, 1, 1], [], []>} : vector<64x432xbf16>, vector<432x384xbf16>, vector<64x384xf32> -> vector<64x384xf32>
    %c2_144 = arith.constant 2 : index
    %c0_145 = arith.constant 0 : index
    %c0_146 = arith.constant 0 : index
    %129 = vector.load %arg8[%c2_144, %c0_145, %c0_146] : memref<6x64x1xf32, #tpu.memory_space<vmem>>, vector<1x64x1xf32>
    %130 = vector.shape_cast %129 : vector<1x64x1xf32> to vector<64x1xf32>
    %131 = vector.broadcast %130 : vector<64x1xf32> to vector<64x384xf32>
    %132 = arith.addf %128, %131 : vector<64x384xf32>
    %cst_147 = arith.constant 0.000000e+00 : f32
    %133 = vector.broadcast %cst_147 : f32 to vector<64x384xf32>
    %134 = arith.maximumf %132, %133 : vector<64x384xf32>
    %c2_148 = arith.constant 2 : index
    %c0_149 = arith.constant 0 : index
    %c0_150 = arith.constant 0 : index
    %135 = vector.load %arg9[%c2_148, %c0_149, %c0_150] : memref<6x16x64xbf16, #tpu.memory_space<vmem>>, vector<1x16x64xbf16>
    %136 = vector.shape_cast %135 : vector<1x16x64xbf16> to vector<16x64xbf16>
    %137 = arith.truncf %134 : vector<64x384xf32> to vector<64x384xbf16>
    %cst_151 = arith.constant dense<0.000000e+00> : vector<16x384xf32>
    %138 = tpu.matmul %136, %137, %cst_151 {dimension_numbers = #tpu.dot_dimension_numbers<[1], [0], [0], [1], [0, 0, 1, 1], [], []>} : vector<16x64xbf16>, vector<64x384xbf16>, vector<16x384xf32> -> vector<16x384xf32>
    %c2_152 = arith.constant 2 : index
    %c0_153 = arith.constant 0 : index
    %c0_154 = arith.constant 0 : index
    %139 = vector.load %arg10[%c2_152, %c0_153, %c0_154] : memref<6x16x1xf32, #tpu.memory_space<vmem>>, vector<1x16x1xf32>
    %140 = vector.shape_cast %139 : vector<1x16x1xf32> to vector<16x1xf32>
    %141 = vector.broadcast %140 : vector<16x1xf32> to vector<16x384xf32>
    %142 = arith.addf %138, %141 : vector<16x384xf32>
    %143 = vector.broadcast %0 : vector<1x384xf32> to vector<16x384xf32>
    %144 = arith.mulf %142, %143 : vector<16x384xf32>
    %145 = arith.truncf %144 : vector<16x384xf32> to vector<16x384xbf16>
    %c0_155 = arith.constant 0 : index
    %c128_156 = arith.constant 128 : index
    %146 = vector.load %arg12[%c0_155, %c128_156] : memref<48x640xbf16, #tpu.memory_space<vmem>>, vector<16x384xbf16>
    tpu.vector_store %arg12[%c0_155, %c128_156], %145 {strides = array<i32>} : memref<48x640xbf16, #tpu.memory_space<vmem>>, vector<16x384xbf16>,
    %c0_157 = arith.constant 0 : index
    %c109_158 = arith.constant 109 : index
    %147 = vector.load %arg12[%c0_157, %c109_158] : memref<48x640xbf16, #tpu.memory_space<vmem>>, vector<48x384xbf16>
    %c0_159 = arith.constant 0 : index
    %c110_160 = arith.constant 110 : index
    %148 = vector.load %arg12[%c0_159, %c110_160] : memref<48x640xbf16, #tpu.memory_space<vmem>>, vector<48x384xbf16>
    %c0_161 = arith.constant 0 : index
    %c111_162 = arith.constant 111 : index
    %149 = vector.load %arg12[%c0_161, %c111_162] : memref<48x640xbf16, #tpu.memory_space<vmem>>, vector<48x384xbf16>
    %c0_163 = arith.constant 0 : index
    %c127_164 = arith.constant 127 : index
    %150 = vector.load %arg12[%c0_163, %c127_164] : memref<48x640xbf16, #tpu.memory_space<vmem>>, vector<48x384xbf16>
    %c0_165 = arith.constant 0 : index
    %c128_166 = arith.constant 128 : index
    %151 = vector.load %arg12[%c0_165, %c128_166] : memref<48x640xbf16, #tpu.memory_space<vmem>>, vector<48x384xbf16>
    %c0_167 = arith.constant 0 : index
    %c129_168 = arith.constant 129 : index
    %152 = vector.load %arg12[%c0_167, %c129_168] : memref<48x640xbf16, #tpu.memory_space<vmem>>, vector<48x384xbf16>
    %c0_169 = arith.constant 0 : index
    %c145_170 = arith.constant 145 : index
    %153 = vector.load %arg12[%c0_169, %c145_170] : memref<48x640xbf16, #tpu.memory_space<vmem>>, vector<48x384xbf16>
    %c0_171 = arith.constant 0 : index
    %c146_172 = arith.constant 146 : index
    %154 = vector.load %arg12[%c0_171, %c146_172] : memref<48x640xbf16, #tpu.memory_space<vmem>>, vector<48x384xbf16>
    %c0_173 = arith.constant 0 : index
    %c147_174 = arith.constant 147 : index
    %155 = vector.load %arg12[%c0_173, %c147_174] : memref<48x640xbf16, #tpu.memory_space<vmem>>, vector<48x384xbf16>
    %156 = tpu.concatenate %147, %148, %149, %150, %151, %152, %153, %154, %155 in 0 : vector<48x384xbf16>, vector<48x384xbf16>, vector<48x384xbf16>, vector<48x384xbf16>, vector<48x384xbf16>, vector<48x384xbf16>, vector<48x384xbf16>, vector<48x384xbf16>, vector<48x384xbf16> -> vector<432x384xbf16>
    %c3 = arith.constant 3 : index
    %c0_175 = arith.constant 0 : index
    %c0_176 = arith.constant 0 : index
    %157 = vector.load %arg7[%c3, %c0_175, %c0_176] : memref<6x64x432xbf16, #tpu.memory_space<vmem>>, vector<1x64x432xbf16>
    %158 = vector.shape_cast %157 : vector<1x64x432xbf16> to vector<64x432xbf16>
    %cst_177 = arith.constant dense<0.000000e+00> : vector<64x384xf32>
    %159 = tpu.matmul %158, %156, %cst_177 {dimension_numbers = #tpu.dot_dimension_numbers<[1], [0], [0], [1], [0, 0, 1, 1], [], []>} : vector<64x432xbf16>, vector<432x384xbf16>, vector<64x384xf32> -> vector<64x384xf32>
    %c3_178 = arith.constant 3 : index
    %c0_179 = arith.constant 0 : index
    %c0_180 = arith.constant 0 : index
    %160 = vector.load %arg8[%c3_178, %c0_179, %c0_180] : memref<6x64x1xf32, #tpu.memory_space<vmem>>, vector<1x64x1xf32>
    %161 = vector.shape_cast %160 : vector<1x64x1xf32> to vector<64x1xf32>
    %162 = vector.broadcast %161 : vector<64x1xf32> to vector<64x384xf32>
    %163 = arith.addf %159, %162 : vector<64x384xf32>
    %cst_181 = arith.constant 0.000000e+00 : f32
    %164 = vector.broadcast %cst_181 : f32 to vector<64x384xf32>
    %165 = arith.maximumf %163, %164 : vector<64x384xf32>
    %c3_182 = arith.constant 3 : index
    %c0_183 = arith.constant 0 : index
    %c0_184 = arith.constant 0 : index
    %166 = vector.load %arg9[%c3_182, %c0_183, %c0_184] : memref<6x16x64xbf16, #tpu.memory_space<vmem>>, vector<1x16x64xbf16>
    %167 = vector.shape_cast %166 : vector<1x16x64xbf16> to vector<16x64xbf16>
    %168 = arith.truncf %165 : vector<64x384xf32> to vector<64x384xbf16>
    %cst_185 = arith.constant dense<0.000000e+00> : vector<16x384xf32>
    %169 = tpu.matmul %167, %168, %cst_185 {dimension_numbers = #tpu.dot_dimension_numbers<[1], [0], [0], [1], [0, 0, 1, 1], [], []>} : vector<16x64xbf16>, vector<64x384xbf16>, vector<16x384xf32> -> vector<16x384xf32>
    %c3_186 = arith.constant 3 : index
    %c0_187 = arith.constant 0 : index
    %c0_188 = arith.constant 0 : index
    %170 = vector.load %arg10[%c3_186, %c0_187, %c0_188] : memref<6x16x1xf32, #tpu.memory_space<vmem>>, vector<1x16x1xf32>
    %171 = vector.shape_cast %170 : vector<1x16x1xf32> to vector<16x1xf32>
    %172 = vector.broadcast %171 : vector<16x1xf32> to vector<16x384xf32>
    %173 = arith.addf %169, %172 : vector<16x384xf32>
    %174 = vector.broadcast %0 : vector<1x384xf32> to vector<16x384xf32>
    %175 = arith.mulf %173, %174 : vector<16x384xf32>
    %176 = arith.truncf %175 : vector<16x384xf32> to vector<16x384xbf16>
    %c0_189 = arith.constant 0 : index
    %c128_190 = arith.constant 128 : index
    %177 = vector.load %arg12[%c0_189, %c128_190] : memref<48x640xbf16, #tpu.memory_space<vmem>>, vector<16x384xbf16>
    tpu.vector_store %arg12[%c0_189, %c128_190], %176 {strides = array<i32>} : memref<48x640xbf16, #tpu.memory_space<vmem>>, vector<16x384xbf16>,
    %c0_191 = arith.constant 0 : index
    %c109_192 = arith.constant 109 : index
    %178 = vector.load %arg12[%c0_191, %c109_192] : memref<48x640xbf16, #tpu.memory_space<vmem>>, vector<48x384xbf16>
    %c0_193 = arith.constant 0 : index
    %c110_194 = arith.constant 110 : index
    %179 = vector.load %arg12[%c0_193, %c110_194] : memref<48x640xbf16, #tpu.memory_space<vmem>>, vector<48x384xbf16>
    %c0_195 = arith.constant 0 : index
    %c111_196 = arith.constant 111 : index
    %180 = vector.load %arg12[%c0_195, %c111_196] : memref<48x640xbf16, #tpu.memory_space<vmem>>, vector<48x384xbf16>
    %c0_197 = arith.constant 0 : index
    %c127_198 = arith.constant 127 : index
    %181 = vector.load %arg12[%c0_197, %c127_198] : memref<48x640xbf16, #tpu.memory_space<vmem>>, vector<48x384xbf16>
    %c0_199 = arith.constant 0 : index
    %c128_200 = arith.constant 128 : index
    %182 = vector.load %arg12[%c0_199, %c128_200] : memref<48x640xbf16, #tpu.memory_space<vmem>>, vector<48x384xbf16>
    %c0_201 = arith.constant 0 : index
    %c129_202 = arith.constant 129 : index
    %183 = vector.load %arg12[%c0_201, %c129_202] : memref<48x640xbf16, #tpu.memory_space<vmem>>, vector<48x384xbf16>
    %c0_203 = arith.constant 0 : index
    %c145_204 = arith.constant 145 : index
    %184 = vector.load %arg12[%c0_203, %c145_204] : memref<48x640xbf16, #tpu.memory_space<vmem>>, vector<48x384xbf16>
    %c0_205 = arith.constant 0 : index
    %c146_206 = arith.constant 146 : index
    %185 = vector.load %arg12[%c0_205, %c146_206] : memref<48x640xbf16, #tpu.memory_space<vmem>>, vector<48x384xbf16>
    %c0_207 = arith.constant 0 : index
    %c147_208 = arith.constant 147 : index
    %186 = vector.load %arg12[%c0_207, %c147_208] : memref<48x640xbf16, #tpu.memory_space<vmem>>, vector<48x384xbf16>
    %187 = tpu.concatenate %178, %179, %180, %181, %182, %183, %184, %185, %186 in 0 : vector<48x384xbf16>, vector<48x384xbf16>, vector<48x384xbf16>, vector<48x384xbf16>, vector<48x384xbf16>, vector<48x384xbf16>, vector<48x384xbf16>, vector<48x384xbf16>, vector<48x384xbf16> -> vector<432x384xbf16>
    %c4 = arith.constant 4 : index
    %c0_209 = arith.constant 0 : index
    %c0_210 = arith.constant 0 : index
    %188 = vector.load %arg7[%c4, %c0_209, %c0_210] : memref<6x64x432xbf16, #tpu.memory_space<vmem>>, vector<1x64x432xbf16>
    %189 = vector.shape_cast %188 : vector<1x64x432xbf16> to vector<64x432xbf16>
    %cst_211 = arith.constant dense<0.000000e+00> : vector<64x384xf32>
    %190 = tpu.matmul %189, %187, %cst_211 {dimension_numbers = #tpu.dot_dimension_numbers<[1], [0], [0], [1], [0, 0, 1, 1], [], []>} : vector<64x432xbf16>, vector<432x384xbf16>, vector<64x384xf32> -> vector<64x384xf32>
    %c4_212 = arith.constant 4 : index
    %c0_213 = arith.constant 0 : index
    %c0_214 = arith.constant 0 : index
    %191 = vector.load %arg8[%c4_212, %c0_213, %c0_214] : memref<6x64x1xf32, #tpu.memory_space<vmem>>, vector<1x64x1xf32>
    %192 = vector.shape_cast %191 : vector<1x64x1xf32> to vector<64x1xf32>
    %193 = vector.broadcast %192 : vector<64x1xf32> to vector<64x384xf32>
    %194 = arith.addf %190, %193 : vector<64x384xf32>
    %cst_215 = arith.constant 0.000000e+00 : f32
    %195 = vector.broadcast %cst_215 : f32 to vector<64x384xf32>
    %196 = arith.maximumf %194, %195 : vector<64x384xf32>
    %c4_216 = arith.constant 4 : index
    %c0_217 = arith.constant 0 : index
    %c0_218 = arith.constant 0 : index
    %197 = vector.load %arg9[%c4_216, %c0_217, %c0_218] : memref<6x16x64xbf16, #tpu.memory_space<vmem>>, vector<1x16x64xbf16>
    %198 = vector.shape_cast %197 : vector<1x16x64xbf16> to vector<16x64xbf16>
    %199 = arith.truncf %196 : vector<64x384xf32> to vector<64x384xbf16>
    %cst_219 = arith.constant dense<0.000000e+00> : vector<16x384xf32>
    %200 = tpu.matmul %198, %199, %cst_219 {dimension_numbers = #tpu.dot_dimension_numbers<[1], [0], [0], [1], [0, 0, 1, 1], [], []>} : vector<16x64xbf16>, vector<64x384xbf16>, vector<16x384xf32> -> vector<16x384xf32>
    %c4_220 = arith.constant 4 : index
    %c0_221 = arith.constant 0 : index
    %c0_222 = arith.constant 0 : index
    %201 = vector.load %arg10[%c4_220, %c0_221, %c0_222] : memref<6x16x1xf32, #tpu.memory_space<vmem>>, vector<1x16x1xf32>
    %202 = vector.shape_cast %201 : vector<1x16x1xf32> to vector<16x1xf32>
    %203 = vector.broadcast %202 : vector<16x1xf32> to vector<16x384xf32>
    %204 = arith.addf %200, %203 : vector<16x384xf32>
    %205 = vector.broadcast %0 : vector<1x384xf32> to vector<16x384xf32>
    %206 = arith.mulf %204, %205 : vector<16x384xf32>
    %207 = arith.truncf %206 : vector<16x384xf32> to vector<16x384xbf16>
    %c0_223 = arith.constant 0 : index
    %c128_224 = arith.constant 128 : index
    %208 = vector.load %arg12[%c0_223, %c128_224] : memref<48x640xbf16, #tpu.memory_space<vmem>>, vector<16x384xbf16>
    tpu.vector_store %arg12[%c0_223, %c128_224], %207 {strides = array<i32>} : memref<48x640xbf16, #tpu.memory_space<vmem>>, vector<16x384xbf16>,
    %c0_225 = arith.constant 0 : index
    %c109_226 = arith.constant 109 : index
    %209 = vector.load %arg12[%c0_225, %c109_226] : memref<48x640xbf16, #tpu.memory_space<vmem>>, vector<48x384xbf16>
    %c0_227 = arith.constant 0 : index
    %c110_228 = arith.constant 110 : index
    %210 = vector.load %arg12[%c0_227, %c110_228] : memref<48x640xbf16, #tpu.memory_space<vmem>>, vector<48x384xbf16>
    %c0_229 = arith.constant 0 : index
    %c111_230 = arith.constant 111 : index
    %211 = vector.load %arg12[%c0_229, %c111_230] : memref<48x640xbf16, #tpu.memory_space<vmem>>, vector<48x384xbf16>
    %c0_231 = arith.constant 0 : index
    %c127_232 = arith.constant 127 : index
    %212 = vector.load %arg12[%c0_231, %c127_232] : memref<48x640xbf16, #tpu.memory_space<vmem>>, vector<48x384xbf16>
    %c0_233 = arith.constant 0 : index
    %c128_234 = arith.constant 128 : index
    %213 = vector.load %arg12[%c0_233, %c128_234] : memref<48x640xbf16, #tpu.memory_space<vmem>>, vector<48x384xbf16>
    %c0_235 = arith.constant 0 : index
    %c129_236 = arith.constant 129 : index
    %214 = vector.load %arg12[%c0_235, %c129_236] : memref<48x640xbf16, #tpu.memory_space<vmem>>, vector<48x384xbf16>
    %c0_237 = arith.constant 0 : index
    %c145_238 = arith.constant 145 : index
    %215 = vector.load %arg12[%c0_237, %c145_238] : memref<48x640xbf16, #tpu.memory_space<vmem>>, vector<48x384xbf16>
    %c0_239 = arith.constant 0 : index
    %c146_240 = arith.constant 146 : index
    %216 = vector.load %arg12[%c0_239, %c146_240] : memref<48x640xbf16, #tpu.memory_space<vmem>>, vector<48x384xbf16>
    %c0_241 = arith.constant 0 : index
    %c147_242 = arith.constant 147 : index
    %217 = vector.load %arg12[%c0_241, %c147_242] : memref<48x640xbf16, #tpu.memory_space<vmem>>, vector<48x384xbf16>
    %218 = tpu.concatenate %209, %210, %211, %212, %213, %214, %215, %216, %217 in 0 : vector<48x384xbf16>, vector<48x384xbf16>, vector<48x384xbf16>, vector<48x384xbf16>, vector<48x384xbf16>, vector<48x384xbf16>, vector<48x384xbf16>, vector<48x384xbf16>, vector<48x384xbf16> -> vector<432x384xbf16>
    %c5 = arith.constant 5 : index
    %c0_243 = arith.constant 0 : index
    %c0_244 = arith.constant 0 : index
    %219 = vector.load %arg7[%c5, %c0_243, %c0_244] : memref<6x64x432xbf16, #tpu.memory_space<vmem>>, vector<1x64x432xbf16>
    %220 = vector.shape_cast %219 : vector<1x64x432xbf16> to vector<64x432xbf16>
    %cst_245 = arith.constant dense<0.000000e+00> : vector<64x384xf32>
    %221 = tpu.matmul %220, %218, %cst_245 {dimension_numbers = #tpu.dot_dimension_numbers<[1], [0], [0], [1], [0, 0, 1, 1], [], []>} : vector<64x432xbf16>, vector<432x384xbf16>, vector<64x384xf32> -> vector<64x384xf32>
    %c5_246 = arith.constant 5 : index
    %c0_247 = arith.constant 0 : index
    %c0_248 = arith.constant 0 : index
    %222 = vector.load %arg8[%c5_246, %c0_247, %c0_248] : memref<6x64x1xf32, #tpu.memory_space<vmem>>, vector<1x64x1xf32>
    %223 = vector.shape_cast %222 : vector<1x64x1xf32> to vector<64x1xf32>
    %224 = vector.broadcast %223 : vector<64x1xf32> to vector<64x384xf32>
    %225 = arith.addf %221, %224 : vector<64x384xf32>
    %cst_249 = arith.constant 0.000000e+00 : f32
    %226 = vector.broadcast %cst_249 : f32 to vector<64x384xf32>
    %227 = arith.maximumf %225, %226 : vector<64x384xf32>
    %c5_250 = arith.constant 5 : index
    %c0_251 = arith.constant 0 : index
    %c0_252 = arith.constant 0 : index
    %228 = vector.load %arg9[%c5_250, %c0_251, %c0_252] : memref<6x16x64xbf16, #tpu.memory_space<vmem>>, vector<1x16x64xbf16>
    %229 = vector.shape_cast %228 : vector<1x16x64xbf16> to vector<16x64xbf16>
    %230 = arith.truncf %227 : vector<64x384xf32> to vector<64x384xbf16>
    %cst_253 = arith.constant dense<0.000000e+00> : vector<16x384xf32>
    %231 = tpu.matmul %229, %230, %cst_253 {dimension_numbers = #tpu.dot_dimension_numbers<[1], [0], [0], [1], [0, 0, 1, 1], [], []>} : vector<16x64xbf16>, vector<64x384xbf16>, vector<16x384xf32> -> vector<16x384xf32>
    %c5_254 = arith.constant 5 : index
    %c0_255 = arith.constant 0 : index
    %c0_256 = arith.constant 0 : index
    %232 = vector.load %arg10[%c5_254, %c0_255, %c0_256] : memref<6x16x1xf32, #tpu.memory_space<vmem>>, vector<1x16x1xf32>
    %233 = vector.shape_cast %232 : vector<1x16x1xf32> to vector<16x1xf32>
    %234 = vector.broadcast %233 : vector<16x1xf32> to vector<16x384xf32>
    %235 = arith.addf %231, %234 : vector<16x384xf32>
    %236 = vector.broadcast %0 : vector<1x384xf32> to vector<16x384xf32>
    %237 = arith.mulf %235, %236 : vector<16x384xf32>
    %c0_257 = arith.constant 0 : index
    %c0_258 = arith.constant 0 : index
    %c0_259 = arith.constant 0 : index
    %238 = vector.load %arg11[%c0_257, %c0_258, %c0_259] : memref<1x16x384xf32, #tpu.memory_space<vmem>>, vector<1x16x384xf32>
    %239 = vector.shape_cast %238 : vector<1x16x384xf32> to vector<16x384xf32>
    %240 = vector.shape_cast %237 : vector<16x384xf32> to vector<1x16x384xf32>
    tpu.vector_store %arg11[%c0_257, %c0_258, %c0_259], %240 {strides = array<i32>} : memref<1x16x384xf32, #tpu.memory_space<vmem>>, vector<1x16x384xf32>,
    return
  }
  func.func @transform_0(%arg0: i32) -> (i32, i32, i32) {
    %c0_i32 = arith.constant 0 : i32
    %c0_i32_0 = arith.constant 0 : i32
    %c0_i32_1 = arith.constant 0 : i32
    return %arg0, %c0_i32, %c0_i32_0 : i32, i32, i32
  }
  func.func @transform_1(%arg0: i32) -> (i32, i32) {
    %c0_i32 = arith.constant 0 : i32
    %c0_i32_0 = arith.constant 0 : i32
    %c0_i32_1 = arith.constant 0 : i32
    return %c0_i32, %c0_i32_0 : i32, i32
  }
  func.func @transform_2(%arg0: i32) -> (i32, i32) {
    %c0_i32 = arith.constant 0 : i32
    %c0_i32_0 = arith.constant 0 : i32
    %c0_i32_1 = arith.constant 0 : i32
    return %c0_i32, %c0_i32_0 : i32, i32
  }
  func.func @transform_3(%arg0: i32) -> (i32, i32) {
    %c0_i32 = arith.constant 0 : i32
    %c0_i32_0 = arith.constant 0 : i32
    %c0_i32_1 = arith.constant 0 : i32
    return %c0_i32, %c0_i32_0 : i32, i32
  }
  func.func @transform_4(%arg0: i32) -> (i32, i32) {
    %c0_i32 = arith.constant 0 : i32
    %c0_i32_0 = arith.constant 0 : i32
    %c0_i32_1 = arith.constant 0 : i32
    return %c0_i32, %c0_i32_0 : i32, i32
  }
  func.func @transform_5(%arg0: i32) -> (i32, i32) {
    %c0_i32 = arith.constant 0 : i32
    %c0_i32_0 = arith.constant 0 : i32
    %c0_i32_1 = arith.constant 0 : i32
    return %c0_i32, %c0_i32_0 : i32, i32
  }
  func.func @transform_6(%arg0: i32) -> (i32, i32, i32) {
    %c0_i32 = arith.constant 0 : i32
    %c0_i32_0 = arith.constant 0 : i32
    %c0_i32_1 = arith.constant 0 : i32
    %c0_i32_2 = arith.constant 0 : i32
    return %c0_i32, %c0_i32_0, %c0_i32_1 : i32, i32, i32
  }
  func.func @transform_7(%arg0: i32) -> (i32, i32, i32) {
    %c0_i32 = arith.constant 0 : i32
    %c0_i32_0 = arith.constant 0 : i32
    %c0_i32_1 = arith.constant 0 : i32
    %c0_i32_2 = arith.constant 0 : i32
    return %c0_i32, %c0_i32_0, %c0_i32_1 : i32, i32, i32
  }
  func.func @transform_8(%arg0: i32) -> (i32, i32, i32) {
    %c0_i32 = arith.constant 0 : i32
    %c0_i32_0 = arith.constant 0 : i32
    %c0_i32_1 = arith.constant 0 : i32
    %c0_i32_2 = arith.constant 0 : i32
    return %c0_i32, %c0_i32_0, %c0_i32_1 : i32, i32, i32
  }
  func.func @transform_9(%arg0: i32) -> (i32, i32, i32) {
    %c0_i32 = arith.constant 0 : i32
    %c0_i32_0 = arith.constant 0 : i32
    %c0_i32_1 = arith.constant 0 : i32
    %c0_i32_2 = arith.constant 0 : i32
    return %c0_i32, %c0_i32_0, %c0_i32_1 : i32, i32, i32
  }
  func.func @transform_10(%arg0: i32) -> (i32, i32, i32) {
    %c0_i32 = arith.constant 0 : i32
    %c0_i32_0 = arith.constant 0 : i32
    %c0_i32_1 = arith.constant 0 : i32
    return %arg0, %c0_i32, %c0_i32_0 : i32, i32, i32
  }
}

</mosaic_0001>

<llo_original>
// kernel: _lambda_.1
$region0: #{_lambda_.1}
  #allocation0 [shape = 'u32[]', space=smem, size = 0x4, offset = 0x4, fixed_abs, tag = 'smem constant byte address 0x4 - core index']
  #allocation1 [shape = 'u32[144,128]{1,0:T(1,128)}', space=vmem, size = 0x12000, scoped, tag = 'internal scratch']
  #allocation2 [shape = 'bf16[48,640]{1,0:T(16,128)(2,1)}', space=vmem, size = 0xf000, scoped, tag = 'scratch operand']
  %s0 = inlined_call_operand.vmem [shape: bf16[2,16,640], index: 0, kind: input, shape index: {}]
  %s1 = inlined_call_operand.vmem [shape: f32[1,384], index: 1, kind: input, shape index: {}]
  %s2 = inlined_call_operand.vmem [shape: bf16[16,144], index: 2, kind: input, shape index: {}]
  %s3 = inlined_call_operand.vmem [shape: f32[16,1], index: 3, kind: input, shape index: {}]
  %s4 = inlined_call_operand.vmem [shape: bf16[32,144], index: 4, kind: input, shape index: {}]
  %s5 = inlined_call_operand.vmem [shape: f32[32,1], index: 5, kind: input, shape index: {}]
  %s6 = inlined_call_operand.vmem [shape: bf16[6,64,432], index: 6, kind: input, shape index: {}]
  %s7 = inlined_call_operand.vmem [shape: f32[6,64,1], index: 7, kind: input, shape index: {}]
  %s8 = inlined_call_operand.vmem [shape: bf16[6,16,64], index: 8, kind: input, shape index: {}]
  %s9 = inlined_call_operand.vmem [shape: f32[6,16,1], index: 9, kind: input, shape index: {}]
  %s10 = inlined_call_operand.vmem [shape: f32[2,16,384], index: 10, kind: output, shape index: {}]
  %s11 = sld [smem:[#allocation0]]
  $region73: #{_lambda_.1} parent=0
    _
  %s13 = ssub.s32 1, %s11
  %s14 = scalar_select 0, %s13, %s11
  loop: start=0, step=1, limit=4
  $region2: #{_lambda_.1} parent=0 // loop_pre_header
    _
  $region3: #{_lambda_.1} parent=0 // loop_header
    %s16 = sphi 0, %s20
    %p17 = scmp.ge.s32.totalorder %s16, 4
    %s26 = sphi 0, %s28
    %s29 = sphi 0, %s26
    %s30 = sphi 0, %s29
    %s46 = sphi 0, %s30
    %s50 = sphi 0, %s50
    %s52 = sphi 0, %s50
    %s53 = sphi 0, %s52
    %s67 = sphi 0, %s53
    %s71 = sphi 0, %s71
    %s73 = sphi 0, %s71
    %s74 = sphi 0, %s73
    %s88 = sphi 0, %s74
    %s92 = sphi 0, %s92
    %s94 = sphi 0, %s92
    %s95 = sphi 0, %s94
    %s109 = sphi 0, %s95
    %s113 = sphi 0, %s113
    %s115 = sphi 0, %s113
    %s116 = sphi 0, %s115
    %s130 = sphi 0, %s116
    %s134 = sphi 0, %s134
    %s136 = sphi 0, %s134
    %s137 = sphi 0, %s136
    %s151 = sphi 0, %s137
    %s155 = sphi 0, %s155
    %s157 = sphi 0, %s155
    %s158 = sphi 0, %s157
    %s172 = sphi 0, %s158
    %s176 = sphi 0, %s176
    %s178 = sphi 0, %s176
    %s179 = sphi 0, %s178
    %s193 = sphi 0, %s179
    %s197 = sphi 0, %s197
    %s199 = sphi 0, %s197
    %s200 = sphi 0, %s199
    %s214 = sphi 0, %s200
    %s218 = sphi 0, %s218
    %s220 = sphi 0, %s218
    %s221 = sphi 0, %s220
    %s235 = sphi 0, %s221
    %s241 = sphi 0, %s243
    %s244 = sphi 0, %s241
    %s245 = sphi 0, %s244
    %s261 = sphi 0, %s245
  $region4: #{_lambda_.1} parent=0 // loop_header_branch
    %19 = sbr.rel (%p17) target = $region8
  $region5: #{_lambda_.1} parent=0 // loop_body
    %s21 = ssub.s32 %s16, 1
    %s22 = ssub.s32 %s16, 2
    %s23 = sadd.s32 %s16, 1
    %s24 = ssub.s32 %s16, %s23
    %p25 = scmp.eq.s32.totalorder %s24, 0
    %s27 = sadd.s32 %s26, 1
    %s28 = scalar_select %p25, %s26, %s27
    %p31 = pneg %p25
    %p32 = scmp.eq.s32.totalorder %s16, 1
    %p33 = por %p31, %p32
    %p34 = scmp.ne.s32.totalorder %s26, %s29
    %p35 = scmp.eq.s32.totalorder %s16, 0
    %p36 = por %p34, %p35
    %p37 = scmp.ne.s32.totalorder %s26, %s29
    %p38 = scmp.eq.s32.totalorder %s21, 1
    %p39 = por %p37, %p38
    %p40 = scmp.ne.s32.totalorder %s29, %s30
    %p41 = scmp.eq.s32.totalorder %s21, 0
    %p42 = por %p40, %p41
    %p43 = scmp.ne.s32.totalorder %s29, %s30
    %p44 = scmp.eq.s32.totalorder %s22, 1
    %p45 = por %p43, %p44
    %p47 = scmp.ne.s32.totalorder %s30, %s46
    %p48 = scmp.eq.s32.totalorder %s22, 0
    %p49 = por %p47, %p48
    %s51 = sadd.s32 %s50, 1
    %p54 = scmp.eq.s32.totalorder %s16, 1
    %p55 = scmp.ne.s32.totalorder %s50, %s52
    %p56 = scmp.eq.s32.totalorder %s16, 0
    %p57 = por %p55, %p56
    %p58 = scmp.ne.s32.totalorder %s50, %s52
    %p59 = scmp.eq.s32.totalorder %s21, 1
    %p60 = por %p58, %p59
    %p61 = scmp.ne.s32.totalorder %s52, %s53
    %p62 = scmp.eq.s32.totalorder %s21, 0
    %p63 = por %p61, %p62
    %p64 = scmp.ne.s32.totalorder %s52, %s53
    %p65 = scmp.eq.s32.totalorder %s22, 1
    %p66 = por %p64, %p65
    %p68 = scmp.ne.s32.totalorder %s53, %s67
    %p69 = scmp.eq.s32.totalorder %s22, 0
    %p70 = por %p68, %p69
    %s72 = sadd.s32 %s71, 1
    %p75 = scmp.eq.s32.totalorder %s16, 1
    %p76 = scmp.ne.s32.totalorder %s71, %s73
    %p77 = scmp.eq.s32.totalorder %s16, 0
    %p78 = por %p76, %p77
    %p79 = scmp.ne.s32.totalorder %s71, %s73
    %p80 = scmp.eq.s32.totalorder %s21, 1
    %p81 = por %p79, %p80
    %p82 = scmp.ne.s32.totalorder %s73, %s74
    %p83 = scmp.eq.s32.totalorder %s21, 0
    %p84 = por %p82, %p83
    %p85 = scmp.ne.s32.totalorder %s73, %s74
    %p86 = scmp.eq.s32.totalorder %s22, 1
    %p87 = por %p85, %p86
    %p89 = scmp.ne.s32.totalorder %s74, %s88
    %p90 = scmp.eq.s32.totalorder %s22, 0
    %p91 = por %p89, %p90
    %s93 = sadd.s32 %s92, 1
    %p96 = scmp.eq.s32.totalorder %s16, 1
    %p97 = scmp.ne.s32.totalorder %s92, %s94
    %p98 = scmp.eq.s32.totalorder %s16, 0
    %p99 = por %p97, %p98
    %p100 = scmp.ne.s32.totalorder %s92, %s94
    %p101 = scmp.eq.s32.totalorder %s21, 1
    %p102 = por %p100, %p101
    %p103 = scmp.ne.s32.totalorder %s94, %s95
    %p104 = scmp.eq.s32.totalorder %s21, 0
    %p105 = por %p103, %p104
    %p106 = scmp.ne.s32.totalorder %s94, %s95
    %p107 = scmp.eq.s32.totalorder %s22, 1
    %p108 = por %p106, %p107
    %p110 = scmp.ne.s32.totalorder %s95, %s109
    %p111 = scmp.eq.s32.totalorder %s22, 0
    %p112 = por %p110, %p111
    %s114 = sadd.s32 %s113, 1
    %p117 = scmp.eq.s32.totalorder %s16, 1
    %p118 = scmp.ne.s32.totalorder %s113, %s115
    %p119 = scmp.eq.s32.totalorder %s16, 0
    %p120 = por %p118, %p119
    %p121 = scmp.ne.s32.totalorder %s113, %s115
    %p122 = scmp.eq.s32.totalorder %s21, 1
    %p123 = por %p121, %p122
    %p124 = scmp.ne.s32.totalorder %s115, %s116
    %p125 = scmp.eq.s32.totalorder %s21, 0
    %p126 = por %p124, %p125
    %p127 = scmp.ne.s32.totalorder %s115, %s116
    %p128 = scmp.eq.s32.totalorder %s22, 1
    %p129 = por %p127, %p128
    %p131 = scmp.ne.s32.totalorder %s116, %s130
    %p132 = scmp.eq.s32.totalorder %s22, 0
    %p133 = por %p131, %p132
    %s135 = sadd.s32 %s134, 1
    %p138 = scmp.eq.s32.totalorder %s16, 1
    %p139 = scmp.ne.s32.totalorder %s134, %s136
    %p140 = scmp.eq.s32.totalorder %s16, 0
    %p141 = por %p139, %p140
    %p142 = scmp.ne.s32.totalorder %s134, %s136
    %p143 = scmp.eq.s32.totalorder %s21, 1
    %p144 = por %p142, %p143
    %p145 = scmp.ne.s32.totalorder %s136, %s137
    %p146 = scmp.eq.s32.totalorder %s21, 0
    %p147 = por %p145, %p146
    %p148 = scmp.ne.s32.totalorder %s136, %s137
    %p149 = scmp.eq.s32.totalorder %s22, 1
    %p150 = por %p148, %p149
    %p152 = scmp.ne.s32.totalorder %s137, %s151
    %p153 = scmp.eq.s32.totalorder %s22, 0
    %p154 = por %p152, %p153
    %s156 = sadd.s32 %s155, 1
    %p159 = scmp.eq.s32.totalorder %s16, 1
    %p160 = scmp.ne.s32.totalorder %s155, %s157
    %p161 = scmp.eq.s32.totalorder %s16, 0
    %p162 = por %p160, %p161
    %p163 = scmp.ne.s32.totalorder %s155, %s157
    %p164 = scmp.eq.s32.totalorder %s21, 1
    %p165 = por %p163, %p164
    %p166 = scmp.ne.s32.totalorder %s157, %s158
    %p167 = scmp.eq.s32.totalorder %s21, 0
    %p168 = por %p166, %p167
    %p169 = scmp.ne.s32.totalorder %s157, %s158
    %p170 = scmp.eq.s32.totalorder %s22, 1
    %p171 = por %p169, %p170
    %p173 = scmp.ne.s32.totalorder %s158, %s172
    %p174 = scmp.eq.s32.totalorder %s22, 0
    %p175 = por %p173, %p174
    %s177 = sadd.s32 %s176, 1
    %p180 = scmp.eq.s32.totalorder %s16, 1
    %p181 = scmp.ne.s32.totalorder %s176, %s178
    %p182 = scmp.eq.s32.totalorder %s16, 0
    %p183 = por %p181, %p182
    %p184 = scmp.ne.s32.totalorder %s176, %s178
    %p185 = scmp.eq.s32.totalorder %s21, 1
    %p186 = por %p184, %p185
    %p187 = scmp.ne.s32.totalorder %s178, %s179
    %p188 = scmp.eq.s32.totalorder %s21, 0
    %p189 = por %p187, %p188
    %p190 = scmp.ne.s32.totalorder %s178, %s179
    %p191 = scmp.eq.s32.totalorder %s22, 1
    %p192 = por %p190, %p191
    %p194 = scmp.ne.s32.totalorder %s179, %s193
    %p195 = scmp.eq.s32.totalorder %s22, 0
    %p196 = por %p194, %p195
    %s198 = sadd.s32 %s197, 1
    %p201 = scmp.eq.s32.totalorder %s16, 1
    %p202 = scmp.ne.s32.totalorder %s197, %s199
    %p203 = scmp.eq.s32.totalorder %s16, 0
    %p204 = por %p202, %p203
    %p205 = scmp.ne.s32.totalorder %s197, %s199
    %p206 = scmp.eq.s32.totalorder %s21, 1
    %p207 = por %p205, %p206
    %p208 = scmp.ne.s32.totalorder %s199, %s200
    %p209 = scmp.eq.s32.totalorder %s21, 0
    %p210 = por %p208, %p209
    %p211 = scmp.ne.s32.totalorder %s199, %s200
    %p212 = scmp.eq.s32.totalorder %s22, 1
    %p213 = por %p211, %p212
    %p215 = scmp.ne.s32.totalorder %s200, %s214
    %p216 = scmp.eq.s32.totalorder %s22, 0
    %p217 = por %p215, %p216
    %s219 = sadd.s32 %s218, 1
    %p222 = scmp.eq.s32.totalorder %s16, 1
    %p223 = scmp.ne.s32.totalorder %s218, %s220
    %p224 = scmp.eq.s32.totalorder %s16, 0
    %p225 = por %p223, %p224
    %p226 = scmp.ne.s32.totalorder %s218, %s220
    %p227 = scmp.eq.s32.totalorder %s21, 1
    %p228 = por %p226, %p227
    %p229 = scmp.ne.s32.totalorder %s220, %s221
    %p230 = scmp.eq.s32.totalorder %s21, 0
    %p231 = por %p229, %p230
    %p232 = scmp.ne.s32.totalorder %s220, %s221
    %p233 = scmp.eq.s32.totalorder %s22, 1
    %p234 = por %p232, %p233
    %p236 = scmp.ne.s32.totalorder %s221, %s235
    %p237 = scmp.eq.s32.totalorder %s22, 0
    %p238 = por %p236, %p237
    %s239 = ssub.s32 %s16, %s23
    %p240 = scmp.eq.s32.totalorder %s239, 0
    %s242 = sadd.s32 %s241, 1
    %s243 = scalar_select %p240, %s241, %s242
    %p246 = pneg %p240
    %p247 = scmp.eq.s32.totalorder %s16, 1
    %p248 = por %p246, %p247
    %p249 = scmp.ne.s32.totalorder %s241, %s244
    %p250 = scmp.eq.s32.totalorder %s16, 0
    %p251 = por %p249, %p250
    %p252 = scmp.ne.s32.totalorder %s241, %s244
    %p253 = scmp.eq.s32.totalorder %s21, 1
    %p254 = por %p252, %p253
    %p255 = scmp.ne.s32.totalorder %s244, %s245
    %p256 = scmp.eq.s32.totalorder %s21, 0
    %p257 = por %p255, %p256
    %p258 = scmp.ne.s32.totalorder %s244, %s245
    %p259 = scmp.eq.s32.totalorder %s22, 1
    %p260 = por %p258, %p259
    %p262 = scmp.ne.s32.totalorder %s245, %s261
    %p263 = scmp.eq.s32.totalorder %s22, 0
    %p264 = por %p262, %p263
    %p265 = scmp.le.s32.totalorder 1, %s16
    %p266 = scmp.lt.s32.totalorder %s16, 3
    %p267 = pnand %p265, %p266
    %p268 = pneg %p267
    // Predicated region
    $region9: #{_lambda_.1} parent=5 // pred_check
      _
    $region10: #{_lambda_.1} parent=5 // pred_check_branch
      %270 = sbr.rel (%p267) target = $region12
    $region11: #{_lambda_.1} parent=5 // pred_region
      %s271 = ssub.s32 %s16, 1
      // Predicated region
      $region13: #{_lambda_.1} parent=11 // pred_check
        %p272 = pneg %p63
      $region14: #{_lambda_.1} parent=11 // pred_check_branch
        %274 = sbr.rel (%p272) target = $region16
      $region15: #{_lambda_.1} parent=11 // pred_region
        _
      $region16: #{_lambda_.1} parent=11 // pred_fallthru
        _
      // Predicated region
      $region17: #{_lambda_.1} parent=11 // pred_check
        %p275 = pneg %p84
      $region18: #{_lambda_.1} parent=11 // pred_check_branch
        %277 = sbr.rel (%p275) target = $region20
      $region19: #{_lambda_.1} parent=11 // pred_region
        _
      $region20: #{_lambda_.1} parent=11 // pred_fallthru
        _
      // Predicated region
      $region21: #{_lambda_.1} parent=11 // pred_check
        %p278 = pneg %p105
      $region22: #{_lambda_.1} parent=11 // pred_check_branch
        %280 = sbr.rel (%p278) target = $region24
      $region23: #{_lambda_.1} parent=11 // pred_region
        _
      $region24: #{_lambda_.1} parent=11 // pred_fallthru
        _
      // Predicated region
      $region25: #{_lambda_.1} parent=11 // pred_check
        %p281 = pneg %p126
      $region26: #{_lambda_.1} parent=11 // pred_check_branch
        %283 = sbr.rel (%p281) target = $region28
      $region27: #{_lambda_.1} parent=11 // pred_region
        _
      $region28: #{_lambda_.1} parent=11 // pred_fallthru
        _
      // Predicated region
      $region29: #{_lambda_.1} parent=11 // pred_check
        %p284 = pneg %p147
      $region30: #{_lambda_.1} parent=11 // pred_check_branch
        %286 = sbr.rel (%p284) target = $region32
      $region31: #{_lambda_.1} parent=11 // pred_region
        _
      $region32: #{_lambda_.1} parent=11 // pred_fallthru
        _
      // Predicated region
      $region33: #{_lambda_.1} parent=11 // pred_check
        %p287 = pneg %p168
      $region34: #{_lambda_.1} parent=11 // pred_check_branch
        %289 = sbr.rel (%p287) target = $region36
      $region35: #{_lambda_.1} parent=11 // pred_region
        _
      $region36: #{_lambda_.1} parent=11 // pred_fallthru
        _
      // Predicated region
      $region37: #{_lambda_.1} parent=11 // pred_check
        %p290 = pneg %p189
      $region38: #{_lambda_.1} parent=11 // pred_check_branch
        %292 = sbr.rel (%p290) target = $region40
      $region39: #{_lambda_.1} parent=11 // pred_region
        _
      $region40: #{_lambda_.1} parent=11 // pred_fallthru
        _
      // Predicated region
      $region41: #{_lambda_.1} parent=11 // pred_check
        %p293 = pneg %p210
      $region42: #{_lambda_.1} parent=11 // pred_check_branch
        %295 = sbr.rel (%p293) target = $region44
      $region43: #{_lambda_.1} parent=11 // pred_region
        _
      $region44: #{_lambda_.1} parent=11 // pred_fallthru
        _
      // Predicated region
      $region45: #{_lambda_.1} parent=11 // pred_check
        %p296 = pneg %p231
      $region46: #{_lambda_.1} parent=11 // pred_check_branch
        %298 = sbr.rel (%p296) target = $region48
      $region47: #{_lambda_.1} parent=11 // pred_region
        _
      $region48: #{_lambda_.1} parent=11 // pred_fallthru
        _
    $region12: #{_lambda_.1} parent=5 // pred_fallthru
      _
    %p299 = scmp.lt.s32.totalorder %s16, 2
    // Predicated region
    $region49: #{_lambda_.1} parent=5 // pred_check
      %p300 = pneg %p299
    $region50: #{_lambda_.1} parent=5 // pred_check_branch
      %302 = sbr.rel (%p300) target = $region52
    $region51: #{_lambda_.1} parent=5 // pred_region
      // Predicated region
      $region53: #{_lambda_.1} parent=51 // pred_check
        %p303 = pneg %p36
      $region54: #{_lambda_.1} parent=51 // pred_check_branch
        %305 = sbr.rel (%p303) target = $region56
      $region55: #{_lambda_.1} parent=51 // pred_region
        %p306 = scmp.lt.s32.totalorder %s16, 1
        %s307 = scalar_select %p306, %s16, 1
        %s308 = smul.addr %s307, 10
        %s309 = smul.addr %s308, 4
        %s310 = scalar_lea.vmem %s0, %s309
      $region56: #{_lambda_.1} parent=51 // pred_fallthru
        _
    $region52: #{_lambda_.1} parent=5 // pred_fallthru
      _
    %p311 = scmp.le.s32.totalorder 1, %s16
    %p312 = scmp.lt.s32.totalorder %s16, 3
    %p313 = pnand %p311, %p312
    %p314 = pneg %p313
    // Predicated region
    $region57: #{_lambda_.1} parent=5 // pred_check
      _
    $region58: #{_lambda_.1} parent=5 // pred_check_branch
      %316 = sbr.rel (%p313) target = $region60
    $region59: #{_lambda_.1} parent=5 // pred_region
      %s317 = ssub.s32 %s16, 1
      %p318 = scmp.lt.s32.totalorder %s21, 1
      %s319 = scalar_select %p318, %s21, 1
      %s320 = smul.addr %s319, 10
      %s321 = smul.addr %s320, 4
      %s322 = scalar_lea.vmem %s0, %s321
      %p323 = pneg %p42
      %p324 = pneg %p39
      %p325 = pneg %p63
      %p326 = pneg %p60
      %p327 = pneg %p84
      %p328 = pneg %p81
      %p329 = pneg %p105
      %p330 = pneg %p102
      %p331 = pneg %p126
      %p332 = pneg %p123
      %p333 = pneg %p147
      %p334 = pneg %p144
      %p335 = pneg %p168
      %p336 = pneg %p165
      %p337 = pneg %p189
      %p338 = pneg %p186
      %p339 = pneg %p210
      %p340 = pneg %p207
      %p341 = pneg %p231
      %p342 = pneg %p228
      %p343 = pneg %p257
      %p344 = pneg %p254
      %p345 = scmp.lt.s32.totalorder %s21, 1
      %s346 = scalar_select %p345, %s21, 1
      %s347 = smul.addr %s346, 6
      %s348 = smul.addr %s347, 8
      %s349 = scalar_lea.vmem %s10, %s348
      %p350 = scmp.lt.s32.totalorder %s21, 1
      %s351 = scalar_select %p350, %s21, 1
      %s352 = smul.addr %s351, 10
      %s353 = smul.addr %s352, 4
      %s354 = scalar_lea.vmem %s0, %s353
      %p355 = scmp.lt.s32.totalorder %s21, 1
      %s356 = scalar_select %p355, %s21, 1
      %s357 = smul.addr %s356, 6
      %s358 = smul.addr %s357, 8
      %s359 = scalar_lea.vmem %s10, %s358
      %v361 = vld [vmem:[%s1] sm:$0x7]
      %362 = vst [vmem:[#allocation2] sm:$0xff] 0
      %363 = vst [vmem:[#allocation2 + $0x8] sm:$0xff] 0
      %364 = vst [vmem:[#allocation2 + $0x10] sm:$0xff] 0
      %365 = vst [vmem:[#allocation2 + $0x18] sm:$0xff] 0
      %366 = vst [vmem:[#allocation2 + $0x20] sm:$0xff] 0
      %367 = vst [vmem:[#allocation2 + $0x28] sm:$0xff] 0
      %368 = vst [vmem:[#allocation2 + $0x30] sm:$0xff] 0
      %369 = vst [vmem:[#allocation2 + $0x38] sm:$0xff] 0
      %370 = vst [vmem:[#allocation2 + $0x40] sm:$0xff] 0
      %371 = vst [vmem:[#allocation2 + $0x48] sm:$0xff] 0
      %372 = vst [vmem:[#allocation2 + $0x50] sm:$0xff] 0
      %373 = vst [vmem:[#allocation2 + $0x58] sm:$0xff] 0
      %374 = vst [vmem:[#allocation2 + $0x60] sm:$0xff] 0
      %375 = vst [vmem:[#allocation2 + $0x68] sm:$0xff] 0
      %376 = vst [vmem:[#allocation2 + $0x70] sm:$0xff] 0
      %v377 = vld [vmem:[%s354] sm:$0xff]
      %v378 = vld [vmem:[%s354 + $0x8] sm:$0xff]
      %v379 = vld [vmem:[%s354 + $0x14] sm:$0xff]
      %v380 = vld [vmem:[%s354 + $0x1c] sm:$0xff]
      %v381 = vld [vmem:[%s354 + $0x4] sm:$0xff]
      %v382 = vld [vmem:[%s354 + $0xc] sm:$0xf]
      %v383 = vld [vmem:[%s354 + $0x18] sm:$0xff]
      %v384 = vld [vmem:[%s354 + $0x20] sm:$0xf]
      %v385 = vld [vmem:[%s354 + $0x4] sm:$0xff]
      %v386 = vld [vmem:[%s354 + $0xc] sm:$0xff]
      %v387 = vld [vmem:[%s354 + $0x18] sm:$0xff]
      %v388 = vld [vmem:[%s354 + $0x20] sm:$0xff]
      %v393 = vunpack.c.l.b16 %v377
      %v394 = vunpack.c.h.b16 %v377
      %v395 = vunpack.c.l.b16 %v378
      %v396 = vunpack.c.h.b16 %v378
      %v397 = vunpack.c.l.b16 %v379
      %v398 = vunpack.c.h.b16 %v379
      %v399 = vunpack.c.l.b16 %v380
      %v400 = vunpack.c.h.b16 %v380
      %v401 = vpack.c.b16 %v397, %v393
      %v402 = vpack.c.b16 %v398, %v394
      %v403 = vpack.c.b16 %v399, %v395
      %v404 = vpack.c.b16 %v400, %v396
      %405 = vrot.lane.b32.xlu0 %v401, 127
      %v406 = vpop.permute.xlu0 %405
      %407 = vrot.lane.b32.xlu0 %v402, 127
      %v408 = vpop.permute.xlu0 %407
      %409 = vrot.lane.b32.xlu0 %v403, 127
      %v410 = vpop.permute.xlu0 %409
      %411 = vrot.lane.b32.xlu0 %v404, 127
      %v412 = vpop.permute.xlu0 %411
      %vm413 = vcmask 1039360
      %v414 = vsel %vm413, %v406, %v408
      %v415 = vsel %vm413, %v408, %v410
      %v416 = vsel %vm413, %v410, %v412
      %417 = vrot.lane.b32.xlu0 %v401, 126
      %v418 = vpop.permute.xlu0 %417
      %419 = vrot.lane.b32.xlu0 %v402, 126
      %v420 = vpop.permute.xlu0 %419
      %421 = vrot.lane.b32.xlu0 %v403, 126
      %v422 = vpop.permute.xlu0 %421
      %423 = vrot.lane.b32.xlu0 %v404, 126
      %v424 = vpop.permute.xlu0 %423
      %vm425 = vcmask 1031168
      %v426 = vsel %vm425, %v418, %v420
      %v427 = vsel %vm425, %v420, %v422
      %v428 = vsel %vm425, %v422, %v424
      %429 = vrot.lane.b32.xlu0 %v401, 110
      %v430 = vpop.permute.xlu0 %429
      %431 = vrot.lane.b32.xlu0 %v402, 110
      %v432 = vpop.permute.xlu0 %431
      %433 = vrot.lane.b32.xlu0 %v403, 110
      %v434 = vpop.permute.xlu0 %433
      %435 = vrot.lane.b32.xlu0 %v404, 110
      %v436 = vpop.permute.xlu0 %435
      %vm437 = vcmask 900096
      %v438 = vsel %vm437, %v430, %v432
      %v439 = vsel %vm437, %v432, %v434
      %v440 = vsel %vm437, %v434, %v436
      %v445 = vunpack.c.l.b16 %v381
      %v446 = vunpack.c.h.b16 %v381
      %v447 = vunpack.c.l.b16 %v382
      %v448 = vunpack.c.l.b16 %v383
      %v449 = vunpack.c.h.b16 %v383
      %v450 = vunpack.c.l.b16 %v384
      %v451 = vpack.c.b16 %v448, %v445
      %v452 = vpack.c.b16 %v449, %v446
      %v453 = vpack.c.b16 %v450, %v447
      %454 = vrot.lane.b32.xlu0 %v451, 109
      %v455 = vpop.permute.xlu0 %454
      %456 = vrot.lane.b32.xlu0 %v452, 109
      %v457 = vpop.permute.xlu0 %456
      %458 = vrot.lane.b32.xlu0 %v453, 109
      %v459 = vpop.permute.xlu0 %458
      %vm460 = vcmask 891904
      %v461 = vsel %vm460, %v455, %v457
      %v462 = vsel %vm460, %v457, %v459
      %v467 = vunpack.c.l.b16 %v385
      %v468 = vunpack.c.h.b16 %v385
      %v469 = vunpack.c.l.b16 %v386
      %v470 = vunpack.c.h.b16 %v386
      %v471 = vunpack.c.l.b16 %v387
      %v472 = vunpack.c.h.b16 %v387
      %v473 = vunpack.c.l.b16 %v388
      %v474 = vunpack.c.h.b16 %v388
      %v475 = vpack.c.b16 %v471, %v467
      %v476 = vpack.c.b16 %v472, %v468
      %v477 = vpack.c.b16 %v473, %v469
      %v478 = vpack.c.b16 %v474, %v470
      %479 = vrot.lane.b32.xlu0 %v475, 108
      %v480 = vpop.permute.xlu0 %479
      %481 = vrot.lane.b32.xlu0 %v476, 108
      %v482 = vpop.permute.xlu0 %481
      %483 = vrot.lane.b32.xlu0 %v477, 108
      %v484 = vpop.permute.xlu0 %483
      %485 = vrot.lane.b32.xlu0 %v478, 108
      %v486 = vpop.permute.xlu0 %485
      %vm487 = vcmask 883712
      %v488 = vsel %vm487, %v480, %v482
      %v489 = vsel %vm487, %v482, %v484
      %v490 = vsel %vm487, %v484, %v486
      %491 = vrot.lane.b32.xlu0 %v475, 92
      %v492 = vpop.permute.xlu0 %491
      %493 = vrot.lane.b32.xlu0 %v476, 92
      %v494 = vpop.permute.xlu0 %493
      %495 = vrot.lane.b32.xlu0 %v477, 92
      %v496 = vpop.permute.xlu0 %495
      %497 = vrot.lane.b32.xlu0 %v478, 92
      %v498 = vpop.permute.xlu0 %497
      %vm499 = vcmask 752640
      %v500 = vsel %vm499, %v492, %v494
      %v501 = vsel %vm499, %v494, %v496
      %v502 = vsel %vm499, %v496, %v498
      %503 = vrot.lane.b32.xlu0 %v475, 91
      %v504 = vpop.permute.xlu0 %503
      %505 = vrot.lane.b32.xlu0 %v476, 91
      %v506 = vpop.permute.xlu0 %505
      %507 = vrot.lane.b32.xlu0 %v477, 91
      %v508 = vpop.permute.xlu0 %507
      %509 = vrot.lane.b32.xlu0 %v478, 91
      %v510 = vpop.permute.xlu0 %509
      %vm511 = vcmask 744448
      %v512 = vsel %vm511, %v504, %v506
      %v513 = vsel %vm511, %v506, %v508
      %v514 = vsel %vm511, %v508, %v510
      %515 = vrot.lane.b32.xlu0 %v475, 90
      %v516 = vpop.permute.xlu0 %515
      %517 = vrot.lane.b32.xlu0 %v476, 90
      %v518 = vpop.permute.xlu0 %517
      %519 = vrot.lane.b32.xlu0 %v477, 90
      %v520 = vpop.permute.xlu0 %519
      %521 = vrot.lane.b32.xlu0 %v478, 90
      %v522 = vpop.permute.xlu0 %521
      %vm523 = vcmask 736256
      %v524 = vsel %vm523, %v516, %v518
      %v525 = vsel %vm523, %v518, %v520
      %v526 = vsel %vm523, %v520, %v522
      %v527 = vld [vmem:[%s2] sm:$0xff]
      %v528 = vld [vmem:[%s2 + $0x8] sm:$0xff]
      %v529 = vld [vmem:[%s3] sm:$0xff]
      %v530 = vld [vmem:[%s3 + $0x8] sm:$0xff]
      %532 = vset.pattern.permute.xlu0 0
      %533 = vperm.xlu0 %532, %v529
      %v534 = vpop.permute.xlu0 %533
      %537 = vset.pattern.permute.xlu0 0
      %538 = vperm.xlu0 %537, %v530
      %v539 = vpop.permute.xlu0 %538
      %v543 = vunpack.c.l.b16 %v527
      %v544 = vunpack.c.h.b16 %v527
      %v545 = vunpack.c.l.b16 %v528
      %v546 = vunpack.c.h.b16 %v528
      %v547 = vpack.c.b16 %v545, %v543
      %v548 = vpack.c.b16 %v546, %v544
      %550 = vrot.lane.b32.xlu0 %v401, 19
      %v551 = vpop.permute.xlu0 %550
      %552 = vrot.lane.b32.xlu0 %v402, 19
      %v553 = vpop.permute.xlu0 %552
      %554 = vrot.lane.b32.xlu0 %v403, 19
      %v555 = vpop.permute.xlu0 %554
      %556 = vrot.lane.b32.xlu0 %v404, 19
      %v557 = vpop.permute.xlu0 %556
      %558 = vrot.lane.b32.xlu0 %v414, 19
      %v559 = vpop.permute.xlu0 %558
      %560 = vrot.lane.b32.xlu0 %v415, 19
      %v561 = vpop.permute.xlu0 %560
      %562 = vrot.lane.b32.xlu0 %v416, 19
      %v563 = vpop.permute.xlu0 %562
      %564 = vrot.lane.b32.xlu0 %v412, 19
      %v565 = vpop.permute.xlu0 %564
      %566 = vrot.lane.b32.xlu0 %v426, 19
      %v567 = vpop.permute.xlu0 %566
      %568 = vrot.lane.b32.xlu0 %v427, 19
      %v569 = vpop.permute.xlu0 %568
      %570 = vrot.lane.b32.xlu0 %v428, 19
      %v571 = vpop.permute.xlu0 %570
      %572 = vrot.lane.b32.xlu0 %v424, 19
      %v573 = vpop.permute.xlu0 %572
      %574 = vrot.lane.b32.xlu0 %v438, 19
      %v575 = vpop.permute.xlu0 %574
      %576 = vrot.lane.b32.xlu0 %v439, 19
      %v577 = vpop.permute.xlu0 %576
      %578 = vrot.lane.b32.xlu0 %v440, 19
      %v579 = vpop.permute.xlu0 %578
      %580 = vrot.lane.b32.xlu0 %v436, 19
      %v581 = vpop.permute.xlu0 %580
      %582 = vrot.lane.b32.xlu0 %v455, 19
      %v583 = vpop.permute.xlu0 %582
      %584 = vrot.lane.b32.xlu0 %v461, 19
      %v585 = vpop.permute.xlu0 %584
      %586 = vrot.lane.b32.xlu0 %v462, 19
      %v587 = vpop.permute.xlu0 %586
      %588 = vrot.lane.b32.xlu0 %v459, 19
      %v589 = vpop.permute.xlu0 %588
      %590 = vrot.lane.b32.xlu0 %v480, 19
      %v591 = vpop.permute.xlu0 %590
      %592 = vrot.lane.b32.xlu0 %v488, 19
      %v593 = vpop.permute.xlu0 %592
      %594 = vrot.lane.b32.xlu0 %v489, 19
      %v595 = vpop.permute.xlu0 %594
      %596 = vrot.lane.b32.xlu0 %v490, 19
      %v597 = vpop.permute.xlu0 %596
      %598 = vrot.lane.b32.xlu0 %v492, 19
      %v599 = vpop.permute.xlu0 %598
      %600 = vrot.lane.b32.xlu0 %v500, 19
      %v601 = vpop.permute.xlu0 %600
      %602 = vrot.lane.b32.xlu0 %v501, 19
      %v603 = vpop.permute.xlu0 %602
      %604 = vrot.lane.b32.xlu0 %v502, 19
      %v605 = vpop.permute.xlu0 %604
      %606 = vrot.lane.b32.xlu0 %v504, 19
      %v607 = vpop.permute.xlu0 %606
      %608 = vrot.lane.b32.xlu0 %v512, 19
      %v609 = vpop.permute.xlu0 %608
      %610 = vrot.lane.b32.xlu0 %v513, 19
      %v611 = vpop.permute.xlu0 %610
      %612 = vrot.lane.b32.xlu0 %v514, 19
      %v613 = vpop.permute.xlu0 %612
      %614 = vrot.lane.b32.xlu0 %v516, 19
      %v615 = vpop.permute.xlu0 %614
      %616 = vrot.lane.b32.xlu0 %v524, 19
      %v617 = vpop.permute.xlu0 %616
      %618 = vrot.lane.b32.xlu0 %v525, 19
      %v619 = vpop.permute.xlu0 %618
      %620 = vrot.lane.b32.xlu0 %v526, 19
      %v621 = vpop.permute.xlu0 %620
      %vm622 = vcmask 154624
      %v623 = vsel %vm622, %v551, %v553
      %v624 = vsel %vm622, %v553, %v555
      %v625 = vsel %vm622, %v555, %v557
      %v626 = vsel %vm622, %v559, %v561
      %v627 = vsel %vm622, %v561, %v563
      %v628 = vsel %vm622, %v563, %v565
      %v629 = vsel %vm622, %v567, %v569
      %v630 = vsel %vm622, %v569, %v571
      %v631 = vsel %vm622, %v571, %v573
      %v632 = vsel %vm622, %v575, %v577
      %v633 = vsel %vm622, %v577, %v579
      %v634 = vsel %vm622, %v579, %v581
      %v635 = vsel %vm622, %v583, %v585
      %v636 = vsel %vm622, %v585, %v587
      %v637 = vsel %vm622, %v587, %v589
      %v638 = vsel %vm622, %v591, %v593
      %v639 = vsel %vm622, %v593, %v595
      %v640 = vsel %vm622, %v595, %v597
      %v641 = vsel %vm622, %v599, %v601
      %v642 = vsel %vm622, %v601, %v603
      %v643 = vsel %vm622, %v603, %v605
      %v644 = vsel %vm622, %v607, %v609
      %v645 = vsel %vm622, %v609, %v611
      %v646 = vsel %vm622, %v611, %v613
      %v647 = vsel %vm622, %v615, %v617
      %v648 = vsel %vm622, %v617, %v619
      %v649 = vsel %vm622, %v619, %v621
      %vm677 = vcmask 130048
      %v679 = vsel %vm677, %v548, 0
      %681 = vmatprep.subr.bf16.mxu0 %v624
      %682 = vmatpush1.bf16.msra.mxu0 %v623
      %683 = vmatprep.subr.bf16.mxu0 %v627
      %684 = vmatpush1.bf16.msra.mxu0 %v626
      %685 = vmatprep.subr.bf16.mxu0 %v630
      %686 = vmatpush1.bf16.msra.mxu0 %v629
      %687 = vmatprep.subr.bf16.mxu0 %v633
      %688 = vmatpush1.bf16.msra.mxu0 %v632
      %689 = vmatprep.subr.bf16.mxu0 %v636
      %690 = vmatpush1.bf16.msra.mxu0 %v635
      %691 = vmatprep.subr.bf16.mxu0 %v639
      %692 = vmatpush1.bf16.msra.mxu0 %v638
      %693 = vmatprep.subr.bf16.mxu0 %v642
      %694 = vmatpush1.bf16.msra.mxu0 %v641
      %695 = vmatprep.subr.bf16.mxu0 %v645
      %696 = vmatpush1.bf16.msra.mxu0 %v644
      %697 = vmatprep.subr.bf16.mxu0 %v648
      %698 = vmatpush1.bf16.msra.mxu0 %v647
      %699 = vmatprep.subr.bf16.mxu0 0
      %700 = vmatpush1.bf16.msra.mxu0 0
      %701 = vmatprep.subr.bf16.mxu0 0
      %702 = vmatpush1.bf16.msra.mxu0 0
      %703 = vmatprep.subr.bf16.mxu0 0
      %704 = vmatpush1.bf16.msra.mxu0 0
      %705 = vmatprep.subr.bf16.mxu0 0
      %706 = vmatpush1.bf16.msra.mxu0 0
      %707 = vmatprep.subr.bf16.mxu0 0
      %708 = vmatpush1.bf16.msra.mxu0 0
      %709 = vmatprep.subr.bf16.mxu0 0
      %710 = vmatpush1.bf16.msra.mxu0 0
      %711 = vmatprep.subr.bf16.mxu0 0
      %712 = vmatpush1.bf16.msra.mxu0 0
      %713 = vmatprep.mubr.bf16.mxu0 %v679
      %714 = vmatmul.mubr.bf16.gmra.mrb[0].mxu0 %v547
      %v715 = vpop.f32.mrb[0].mxu0
      %v716 = vadd.f32 %v534, %v715
      %v717 = vpop.f32.mrb[0].mxu0
      %v718 = vadd.f32 %v534, %v717
      %v719 = vpop.f32.mrb[0].mxu0
      %v720 = vadd.f32 %v539, %v719
      %v721 = vpop.f32.mrb[0].mxu0
      %v722 = vadd.f32 %v539, %v721
      %723 = vdwg.mxu0
      %724 = vmatprep.subr.bf16.mxu0 0
      %725 = vmatpush1.bf16.msra.mxu0 %v625
      %726 = vmatprep.subr.bf16.mxu0 0
      %727 = vmatpush1.bf16.msra.mxu0 %v628
      %728 = vmatprep.subr.bf16.mxu0 0
      %729 = vmatpush1.bf16.msra.mxu0 %v631
      %730 = vmatprep.subr.bf16.mxu0 0
      %731 = vmatpush1.bf16.msra.mxu0 %v634
      %732 = vmatprep.subr.bf16.mxu0 0
      %733 = vmatpush1.bf16.msra.mxu0 %v637
      %734 = vmatprep.subr.bf16.mxu0 0
      %735 = vmatpush1.bf16.msra.mxu0 %v640
      %736 = vmatprep.subr.bf16.mxu0 0
      %737 = vmatpush1.bf16.msra.mxu0 %v643
      %738 = vmatprep.subr.bf16.mxu0 0
      %739 = vmatpush1.bf16.msra.mxu0 %v646
      %740 = vmatprep.subr.bf16.mxu0 0
      %741 = vmatpush1.bf16.msra.mxu0 %v649
      %742 = vmatprep.subr.bf16.mxu0 0
      %743 = vmatpush1.bf16.msra.mxu0 0
      %744 = vmatprep.subr.bf16.mxu0 0
      %745 = vmatpush1.bf16.msra.mxu0 0
      %746 = vmatprep.subr.bf16.mxu0 0
      %747 = vmatpush1.bf16.msra.mxu0 0
      %748 = vmatprep.subr.bf16.mxu0 0
      %749 = vmatpush1.bf16.msra.mxu0 0
      %750 = vmatprep.subr.bf16.mxu0 0
      %751 = vmatpush1.bf16.msra.mxu0 0
      %752 = vmatprep.subr.bf16.mxu0 0
      %753 = vmatpush1.bf16.msra.mxu0 0
      %754 = vmatprep.subr.bf16.mxu0 0
      %755 = vmatpush1.bf16.msra.mxu0 0
      %756 = vmatprep.mubr.bf16.mxu0 %v679
      %757 = vmatmul.mubr.bf16.gmra.mrb[0].mxu0 %v547
      %v758 = vpop.f32.mrb[0].mxu0
      %v759 = vadd.f32 %v534, %v758
      %v760 = vpop.f32.mrb[0].mxu0
      %v761 = vpop.f32.mrb[0].mxu0
      %v762 = vadd.f32 %v539, %v761
      %v763 = vpop.f32.mrb[0].mxu0
      %764 = vdwg.mxu0
      %v765 = vmax.f32 %v716, 0.0
      %v766 = vmax.f32 %v718, 0.0
      %v767 = vmax.f32 %v759, 0.0
      %v768 = vmax.f32 %v720, 0.0
      %v769 = vmax.f32 %v722, 0.0
      %v770 = vmax.f32 %v762, 0.0
      %v772 = vlaneseq
      %v773 = vshrl.u32 %v772, 7
      %v774 = vsub.s32 0, %v773
      %v775 = vrot.slane %v361, %v774
      %v776 = vlaneseq
      %v777 = vshrl.u32 %v776, 7
      %v778 = vsub.s32 1, %v777
      %v779 = vrot.slane %v361, %v778
      %v780 = vlaneseq
      %v781 = vshrl.u32 %v780, 7
      %v782 = vsub.s32 2, %v781
      %v783 = vrot.slane %v361, %v782
      %v787 = vmul.f32 %v765, %v775
      %v788 = vmul.f32 %v766, %v779
      %v789 = vmul.f32 %v767, %v783
      %v790 = vmul.f32 %v768, %v775
      %v791 = vmul.f32 %v769, %v779
      %v792 = vmul.f32 %v770, %v783
      %v793 = vpack.c.bf16 %v790, %v787
      %v794 = vpack.c.bf16 %v791, %v788
      %v795 = vpack.c.bf16 %v792, %v789
      %796 = vst [vmem:[#allocation2 + $0x8] sm:$0xff] %v793
      %797 = vst [vmem:[#allocation2 + $0x10] sm:$0xff] %v794
      %798 = vst [vmem:[#allocation2 + $0x18] sm:$0xff] %v795
      %v799 = vld [vmem:[#allocation2] sm:$0xff]
      %v800 = vld [vmem:[#allocation2 + $0x8] sm:$0xff]
      %v801 = vld [vmem:[#allocation2 + $0x10] sm:$0xff]
      %v802 = vld [vmem:[#allocation2 + $0x18] sm:$0xff]
      %v803 = vld [vmem:[#allocation2 + $0x20] sm:$0xff]
      %808 = vrot.lane.b32.xlu0 %v799, 127
      %v809 = vpop.permute.xlu0 %808
      %810 = vrot.lane.b32.xlu0 %v800, 127
      %v811 = vpop.permute.xlu0 %810
      %812 = vrot.lane.b32.xlu0 %v801, 127
      %v813 = vpop.permute.xlu0 %812
      %814 = vrot.lane.b32.xlu0 %v802, 127
      %v815 = vpop.permute.xlu0 %814
      %v816 = vsel %vm413, %v809, %v811
      %v817 = vsel %vm413, %v811, %v813
      %v818 = vsel %vm413, %v813, %v815
      %819 = vrot.lane.b32.xlu0 %v799, 126
      %v820 = vpop.permute.xlu0 %819
      %821 = vrot.lane.b32.xlu0 %v800, 126
      %v822 = vpop.permute.xlu0 %821
      %823 = vrot.lane.b32.xlu0 %v801, 126
      %v824 = vpop.permute.xlu0 %823
      %825 = vrot.lane.b32.xlu0 %v802, 126
      %v826 = vpop.permute.xlu0 %825
      %v827 = vsel %vm425, %v820, %v822
      %v828 = vsel %vm425, %v822, %v824
      %v829 = vsel %vm425, %v824, %v826
      %830 = vrot.lane.b32.xlu0 %v799, 110
      %v831 = vpop.permute.xlu0 %830
      %832 = vrot.lane.b32.xlu0 %v800, 110
      %v833 = vpop.permute.xlu0 %832
      %834 = vrot.lane.b32.xlu0 %v801, 110
      %v835 = vpop.permute.xlu0 %834
      %836 = vrot.lane.b32.xlu0 %v802, 110
      %v837 = vpop.permute.xlu0 %836
      %v838 = vsel %vm437, %v831, %v833
      %v839 = vsel %vm437, %v833, %v835
      %v840 = vsel %vm437, %v835, %v837
      %841 = vrot.lane.b32.xlu0 %v800, 109
      %v842 = vpop.permute.xlu0 %841
      %843 = vrot.lane.b32.xlu0 %v801, 109
      %v844 = vpop.permute.xlu0 %843
      %845 = vrot.lane.b32.xlu0 %v802, 109
      %v846 = vpop.permute.xlu0 %845
      %v847 = vsel %vm460, %v842, %v844
      %v848 = vsel %vm460, %v844, %v846
      %850 = vrot.lane.b32.xlu0 %v800, 108
      %v851 = vpop.permute.xlu0 %850
      %852 = vrot.lane.b32.xlu0 %v801, 108
      %v853 = vpop.permute.xlu0 %852
      %854 = vrot.lane.b32.xlu0 %v802, 108
      %v855 = vpop.permute.xlu0 %854
      %856 = vrot.lane.b32.xlu0 %v803, 108
      %v857 = vpop.permute.xlu0 %856
      %v858 = vsel %vm487, %v851, %v853
      %v859 = vsel %vm487, %v853, %v855
      %v860 = vsel %vm487, %v855, %v857
      %861 = vrot.lane.b32.xlu0 %v800, 92
      %v862 = vpop.permute.xlu0 %861
      %863 = vrot.lane.b32.xlu0 %v801, 92
      %v864 = vpop.permute.xlu0 %863
      %865 = vrot.lane.b32.xlu0 %v802, 92
      %v866 = vpop.permute.xlu0 %865
      %867 = vrot.lane.b32.xlu0 %v803, 92
      %v868 = vpop.permute.xlu0 %867
      %v869 = vsel %vm499, %v862, %v864
      %v870 = vsel %vm499, %v864, %v866
      %v871 = vsel %vm499, %v866, %v868
      %872 = vrot.lane.b32.xlu0 %v800, 91
      %v873 = vpop.permute.xlu0 %872
      %874 = vrot.lane.b32.xlu0 %v801, 91
      %v875 = vpop.permute.xlu0 %874
      %876 = vrot.lane.b32.xlu0 %v802, 91
      %v877 = vpop.permute.xlu0 %876
      %878 = vrot.lane.b32.xlu0 %v803, 91
      %v879 = vpop.permute.xlu0 %878
      %v880 = vsel %vm511, %v873, %v875
      %v881 = vsel %vm511, %v875, %v877
      %v882 = vsel %vm511, %v877, %v879
      %883 = vrot.lane.b32.xlu0 %v800, 90
      %v884 = vpop.permute.xlu0 %883
      %885 = vrot.lane.b32.xlu0 %v801, 90
      %v886 = vpop.permute.xlu0 %885
      %887 = vrot.lane.b32.xlu0 %v802, 90
      %v888 = vpop.permute.xlu0 %887
      %889 = vrot.lane.b32.xlu0 %v803, 90
      %v890 = vpop.permute.xlu0 %889
      %v891 = vsel %vm523, %v884, %v886
      %v892 = vsel %vm523, %v886, %v888
      %v893 = vsel %vm523, %v888, %v890
      %v894 = vld [vmem:[%s4] sm:$0xff]
      %v895 = vld [vmem:[%s4 + $0x8] sm:$0xff]
      %v896 = vld [vmem:[%s4 + $0x10] sm:$0xff]
      %v897 = vld [vmem:[%s4 + $0x18] sm:$0xff]
      %v898 = vld [vmem:[%s5] sm:$0xff]
      %v899 = vld [vmem:[%s5 + $0x8] sm:$0xff]
      %v900 = vld [vmem:[%s5 + $0x10] sm:$0xff]
      %v901 = vld [vmem:[%s5 + $0x18] sm:$0xff]
      %903 = vset.pattern.permute.xlu0 0
      %904 = vperm.xlu0 %903, %v898
      %v905 = vpop.permute.xlu0 %904
      %908 = vset.pattern.permute.xlu0 0
      %909 = vperm.xlu0 %908, %v899
      %v910 = vpop.permute.xlu0 %909
      %913 = vset.pattern.permute.xlu0 0
      %914 = vperm.xlu0 %913, %v900
      %v915 = vpop.permute.xlu0 %914
      %918 = vset.pattern.permute.xlu0 0
      %919 = vperm.xlu0 %918, %v901
      %v920 = vpop.permute.xlu0 %919
      %v926 = vunpack.c.l.b16 %v894
      %v927 = vunpack.c.h.b16 %v894
      %v928 = vunpack.c.l.b16 %v895
      %v929 = vunpack.c.h.b16 %v895
      %v930 = vunpack.c.l.b16 %v896
      %v931 = vunpack.c.h.b16 %v896
      %v932 = vunpack.c.l.b16 %v897
      %v933 = vunpack.c.h.b16 %v897
      %v934 = vpack.c.b16 %v928, %v926
      %v935 = vpack.c.b16 %v929, %v927
      %v936 = vpack.c.b16 %v932, %v930
      %v937 = vpack.c.b16 %v933, %v931
      %940 = vrot.lane.b32.xlu0 %v799, 19
      %v941 = vpop.permute.xlu0 %940
      %942 = vrot.lane.b32.xlu0 %v800, 19
      %v943 = vpop.permute.xlu0 %942
      %944 = vrot.lane.b32.xlu0 %v801, 19
      %v945 = vpop.permute.xlu0 %944
      %946 = vrot.lane.b32.xlu0 %v802, 19
      %v947 = vpop.permute.xlu0 %946
      %948 = vrot.lane.b32.xlu0 %v816, 19
      %v949 = vpop.permute.xlu0 %948
      %950 = vrot.lane.b32.xlu0 %v817, 19
      %v951 = vpop.permute.xlu0 %950
      %952 = vrot.lane.b32.xlu0 %v818, 19
      %v953 = vpop.permute.xlu0 %952
      %954 = vrot.lane.b32.xlu0 %v815, 19
      %v955 = vpop.permute.xlu0 %954
      %956 = vrot.lane.b32.xlu0 %v827, 19
      %v957 = vpop.permute.xlu0 %956
      %958 = vrot.lane.b32.xlu0 %v828, 19
      %v959 = vpop.permute.xlu0 %958
      %960 = vrot.lane.b32.xlu0 %v829, 19
      %v961 = vpop.permute.xlu0 %960
      %962 = vrot.lane.b32.xlu0 %v826, 19
      %v963 = vpop.permute.xlu0 %962
      %964 = vrot.lane.b32.xlu0 %v838, 19
      %v965 = vpop.permute.xlu0 %964
      %966 = vrot.lane.b32.xlu0 %v839, 19
      %v967 = vpop.permute.xlu0 %966
      %968 = vrot.lane.b32.xlu0 %v840, 19
      %v969 = vpop.permute.xlu0 %968
      %970 = vrot.lane.b32.xlu0 %v837, 19
      %v971 = vpop.permute.xlu0 %970
      %972 = vrot.lane.b32.xlu0 %v842, 19
      %v973 = vpop.permute.xlu0 %972
      %974 = vrot.lane.b32.xlu0 %v847, 19
      %v975 = vpop.permute.xlu0 %974
      %976 = vrot.lane.b32.xlu0 %v848, 19
      %v977 = vpop.permute.xlu0 %976
      %978 = vrot.lane.b32.xlu0 %v846, 19
      %v979 = vpop.permute.xlu0 %978
      %980 = vrot.lane.b32.xlu0 %v851, 19
      %v981 = vpop.permute.xlu0 %980
      %982 = vrot.lane.b32.xlu0 %v858, 19
      %v983 = vpop.permute.xlu0 %982
      %984 = vrot.lane.b32.xlu0 %v859, 19
      %v985 = vpop.permute.xlu0 %984
      %986 = vrot.lane.b32.xlu0 %v860, 19
      %v987 = vpop.permute.xlu0 %986
      %988 = vrot.lane.b32.xlu0 %v862, 19
      %v989 = vpop.permute.xlu0 %988
      %990 = vrot.lane.b32.xlu0 %v869, 19
      %v991 = vpop.permute.xlu0 %990
      %992 = vrot.lane.b32.xlu0 %v870, 19
      %v993 = vpop.permute.xlu0 %992
      %994 = vrot.lane.b32.xlu0 %v871, 19
      %v995 = vpop.permute.xlu0 %994
      %996 = vrot.lane.b32.xlu0 %v873, 19
      %v997 = vpop.permute.xlu0 %996
      %998 = vrot.lane.b32.xlu0 %v880, 19
      %v999 = vpop.permute.xlu0 %998
      %1000 = vrot.lane.b32.xlu0 %v881, 19
      %v1001 = vpop.permute.xlu0 %1000
      %1002 = vrot.lane.b32.xlu0 %v882, 19
      %v1003 = vpop.permute.xlu0 %1002
      %1004 = vrot.lane.b32.xlu0 %v884, 19
      %v1005 = vpop.permute.xlu0 %1004
      %1006 = vrot.lane.b32.xlu0 %v891, 19
      %v1007 = vpop.permute.xlu0 %1006
      %1008 = vrot.lane.b32.xlu0 %v892, 19
      %v1009 = vpop.permute.xlu0 %1008
      %1010 = vrot.lane.b32.xlu0 %v893, 19
      %v1011 = vpop.permute.xlu0 %1010
      %v1012 = vsel %vm622, %v941, %v943
      %v1013 = vsel %vm622, %v943, %v945
      %v1014 = vsel %vm622, %v945, %v947
      %v1015 = vsel %vm622, %v949, %v951
      %v1016 = vsel %vm622, %v951, %v953
      %v1017 = vsel %vm622, %v953, %v955
      %v1018 = vsel %vm622, %v957, %v959
      %v1019 = vsel %vm622, %v959, %v961
      %v1020 = vsel %vm622, %v961, %v963
      %v1021 = vsel %vm622, %v965, %v967
      %v1022 = vsel %vm622, %v967, %v969
      %v1023 = vsel %vm622, %v969, %v971
      %v1024 = vsel %vm622, %v973, %v975
      %v1025 = vsel %vm622, %v975, %v977
      %v1026 = vsel %vm622, %v977, %v979
      %v1027 = vsel %vm622, %v981, %v983
      %v1028 = vsel %vm622, %v983, %v985
      %v1029 = vsel %vm622, %v985, %v987
      %v1030 = vsel %vm622, %v989, %v991
      %v1031 = vsel %vm622, %v991, %v993
      %v1032 = vsel %vm622, %v993, %v995
      %v1033 = vsel %vm622, %v997, %v999
      %v1034 = vsel %vm622, %v999, %v1001
      %v1035 = vsel %vm622, %v1001, %v1003
      %v1036 = vsel %vm622, %v1005, %v1007
      %v1037 = vsel %vm622, %v1007, %v1009
      %v1038 = vsel %vm622, %v1009, %v1011
      %v1067 = vsel %vm677, %v935, 0
      %v1070 = vsel %vm677, %v937, 0
      %1072 = vmatprep.subr.bf16.mxu0 %v1013
      %1073 = vmatpush1.bf16.msra.mxu0 %v1012
      %1074 = vmatprep.subr.bf16.mxu0 %v1016
      %1075 = vmatpush1.bf16.msra.mxu0 %v1015
      %1076 = vmatprep.subr.bf16.mxu0 %v1019
      %1077 = vmatpush1.bf16.msra.mxu0 %v1018
      %1078 = vmatprep.subr.bf16.mxu0 %v1022
      %1079 = vmatpush1.bf16.msra.mxu0 %v1021
      %1080 = vmatprep.subr.bf16.mxu0 %v1025
      %1081 = vmatpush1.bf16.msra.mxu0 %v1024
      %1082 = vmatprep.subr.bf16.mxu0 %v1028
      %1083 = vmatpush1.bf16.msra.mxu0 %v1027
      %1084 = vmatprep.subr.bf16.mxu0 %v1031
      %1085 = vmatpush1.bf16.msra.mxu0 %v1030
      %1086 = vmatprep.subr.bf16.mxu0 %v1034
      %1087 = vmatpush1.bf16.msra.mxu0 %v1033
      %1088 = vmatprep.subr.bf16.mxu0 %v1037
      %1089 = vmatpush1.bf16.msra.mxu0 %v1036
      %1090 = vmatprep.subr.bf16.mxu0 0
      %1091 = vmatpush1.bf16.msra.mxu0 0
      %1092 = vmatprep.subr.bf16.mxu0 0
      %1093 = vmatpush1.bf16.msra.mxu0 0
      %1094 = vmatprep.subr.bf16.mxu0 0
      %1095 = vmatpush1.bf16.msra.mxu0 0
      %1096 = vmatprep.subr.bf16.mxu0 0
      %1097 = vmatpush1.bf16.msra.mxu0 0
      %1098 = vmatprep.subr.bf16.mxu0 0
      %1099 = vmatpush1.bf16.msra.mxu0 0
      %1100 = vmatprep.subr.bf16.mxu0 0
      %1101 = vmatpush1.bf16.msra.mxu0 0
      %1102 = vmatprep.subr.bf16.mxu0 0
      %1103 = vmatpush1.bf16.msra.mxu0 0
      %1104 = vmatprep.mubr.bf16.mxu0 %v1067
      %1105 = vmatmul.mubr.bf16.gmra.mrb[0].mxu0 %v934
      %v1106 = vpop.f32.mrb[0].mxu0
      %v1107 = vadd.f32 %v905, %v1106
      %v1108 = vpop.f32.mrb[0].mxu0
      %v1109 = vadd.f32 %v905, %v1108
      %v1110 = vpop.f32.mrb[0].mxu0
      %v1111 = vadd.f32 %v910, %v1110
      %v1112 = vpop.f32.mrb[0].mxu0
      %v1113 = vadd.f32 %v910, %v1112
      %1114 = vmatprep.mubr.bf16.mxu0 %v1070
      %1115 = vmatmul.mubr.bf16.gmra.mrb[0].mxu0 %v936
      %v1116 = vpop.f32.mrb[0].mxu0
      %v1117 = vadd.f32 %v915, %v1116
      %v1118 = vpop.f32.mrb[0].mxu0
      %v1119 = vadd.f32 %v915, %v1118
      %v1120 = vpop.f32.mrb[0].mxu0
      %v1121 = vadd.f32 %v920, %v1120
      %v1122 = vpop.f32.mrb[0].mxu0
      %v1123 = vadd.f32 %v920, %v1122
      %1124 = vdwg.mxu0
      %1125 = vmatprep.subr.bf16.mxu0 0
      %1126 = vmatpush1.bf16.msra.mxu0 %v1014
      %1127 = vmatprep.subr.bf16.mxu0 0
      %1128 = vmatpush1.bf16.msra.mxu0 %v1017
      %1129 = vmatprep.subr.bf16.mxu0 0
      %1130 = vmatpush1.bf16.msra.mxu0 %v1020
      %1131 = vmatprep.subr.bf16.mxu0 0
      %1132 = vmatpush1.bf16.msra.mxu0 %v1023
      %1133 = vmatprep.subr.bf16.mxu0 0
      %1134 = vmatpush1.bf16.msra.mxu0 %v1026
      %1135 = vmatprep.subr.bf16.mxu0 0
      %1136 = vmatpush1.bf16.msra.mxu0 %v1029
      %1137 = vmatprep.subr.bf16.mxu0 0
      %1138 = vmatpush1.bf16.msra.mxu0 %v1032
      %1139 = vmatprep.subr.bf16.mxu0 0
      %1140 = vmatpush1.bf16.msra.mxu0 %v1035
      %1141 = vmatprep.subr.bf16.mxu0 0
      %1142 = vmatpush1.bf16.msra.mxu0 %v1038
      %1143 = vmatprep.subr.bf16.mxu0 0
      %1144 = vmatpush1.bf16.msra.mxu0 0
      %1145 = vmatprep.subr.bf16.mxu0 0
      %1146 = vmatpush1.bf16.msra.mxu0 0
      %1147 = vmatprep.subr.bf16.mxu0 0
      %1148 = vmatpush1.bf16.msra.mxu0 0
      %1149 = vmatprep.subr.bf16.mxu0 0
      %1150 = vmatpush1.bf16.msra.mxu0 0
      %1151 = vmatprep.subr.bf16.mxu0 0
      %1152 = vmatpush1.bf16.msra.mxu0 0
      %1153 = vmatprep.subr.bf16.mxu0 0
      %1154 = vmatpush1.bf16.msra.mxu0 0
      %1155 = vmatprep.subr.bf16.mxu0 0
      %1156 = vmatpush1.bf16.msra.mxu0 0
      %1157 = vmatprep.mubr.bf16.mxu0 %v1067
      %1158 = vmatmul.mubr.bf16.gmra.mrb[0].mxu0 %v934
      %v1159 = vpop.f32.mrb[0].mxu0
      %v1160 = vadd.f32 %v905, %v1159
      %v1161 = vpop.f32.mrb[0].mxu0
      %v1162 = vpop.f32.mrb[0].mxu0
      %v1163 = vadd.f32 %v910, %v1162
      %v1164 = vpop.f32.mrb[0].mxu0
      %1165 = vmatprep.mubr.bf16.mxu0 %v1070
      %1166 = vmatmul.mubr.bf16.gmra.mrb[0].mxu0 %v936
      %v1167 = vpop.f32.mrb[0].mxu0
      %v1168 = vadd.f32 %v915, %v1167
      %v1169 = vpop.f32.mrb[0].mxu0
      %v1170 = vpop.f32.mrb[0].mxu0
      %v1171 = vadd.f32 %v920, %v1170
      %v1172 = vpop.f32.mrb[0].mxu0
      %1173 = vdwg.mxu0
      %v1174 = vmax.f32 %v1107, 0.0
      %v1175 = vmax.f32 %v1109, 0.0
      %v1176 = vmax.f32 %v1160, 0.0
      %v1177 = vmax.f32 %v1111, 0.0
      %v1178 = vmax.f32 %v1113, 0.0
      %v1179 = vmax.f32 %v1163, 0.0
      %v1180 = vmax.f32 %v1117, 0.0
      %v1181 = vmax.f32 %v1119, 0.0
      %v1182 = vmax.f32 %v1168, 0.0
      %v1183 = vmax.f32 %v1121, 0.0
      %v1184 = vmax.f32 %v1123, 0.0
      %v1185 = vmax.f32 %v1171, 0.0
      %v1186 = vmul.f32 %v1174, %v775
      %v1187 = vmul.f32 %v1175, %v779
      %v1188 = vmul.f32 %v1176, %v783
      %v1189 = vmul.f32 %v1177, %v775
      %v1190 = vmul.f32 %v1178, %v779
      %v1191 = vmul.f32 %v1179, %v783
      %v1192 = vmul.f32 %v1180, %v775
      %v1193 = vmul.f32 %v1181, %v779
      %v1194 = vmul.f32 %v1182, %v783
      %v1195 = vmul.f32 %v1183, %v775
      %v1196 = vmul.f32 %v1184, %v779
      %v1197 = vmul.f32 %v1185, %v783
      %v1198 = vpack.c.bf16 %v1189, %v1186
      %v1199 = vpack.c.bf16 %v1190, %v1187
      %v1200 = vpack.c.bf16 %v1191, %v1188
      %v1201 = vpack.c.bf16 %v1195, %v1192
      %v1202 = vpack.c.bf16 %v1196, %v1193
      %v1203 = vpack.c.bf16 %v1197, %v1194
      %1204 = vst [vmem:[#allocation2 + $0x30] sm:$0xff] %v1198
      %1205 = vst [vmem:[#allocation2 + $0x38] sm:$0xff] %v1199
      %1206 = vst [vmem:[#allocation2 + $0x40] sm:$0xff] %v1200
      %1207 = vst [vmem:[#allocation2 + $0x58] sm:$0xff] %v1201
      %1208 = vst [vmem:[#allocation2 + $0x60] sm:$0xff] %v1202
      %1209 = vst [vmem:[#allocation2 + $0x68] sm:$0xff] %v1203
      %v1210 = vld [vmem:[#allocation2] sm:$0xff]
      %v1211 = vld [vmem:[#allocation2 + $0x8] sm:$0xff]
      %v1212 = vld [vmem:[#allocation2 + $0x10] sm:$0xff]
      %v1213 = vld [vmem:[#allocation2 + $0x18] sm:$0xff]
      %v1214 = vld [vmem:[#allocation2 + $0x28] sm:$0xff]
      %v1215 = vld [vmem:[#allocation2 + $0x30] sm:$0xff]
      %v1216 = vld [vmem:[#allocation2 + $0x38] sm:$0xff]
      %v1217 = vld [vmem:[#allocation2 + $0x40] sm:$0xff]
      %v1218 = vld [vmem:[#allocation2 + $0x50] sm:$0xff]
      %v1219 = vld [vmem:[#allocation2 + $0x58] sm:$0xff]
      %v1220 = vld [vmem:[#allocation2 + $0x60] sm:$0xff]
      %v1221 = vld [vmem:[#allocation2 + $0x68] sm:$0xff]
      %v1222 = vld [vmem:[#allocation2 + $0x8] sm:$0xff]
      %v1223 = vld [vmem:[#allocation2 + $0x10] sm:$0xff]
      %v1224 = vld [vmem:[#allocation2 + $0x18] sm:$0xff]
      %v1225 = vld [vmem:[#allocation2 + $0x20] sm:$0xff]
      %v1226 = vld [vmem:[#allocation2 + $0x30] sm:$0xff]
      %v1227 = vld [vmem:[#allocation2 + $0x38] sm:$0xff]
      %v1228 = vld [vmem:[#allocation2 + $0x40] sm:$0xff]
      %v1229 = vld [vmem:[#allocation2 + $0x48] sm:$0xff]
      %v1230 = vld [vmem:[#allocation2 + $0x58] sm:$0xff]
      %v1231 = vld [vmem:[#allocation2 + $0x60] sm:$0xff]
      %v1232 = vld [vmem:[#allocation2 + $0x68] sm:$0xff]
      %v1233 = vld [vmem:[#allocation2 + $0x70] sm:$0xff]
      %1246 = vrot.lane.b32.xlu0 %v1210, 127
      %v1247 = vpop.permute.xlu0 %1246
      %1248 = vrot.lane.b32.xlu0 %v1211, 127
      %v1249 = vpop.permute.xlu0 %1248
      %1250 = vrot.lane.b32.xlu0 %v1212, 127
      %v1251 = vpop.permute.xlu0 %1250
      %1252 = vrot.lane.b32.xlu0 %v1213, 127
      %v1253 = vpop.permute.xlu0 %1252
      %1254 = vrot.lane.b32.xlu0 %v1214, 127
      %v1255 = vpop.permute.xlu0 %1254
      %1256 = vrot.lane.b32.xlu0 %v1215, 127
      %v1257 = vpop.permute.xlu0 %1256
      %1258 = vrot.lane.b32.xlu0 %v1216, 127
      %v1259 = vpop.permute.xlu0 %1258
      %1260 = vrot.lane.b32.xlu0 %v1217, 127
      %v1261 = vpop.permute.xlu0 %1260
      %1262 = vrot.lane.b32.xlu0 %v1218, 127
      %v1263 = vpop.permute.xlu0 %1262
      %1264 = vrot.lane.b32.xlu0 %v1219, 127
      %v1265 = vpop.permute.xlu0 %1264
      %1266 = vrot.lane.b32.xlu0 %v1220, 127
      %v1267 = vpop.permute.xlu0 %1266
      %1268 = vrot.lane.b32.xlu0 %v1221, 127
      %v1269 = vpop.permute.xlu0 %1268
      %v1270 = vsel %vm413, %v1247, %v1249
      %v1271 = vsel %vm413, %v1249, %v1251
      %v1272 = vsel %vm413, %v1251, %v1253
      %v1273 = vsel %vm413, %v1255, %v1257
      %v1274 = vsel %vm413, %v1257, %v1259
      %v1275 = vsel %vm413, %v1259, %v1261
      %v1276 = vsel %vm413, %v1263, %v1265
      %v1277 = vsel %vm413, %v1265, %v1267
      %v1278 = vsel %vm413, %v1267, %v1269
      %1279 = vrot.lane.b32.xlu0 %v1210, 126
      %v1280 = vpop.permute.xlu0 %1279
      %1281 = vrot.lane.b32.xlu0 %v1211, 126
      %v1282 = vpop.permute.xlu0 %1281
      %1283 = vrot.lane.b32.xlu0 %v1212, 126
      %v1284 = vpop.permute.xlu0 %1283
      %1285 = vrot.lane.b32.xlu0 %v1213, 126
      %v1286 = vpop.permute.xlu0 %1285
      %1287 = vrot.lane.b32.xlu0 %v1214, 126
      %v1288 = vpop.permute.xlu0 %1287
      %1289 = vrot.lane.b32.xlu0 %v1215, 126
      %v1290 = vpop.permute.xlu0 %1289
      %1291 = vrot.lane.b32.xlu0 %v1216, 126
      %v1292 = vpop.permute.xlu0 %1291
      %1293 = vrot.lane.b32.xlu0 %v1217, 126
      %v1294 = vpop.permute.xlu0 %1293
      %1295 = vrot.lane.b32.xlu0 %v1218, 126
      %v1296 = vpop.permute.xlu0 %1295
      %1297 = vrot.lane.b32.xlu0 %v1219, 126
      %v1298 = vpop.permute.xlu0 %1297
      %1299 = vrot.lane.b32.xlu0 %v1220, 126
      %v1300 = vpop.permute.xlu0 %1299
      %1301 = vrot.lane.b32.xlu0 %v1221, 126
      %v1302 = vpop.permute.xlu0 %1301
      %v1303 = vsel %vm425, %v1280, %v1282
      %v1304 = vsel %vm425, %v1282, %v1284
      %v1305 = vsel %vm425, %v1284, %v1286
      %v1306 = vsel %vm425, %v1288, %v1290
      %v1307 = vsel %vm425, %v1290, %v1292
      %v1308 = vsel %vm425, %v1292, %v1294
      %v1309 = vsel %vm425, %v1296, %v1298
      %v1310 = vsel %vm425, %v1298, %v1300
      %v1311 = vsel %vm425, %v1300, %v1302
      %1312 = vrot.lane.b32.xlu0 %v1210, 110
      %v1313 = vpop.permute.xlu0 %1312
      %1314 = vrot.lane.b32.xlu0 %v1211, 110
      %v1315 = vpop.permute.xlu0 %1314
      %1316 = vrot.lane.b32.xlu0 %v1212, 110
      %v1317 = vpop.permute.xlu0 %1316
      %1318 = vrot.lane.b32.xlu0 %v1213, 110
      %v1319 = vpop.permute.xlu0 %1318
      %1320 = vrot.lane.b32.xlu0 %v1214, 110
      %v1321 = vpop.permute.xlu0 %1320
      %1322 = vrot.lane.b32.xlu0 %v1215, 110
      %v1323 = vpop.permute.xlu0 %1322
      %1324 = vrot.lane.b32.xlu0 %v1216, 110
      %v1325 = vpop.permute.xlu0 %1324
      %1326 = vrot.lane.b32.xlu0 %v1217, 110
      %v1327 = vpop.permute.xlu0 %1326
      %1328 = vrot.lane.b32.xlu0 %v1218, 110
      %v1329 = vpop.permute.xlu0 %1328
      %1330 = vrot.lane.b32.xlu0 %v1219, 110
      %v1331 = vpop.permute.xlu0 %1330
      %1332 = vrot.lane.b32.xlu0 %v1220, 110
      %v1333 = vpop.permute.xlu0 %1332
      %1334 = vrot.lane.b32.xlu0 %v1221, 110
      %v1335 = vpop.permute.xlu0 %1334
      %v1336 = vsel %vm437, %v1313, %v1315
      %v1337 = vsel %vm437, %v1315, %v1317
      %v1338 = vsel %vm437, %v1317, %v1319
      %v1339 = vsel %vm437, %v1321, %v1323
      %v1340 = vsel %vm437, %v1323, %v1325
      %v1341 = vsel %vm437, %v1325, %v1327
      %v1342 = vsel %vm437, %v1329, %v1331
      %v1343 = vsel %vm437, %v1331, %v1333
      %v1344 = vsel %vm437, %v1333, %v1335
      %1345 = vrot.lane.b32.xlu0 %v1211, 109
      %v1346 = vpop.permute.xlu0 %1345
      %1347 = vrot.lane.b32.xlu0 %v1212, 109
      %v1348 = vpop.permute.xlu0 %1347
      %1349 = vrot.lane.b32.xlu0 %v1213, 109
      %v1350 = vpop.permute.xlu0 %1349
      %1351 = vrot.lane.b32.xlu0 %v1215, 109
      %v1352 = vpop.permute.xlu0 %1351
      %1353 = vrot.lane.b32.xlu0 %v1216, 109
      %v1354 = vpop.permute.xlu0 %1353
      %1355 = vrot.lane.b32.xlu0 %v1217, 109
      %v1356 = vpop.permute.xlu0 %1355
      %1357 = vrot.lane.b32.xlu0 %v1219, 109
      %v1358 = vpop.permute.xlu0 %1357
      %1359 = vrot.lane.b32.xlu0 %v1220, 109
      %v1360 = vpop.permute.xlu0 %1359
      %1361 = vrot.lane.b32.xlu0 %v1221, 109
      %v1362 = vpop.permute.xlu0 %1361
      %v1363 = vsel %vm460, %v1346, %v1348
      %v1364 = vsel %vm460, %v1348, %v1350
      %v1365 = vsel %vm460, %v1352, %v1354
      %v1366 = vsel %vm460, %v1354, %v1356
      %v1367 = vsel %vm460, %v1358, %v1360
      %v1368 = vsel %vm460, %v1360, %v1362
      %1381 = vrot.lane.b32.xlu0 %v1222, 108
      %v1382 = vpop.permute.xlu0 %1381
      %1383 = vrot.lane.b32.xlu0 %v1223, 108
      %v1384 = vpop.permute.xlu0 %1383
      %1385 = vrot.lane.b32.xlu0 %v1224, 108
      %v1386 = vpop.permute.xlu0 %1385
      %1387 = vrot.lane.b32.xlu0 %v1225, 108
      %v1388 = vpop.permute.xlu0 %1387
      %1389 = vrot.lane.b32.xlu0 %v1226, 108
      %v1390 = vpop.permute.xlu0 %1389
      %1391 = vrot.lane.b32.xlu0 %v1227, 108
      %v1392 = vpop.permute.xlu0 %1391
      %1393 = vrot.lane.b32.xlu0 %v1228, 108
      %v1394 = vpop.permute.xlu0 %1393
      %1395 = vrot.lane.b32.xlu0 %v1229, 108
      %v1396 = vpop.permute.xlu0 %1395
      %1397 = vrot.lane.b32.xlu0 %v1230, 108
      %v1398 = vpop.permute.xlu0 %1397
      %1399 = vrot.lane.b32.xlu0 %v1231, 108
      %v1400 = vpop.permute.xlu0 %1399
      %1401 = vrot.lane.b32.xlu0 %v1232, 108
      %v1402 = vpop.permute.xlu0 %1401
      %1403 = vrot.lane.b32.xlu0 %v1233, 108
      %v1404 = vpop.permute.xlu0 %1403
      %v1405 = vsel %vm487, %v1382, %v1384
      %v1406 = vsel %vm487, %v1384, %v1386
      %v1407 = vsel %vm487, %v1386, %v1388
      %v1408 = vsel %vm487, %v1390, %v1392
      %v1409 = vsel %vm487, %v1392, %v1394
      %v1410 = vsel %vm487, %v1394, %v1396
      %v1411 = vsel %vm487, %v1398, %v1400
      %v1412 = vsel %vm487, %v1400, %v1402
      %v1413 = vsel %vm487, %v1402, %v1404
      %1414 = vrot.lane.b32.xlu0 %v1222, 92
      %v1415 = vpop.permute.xlu0 %1414
      %1416 = vrot.lane.b32.xlu0 %v1223, 92
      %v1417 = vpop.permute.xlu0 %1416
      %1418 = vrot.lane.b32.xlu0 %v1224, 92
      %v1419 = vpop.permute.xlu0 %1418
      %1420 = vrot.lane.b32.xlu0 %v1225, 92
      %v1421 = vpop.permute.xlu0 %1420
      %1422 = vrot.lane.b32.xlu0 %v1226, 92
      %v1423 = vpop.permute.xlu0 %1422
      %1424 = vrot.lane.b32.xlu0 %v1227, 92
      %v1425 = vpop.permute.xlu0 %1424
      %1426 = vrot.lane.b32.xlu0 %v1228, 92
      %v1427 = vpop.permute.xlu0 %1426
      %1428 = vrot.lane.b32.xlu0 %v1229, 92
      %v1429 = vpop.permute.xlu0 %1428
      %1430 = vrot.lane.b32.xlu0 %v1230, 92
      %v1431 = vpop.permute.xlu0 %1430
      %1432 = vrot.lane.b32.xlu0 %v1231, 92
      %v1433 = vpop.permute.xlu0 %1432
      %1434 = vrot.lane.b32.xlu0 %v1232, 92
      %v1435 = vpop.permute.xlu0 %1434
      %1436 = vrot.lane.b32.xlu0 %v1233, 92
      %v1437 = vpop.permute.xlu0 %1436
      %v1438 = vsel %vm499, %v1415, %v1417
      %v1439 = vsel %vm499, %v1417, %v1419
      %v1440 = vsel %vm499, %v1419, %v1421
      %v1441 = vsel %vm499, %v1423, %v1425
      %v1442 = vsel %vm499, %v1425, %v1427
      %v1443 = vsel %vm499, %v1427, %v1429
      %v1444 = vsel %vm499, %v1431, %v1433
      %v1445 = vsel %vm499, %v1433, %v1435
      %v1446 = vsel %vm499, %v1435, %v1437
      %1447 = vrot.lane.b32.xlu0 %v1222, 91
      %v1448 = vpop.permute.xlu0 %1447
      %1449 = vrot.lane.b32.xlu0 %v1223, 91
      %v1450 = vpop.permute.xlu0 %1449
      %1451 = vrot.lane.b32.xlu0 %v1224, 91
      %v1452 = vpop.permute.xlu0 %1451
      %1453 = vrot.lane.b32.xlu0 %v1225, 91
      %v1454 = vpop.permute.xlu0 %1453
      %1455 = vrot.lane.b32.xlu0 %v1226, 91
      %v1456 = vpop.permute.xlu0 %1455
      %1457 = vrot.lane.b32.xlu0 %v1227, 91
      %v1458 = vpop.permute.xlu0 %1457
      %1459 = vrot.lane.b32.xlu0 %v1228, 91
      %v1460 = vpop.permute.xlu0 %1459
      %1461 = vrot.lane.b32.xlu0 %v1229, 91
      %v1462 = vpop.permute.xlu0 %1461
      %1463 = vrot.lane.b32.xlu0 %v1230, 91
      %v1464 = vpop.permute.xlu0 %1463
      %1465 = vrot.lane.b32.xlu0 %v1231, 91
      %v1466 = vpop.permute.xlu0 %1465
      %1467 = vrot.lane.b32.xlu0 %v1232, 91
      %v1468 = vpop.permute.xlu0 %1467
      %1469 = vrot.lane.b32.xlu0 %v1233, 91
      %v1470 = vpop.permute.xlu0 %1469
      %v1471 = vsel %vm511, %v1448, %v1450
      %v1472 = vsel %vm511, %v1450, %v1452
      %v1473 = vsel %vm511, %v1452, %v1454
      %v1474 = vsel %vm511, %v1456, %v1458
      %v1475 = vsel %vm511, %v1458, %v1460
      %v1476 = vsel %vm511, %v1460, %v1462
      %v1477 = vsel %vm511, %v1464, %v1466
      %v1478 = vsel %vm511, %v1466, %v1468
      %v1479 = vsel %vm511, %v1468, %v1470
      %1480 = vrot.lane.b32.xlu0 %v1222, 90
      %v1481 = vpop.permute.xlu0 %1480
      %1482 = vrot.lane.b32.xlu0 %v1223, 90
      %v1483 = vpop.permute.xlu0 %1482
      %1484 = vrot.lane.b32.xlu0 %v1224, 90
      %v1485 = vpop.permute.xlu0 %1484
      %1486 = vrot.lane.b32.xlu0 %v1225, 90
      %v1487 = vpop.permute.xlu0 %1486
      %1488 = vrot.lane.b32.xlu0 %v1226, 90
      %v1489 = vpop.permute.xlu0 %1488
      %1490 = vrot.lane.b32.xlu0 %v1227, 90
      %v1491 = vpop.permute.xlu0 %1490
      %1492 = vrot.lane.b32.xlu0 %v1228, 90
      %v1493 = vpop.permute.xlu0 %1492
      %1494 = vrot.lane.b32.xlu0 %v1229, 90
      %v1495 = vpop.permute.xlu0 %1494
      %1496 = vrot.lane.b32.xlu0 %v1230, 90
      %v1497 = vpop.permute.xlu0 %1496
      %1498 = vrot.lane.b32.xlu0 %v1231, 90
      %v1499 = vpop.permute.xlu0 %1498
      %1500 = vrot.lane.b32.xlu0 %v1232, 90
      %v1501 = vpop.permute.xlu0 %1500
      %1502 = vrot.lane.b32.xlu0 %v1233, 90
      %v1503 = vpop.permute.xlu0 %1502
      %v1504 = vsel %vm523, %v1481, %v1483
      %v1505 = vsel %vm523, %v1483, %v1485
      %v1506 = vsel %vm523, %v1485, %v1487
      %v1507 = vsel %vm523, %v1489, %v1491
      %v1508 = vsel %vm523, %v1491, %v1493
      %v1509 = vsel %vm523, %v1493, %v1495
      %v1510 = vsel %vm523, %v1497, %v1499
      %v1511 = vsel %vm523, %v1499, %v1501
      %v1512 = vsel %vm523, %v1501, %v1503
      %v1513 = vld [vmem:[%s6] sm:$0xff]
      %v1514 = vld [vmem:[%s6 + $0x8] sm:$0xff]
      %v1515 = vld [vmem:[%s6 + $0x10] sm:$0xff]
      %v1516 = vld [vmem:[%s6 + $0x18] sm:$0xff]
      %v1517 = vld [vmem:[%s6 + $0x20] sm:$0xff]
      %v1518 = vld [vmem:[%s6 + $0x28] sm:$0xff]
      %v1519 = vld [vmem:[%s6 + $0x30] sm:$0xff]
      %v1520 = vld [vmem:[%s6 + $0x38] sm:$0xff]
      %v1521 = vld [vmem:[%s6 + $0x40] sm:$0xff]
      %v1522 = vld [vmem:[%s6 + $0x48] sm:$0xff]
      %v1523 = vld [vmem:[%s6 + $0x50] sm:$0xff]
      %v1524 = vld [vmem:[%s6 + $0x58] sm:$0xff]
      %v1525 = vld [vmem:[%s6 + $0x60] sm:$0xff]
      %v1526 = vld [vmem:[%s6 + $0x68] sm:$0xff]
      %v1527 = vld [vmem:[%s6 + $0x70] sm:$0xff]
      %v1528 = vld [vmem:[%s6 + $0x78] sm:$0xff]
      %v1529 = vld [vmem:[%s7] sm:$0xff]
      %v1530 = vld [vmem:[%s7 + $0x8] sm:$0xff]
      %v1531 = vld [vmem:[%s7 + $0x10] sm:$0xff]
      %v1532 = vld [vmem:[%s7 + $0x18] sm:$0xff]
      %v1533 = vld [vmem:[%s7 + $0x20] sm:$0xff]
      %v1534 = vld [vmem:[%s7 + $0x28] sm:$0xff]
      %v1535 = vld [vmem:[%s7 + $0x30] sm:$0xff]
      %v1536 = vld [vmem:[%s7 + $0x38] sm:$0xff]
      %1538 = vset.pattern.permute.xlu0 0
      %1539 = vperm.xlu0 %1538, %v1529
      %v1540 = vpop.permute.xlu0 %1539
      %1543 = vset.pattern.permute.xlu0 0
      %1544 = vperm.xlu0 %1543, %v1530
      %v1545 = vpop.permute.xlu0 %1544
      %1548 = vset.pattern.permute.xlu0 0
      %1549 = vperm.xlu0 %1548, %v1531
      %v1550 = vpop.permute.xlu0 %1549
      %1553 = vset.pattern.permute.xlu0 0
      %1554 = vperm.xlu0 %1553, %v1532
      %v1555 = vpop.permute.xlu0 %1554
      %1558 = vset.pattern.permute.xlu0 0
      %1559 = vperm.xlu0 %1558, %v1533
      %v1560 = vpop.permute.xlu0 %1559
      %1563 = vset.pattern.permute.xlu0 0
      %1564 = vperm.xlu0 %1563, %v1534
      %v1565 = vpop.permute.xlu0 %1564
      %1568 = vset.pattern.permute.xlu0 0
      %1569 = vperm.xlu0 %1568, %v1535
      %v1570 = vpop.permute.xlu0 %1569
      %1573 = vset.pattern.permute.xlu0 0
      %1574 = vperm.xlu0 %1573, %v1536
      %v1575 = vpop.permute.xlu0 %1574
      %v1593 = vunpack.c.l.b16 %v1513
      %v1594 = vunpack.c.h.b16 %v1513
      %v1595 = vunpack.c.l.b16 %v1514
      %v1596 = vunpack.c.h.b16 %v1514
      %v1597 = vunpack.c.l.b16 %v1515
      %v1598 = vunpack.c.h.b16 %v1515
      %v1599 = vunpack.c.l.b16 %v1516
      %v1600 = vunpack.c.h.b16 %v1516
      %v1601 = vunpack.c.l.b16 %v1517
      %v1602 = vunpack.c.h.b16 %v1517
      %v1603 = vunpack.c.l.b16 %v1518
      %v1604 = vunpack.c.h.b16 %v1518
      %v1605 = vunpack.c.l.b16 %v1519
      %v1606 = vunpack.c.h.b16 %v1519
      %v1607 = vunpack.c.l.b16 %v1520
      %v1608 = vunpack.c.h.b16 %v1520
      %v1609 = vunpack.c.l.b16 %v1521
      %v1610 = vunpack.c.h.b16 %v1521
      %v1611 = vunpack.c.l.b16 %v1522
      %v1612 = vunpack.c.h.b16 %v1522
      %v1613 = vunpack.c.l.b16 %v1523
      %v1614 = vunpack.c.h.b16 %v1523
      %v1615 = vunpack.c.l.b16 %v1524
      %v1616 = vunpack.c.h.b16 %v1524
      %v1617 = vunpack.c.l.b16 %v1525
      %v1618 = vunpack.c.h.b16 %v1525
      %v1619 = vunpack.c.l.b16 %v1526
      %v1620 = vunpack.c.h.b16 %v1526
      %v1621 = vunpack.c.l.b16 %v1527
      %v1622 = vunpack.c.h.b16 %v1527
      %v1623 = vunpack.c.l.b16 %v1528
      %v1624 = vunpack.c.h.b16 %v1528
      %v1625 = vpack.c.b16 %v1597, %v1593
      %v1626 = vpack.c.b16 %v1598, %v1594
      %v1627 = vpack.c.b16 %v1599, %v1595
      %v1628 = vpack.c.b16 %v1600, %v1596
      %v1629 = vpack.c.b16 %v1605, %v1601
      %v1630 = vpack.c.b16 %v1606, %v1602
      %v1631 = vpack.c.b16 %v1607, %v1603
      %v1632 = vpack.c.b16 %v1608, %v1604
      %v1633 = vpack.c.b16 %v1613, %v1609
      %v1634 = vpack.c.b16 %v1614, %v1610
      %v1635 = vpack.c.b16 %v1615, %v1611
      %v1636 = vpack.c.b16 %v1616, %v1612
      %v1637 = vpack.c.b16 %v1621, %v1617
      %v1638 = vpack.c.b16 %v1622, %v1618
      %v1639 = vpack.c.b16 %v1623, %v1619
      %v1640 = vpack.c.b16 %v1624, %v1620
      %1653 = vrot.lane.b32.xlu0 %v1210, 19
      %v1654 = vpop.permute.xlu0 %1653
      %1655 = vrot.lane.b32.xlu0 %v1211, 19
      %v1656 = vpop.permute.xlu0 %1655
      %1657 = vrot.lane.b32.xlu0 %v1212, 19
      %v1658 = vpop.permute.xlu0 %1657
      %1659 = vrot.lane.b32.xlu0 %v1213, 19
      %v1660 = vpop.permute.xlu0 %1659
      %1661 = vrot.lane.b32.xlu0 %v1214, 19
      %v1662 = vpop.permute.xlu0 %1661
      %1663 = vrot.lane.b32.xlu0 %v1215, 19
      %v1664 = vpop.permute.xlu0 %1663
      %1665 = vrot.lane.b32.xlu0 %v1216, 19
      %v1666 = vpop.permute.xlu0 %1665
      %1667 = vrot.lane.b32.xlu0 %v1217, 19
      %v1668 = vpop.permute.xlu0 %1667
      %1669 = vrot.lane.b32.xlu0 %v1218, 19
      %v1670 = vpop.permute.xlu0 %1669
      %1671 = vrot.lane.b32.xlu0 %v1219, 19
      %v1672 = vpop.permute.xlu0 %1671
      %1673 = vrot.lane.b32.xlu0 %v1220, 19
      %v1674 = vpop.permute.xlu0 %1673
      %1675 = vrot.lane.b32.xlu0 %v1221, 19
      %v1676 = vpop.permute.xlu0 %1675
      %1677 = vrot.lane.b32.xlu0 %v1270, 19
      %v1678 = vpop.permute.xlu0 %1677
      %1679 = vrot.lane.b32.xlu0 %v1271, 19
      %v1680 = vpop.permute.xlu0 %1679
      %1681 = vrot.lane.b32.xlu0 %v1272, 19
      %v1682 = vpop.permute.xlu0 %1681
      %1683 = vrot.lane.b32.xlu0 %v1253, 19
      %v1684 = vpop.permute.xlu0 %1683
      %1685 = vrot.lane.b32.xlu0 %v1273, 19
      %v1686 = vpop.permute.xlu0 %1685
      %1687 = vrot.lane.b32.xlu0 %v1274, 19
      %v1688 = vpop.permute.xlu0 %1687
      %1689 = vrot.lane.b32.xlu0 %v1275, 19
      %v1690 = vpop.permute.xlu0 %1689
      %1691 = vrot.lane.b32.xlu0 %v1261, 19
      %v1692 = vpop.permute.xlu0 %1691
      %1693 = vrot.lane.b32.xlu0 %v1276, 19
      %v1694 = vpop.permute.xlu0 %1693
      %1695 = vrot.lane.b32.xlu0 %v1277, 19
      %v1696 = vpop.permute.xlu0 %1695
      %1697 = vrot.lane.b32.xlu0 %v1278, 19
      %v1698 = vpop.permute.xlu0 %1697
      %1699 = vrot.lane.b32.xlu0 %v1269, 19
      %v1700 = vpop.permute.xlu0 %1699
      %1701 = vrot.lane.b32.xlu0 %v1303, 19
      %v1702 = vpop.permute.xlu0 %1701
      %1703 = vrot.lane.b32.xlu0 %v1304, 19
      %v1704 = vpop.permute.xlu0 %1703
      %1705 = vrot.lane.b32.xlu0 %v1305, 19
      %v1706 = vpop.permute.xlu0 %1705
      %1707 = vrot.lane.b32.xlu0 %v1286, 19
      %v1708 = vpop.permute.xlu0 %1707
      %1709 = vrot.lane.b32.xlu0 %v1306, 19
      %v1710 = vpop.permute.xlu0 %1709
      %1711 = vrot.lane.b32.xlu0 %v1307, 19
      %v1712 = vpop.permute.xlu0 %1711
      %1713 = vrot.lane.b32.xlu0 %v1308, 19
      %v1714 = vpop.permute.xlu0 %1713
      %1715 = vrot.lane.b32.xlu0 %v1294, 19
      %v1716 = vpop.permute.xlu0 %1715
      %1717 = vrot.lane.b32.xlu0 %v1309, 19
      %v1718 = vpop.permute.xlu0 %1717
      %1719 = vrot.lane.b32.xlu0 %v1310, 19
      %v1720 = vpop.permute.xlu0 %1719
      %1721 = vrot.lane.b32.xlu0 %v1311, 19
      %v1722 = vpop.permute.xlu0 %1721
      %1723 = vrot.lane.b32.xlu0 %v1302, 19
      %v1724 = vpop.permute.xlu0 %1723
      %1725 = vrot.lane.b32.xlu0 %v1336, 19
      %v1726 = vpop.permute.xlu0 %1725
      %1727 = vrot.lane.b32.xlu0 %v1337, 19
      %v1728 = vpop.permute.xlu0 %1727
      %1729 = vrot.lane.b32.xlu0 %v1338, 19
      %v1730 = vpop.permute.xlu0 %1729
      %1731 = vrot.lane.b32.xlu0 %v1319, 19
      %v1732 = vpop.permute.xlu0 %1731
      %1733 = vrot.lane.b32.xlu0 %v1339, 19
      %v1734 = vpop.permute.xlu0 %1733
      %1735 = vrot.lane.b32.xlu0 %v1340, 19
      %v1736 = vpop.permute.xlu0 %1735
      %1737 = vrot.lane.b32.xlu0 %v1341, 19
      %v1738 = vpop.permute.xlu0 %1737
      %1739 = vrot.lane.b32.xlu0 %v1327, 19
      %v1740 = vpop.permute.xlu0 %1739
      %1741 = vrot.lane.b32.xlu0 %v1342, 19
      %v1742 = vpop.permute.xlu0 %1741
      %1743 = vrot.lane.b32.xlu0 %v1343, 19
      %v1744 = vpop.permute.xlu0 %1743
      %1745 = vrot.lane.b32.xlu0 %v1344, 19
      %v1746 = vpop.permute.xlu0 %1745
      %1747 = vrot.lane.b32.xlu0 %v1335, 19
      %v1748 = vpop.permute.xlu0 %1747
      %1749 = vrot.lane.b32.xlu0 %v1346, 19
      %v1750 = vpop.permute.xlu0 %1749
      %1751 = vrot.lane.b32.xlu0 %v1363, 19
      %v1752 = vpop.permute.xlu0 %1751
      %1753 = vrot.lane.b32.xlu0 %v1364, 19
      %v1754 = vpop.permute.xlu0 %1753
      %1755 = vrot.lane.b32.xlu0 %v1350, 19
      %v1756 = vpop.permute.xlu0 %1755
      %1757 = vrot.lane.b32.xlu0 %v1352, 19
      %v1758 = vpop.permute.xlu0 %1757
      %1759 = vrot.lane.b32.xlu0 %v1365, 19
      %v1760 = vpop.permute.xlu0 %1759
      %1761 = vrot.lane.b32.xlu0 %v1366, 19
      %v1762 = vpop.permute.xlu0 %1761
      %1763 = vrot.lane.b32.xlu0 %v1356, 19
      %v1764 = vpop.permute.xlu0 %1763
      %1765 = vrot.lane.b32.xlu0 %v1358, 19
      %v1766 = vpop.permute.xlu0 %1765
      %1767 = vrot.lane.b32.xlu0 %v1367, 19
      %v1768 = vpop.permute.xlu0 %1767
      %1769 = vrot.lane.b32.xlu0 %v1368, 19
      %v1770 = vpop.permute.xlu0 %1769
      %1771 = vrot.lane.b32.xlu0 %v1362, 19
      %v1772 = vpop.permute.xlu0 %1771
      %1773 = vrot.lane.b32.xlu0 %v1382, 19
      %v1774 = vpop.permute.xlu0 %1773
      %1775 = vrot.lane.b32.xlu0 %v1405, 19
      %v1776 = vpop.permute.xlu0 %1775
      %1777 = vrot.lane.b32.xlu0 %v1406, 19
      %v1778 = vpop.permute.xlu0 %1777
      %1779 = vrot.lane.b32.xlu0 %v1407, 19
      %v1780 = vpop.permute.xlu0 %1779
      %1781 = vrot.lane.b32.xlu0 %v1390, 19
      %v1782 = vpop.permute.xlu0 %1781
      %1783 = vrot.lane.b32.xlu0 %v1408, 19
      %v1784 = vpop.permute.xlu0 %1783
      %1785 = vrot.lane.b32.xlu0 %v1409, 19
      %v1786 = vpop.permute.xlu0 %1785
      %1787 = vrot.lane.b32.xlu0 %v1410, 19
      %v1788 = vpop.permute.xlu0 %1787
      %1789 = vrot.lane.b32.xlu0 %v1398, 19
      %v1790 = vpop.permute.xlu0 %1789
      %1791 = vrot.lane.b32.xlu0 %v1411, 19
      %v1792 = vpop.permute.xlu0 %1791
      %1793 = vrot.lane.b32.xlu0 %v1412, 19
      %v1794 = vpop.permute.xlu0 %1793
      %1795 = vrot.lane.b32.xlu0 %v1413, 19
      %v1796 = vpop.permute.xlu0 %1795
      %1797 = vrot.lane.b32.xlu0 %v1415, 19
      %v1798 = vpop.permute.xlu0 %1797
      %1799 = vrot.lane.b32.xlu0 %v1438, 19
      %v1800 = vpop.permute.xlu0 %1799
      %1801 = vrot.lane.b32.xlu0 %v1439, 19
      %v1802 = vpop.permute.xlu0 %1801
      %1803 = vrot.lane.b32.xlu0 %v1440, 19
      %v1804 = vpop.permute.xlu0 %1803
      %1805 = vrot.lane.b32.xlu0 %v1423, 19
      %v1806 = vpop.permute.xlu0 %1805
      %1807 = vrot.lane.b32.xlu0 %v1441, 19
      %v1808 = vpop.permute.xlu0 %1807
      %1809 = vrot.lane.b32.xlu0 %v1442, 19
      %v1810 = vpop.permute.xlu0 %1809
      %1811 = vrot.lane.b32.xlu0 %v1443, 19
      %v1812 = vpop.permute.xlu0 %1811
      %1813 = vrot.lane.b32.xlu0 %v1431, 19
      %v1814 = vpop.permute.xlu0 %1813
      %1815 = vrot.lane.b32.xlu0 %v1444, 19
      %v1816 = vpop.permute.xlu0 %1815
      %1817 = vrot.lane.b32.xlu0 %v1445, 19
      %v1818 = vpop.permute.xlu0 %1817
      %1819 = vrot.lane.b32.xlu0 %v1446, 19
      %v1820 = vpop.permute.xlu0 %1819
      %1821 = vrot.lane.b32.xlu0 %v1448, 19
      %v1822 = vpop.permute.xlu0 %1821
      %1823 = vrot.lane.b32.xlu0 %v1471, 19
      %v1824 = vpop.permute.xlu0 %1823
      %1825 = vrot.lane.b32.xlu0 %v1472, 19
      %v1826 = vpop.permute.xlu0 %1825
      %1827 = vrot.lane.b32.xlu0 %v1473, 19
      %v1828 = vpop.permute.xlu0 %1827
      %1829 = vrot.lane.b32.xlu0 %v1456, 19
      %v1830 = vpop.permute.xlu0 %1829
      %1831 = vrot.lane.b32.xlu0 %v1474, 19
      %v1832 = vpop.permute.xlu0 %1831
      %1833 = vrot.lane.b32.xlu0 %v1475, 19
      %v1834 = vpop.permute.xlu0 %1833
      %1835 = vrot.lane.b32.xlu0 %v1476, 19
      %v1836 = vpop.permute.xlu0 %1835
      %1837 = vrot.lane.b32.xlu0 %v1464, 19
      %v1838 = vpop.permute.xlu0 %1837
      %1839 = vrot.lane.b32.xlu0 %v1477, 19
      %v1840 = vpop.permute.xlu0 %1839
      %1841 = vrot.lane.b32.xlu0 %v1478, 19
      %v1842 = vpop.permute.xlu0 %1841
      %1843 = vrot.lane.b32.xlu0 %v1479, 19
      %v1844 = vpop.permute.xlu0 %1843
      %1845 = vrot.lane.b32.xlu0 %v1481, 19
      %v1846 = vpop.permute.xlu0 %1845
      %1847 = vrot.lane.b32.xlu0 %v1504, 19
      %v1848 = vpop.permute.xlu0 %1847
      %1849 = vrot.lane.b32.xlu0 %v1505, 19
      %v1850 = vpop.permute.xlu0 %1849
      %1851 = vrot.lane.b32.xlu0 %v1506, 19
      %v1852 = vpop.permute.xlu0 %1851
      %1853 = vrot.lane.b32.xlu0 %v1489, 19
      %v1854 = vpop.permute.xlu0 %1853
      %1855 = vrot.lane.b32.xlu0 %v1507, 19
      %v1856 = vpop.permute.xlu0 %1855
      %1857 = vrot.lane.b32.xlu0 %v1508, 19
      %v1858 = vpop.permute.xlu0 %1857
      %1859 = vrot.lane.b32.xlu0 %v1509, 19
      %v1860 = vpop.permute.xlu0 %1859
      %1861 = vrot.lane.b32.xlu0 %v1497, 19
      %v1862 = vpop.permute.xlu0 %1861
      %1863 = vrot.lane.b32.xlu0 %v1510, 19
      %v1864 = vpop.permute.xlu0 %1863
      %1865 = vrot.lane.b32.xlu0 %v1511, 19
      %v1866 = vpop.permute.xlu0 %1865
      %1867 = vrot.lane.b32.xlu0 %v1512, 19
      %v1868 = vpop.permute.xlu0 %1867
      %v1869 = vsel %vm622, %v1654, %v1656
      %v1870 = vsel %vm622, %v1656, %v1658
      %v1871 = vsel %vm622, %v1658, %v1660
      %v1872 = vsel %vm622, %v1662, %v1664
      %v1873 = vsel %vm622, %v1664, %v1666
      %v1874 = vsel %vm622, %v1666, %v1668
      %v1875 = vsel %vm622, %v1670, %v1672
      %v1876 = vsel %vm622, %v1672, %v1674
      %v1877 = vsel %vm622, %v1674, %v1676
      %v1878 = vsel %vm622, %v1678, %v1680
      %v1879 = vsel %vm622, %v1680, %v1682
      %v1880 = vsel %vm622, %v1682, %v1684
      %v1881 = vsel %vm622, %v1686, %v1688
      %v1882 = vsel %vm622, %v1688, %v1690
      %v1883 = vsel %vm622, %v1690, %v1692
      %v1884 = vsel %vm622, %v1694, %v1696
      %v1885 = vsel %vm622, %v1696, %v1698
      %v1886 = vsel %vm622, %v1698, %v1700
      %v1887 = vsel %vm622, %v1702, %v1704
      %v1888 = vsel %vm622, %v1704, %v1706
      %v1889 = vsel %vm622, %v1706, %v1708
      %v1890 = vsel %vm622, %v1710, %v1712
      %v1891 = vsel %vm622, %v1712, %v1714
      %v1892 = vsel %vm622, %v1714, %v1716
      %v1893 = vsel %vm622, %v1718, %v1720
      %v1894 = vsel %vm622, %v1720, %v1722
      %v1895 = vsel %vm622, %v1722, %v1724
      %v1896 = vsel %vm622, %v1726, %v1728
      %v1897 = vsel %vm622, %v1728, %v1730
      %v1898 = vsel %vm622, %v1730, %v1732
      %v1899 = vsel %vm622, %v1734, %v1736
      %v1900 = vsel %vm622, %v1736, %v1738
      %v1901 = vsel %vm622, %v1738, %v1740
      %v1902 = vsel %vm622, %v1742, %v1744
      %v1903 = vsel %vm622, %v1744, %v1746
      %v1904 = vsel %vm622, %v1746, %v1748
      %v1905 = vsel %vm622, %v1750, %v1752
      %v1906 = vsel %vm622, %v1752, %v1754
      %v1907 = vsel %vm622, %v1754, %v1756
      %v1908 = vsel %vm622, %v1758, %v1760
      %v1909 = vsel %vm622, %v1760, %v1762
      %v1910 = vsel %vm622, %v1762, %v1764
      %v1911 = vsel %vm622, %v1766, %v1768
      %v1912 = vsel %vm622, %v1768, %v1770
      %v1913 = vsel %vm622, %v1770, %v1772
      %v1914 = vsel %vm622, %v1774, %v1776
      %v1915 = vsel %vm622, %v1776, %v1778
      %v1916 = vsel %vm622, %v1778, %v1780
      %v1917 = vsel %vm622, %v1782, %v1784
      %v1918 = vsel %vm622, %v1784, %v1786
      %v1919 = vsel %vm622, %v1786, %v1788
      %v1920 = vsel %vm622, %v1790, %v1792
      %v1921 = vsel %vm622, %v1792, %v1794
      %v1922 = vsel %vm622, %v1794, %v1796
      %v1923 = vsel %vm622, %v1798, %v1800
      %v1924 = vsel %vm622, %v1800, %v1802
      %v1925 = vsel %vm622, %v1802, %v1804
      %v1926 = vsel %vm622, %v1806, %v1808
      %v1927 = vsel %vm622, %v1808, %v1810
      %v1928 = vsel %vm622, %v1810, %v1812
      %v1929 = vsel %vm622, %v1814, %v1816
      %v1930 = vsel %vm622, %v1816, %v1818
      %v1931 = vsel %vm622, %v1818, %v1820
      %v1932 = vsel %vm622, %v1822, %v1824
      %v1933 = vsel %vm622, %v1824, %v1826
      %v1934 = vsel %vm622, %v1826, %v1828
      %v1935 = vsel %vm622, %v1830, %v1832
      %v1936 = vsel %vm622, %v1832, %v1834
      %v1937 = vsel %vm622, %v1834, %v1836
      %v1938 = vsel %vm622, %v1838, %v1840
      %v1939 = vsel %vm622, %v1840, %v1842
      %v1940 = vsel %vm622, %v1842, %v1844
      %v1941 = vsel %vm622, %v1846, %v1848
      %v1942 = vsel %vm622, %v1848, %v1850
      %v1943 = vsel %vm622, %v1850, %v1852
      %v1944 = vsel %vm622, %v1854, %v1856
      %v1945 = vsel %vm622, %v1856, %v1858
      %v1946 = vsel %vm622, %v1858, %v1860
      %v1947 = vsel %vm622, %v1862, %v1864
      %v1948 = vsel %vm622, %v1864, %v1866
      %v1949 = vsel %vm622, %v1866, %v1868
      %vm2031 = vcmask 392192
      %v2033 = vsel %vm2031, %v1628, 0
      %v2036 = vsel %vm2031, %v1632, 0
      %v2039 = vsel %vm2031, %v1636, 0
      %v2042 = vsel %vm2031, %v1640, 0
      %2044 = vmatprep.subr.bf16.mxu0 %v1870
      %2045 = vmatpush1.bf16.msra.mxu0 %v1869
      %2046 = vmatprep.subr.bf16.mxu0 %v1873
      %2047 = vmatpush1.bf16.msra.mxu0 %v1872
      %2048 = vmatprep.subr.bf16.mxu0 %v1876
      %2049 = vmatpush1.bf16.msra.mxu0 %v1875
      %2050 = vmatprep.subr.bf16.mxu0 %v1879
      %2051 = vmatpush1.bf16.msra.mxu0 %v1878
      %2052 = vmatprep.subr.bf16.mxu0 %v1882
      %2053 = vmatpush1.bf16.msra.mxu0 %v1881
      %2054 = vmatprep.subr.bf16.mxu0 %v1885
      %2055 = vmatpush1.bf16.msra.mxu0 %v1884
      %2056 = vmatprep.subr.bf16.mxu0 %v1888
      %2057 = vmatpush1.bf16.msra.mxu0 %v1887
      %2058 = vmatprep.subr.bf16.mxu0 %v1891
      %2059 = vmatpush1.bf16.msra.mxu0 %v1890
      %2060 = vmatprep.subr.bf16.mxu0 %v1894
      %2061 = vmatpush1.bf16.msra.mxu0 %v1893
      %2062 = vmatprep.subr.bf16.mxu0 %v1897
      %2063 = vmatpush1.bf16.msra.mxu0 %v1896
      %2064 = vmatprep.subr.bf16.mxu0 %v1900
      %2065 = vmatpush1.bf16.msra.mxu0 %v1899
      %2066 = vmatprep.subr.bf16.mxu0 %v1903
      %2067 = vmatpush1.bf16.msra.mxu0 %v1902
      %2068 = vmatprep.subr.bf16.mxu0 %v1906
      %2069 = vmatpush1.bf16.msra.mxu0 %v1905
      %2070 = vmatprep.subr.bf16.mxu0 %v1909
      %2071 = vmatpush1.bf16.msra.mxu0 %v1908
      %2072 = vmatprep.subr.bf16.mxu0 %v1912
      %2073 = vmatpush1.bf16.msra.mxu0 %v1911
      %2074 = vmatprep.subr.bf16.mxu0 %v1915
      %2075 = vmatpush1.bf16.msra.mxu0 %v1914
      %2076 = vmatprep.mubr.bf16.mxu0 %v1626
      %2077 = vmatmul.mubr.bf16.gmra.mrb[0].mxu0 %v1625
      %v2078 = vpop.f32.mrb[0].mxu0
      %v2079 = vadd.f32 %v1540, %v2078
      %v2080 = vpop.f32.mrb[0].mxu0
      %v2081 = vadd.f32 %v1540, %v2080
      %v2082 = vpop.f32.mrb[0].mxu0
      %v2083 = vadd.f32 %v1545, %v2082
      %v2084 = vpop.f32.mrb[0].mxu0
      %v2085 = vadd.f32 %v1545, %v2084
      %2086 = vmatprep.mubr.bf16.mxu0 %v1630
      %2087 = vmatmul.mubr.bf16.gmra.mrb[0].mxu0 %v1629
      %v2088 = vpop.f32.mrb[0].mxu0
      %v2089 = vadd.f32 %v1550, %v2088
      %v2090 = vpop.f32.mrb[0].mxu0
      %v2091 = vadd.f32 %v1550, %v2090
      %v2092 = vpop.f32.mrb[0].mxu0
      %v2093 = vadd.f32 %v1555, %v2092
      %v2094 = vpop.f32.mrb[0].mxu0
      %v2095 = vadd.f32 %v1555, %v2094
      %2096 = vmatprep.mubr.bf16.mxu0 %v1634
      %2097 = vmatmul.mubr.bf16.gmra.mrb[0].mxu0 %v1633
      %v2098 = vpop.f32.mrb[0].mxu0
      %v2099 = vadd.f32 %v1560, %v2098
      %v2100 = vpop.f32.mrb[0].mxu0
      %v2101 = vadd.f32 %v1560, %v2100
      %v2102 = vpop.f32.mrb[0].mxu0
      %v2103 = vadd.f32 %v1565, %v2102
      %v2104 = vpop.f32.mrb[0].mxu0
      %v2105 = vadd.f32 %v1565, %v2104
      %2106 = vmatprep.mubr.bf16.mxu0 %v1638
      %2107 = vmatmul.mubr.bf16.gmra.mrb[0].mxu0 %v1637
      %v2108 = vpop.f32.mrb[0].mxu0
      %v2109 = vadd.f32 %v1570, %v2108
      %v2110 = vpop.f32.mrb[0].mxu0
      %v2111 = vadd.f32 %v1570, %v2110
      %v2112 = vpop.f32.mrb[0].mxu0
      %v2113 = vadd.f32 %v1575, %v2112
      %v2114 = vpop.f32.mrb[0].mxu0
      %v2115 = vadd.f32 %v1575, %v2114
      %2116 = vdwg.mxu0
      %2117 = vmatprep.subr.bf16.mxu0 %v1918
      %2118 = vmatpush1.bf16.msra.mxu0 %v1917
      %2119 = vmatprep.subr.bf16.mxu0 %v1921
      %2120 = vmatpush1.bf16.msra.mxu0 %v1920
      %2121 = vmatprep.subr.bf16.mxu0 %v1924
      %2122 = vmatpush1.bf16.msra.mxu0 %v1923
      %2123 = vmatprep.subr.bf16.mxu0 %v1927
      %2124 = vmatpush1.bf16.msra.mxu0 %v1926
      %2125 = vmatprep.subr.bf16.mxu0 %v1930
      %2126 = vmatpush1.bf16.msra.mxu0 %v1929
      %2127 = vmatprep.subr.bf16.mxu0 %v1933
      %2128 = vmatpush1.bf16.msra.mxu0 %v1932
      %2129 = vmatprep.subr.bf16.mxu0 %v1936
      %2130 = vmatpush1.bf16.msra.mxu0 %v1935
      %2131 = vmatprep.subr.bf16.mxu0 %v1939
      %2132 = vmatpush1.bf16.msra.mxu0 %v1938
      %2133 = vmatprep.subr.bf16.mxu0 %v1942
      %2134 = vmatpush1.bf16.msra.mxu0 %v1941
      %2135 = vmatprep.subr.bf16.mxu0 %v1945
      %2136 = vmatpush1.bf16.msra.mxu0 %v1944
      %2137 = vmatprep.subr.bf16.mxu0 %v1948
      %2138 = vmatpush1.bf16.msra.mxu0 %v1947
      %2139 = vmatprep.subr.bf16.mxu0 0
      %2140 = vmatpush1.bf16.msra.mxu0 0
      %2141 = vmatprep.subr.bf16.mxu0 0
      %2142 = vmatpush1.bf16.msra.mxu0 0
      %2143 = vmatprep.subr.bf16.mxu0 0
      %2144 = vmatpush1.bf16.msra.mxu0 0
      %2145 = vmatprep.subr.bf16.mxu0 0
      %2146 = vmatpush1.bf16.msra.mxu0 0
      %2147 = vmatprep.subr.bf16.mxu0 0
      %2148 = vmatpush1.bf16.msra.mxu0 0
      %2149 = vmatprep.mubr.bf16.mxu0 %v2033
      %2150 = vmatmul.mubr.bf16.gmra.mrb[0].mxu0 %v1627
      %v2151 = vpop.f32.mrb[0].mxu0
      %v2152 = vadd.f32 %v2079, %v2151
      %v2153 = vpop.f32.mrb[0].mxu0
      %v2154 = vadd.f32 %v2081, %v2153
      %v2155 = vpop.f32.mrb[0].mxu0
      %v2156 = vadd.f32 %v2083, %v2155
      %v2157 = vpop.f32.mrb[0].mxu0
      %v2158 = vadd.f32 %v2085, %v2157
      %2159 = vmatprep.mubr.bf16.mxu0 %v2036
      %2160 = vmatmul.mubr.bf16.gmra.mrb[0].mxu0 %v1631
      %v2161 = vpop.f32.mrb[0].mxu0
      %v2162 = vadd.f32 %v2089, %v2161
      %v2163 = vpop.f32.mrb[0].mxu0
      %v2164 = vadd.f32 %v2091, %v2163
      %v2165 = vpop.f32.mrb[0].mxu0
      %v2166 = vadd.f32 %v2093, %v2165
      %v2167 = vpop.f32.mrb[0].mxu0
      %v2168 = vadd.f32 %v2095, %v2167
      %2169 = vmatprep.mubr.bf16.mxu0 %v2039
      %2170 = vmatmul.mubr.bf16.gmra.mrb[0].mxu0 %v1635
      %v2171 = vpop.f32.mrb[0].mxu0
      %v2172 = vadd.f32 %v2099, %v2171
      %v2173 = vpop.f32.mrb[0].mxu0
      %v2174 = vadd.f32 %v2101, %v2173
      %v2175 = vpop.f32.mrb[0].mxu0
      %v2176 = vadd.f32 %v2103, %v2175
      %v2177 = vpop.f32.mrb[0].mxu0
      %v2178 = vadd.f32 %v2105, %v2177
      %2179 = vmatprep.mubr.bf16.mxu0 %v2042
      %2180 = vmatmul.mubr.bf16.gmra.mrb[0].mxu0 %v1639
      %v2181 = vpop.f32.mrb[0].mxu0
      %v2182 = vadd.f32 %v2109, %v2181
      %v2183 = vpop.f32.mrb[0].mxu0
      %v2184 = vadd.f32 %v2111, %v2183
      %v2185 = vpop.f32.mrb[0].mxu0
      %v2186 = vadd.f32 %v2113, %v2185
      %v2187 = vpop.f32.mrb[0].mxu0
      %v2188 = vadd.f32 %v2115, %v2187
      %2189 = vdwg.mxu0
      %2190 = vmatprep.subr.bf16.mxu0 0
      %2191 = vmatpush1.bf16.msra.mxu0 %v1871
      %2192 = vmatprep.subr.bf16.mxu0 0
      %2193 = vmatpush1.bf16.msra.mxu0 %v1874
      %2194 = vmatprep.subr.bf16.mxu0 0
      %2195 = vmatpush1.bf16.msra.mxu0 %v1877
      %2196 = vmatprep.subr.bf16.mxu0 0
      %2197 = vmatpush1.bf16.msra.mxu0 %v1880
      %2198 = vmatprep.subr.bf16.mxu0 0
      %2199 = vmatpush1.bf16.msra.mxu0 %v1883
      %2200 = vmatprep.subr.bf16.mxu0 0
      %2201 = vmatpush1.bf16.msra.mxu0 %v1886
      %2202 = vmatprep.subr.bf16.mxu0 0
      %2203 = vmatpush1.bf16.msra.mxu0 %v1889
      %2204 = vmatprep.subr.bf16.mxu0 0
      %2205 = vmatpush1.bf16.msra.mxu0 %v1892
      %2206 = vmatprep.subr.bf16.mxu0 0
      %2207 = vmatpush1.bf16.msra.mxu0 %v1895
      %2208 = vmatprep.subr.bf16.mxu0 0
      %2209 = vmatpush1.bf16.msra.mxu0 %v1898
      %2210 = vmatprep.subr.bf16.mxu0 0
      %2211 = vmatpush1.bf16.msra.mxu0 %v1901
      %2212 = vmatprep.subr.bf16.mxu0 0
      %2213 = vmatpush1.bf16.msra.mxu0 %v1904
      %2214 = vmatprep.subr.bf16.mxu0 0
      %2215 = vmatpush1.bf16.msra.mxu0 %v1907
      %2216 = vmatprep.subr.bf16.mxu0 0
      %2217 = vmatpush1.bf16.msra.mxu0 %v1910
      %2218 = vmatprep.subr.bf16.mxu0 0
      %2219 = vmatpush1.bf16.msra.mxu0 %v1913
      %2220 = vmatprep.subr.bf16.mxu0 0
      %2221 = vmatpush1.bf16.msra.mxu0 %v1916
      %2222 = vmatprep.mubr.bf16.mxu0 %v1626
      %2223 = vmatmul.mubr.bf16.gmra.mrb[0].mxu0 %v1625
      %v2224 = vpop.f32.mrb[0].mxu0
      %v2225 = vadd.f32 %v1540, %v2224
      %v2226 = vpop.f32.mrb[0].mxu0
      %v2227 = vpop.f32.mrb[0].mxu0
      %v2228 = vadd.f32 %v1545, %v2227
      %v2229 = vpop.f32.mrb[0].mxu0
      %2230 = vmatprep.mubr.bf16.mxu0 %v1630
      %2231 = vmatmul.mubr.bf16.gmra.mrb[0].mxu0 %v1629
      %v2232 = vpop.f32.mrb[0].mxu0
      %v2233 = vadd.f32 %v1550, %v2232
      %v2234 = vpop.f32.mrb[0].mxu0
      %v2235 = vpop.f32.mrb[0].mxu0
      %v2236 = vadd.f32 %v1555, %v2235
      %v2237 = vpop.f32.mrb[0].mxu0
      %2238 = vmatprep.mubr.bf16.mxu0 %v1634
      %2239 = vmatmul.mubr.bf16.gmra.mrb[0].mxu0 %v1633
      %v2240 = vpop.f32.mrb[0].mxu0
      %v2241 = vadd.f32 %v1560, %v2240
      %v2242 = vpop.f32.mrb[0].mxu0
      %v2243 = vpop.f32.mrb[0].mxu0
      %v2244 = vadd.f32 %v1565, %v2243
      %v2245 = vpop.f32.mrb[0].mxu0
      %2246 = vmatprep.mubr.bf16.mxu0 %v1638
      %2247 = vmatmul.mubr.bf16.gmra.mrb[0].mxu0 %v1637
      %v2248 = vpop.f32.mrb[0].mxu0
      %v2249 = vadd.f32 %v1570, %v2248
      %v2250 = vpop.f32.mrb[0].mxu0
      %v2251 = vpop.f32.mrb[0].mxu0
      %v2252 = vadd.f32 %v1575, %v2251
      %v2253 = vpop.f32.mrb[0].mxu0
      %2254 = vdwg.mxu0
      %2255 = vmatprep.subr.bf16.mxu0 0
      %2256 = vmatpush1.bf16.msra.mxu0 %v1919
      %2257 = vmatprep.subr.bf16.mxu0 0
      %2258 = vmatpush1.bf16.msra.mxu0 %v1922
      %2259 = vmatprep.subr.bf16.mxu0 0
      %2260 = vmatpush1.bf16.msra.mxu0 %v1925
      %2261 = vmatprep.subr.bf16.mxu0 0
      %2262 = vmatpush1.bf16.msra.mxu0 %v1928
      %2263 = vmatprep.subr.bf16.mxu0 0
      %2264 = vmatpush1.bf16.msra.mxu0 %v1931
      %2265 = vmatprep.subr.bf16.mxu0 0
      %2266 = vmatpush1.bf16.msra.mxu0 %v1934
      %2267 = vmatprep.subr.bf16.mxu0 0
      %2268 = vmatpush1.bf16.msra.mxu0 %v1937
      %2269 = vmatprep.subr.bf16.mxu0 0
      %2270 = vmatpush1.bf16.msra.mxu0 %v1940
      %2271 = vmatprep.subr.bf16.mxu0 0
      %2272 = vmatpush1.bf16.msra.mxu0 %v1943
      %2273 = vmatprep.subr.bf16.mxu0 0
      %2274 = vmatpush1.bf16.msra.mxu0 %v1946
      %2275 = vmatprep.subr.bf16.mxu0 0
      %2276 = vmatpush1.bf16.msra.mxu0 %v1949
      %2277 = vmatprep.subr.bf16.mxu0 0
      %2278 = vmatpush1.bf16.msra.mxu0 0
      %2279 = vmatprep.subr.bf16.mxu0 0
      %2280 = vmatpush1.bf16.msra.mxu0 0
      %2281 = vmatprep.subr.bf16.mxu0 0
      %2282 = vmatpush1.bf16.msra.mxu0 0
      %2283 = vmatprep.subr.bf16.mxu0 0
      %2284 = vmatpush1.bf16.msra.mxu0 0
      %2285 = vmatprep.subr.bf16.mxu0 0
      %2286 = vmatpush1.bf16.msra.mxu0 0
      %2287 = vmatprep.mubr.bf16.mxu0 %v2033
      %2288 = vmatmul.mubr.bf16.gmra.mrb[0].mxu0 %v1627
      %v2289 = vpop.f32.mrb[0].mxu0
      %v2290 = vadd.f32 %v2225, %v2289
      %v2291 = vpop.f32.mrb[0].mxu0
      %v2292 = vpop.f32.mrb[0].mxu0
      %v2293 = vadd.f32 %v2228, %v2292
      %v2294 = vpop.f32.mrb[0].mxu0
      %2295 = vmatprep.mubr.bf16.mxu0 %v2036
      %2296 = vmatmul.mubr.bf16.gmra.mrb[0].mxu0 %v1631
      %v2297 = vpop.f32.mrb[0].mxu0
      %v2298 = vadd.f32 %v2233, %v2297
      %v2299 = vpop.f32.mrb[0].mxu0
      %v2300 = vpop.f32.mrb[0].mxu0
      %v2301 = vadd.f32 %v2236, %v2300
      %v2302 = vpop.f32.mrb[0].mxu0
      %2303 = vmatprep.mubr.bf16.mxu0 %v2039
      %2304 = vmatmul.mubr.bf16.gmra.mrb[0].mxu0 %v1635
      %v2305 = vpop.f32.mrb[0].mxu0
      %v2306 = vadd.f32 %v2241, %v2305
      %v2307 = vpop.f32.mrb[0].mxu0
      %v2308 = vpop.f32.mrb[0].mxu0
      %v2309 = vadd.f32 %v2244, %v2308
      %v2310 = vpop.f32.mrb[0].mxu0
      %2311 = vmatprep.mubr.bf16.mxu0 %v2042
      %2312 = vmatmul.mubr.bf16.gmra.mrb[0].mxu0 %v1639
      %v2313 = vpop.f32.mrb[0].mxu0
      %v2314 = vadd.f32 %v2249, %v2313
      %v2315 = vpop.f32.mrb[0].mxu0
      %v2316 = vpop.f32.mrb[0].mxu0
      %v2317 = vadd.f32 %v2252, %v2316
      %v2318 = vpop.f32.mrb[0].mxu0
      %2319 = vdwg.mxu0
      %v2320 = vmax.f32 %v2152, 0.0
      %v2321 = vmax.f32 %v2154, 0.0
      %v2322 = vmax.f32 %v2290, 0.0
      %v2323 = vmax.f32 %v2156, 0.0
      %v2324 = vmax.f32 %v2158, 0.0
      %v2325 = vmax.f32 %v2293, 0.0
      %v2326 = vmax.f32 %v2162, 0.0
      %v2327 = vmax.f32 %v2164, 0.0
      %v2328 = vmax.f32 %v2298, 0.0
      %v2329 = vmax.f32 %v2166, 0.0
      %v2330 = vmax.f32 %v2168, 0.0
      %v2331 = vmax.f32 %v2301, 0.0
      %v2332 = vmax.f32 %v2172, 0.0
      %v2333 = vmax.f32 %v2174, 0.0
      %v2334 = vmax.f32 %v2306, 0.0
      %v2335 = vmax.f32 %v2176, 0.0
      %v2336 = vmax.f32 %v2178, 0.0
      %v2337 = vmax.f32 %v2309, 0.0
      %v2338 = vmax.f32 %v2182, 0.0
      %v2339 = vmax.f32 %v2184, 0.0
      %v2340 = vmax.f32 %v2314, 0.0
      %v2341 = vmax.f32 %v2186, 0.0
      %v2342 = vmax.f32 %v2188, 0.0
      %v2343 = vmax.f32 %v2317, 0.0
      %v2344 = vld [vmem:[%s8] sm:$0xf]
      %v2345 = vld [vmem:[%s8 + $0x4] sm:$0xf]
      %v2346 = vpack.c.bf16 %v2323, %v2320
      %v2347 = vpack.c.bf16 %v2324, %v2321
      %v2348 = vpack.c.bf16 %v2325, %v2322
      %v2349 = vpack.c.bf16 %v2329, %v2326
      %v2350 = vpack.c.bf16 %v2330, %v2327
      %v2351 = vpack.c.bf16 %v2331, %v2328
      %v2352 = vpack.c.bf16 %v2335, %v2332
      %v2353 = vpack.c.bf16 %v2336, %v2333
      %v2354 = vpack.c.bf16 %v2337, %v2334
      %v2355 = vpack.c.bf16 %v2341, %v2338
      %v2356 = vpack.c.bf16 %v2342, %v2339
      %v2357 = vpack.c.bf16 %v2343, %v2340
      %v2358 = vld [vmem:[%s9] sm:$0xff]
      %v2359 = vld [vmem:[%s9 + $0x8] sm:$0xff]
      %2361 = vset.pattern.permute.xlu0 0
      %2362 = vperm.xlu0 %2361, %v2358
      %v2363 = vpop.permute.xlu0 %2362
      %2366 = vset.pattern.permute.xlu0 0
      %2367 = vperm.xlu0 %2366, %v2359
      %v2368 = vpop.permute.xlu0 %2367
      %v2372 = vunpack.c.l.b16 %v2344
      %v2373 = vunpack.c.l.b16 %v2345
      %v2374 = vpack.c.b16 %v2373, %v2372
      %vm2375 = vcmask 523264
      %v2377 = vsel %vm2375, %v2374, 0
      %2379 = vmatprep.subr.bf16.mxu0 %v2347
      %2380 = vmatpush1.bf16.msra.mxu0 %v2346
      %2381 = vmatprep.subr.bf16.mxu0 %v2350
      %2382 = vmatpush1.bf16.msra.mxu0 %v2349
      %2383 = vmatprep.subr.bf16.mxu0 %v2353
      %2384 = vmatpush1.bf16.msra.mxu0 %v2352
      %2385 = vmatprep.subr.bf16.mxu0 %v2356
      %2386 = vmatpush1.bf16.msra.mxu0 %v2355
      %2387 = vmatprep.subr.bf16.mxu0 0
      %2388 = vmatpush1.bf16.msra.mxu0 0
      %2389 = vmatprep.subr.bf16.mxu0 0
      %2390 = vmatpush1.bf16.msra.mxu0 0
      %2391 = vmatprep.subr.bf16.mxu0 0
      %2392 = vmatpush1.bf16.msra.mxu0 0
      %2393 = vmatprep.subr.bf16.mxu0 0
      %2394 = vmatpush1.bf16.msra.mxu0 0
      %2395 = vmatprep.subr.bf16.mxu0 0
      %2396 = vmatpush1.bf16.msra.mxu0 0
      %2397 = vmatprep.subr.bf16.mxu0 0
      %2398 = vmatpush1.bf16.msra.mxu0 0
      %2399 = vmatprep.subr.bf16.mxu0 0
      %2400 = vmatpush1.bf16.msra.mxu0 0
      %2401 = vmatprep.subr.bf16.mxu0 0
      %2402 = vmatpush1.bf16.msra.mxu0 0
      %2403 = vmatprep.subr.bf16.mxu0 0
      %2404 = vmatpush1.bf16.msra.mxu0 0
      %2405 = vmatprep.subr.bf16.mxu0 0
      %2406 = vmatpush1.bf16.msra.mxu0 0
      %2407 = vmatprep.subr.bf16.mxu0 0
      %2408 = vmatpush1.bf16.msra.mxu0 0
      %2409 = vmatprep.subr.bf16.mxu0 0
      %2410 = vmatpush1.bf16.msra.mxu0 0
      %2411 = vmatprep.mubr.bf16.mxu0 0
      %2412 = vmatmul.mubr.bf16.gmra.mrb[0].mxu0 %v2377
      %v2413 = vpop.f32.mrb[0].mxu0
      %v2414 = vadd.f32 %v2363, %v2413
      %v2415 = vpop.f32.mrb[0].mxu0
      %v2416 = vadd.f32 %v2363, %v2415
      %v2417 = vpop.f32.mrb[0].mxu0
      %v2418 = vadd.f32 %v2368, %v2417
      %v2419 = vpop.f32.mrb[0].mxu0
      %v2420 = vadd.f32 %v2368, %v2419
      %2421 = vdwg.mxu0
      %2422 = vmatprep.subr.bf16.mxu0 0
      %2423 = vmatpush1.bf16.msra.mxu0 %v2348
      %2424 = vmatprep.subr.bf16.mxu0 0
      %2425 = vmatpush1.bf16.msra.mxu0 %v2351
      %2426 = vmatprep.subr.bf16.mxu0 0
      %2427 = vmatpush1.bf16.msra.mxu0 %v2354
      %2428 = vmatprep.subr.bf16.mxu0 0
      %2429 = vmatpush1.bf16.msra.mxu0 %v2357
      %2430 = vmatprep.subr.bf16.mxu0 0
      %2431 = vmatpush1.bf16.msra.mxu0 0
      %2432 = vmatprep.subr.bf16.mxu0 0
      %2433 = vmatpush1.bf16.msra.mxu0 0
      %2434 = vmatprep.subr.bf16.mxu0 0
      %2435 = vmatpush1.bf16.msra.mxu0 0
      %2436 = vmatprep.subr.bf16.mxu0 0
      %2437 = vmatpush1.bf16.msra.mxu0 0
      %2438 = vmatprep.subr.bf16.mxu0 0
      %2439 = vmatpush1.bf16.msra.mxu0 0
      %2440 = vmatprep.subr.bf16.mxu0 0
      %2441 = vmatpush1.bf16.msra.mxu0 0
      %2442 = vmatprep.subr.bf16.mxu0 0
      %2443 = vmatpush1.bf16.msra.mxu0 0
      %2444 = vmatprep.subr.bf16.mxu0 0
      %2445 = vmatpush1.bf16.msra.mxu0 0
      %2446 = vmatprep.subr.bf16.mxu0 0
      %2447 = vmatpush1.bf16.msra.mxu0 0
      %2448 = vmatprep.subr.bf16.mxu0 0
      %2449 = vmatpush1.bf16.msra.mxu0 0
      %2450 = vmatprep.subr.bf16.mxu0 0
      %2451 = vmatpush1.bf16.msra.mxu0 0
      %2452 = vmatprep.subr.bf16.mxu0 0
      %2453 = vmatpush1.bf16.msra.mxu0 0
      %2454 = vmatprep.mubr.bf16.mxu0 0
      %2455 = vmatmul.mubr.bf16.gmra.mrb[0].mxu0 %v2377
      %v2456 = vpop.f32.mrb[0].mxu0
      %v2457 = vadd.f32 %v2363, %v2456
      %v2458 = vpop.f32.mrb[0].mxu0
      %v2459 = vpop.f32.mrb[0].mxu0
      %v2460 = vadd.f32 %v2368, %v2459
      %v2461 = vpop.f32.mrb[0].mxu0
      %2462 = vdwg.mxu0
      %v2463 = vmul.f32 %v2414, %v775
      %v2464 = vmul.f32 %v2416, %v779
      %v2465 = vmul.f32 %v2457, %v783
      %v2466 = vmul.f32 %v2418, %v775
      %v2467 = vmul.f32 %v2420, %v779
      %v2468 = vmul.f32 %v2460, %v783
      %v2469 = vpack.c.bf16 %v2466, %v2463
      %v2470 = vpack.c.bf16 %v2467, %v2464
      %v2471 = vpack.c.bf16 %v2468, %v2465
      %2472 = vst [vmem:[#allocation2 + $0x8] sm:$0xff] %v2469
      %2473 = vst [vmem:[#allocation2 + $0x10] sm:$0xff] %v2470
      %2474 = vst [vmem:[#allocation2 + $0x18] sm:$0xff] %v2471
      %v2475 = vld [vmem:[#allocation2] sm:$0xff]
      %v2476 = vld [vmem:[#allocation2 + $0x8] sm:$0xff]
      %v2477 = vld [vmem:[#allocation2 + $0x10] sm:$0xff]
      %v2478 = vld [vmem:[#allocation2 + $0x18] sm:$0xff]
      %v2479 = vld [vmem:[#allocation2 + $0x28] sm:$0xff]
      %v2480 = vld [vmem:[#allocation2 + $0x30] sm:$0xff]
      %v2481 = vld [vmem:[#allocation2 + $0x38] sm:$0xff]
      %v2482 = vld [vmem:[#allocation2 + $0x40] sm:$0xff]
      %v2483 = vld [vmem:[#allocation2 + $0x50] sm:$0xff]
      %v2484 = vld [vmem:[#allocation2 + $0x58] sm:$0xff]
      %v2485 = vld [vmem:[#allocation2 + $0x60] sm:$0xff]
      %v2486 = vld [vmem:[#allocation2 + $0x68] sm:$0xff]
      %v2487 = vld [vmem:[#allocation2 + $0x8] sm:$0xff]
      %v2488 = vld [vmem:[#allocation2 + $0x10] sm:$0xff]
      %v2489 = vld [vmem:[#allocation2 + $0x18] sm:$0xff]
      %v2490 = vld [vmem:[#allocation2 + $0x20] sm:$0xff]
      %v2491 = vld [vmem:[#allocation2 + $0x30] sm:$0xff]
      %v2492 = vld [vmem:[#allocation2 + $0x38] sm:$0xff]
      %v2493 = vld [vmem:[#allocation2 + $0x40] sm:$0xff]
      %v2494 = vld [vmem:[#allocation2 + $0x48] sm:$0xff]
      %v2495 = vld [vmem:[#allocation2 + $0x58] sm:$0xff]
      %v2496 = vld [vmem:[#allocation2 + $0x60] sm:$0xff]
      %v2497 = vld [vmem:[#allocation2 + $0x68] sm:$0xff]
      %v2498 = vld [vmem:[#allocation2 + $0x70] sm:$0xff]
      %2511 = vrot.lane.b32.xlu0 %v2475, 127
      %v2512 = vpop.permute.xlu0 %2511
      %2513 = vrot.lane.b32.xlu0 %v2476, 127
      %v2514 = vpop.permute.xlu0 %2513
      %2515 = vrot.lane.b32.xlu0 %v2477, 127
      %v2516 = vpop.permute.xlu0 %2515
      %2517 = vrot.lane.b32.xlu0 %v2478, 127
      %v2518 = vpop.permute.xlu0 %2517
      %2519 = vrot.lane.b32.xlu0 %v2479, 127
      %v2520 = vpop.permute.xlu0 %2519
      %2521 = vrot.lane.b32.xlu0 %v2480, 127
      %v2522 = vpop.permute.xlu0 %2521
      %2523 = vrot.lane.b32.xlu0 %v2481, 127
      %v2524 = vpop.permute.xlu0 %2523
      %2525 = vrot.lane.b32.xlu0 %v2482, 127
      %v2526 = vpop.permute.xlu0 %2525
      %2527 = vrot.lane.b32.xlu0 %v2483, 127
      %v2528 = vpop.permute.xlu0 %2527
      %2529 = vrot.lane.b32.xlu0 %v2484, 127
      %v2530 = vpop.permute.xlu0 %2529
      %2531 = vrot.lane.b32.xlu0 %v2485, 127
      %v2532 = vpop.permute.xlu0 %2531
      %2533 = vrot.lane.b32.xlu0 %v2486, 127
      %v2534 = vpop.permute.xlu0 %2533
      %v2535 = vsel %vm413, %v2512, %v2514
      %v2536 = vsel %vm413, %v2514, %v2516
      %v2537 = vsel %vm413, %v2516, %v2518
      %v2538 = vsel %vm413, %v2520, %v2522
      %v2539 = vsel %vm413, %v2522, %v2524
      %v2540 = vsel %vm413, %v2524, %v2526
      %v2541 = vsel %vm413, %v2528, %v2530
      %v2542 = vsel %vm413, %v2530, %v2532
      %v2543 = vsel %vm413, %v2532, %v2534
      %2544 = vrot.lane.b32.xlu0 %v2475, 126
      %v2545 = vpop.permute.xlu0 %2544
      %2546 = vrot.lane.b32.xlu0 %v2476, 126
      %v2547 = vpop.permute.xlu0 %2546
      %2548 = vrot.lane.b32.xlu0 %v2477, 126
      %v2549 = vpop.permute.xlu0 %2548
      %2550 = vrot.lane.b32.xlu0 %v2478, 126
      %v2551 = vpop.permute.xlu0 %2550
      %2552 = vrot.lane.b32.xlu0 %v2479, 126
      %v2553 = vpop.permute.xlu0 %2552
      %2554 = vrot.lane.b32.xlu0 %v2480, 126
      %v2555 = vpop.permute.xlu0 %2554
      %2556 = vrot.lane.b32.xlu0 %v2481, 126
      %v2557 = vpop.permute.xlu0 %2556
      %2558 = vrot.lane.b32.xlu0 %v2482, 126
      %v2559 = vpop.permute.xlu0 %2558
      %2560 = vrot.lane.b32.xlu0 %v2483, 126
      %v2561 = vpop.permute.xlu0 %2560
      %2562 = vrot.lane.b32.xlu0 %v2484, 126
      %v2563 = vpop.permute.xlu0 %2562
      %2564 = vrot.lane.b32.xlu0 %v2485, 126
      %v2565 = vpop.permute.xlu0 %2564
      %2566 = vrot.lane.b32.xlu0 %v2486, 126
      %v2567 = vpop.permute.xlu0 %2566
      %v2568 = vsel %vm425, %v2545, %v2547
      %v2569 = vsel %vm425, %v2547, %v2549
      %v2570 = vsel %vm425, %v2549, %v2551
      %v2571 = vsel %vm425, %v2553, %v2555
      %v2572 = vsel %vm425, %v2555, %v2557
      %v2573 = vsel %vm425, %v2557, %v2559
      %v2574 = vsel %vm425, %v2561, %v2563
      %v2575 = vsel %vm425, %v2563, %v2565
      %v2576 = vsel %vm425, %v2565, %v2567
      %2577 = vrot.lane.b32.xlu0 %v2475, 110
      %v2578 = vpop.permute.xlu0 %2577
      %2579 = vrot.lane.b32.xlu0 %v2476, 110
      %v2580 = vpop.permute.xlu0 %2579
      %2581 = vrot.lane.b32.xlu0 %v2477, 110
      %v2582 = vpop.permute.xlu0 %2581
      %2583 = vrot.lane.b32.xlu0 %v2478, 110
      %v2584 = vpop.permute.xlu0 %2583
      %2585 = vrot.lane.b32.xlu0 %v2479, 110
      %v2586 = vpop.permute.xlu0 %2585
      %2587 = vrot.lane.b32.xlu0 %v2480, 110
      %v2588 = vpop.permute.xlu0 %2587
      %2589 = vrot.lane.b32.xlu0 %v2481, 110
      %v2590 = vpop.permute.xlu0 %2589
      %2591 = vrot.lane.b32.xlu0 %v2482, 110
      %v2592 = vpop.permute.xlu0 %2591
      %2593 = vrot.lane.b32.xlu0 %v2483, 110
      %v2594 = vpop.permute.xlu0 %2593
      %2595 = vrot.lane.b32.xlu0 %v2484, 110
      %v2596 = vpop.permute.xlu0 %2595
      %2597 = vrot.lane.b32.xlu0 %v2485, 110
      %v2598 = vpop.permute.xlu0 %2597
      %2599 = vrot.lane.b32.xlu0 %v2486, 110
      %v2600 = vpop.permute.xlu0 %2599
      %v2601 = vsel %vm437, %v2578, %v2580
      %v2602 = vsel %vm437, %v2580, %v2582
      %v2603 = vsel %vm437, %v2582, %v2584
      %v2604 = vsel %vm437, %v2586, %v2588
      %v2605 = vsel %vm437, %v2588, %v2590
      %v2606 = vsel %vm437, %v2590, %v2592
      %v2607 = vsel %vm437, %v2594, %v2596
      %v2608 = vsel %vm437, %v2596, %v2598
      %v2609 = vsel %vm437, %v2598, %v2600
      %2610 = vrot.lane.b32.xlu0 %v2476, 109
      %v2611 = vpop.permute.xlu0 %2610
      %2612 = vrot.lane.b32.xlu0 %v2477, 109
      %v2613 = vpop.permute.xlu0 %2612
      %2614 = vrot.lane.b32.xlu0 %v2478, 109
      %v2615 = vpop.permute.xlu0 %2614
      %2616 = vrot.lane.b32.xlu0 %v2480, 109
      %v2617 = vpop.permute.xlu0 %2616
      %2618 = vrot.lane.b32.xlu0 %v2481, 109
      %v2619 = vpop.permute.xlu0 %2618
      %2620 = vrot.lane.b32.xlu0 %v2482, 109
      %v2621 = vpop.permute.xlu0 %2620
      %2622 = vrot.lane.b32.xlu0 %v2484, 109
      %v2623 = vpop.permute.xlu0 %2622
      %2624 = vrot.lane.b32.xlu0 %v2485, 109
      %v2625 = vpop.permute.xlu0 %2624
      %2626 = vrot.lane.b32.xlu0 %v2486, 109
      %v2627 = vpop.permute.xlu0 %2626
      %v2628 = vsel %vm460, %v2611, %v2613
      %v2629 = vsel %vm460, %v2613, %v2615
      %v2630 = vsel %vm460, %v2617, %v2619
      %v2631 = vsel %vm460, %v2619, %v2621
      %v2632 = vsel %vm460, %v2623, %v2625
      %v2633 = vsel %vm460, %v2625, %v2627
      %2646 = vrot.lane.b32.xlu0 %v2487, 108
      %v2647 = vpop.permute.xlu0 %2646
      %2648 = vrot.lane.b32.xlu0 %v2488, 108
      %v2649 = vpop.permute.xlu0 %2648
      %2650 = vrot.lane.b32.xlu0 %v2489, 108
      %v2651 = vpop.permute.xlu0 %2650
      %2652 = vrot.lane.b32.xlu0 %v2490, 108
      %v2653 = vpop.permute.xlu0 %2652
      %2654 = vrot.lane.b32.xlu0 %v2491, 108
      %v2655 = vpop.permute.xlu0 %2654
      %2656 = vrot.lane.b32.xlu0 %v2492, 108
      %v2657 = vpop.permute.xlu0 %2656
      %2658 = vrot.lane.b32.xlu0 %v2493, 108
      %v2659 = vpop.permute.xlu0 %2658
      %2660 = vrot.lane.b32.xlu0 %v2494, 108
      %v2661 = vpop.permute.xlu0 %2660
      %2662 = vrot.lane.b32.xlu0 %v2495, 108
      %v2663 = vpop.permute.xlu0 %2662
      %2664 = vrot.lane.b32.xlu0 %v2496, 108
      %v2665 = vpop.permute.xlu0 %2664
      %2666 = vrot.lane.b32.xlu0 %v2497, 108
      %v2667 = vpop.permute.xlu0 %2666
      %2668 = vrot.lane.b32.xlu0 %v2498, 108
      %v2669 = vpop.permute.xlu0 %2668
      %v2670 = vsel %vm487, %v2647, %v2649
      %v2671 = vsel %vm487, %v2649, %v2651
      %v2672 = vsel %vm487, %v2651, %v2653
      %v2673 = vsel %vm487, %v2655, %v2657
      %v2674 = vsel %vm487, %v2657, %v2659
      %v2675 = vsel %vm487, %v2659, %v2661
      %v2676 = vsel %vm487, %v2663, %v2665
      %v2677 = vsel %vm487, %v2665, %v2667
      %v2678 = vsel %vm487, %v2667, %v2669
      %2679 = vrot.lane.b32.xlu0 %v2487, 92
      %v2680 = vpop.permute.xlu0 %2679
      %2681 = vrot.lane.b32.xlu0 %v2488, 92
      %v2682 = vpop.permute.xlu0 %2681
      %2683 = vrot.lane.b32.xlu0 %v2489, 92
      %v2684 = vpop.permute.xlu0 %2683
      %2685 = vrot.lane.b32.xlu0 %v2490, 92
      %v2686 = vpop.permute.xlu0 %2685
      %2687 = vrot.lane.b32.xlu0 %v2491, 92
      %v2688 = vpop.permute.xlu0 %2687
      %2689 = vrot.lane.b32.xlu0 %v2492, 92
      %v2690 = vpop.permute.xlu0 %2689
      %2691 = vrot.lane.b32.xlu0 %v2493, 92
      %v2692 = vpop.permute.xlu0 %2691
      %2693 = vrot.lane.b32.xlu0 %v2494, 92
      %v2694 = vpop.permute.xlu0 %2693
      %2695 = vrot.lane.b32.xlu0 %v2495, 92
      %v2696 = vpop.permute.xlu0 %2695
      %2697 = vrot.lane.b32.xlu0 %v2496, 92
      %v2698 = vpop.permute.xlu0 %2697
      %2699 = vrot.lane.b32.xlu0 %v2497, 92
      %v2700 = vpop.permute.xlu0 %2699
      %2701 = vrot.lane.b32.xlu0 %v2498, 92
      %v2702 = vpop.permute.xlu0 %2701
      %v2703 = vsel %vm499, %v2680, %v2682
      %v2704 = vsel %vm499, %v2682, %v2684
      %v2705 = vsel %vm499, %v2684, %v2686
      %v2706 = vsel %vm499, %v2688, %v2690
      %v2707 = vsel %vm499, %v2690, %v2692
      %v2708 = vsel %vm499, %v2692, %v2694
      %v2709 = vsel %vm499, %v2696, %v2698
      %v2710 = vsel %vm499, %v2698, %v2700
      %v2711 = vsel %vm499, %v2700, %v2702
      %2712 = vrot.lane.b32.xlu0 %v2487, 91
      %v2713 = vpop.permute.xlu0 %2712
      %2714 = vrot.lane.b32.xlu0 %v2488, 91
      %v2715 = vpop.permute.xlu0 %2714
      %2716 = vrot.lane.b32.xlu0 %v2489, 91
      %v2717 = vpop.permute.xlu0 %2716
      %2718 = vrot.lane.b32.xlu0 %v2490, 91
      %v2719 = vpop.permute.xlu0 %2718
      %2720 = vrot.lane.b32.xlu0 %v2491, 91
      %v2721 = vpop.permute.xlu0 %2720
      %2722 = vrot.lane.b32.xlu0 %v2492, 91
      %v2723 = vpop.permute.xlu0 %2722
      %2724 = vrot.lane.b32.xlu0 %v2493, 91
      %v2725 = vpop.permute.xlu0 %2724
      %2726 = vrot.lane.b32.xlu0 %v2494, 91
      %v2727 = vpop.permute.xlu0 %2726
      %2728 = vrot.lane.b32.xlu0 %v2495, 91
      %v2729 = vpop.permute.xlu0 %2728
      %2730 = vrot.lane.b32.xlu0 %v2496, 91
      %v2731 = vpop.permute.xlu0 %2730
      %2732 = vrot.lane.b32.xlu0 %v2497, 91
      %v2733 = vpop.permute.xlu0 %2732
      %2734 = vrot.lane.b32.xlu0 %v2498, 91
      %v2735 = vpop.permute.xlu0 %2734
      %v2736 = vsel %vm511, %v2713, %v2715
      %v2737 = vsel %vm511, %v2715, %v2717
      %v2738 = vsel %vm511, %v2717, %v2719
      %v2739 = vsel %vm511, %v2721, %v2723
      %v2740 = vsel %vm511, %v2723, %v2725
      %v2741 = vsel %vm511, %v2725, %v2727
      %v2742 = vsel %vm511, %v2729, %v2731
      %v2743 = vsel %vm511, %v2731, %v2733
      %v2744 = vsel %vm511, %v2733, %v2735
      %2745 = vrot.lane.b32.xlu0 %v2487, 90
      %v2746 = vpop.permute.xlu0 %2745
      %2747 = vrot.lane.b32.xlu0 %v2488, 90
      %v2748 = vpop.permute.xlu0 %2747
      %2749 = vrot.lane.b32.xlu0 %v2489, 90
      %v2750 = vpop.permute.xlu0 %2749
      %2751 = vrot.lane.b32.xlu0 %v2490, 90
      %v2752 = vpop.permute.xlu0 %2751
      %2753 = vrot.lane.b32.xlu0 %v2491, 90
      %v2754 = vpop.permute.xlu0 %2753
      %2755 = vrot.lane.b32.xlu0 %v2492, 90
      %v2756 = vpop.permute.xlu0 %2755
      %2757 = vrot.lane.b32.xlu0 %v2493, 90
      %v2758 = vpop.permute.xlu0 %2757
      %2759 = vrot.lane.b32.xlu0 %v2494, 90
      %v2760 = vpop.permute.xlu0 %2759
      %2761 = vrot.lane.b32.xlu0 %v2495, 90
      %v2762 = vpop.permute.xlu0 %2761
      %2763 = vrot.lane.b32.xlu0 %v2496, 90
      %v2764 = vpop.permute.xlu0 %2763
      %2765 = vrot.lane.b32.xlu0 %v2497, 90
      %v2766 = vpop.permute.xlu0 %2765
      %2767 = vrot.lane.b32.xlu0 %v2498, 90
      %v2768 = vpop.permute.xlu0 %2767
      %v2769 = vsel %vm523, %v2746, %v2748
      %v2770 = vsel %vm523, %v2748, %v2750
      %v2771 = vsel %vm523, %v2750, %v2752
      %v2772 = vsel %vm523, %v2754, %v2756
      %v2773 = vsel %vm523, %v2756, %v2758
      %v2774 = vsel %vm523, %v2758, %v2760
      %v2775 = vsel %vm523, %v2762, %v2764
      %v2776 = vsel %vm523, %v2764, %v2766
      %v2777 = vsel %vm523, %v2766, %v2768
      %s2778 = scalar_lea.vmem %s6, 128
      %v2779 = vld [vmem:[%s2778] sm:$0xff]
      %v2780 = vld [vmem:[%s2778 + $0x8] sm:$0xff]
      %v2781 = vld [vmem:[%s2778 + $0x10] sm:$0xff]
      %v2782 = vld [vmem:[%s2778 + $0x18] sm:$0xff]
      %v2783 = vld [vmem:[%s2778 + $0x20] sm:$0xff]
      %v2784 = vld [vmem:[%s2778 + $0x28] sm:$0xff]
      %v2785 = vld [vmem:[%s2778 + $0x30] sm:$0xff]
      %v2786 = vld [vmem:[%s2778 + $0x38] sm:$0xff]
      %v2787 = vld [vmem:[%s2778 + $0x40] sm:$0xff]
      %v2788 = vld [vmem:[%s2778 + $0x48] sm:$0xff]
      %v2789 = vld [vmem:[%s2778 + $0x50] sm:$0xff]
      %v2790 = vld [vmem:[%s2778 + $0x58] sm:$0xff]
      %v2791 = vld [vmem:[%s2778 + $0x60] sm:$0xff]
      %v2792 = vld [vmem:[%s2778 + $0x68] sm:$0xff]
      %v2793 = vld [vmem:[%s2778 + $0x70] sm:$0xff]
      %v2794 = vld [vmem:[%s2778 + $0x78] sm:$0xff]
      %s2795 = scalar_lea.vmem %s7, 64
      %v2796 = vld [vmem:[%s2795] sm:$0xff]
      %v2797 = vld [vmem:[%s2795 + $0x8] sm:$0xff]
      %v2798 = vld [vmem:[%s2795 + $0x10] sm:$0xff]
      %v2799 = vld [vmem:[%s2795 + $0x18] sm:$0xff]
      %v2800 = vld [vmem:[%s2795 + $0x20] sm:$0xff]
      %v2801 = vld [vmem:[%s2795 + $0x28] sm:$0xff]
      %v2802 = vld [vmem:[%s2795 + $0x30] sm:$0xff]
      %v2803 = vld [vmem:[%s2795 + $0x38] sm:$0xff]
      %2805 = vset.pattern.permute.xlu0 0
      %2806 = vperm.xlu0 %2805, %v2796
      %v2807 = vpop.permute.xlu0 %2806
      %2810 = vset.pattern.permute.xlu0 0
      %2811 = vperm.xlu0 %2810, %v2797
      %v2812 = vpop.permute.xlu0 %2811
      %2815 = vset.pattern.permute.xlu0 0
      %2816 = vperm.xlu0 %2815, %v2798
      %v2817 = vpop.permute.xlu0 %2816
      %2820 = vset.pattern.permute.xlu0 0
      %2821 = vperm.xlu0 %2820, %v2799
      %v2822 = vpop.permute.xlu0 %2821
      %2825 = vset.pattern.permute.xlu0 0
      %2826 = vperm.xlu0 %2825, %v2800
      %v2827 = vpop.permute.xlu0 %2826
      %2830 = vset.pattern.permute.xlu0 0
      %2831 = vperm.xlu0 %2830, %v2801
      %v2832 = vpop.permute.xlu0 %2831
      %2835 = vset.pattern.permute.xlu0 0
      %2836 = vperm.xlu0 %2835, %v2802
      %v2837 = vpop.permute.xlu0 %2836
      %2840 = vset.pattern.permute.xlu0 0
      %2841 = vperm.xlu0 %2840, %v2803
      %v2842 = vpop.permute.xlu0 %2841
      %v2860 = vunpack.c.l.b16 %v2779
      %v2861 = vunpack.c.h.b16 %v2779
      %v2862 = vunpack.c.l.b16 %v2780
      %v2863 = vunpack.c.h.b16 %v2780
      %v2864 = vunpack.c.l.b16 %v2781
      %v2865 = vunpack.c.h.b16 %v2781
      %v2866 = vunpack.c.l.b16 %v2782
      %v2867 = vunpack.c.h.b16 %v2782
      %v2868 = vunpack.c.l.b16 %v2783
      %v2869 = vunpack.c.h.b16 %v2783
      %v2870 = vunpack.c.l.b16 %v2784
      %v2871 = vunpack.c.h.b16 %v2784
      %v2872 = vunpack.c.l.b16 %v2785
      %v2873 = vunpack.c.h.b16 %v2785
      %v2874 = vunpack.c.l.b16 %v2786
      %v2875 = vunpack.c.h.b16 %v2786
      %v2876 = vunpack.c.l.b16 %v2787
      %v2877 = vunpack.c.h.b16 %v2787
      %v2878 = vunpack.c.l.b16 %v2788
      %v2879 = vunpack.c.h.b16 %v2788
      %v2880 = vunpack.c.l.b16 %v2789
      %v2881 = vunpack.c.h.b16 %v2789
      %v2882 = vunpack.c.l.b16 %v2790
      %v2883 = vunpack.c.h.b16 %v2790
      %v2884 = vunpack.c.l.b16 %v2791
      %v2885 = vunpack.c.h.b16 %v2791
      %v2886 = vunpack.c.l.b16 %v2792
      %v2887 = vunpack.c.h.b16 %v2792
      %v2888 = vunpack.c.l.b16 %v2793
      %v2889 = vunpack.c.h.b16 %v2793
      %v2890 = vunpack.c.l.b16 %v2794
      %v2891 = vunpack.c.h.b16 %v2794
      %v2892 = vpack.c.b16 %v2864, %v2860
      %v2893 = vpack.c.b16 %v2865, %v2861
      %v2894 = vpack.c.b16 %v2866, %v2862
      %v2895 = vpack.c.b16 %v2867, %v2863
      %v2896 = vpack.c.b16 %v2872, %v2868
      %v2897 = vpack.c.b16 %v2873, %v2869
      %v2898 = vpack.c.b16 %v2874, %v2870
      %v2899 = vpack.c.b16 %v2875, %v2871
      %v2900 = vpack.c.b16 %v2880, %v2876
      %v2901 = vpack.c.b16 %v2881, %v2877
      %v2902 = vpack.c.b16 %v2882, %v2878
      %v2903 = vpack.c.b16 %v2883, %v2879
      %v2904 = vpack.c.b16 %v2888, %v2884
      %v2905 = vpack.c.b16 %v2889, %v2885
      %v2906 = vpack.c.b16 %v2890, %v2886
      %v2907 = vpack.c.b16 %v2891, %v2887
      %2920 = vrot.lane.b32.xlu0 %v2475, 19
      %v2921 = vpop.permute.xlu0 %2920
      %2922 = vrot.lane.b32.xlu0 %v2476, 19
      %v2923 = vpop.permute.xlu0 %2922
      %2924 = vrot.lane.b32.xlu0 %v2477, 19
      %v2925 = vpop.permute.xlu0 %2924
      %2926 = vrot.lane.b32.xlu0 %v2478, 19
      %v2927 = vpop.permute.xlu0 %2926
      %2928 = vrot.lane.b32.xlu0 %v2479, 19
      %v2929 = vpop.permute.xlu0 %2928
      %2930 = vrot.lane.b32.xlu0 %v2480, 19
      %v2931 = vpop.permute.xlu0 %2930
      %2932 = vrot.lane.b32.xlu0 %v2481, 19
      %v2933 = vpop.permute.xlu0 %2932
      %2934 = vrot.lane.b32.xlu0 %v2482, 19
      %v2935 = vpop.permute.xlu0 %2934
      %2936 = vrot.lane.b32.xlu0 %v2483, 19
      %v2937 = vpop.permute.xlu0 %2936
      %2938 = vrot.lane.b32.xlu0 %v2484, 19
      %v2939 = vpop.permute.xlu0 %2938
      %2940 = vrot.lane.b32.xlu0 %v2485, 19
      %v2941 = vpop.permute.xlu0 %2940
      %2942 = vrot.lane.b32.xlu0 %v2486, 19
      %v2943 = vpop.permute.xlu0 %2942
      %2944 = vrot.lane.b32.xlu0 %v2535, 19
      %v2945 = vpop.permute.xlu0 %2944
      %2946 = vrot.lane.b32.xlu0 %v2536, 19
      %v2947 = vpop.permute.xlu0 %2946
      %2948 = vrot.lane.b32.xlu0 %v2537, 19
      %v2949 = vpop.permute.xlu0 %2948
      %2950 = vrot.lane.b32.xlu0 %v2518, 19
      %v2951 = vpop.permute.xlu0 %2950
      %2952 = vrot.lane.b32.xlu0 %v2538, 19
      %v2953 = vpop.permute.xlu0 %2952
      %2954 = vrot.lane.b32.xlu0 %v2539, 19
      %v2955 = vpop.permute.xlu0 %2954
      %2956 = vrot.lane.b32.xlu0 %v2540, 19
      %v2957 = vpop.permute.xlu0 %2956
      %2958 = vrot.lane.b32.xlu0 %v2526, 19
      %v2959 = vpop.permute.xlu0 %2958
      %2960 = vrot.lane.b32.xlu0 %v2541, 19
      %v2961 = vpop.permute.xlu0 %2960
      %2962 = vrot.lane.b32.xlu0 %v2542, 19
      %v2963 = vpop.permute.xlu0 %2962
      %2964 = vrot.lane.b32.xlu0 %v2543, 19
      %v2965 = vpop.permute.xlu0 %2964
      %2966 = vrot.lane.b32.xlu0 %v2534, 19
      %v2967 = vpop.permute.xlu0 %2966
      %2968 = vrot.lane.b32.xlu0 %v2568, 19
      %v2969 = vpop.permute.xlu0 %2968
      %2970 = vrot.lane.b32.xlu0 %v2569, 19
      %v2971 = vpop.permute.xlu0 %2970
      %2972 = vrot.lane.b32.xlu0 %v2570, 19
      %v2973 = vpop.permute.xlu0 %2972
      %2974 = vrot.lane.b32.xlu0 %v2551, 19
      %v2975 = vpop.permute.xlu0 %2974
      %2976 = vrot.lane.b32.xlu0 %v2571, 19
      %v2977 = vpop.permute.xlu0 %2976
      %2978 = vrot.lane.b32.xlu0 %v2572, 19
      %v2979 = vpop.permute.xlu0 %2978
      %2980 = vrot.lane.b32.xlu0 %v2573, 19
      %v2981 = vpop.permute.xlu0 %2980
      %2982 = vrot.lane.b32.xlu0 %v2559, 19
      %v2983 = vpop.permute.xlu0 %2982
      %2984 = vrot.lane.b32.xlu0 %v2574, 19
      %v2985 = vpop.permute.xlu0 %2984
      %2986 = vrot.lane.b32.xlu0 %v2575, 19
      %v2987 = vpop.permute.xlu0 %2986
      %2988 = vrot.lane.b32.xlu0 %v2576, 19
      %v2989 = vpop.permute.xlu0 %2988
      %2990 = vrot.lane.b32.xlu0 %v2567, 19
      %v2991 = vpop.permute.xlu0 %2990
      %2992 = vrot.lane.b32.xlu0 %v2601, 19
      %v2993 = vpop.permute.xlu0 %2992
      %2994 = vrot.lane.b32.xlu0 %v2602, 19
      %v2995 = vpop.permute.xlu0 %2994
      %2996 = vrot.lane.b32.xlu0 %v2603, 19
      %v2997 = vpop.permute.xlu0 %2996
      %2998 = vrot.lane.b32.xlu0 %v2584, 19
      %v2999 = vpop.permute.xlu0 %2998
      %3000 = vrot.lane.b32.xlu0 %v2604, 19
      %v3001 = vpop.permute.xlu0 %3000
      %3002 = vrot.lane.b32.xlu0 %v2605, 19
      %v3003 = vpop.permute.xlu0 %3002
      %3004 = vrot.lane.b32.xlu0 %v2606, 19
      %v3005 = vpop.permute.xlu0 %3004
      %3006 = vrot.lane.b32.xlu0 %v2592, 19
      %v3007 = vpop.permute.xlu0 %3006
      %3008 = vrot.lane.b32.xlu0 %v2607, 19
      %v3009 = vpop.permute.xlu0 %3008
      %3010 = vrot.lane.b32.xlu0 %v2608, 19
      %v3011 = vpop.permute.xlu0 %3010
      %3012 = vrot.lane.b32.xlu0 %v2609, 19
      %v3013 = vpop.permute.xlu0 %3012
      %3014 = vrot.lane.b32.xlu0 %v2600, 19
      %v3015 = vpop.permute.xlu0 %3014
      %3016 = vrot.lane.b32.xlu0 %v2611, 19
      %v3017 = vpop.permute.xlu0 %3016
      %3018 = vrot.lane.b32.xlu0 %v2628, 19
      %v3019 = vpop.permute.xlu0 %3018
      %3020 = vrot.lane.b32.xlu0 %v2629, 19
      %v3021 = vpop.permute.xlu0 %3020
      %3022 = vrot.lane.b32.xlu0 %v2615, 19
      %v3023 = vpop.permute.xlu0 %3022
      %3024 = vrot.lane.b32.xlu0 %v2617, 19
      %v3025 = vpop.permute.xlu0 %3024
      %3026 = vrot.lane.b32.xlu0 %v2630, 19
      %v3027 = vpop.permute.xlu0 %3026
      %3028 = vrot.lane.b32.xlu0 %v2631, 19
      %v3029 = vpop.permute.xlu0 %3028
      %3030 = vrot.lane.b32.xlu0 %v2621, 19
      %v3031 = vpop.permute.xlu0 %3030
      %3032 = vrot.lane.b32.xlu0 %v2623, 19
      %v3033 = vpop.permute.xlu0 %3032
      %3034 = vrot.lane.b32.xlu0 %v2632, 19
      %v3035 = vpop.permute.xlu0 %3034
      %3036 = vrot.lane.b32.xlu0 %v2633, 19
      %v3037 = vpop.permute.xlu0 %3036
      %3038 = vrot.lane.b32.xlu0 %v2627, 19
      %v3039 = vpop.permute.xlu0 %3038
      %3040 = vrot.lane.b32.xlu0 %v2647, 19
      %v3041 = vpop.permute.xlu0 %3040
      %3042 = vrot.lane.b32.xlu0 %v2670, 19
      %v3043 = vpop.permute.xlu0 %3042
      %3044 = vrot.lane.b32.xlu0 %v2671, 19
      %v3045 = vpop.permute.xlu0 %3044
      %3046 = vrot.lane.b32.xlu0 %v2672, 19
      %v3047 = vpop.permute.xlu0 %3046
      %3048 = vrot.lane.b32.xlu0 %v2655, 19
      %v3049 = vpop.permute.xlu0 %3048
      %3050 = vrot.lane.b32.xlu0 %v2673, 19
      %v3051 = vpop.permute.xlu0 %3050
      %3052 = vrot.lane.b32.xlu0 %v2674, 19
      %v3053 = vpop.permute.xlu0 %3052
      %3054 = vrot.lane.b32.xlu0 %v2675, 19
      %v3055 = vpop.permute.xlu0 %3054
      %3056 = vrot.lane.b32.xlu0 %v2663, 19
      %v3057 = vpop.permute.xlu0 %3056
      %3058 = vrot.lane.b32.xlu0 %v2676, 19
      %v3059 = vpop.permute.xlu0 %3058
      %3060 = vrot.lane.b32.xlu0 %v2677, 19
      %v3061 = vpop.permute.xlu0 %3060
      %3062 = vrot.lane.b32.xlu0 %v2678, 19
      %v3063 = vpop.permute.xlu0 %3062
      %3064 = vrot.lane.b32.xlu0 %v2680, 19
      %v3065 = vpop.permute.xlu0 %3064
      %3066 = vrot.lane.b32.xlu0 %v2703, 19
      %v3067 = vpop.permute.xlu0 %3066
      %3068 = vrot.lane.b32.xlu0 %v2704, 19
      %v3069 = vpop.permute.xlu0 %3068
      %3070 = vrot.lane.b32.xlu0 %v2705, 19
      %v3071 = vpop.permute.xlu0 %3070
      %3072 = vrot.lane.b32.xlu0 %v2688, 19
      %v3073 = vpop.permute.xlu0 %3072
      %3074 = vrot.lane.b32.xlu0 %v2706, 19
      %v3075 = vpop.permute.xlu0 %3074
      %3076 = vrot.lane.b32.xlu0 %v2707, 19
      %v3077 = vpop.permute.xlu0 %3076
      %3078 = vrot.lane.b32.xlu0 %v2708, 19
      %v3079 = vpop.permute.xlu0 %3078
      %3080 = vrot.lane.b32.xlu0 %v2696, 19
      %v3081 = vpop.permute.xlu0 %3080
      %3082 = vrot.lane.b32.xlu0 %v2709, 19
      %v3083 = vpop.permute.xlu0 %3082
      %3084 = vrot.lane.b32.xlu0 %v2710, 19
      %v3085 = vpop.permute.xlu0 %3084
      %3086 = vrot.lane.b32.xlu0 %v2711, 19
      %v3087 = vpop.permute.xlu0 %3086
      %3088 = vrot.lane.b32.xlu0 %v2713, 19
      %v3089 = vpop.permute.xlu0 %3088
      %3090 = vrot.lane.b32.xlu0 %v2736, 19
      %v3091 = vpop.permute.xlu0 %3090
      %3092 = vrot.lane.b32.xlu0 %v2737, 19
      %v3093 = vpop.permute.xlu0 %3092
      %3094 = vrot.lane.b32.xlu0 %v2738, 19
      %v3095 = vpop.permute.xlu0 %3094
      %3096 = vrot.lane.b32.xlu0 %v2721, 19
      %v3097 = vpop.permute.xlu0 %3096
      %3098 = vrot.lane.b32.xlu0 %v2739, 19
      %v3099 = vpop.permute.xlu0 %3098
      %3100 = vrot.lane.b32.xlu0 %v2740, 19
      %v3101 = vpop.permute.xlu0 %3100
      %3102 = vrot.lane.b32.xlu0 %v2741, 19
      %v3103 = vpop.permute.xlu0 %3102
      %3104 = vrot.lane.b32.xlu0 %v2729, 19
      %v3105 = vpop.permute.xlu0 %3104
      %3106 = vrot.lane.b32.xlu0 %v2742, 19
      %v3107 = vpop.permute.xlu0 %3106
      %3108 = vrot.lane.b32.xlu0 %v2743, 19
      %v3109 = vpop.permute.xlu0 %3108
      %3110 = vrot.lane.b32.xlu0 %v2744, 19
      %v3111 = vpop.permute.xlu0 %3110
      %3112 = vrot.lane.b32.xlu0 %v2746, 19
      %v3113 = vpop.permute.xlu0 %3112
      %3114 = vrot.lane.b32.xlu0 %v2769, 19
      %v3115 = vpop.permute.xlu0 %3114
      %3116 = vrot.lane.b32.xlu0 %v2770, 19
      %v3117 = vpop.permute.xlu0 %3116
      %3118 = vrot.lane.b32.xlu0 %v2771, 19
      %v3119 = vpop.permute.xlu0 %3118
      %3120 = vrot.lane.b32.xlu0 %v2754, 19
      %v3121 = vpop.permute.xlu0 %3120
      %3122 = vrot.lane.b32.xlu0 %v2772, 19
      %v3123 = vpop.permute.xlu0 %3122
      %3124 = vrot.lane.b32.xlu0 %v2773, 19
      %v3125 = vpop.permute.xlu0 %3124
      %3126 = vrot.lane.b32.xlu0 %v2774, 19
      %v3127 = vpop.permute.xlu0 %3126
      %3128 = vrot.lane.b32.xlu0 %v2762, 19
      %v3129 = vpop.permute.xlu0 %3128
      %3130 = vrot.lane.b32.xlu0 %v2775, 19
      %v3131 = vpop.permute.xlu0 %3130
      %3132 = vrot.lane.b32.xlu0 %v2776, 19
      %v3133 = vpop.permute.xlu0 %3132
      %3134 = vrot.lane.b32.xlu0 %v2777, 19
      %v3135 = vpop.permute.xlu0 %3134
      %v3136 = vsel %vm622, %v2921, %v2923
      %v3137 = vsel %vm622, %v2923, %v2925
      %v3138 = vsel %vm622, %v2925, %v2927
      %v3139 = vsel %vm622, %v2929, %v2931
      %v3140 = vsel %vm622, %v2931, %v2933
      %v3141 = vsel %vm622, %v2933, %v2935
      %v3142 = vsel %vm622, %v2937, %v2939
      %v3143 = vsel %vm622, %v2939, %v2941
      %v3144 = vsel %vm622, %v2941, %v2943
      %v3145 = vsel %vm622, %v2945, %v2947
      %v3146 = vsel %vm622, %v2947, %v2949
      %v3147 = vsel %vm622, %v2949, %v2951
      %v3148 = vsel %vm622, %v2953, %v2955
      %v3149 = vsel %vm622, %v2955, %v2957
      %v3150 = vsel %vm622, %v2957, %v2959
      %v3151 = vsel %vm622, %v2961, %v2963
      %v3152 = vsel %vm622, %v2963, %v2965
      %v3153 = vsel %vm622, %v2965, %v2967
      %v3154 = vsel %vm622, %v2969, %v2971
      %v3155 = vsel %vm622, %v2971, %v2973
      %v3156 = vsel %vm622, %v2973, %v2975
      %v3157 = vsel %vm622, %v2977, %v2979
      %v3158 = vsel %vm622, %v2979, %v2981
      %v3159 = vsel %vm622, %v2981, %v2983
      %v3160 = vsel %vm622, %v2985, %v2987
      %v3161 = vsel %vm622, %v2987, %v2989
      %v3162 = vsel %vm622, %v2989, %v2991
      %v3163 = vsel %vm622, %v2993, %v2995
      %v3164 = vsel %vm622, %v2995, %v2997
      %v3165 = vsel %vm622, %v2997, %v2999
      %v3166 = vsel %vm622, %v3001, %v3003
      %v3167 = vsel %vm622, %v3003, %v3005
      %v3168 = vsel %vm622, %v3005, %v3007
      %v3169 = vsel %vm622, %v3009, %v3011
      %v3170 = vsel %vm622, %v3011, %v3013
      %v3171 = vsel %vm622, %v3013, %v3015
      %v3172 = vsel %vm622, %v3017, %v3019
      %v3173 = vsel %vm622, %v3019, %v3021
      %v3174 = vsel %vm622, %v3021, %v3023
      %v3175 = vsel %vm622, %v3025, %v3027
      %v3176 = vsel %vm622, %v3027, %v3029
      %v3177 = vsel %vm622, %v3029, %v3031
      %v3178 = vsel %vm622, %v3033, %v3035
      %v3179 = vsel %vm622, %v3035, %v3037
      %v3180 = vsel %vm622, %v3037, %v3039
      %v3181 = vsel %vm622, %v3041, %v3043
      %v3182 = vsel %vm622, %v3043, %v3045
      %v3183 = vsel %vm622, %v3045, %v3047
      %v3184 = vsel %vm622, %v3049, %v3051
      %v3185 = vsel %vm622, %v3051, %v3053
      %v3186 = vsel %vm622, %v3053, %v3055
      %v3187 = vsel %vm622, %v3057, %v3059
      %v3188 = vsel %vm622, %v3059, %v3061
      %v3189 = vsel %vm622, %v3061, %v3063
      %v3190 = vsel %vm622, %v3065, %v3067
      %v3191 = vsel %vm622, %v3067, %v3069
      %v3192 = vsel %vm622, %v3069, %v3071
      %v3193 = vsel %vm622, %v3073, %v3075
      %v3194 = vsel %vm622, %v3075, %v3077
      %v3195 = vsel %vm622, %v3077, %v3079
      %v3196 = vsel %vm622, %v3081, %v3083
      %v3197 = vsel %vm622, %v3083, %v3085
      %v3198 = vsel %vm622, %v3085, %v3087
      %v3199 = vsel %vm622, %v3089, %v3091
      %v3200 = vsel %vm622, %v3091, %v3093
      %v3201 = vsel %vm622, %v3093, %v3095
      %v3202 = vsel %vm622, %v3097, %v3099
      %v3203 = vsel %vm622, %v3099, %v3101
      %v3204 = vsel %vm622, %v3101, %v3103
      %v3205 = vsel %vm622, %v3105, %v3107
      %v3206 = vsel %vm622, %v3107, %v3109
      %v3207 = vsel %vm622, %v3109, %v3111
      %v3208 = vsel %vm622, %v3113, %v3115
      %v3209 = vsel %vm622, %v3115, %v3117
      %v3210 = vsel %vm622, %v3117, %v3119
      %v3211 = vsel %vm622, %v3121, %v3123
      %v3212 = vsel %vm622, %v3123, %v3125
      %v3213 = vsel %vm622, %v3125, %v3127
      %v3214 = vsel %vm622, %v3129, %v3131
      %v3215 = vsel %vm622, %v3131, %v3133
      %v3216 = vsel %vm622, %v3133, %v3135
      %v3299 = vsel %vm2031, %v2895, 0
      %v3302 = vsel %vm2031, %v2899, 0
      %v3305 = vsel %vm2031, %v2903, 0
      %v3308 = vsel %vm2031, %v2907, 0
      %3310 = vmatprep.subr.bf16.mxu0 %v3137
      %3311 = vmatpush1.bf16.msra.mxu0 %v3136
      %3312 = vmatprep.subr.bf16.mxu0 %v3140
      %3313 = vmatpush1.bf16.msra.mxu0 %v3139
      %3314 = vmatprep.subr.bf16.mxu0 %v3143
      %3315 = vmatpush1.bf16.msra.mxu0 %v3142
      %3316 = vmatprep.subr.bf16.mxu0 %v3146
      %3317 = vmatpush1.bf16.msra.mxu0 %v3145
      %3318 = vmatprep.subr.bf16.mxu0 %v3149
      %3319 = vmatpush1.bf16.msra.mxu0 %v3148
      %3320 = vmatprep.subr.bf16.mxu0 %v3152
      %3321 = vmatpush1.bf16.msra.mxu0 %v3151
      %3322 = vmatprep.subr.bf16.mxu0 %v3155
      %3323 = vmatpush1.bf16.msra.mxu0 %v3154
      %3324 = vmatprep.subr.bf16.mxu0 %v3158
      %3325 = vmatpush1.bf16.msra.mxu0 %v3157
      %3326 = vmatprep.subr.bf16.mxu0 %v3161
      %3327 = vmatpush1.bf16.msra.mxu0 %v3160
      %3328 = vmatprep.subr.bf16.mxu0 %v3164
      %3329 = vmatpush1.bf16.msra.mxu0 %v3163
      %3330 = vmatprep.subr.bf16.mxu0 %v3167
      %3331 = vmatpush1.bf16.msra.mxu0 %v3166
      %3332 = vmatprep.subr.bf16.mxu0 %v3170
      %3333 = vmatpush1.bf16.msra.mxu0 %v3169
      %3334 = vmatprep.subr.bf16.mxu0 %v3173
      %3335 = vmatpush1.bf16.msra.mxu0 %v3172
      %3336 = vmatprep.subr.bf16.mxu0 %v3176
      %3337 = vmatpush1.bf16.msra.mxu0 %v3175
      %3338 = vmatprep.subr.bf16.mxu0 %v3179
      %3339 = vmatpush1.bf16.msra.mxu0 %v3178
      %3340 = vmatprep.subr.bf16.mxu0 %v3182
      %3341 = vmatpush1.bf16.msra.mxu0 %v3181
      %3342 = vmatprep.mubr.bf16.mxu0 %v2893
      %3343 = vmatmul.mubr.bf16.gmra.mrb[0].mxu0 %v2892
      %v3344 = vpop.f32.mrb[0].mxu0
      %v3345 = vadd.f32 %v2807, %v3344
      %v3346 = vpop.f32.mrb[0].mxu0
      %v3347 = vadd.f32 %v2807, %v3346
      %v3348 = vpop.f32.mrb[0].mxu0
      %v3349 = vadd.f32 %v2812, %v3348
      %v3350 = vpop.f32.mrb[0].mxu0
      %v3351 = vadd.f32 %v2812, %v3350
      %3352 = vmatprep.mubr.bf16.mxu0 %v2897
      %3353 = vmatmul.mubr.bf16.gmra.mrb[0].mxu0 %v2896
      %v3354 = vpop.f32.mrb[0].mxu0
      %v3355 = vadd.f32 %v2817, %v3354
      %v3356 = vpop.f32.mrb[0].mxu0
      %v3357 = vadd.f32 %v2817, %v3356
      %v3358 = vpop.f32.mrb[0].mxu0
      %v3359 = vadd.f32 %v2822, %v3358
      %v3360 = vpop.f32.mrb[0].mxu0
      %v3361 = vadd.f32 %v2822, %v3360
      %3362 = vmatprep.mubr.bf16.mxu0 %v2901
      %3363 = vmatmul.mubr.bf16.gmra.mrb[0].mxu0 %v2900
      %v3364 = vpop.f32.mrb[0].mxu0
      %v3365 = vadd.f32 %v2827, %v3364
      %v3366 = vpop.f32.mrb[0].mxu0
      %v3367 = vadd.f32 %v2827, %v3366
      %v3368 = vpop.f32.mrb[0].mxu0
      %v3369 = vadd.f32 %v2832, %v3368
      %v3370 = vpop.f32.mrb[0].mxu0
      %v3371 = vadd.f32 %v2832, %v3370
      %3372 = vmatprep.mubr.bf16.mxu0 %v2905
      %3373 = vmatmul.mubr.bf16.gmra.mrb[0].mxu0 %v2904
      %v3374 = vpop.f32.mrb[0].mxu0
      %v3375 = vadd.f32 %v2837, %v3374
      %v3376 = vpop.f32.mrb[0].mxu0
      %v3377 = vadd.f32 %v2837, %v3376
      %v3378 = vpop.f32.mrb[0].mxu0
      %v3379 = vadd.f32 %v2842, %v3378
      %v3380 = vpop.f32.mrb[0].mxu0
      %v3381 = vadd.f32 %v2842, %v3380
      %3382 = vdwg.mxu0
      %3383 = vmatprep.subr.bf16.mxu0 %v3185
      %3384 = vmatpush1.bf16.msra.mxu0 %v3184
      %3385 = vmatprep.subr.bf16.mxu0 %v3188
      %3386 = vmatpush1.bf16.msra.mxu0 %v3187
      %3387 = vmatprep.subr.bf16.mxu0 %v3191
      %3388 = vmatpush1.bf16.msra.mxu0 %v3190
      %3389 = vmatprep.subr.bf16.mxu0 %v3194
      %3390 = vmatpush1.bf16.msra.mxu0 %v3193
      %3391 = vmatprep.subr.bf16.mxu0 %v3197
      %3392 = vmatpush1.bf16.msra.mxu0 %v3196
      %3393 = vmatprep.subr.bf16.mxu0 %v3200
      %3394 = vmatpush1.bf16.msra.mxu0 %v3199
      %3395 = vmatprep.subr.bf16.mxu0 %v3203
      %3396 = vmatpush1.bf16.msra.mxu0 %v3202
      %3397 = vmatprep.subr.bf16.mxu0 %v3206
      %3398 = vmatpush1.bf16.msra.mxu0 %v3205
      %3399 = vmatprep.subr.bf16.mxu0 %v3209
      %3400 = vmatpush1.bf16.msra.mxu0 %v3208
      %3401 = vmatprep.subr.bf16.mxu0 %v3212
      %3402 = vmatpush1.bf16.msra.mxu0 %v3211
      %3403 = vmatprep.subr.bf16.mxu0 %v3215
      %3404 = vmatpush1.bf16.msra.mxu0 %v3214
      %3405 = vmatprep.subr.bf16.mxu0 0
      %3406 = vmatpush1.bf16.msra.mxu0 0
      %3407 = vmatprep.subr.bf16.mxu0 0
      %3408 = vmatpush1.bf16.msra.mxu0 0
      %3409 = vmatprep.subr.bf16.mxu0 0
      %3410 = vmatpush1.bf16.msra.mxu0 0
      %3411 = vmatprep.subr.bf16.mxu0 0
      %3412 = vmatpush1.bf16.msra.mxu0 0
      %3413 = vmatprep.subr.bf16.mxu0 0
      %3414 = vmatpush1.bf16.msra.mxu0 0
      %3415 = vmatprep.mubr.bf16.mxu0 %v3299
      %3416 = vmatmul.mubr.bf16.gmra.mrb[0].mxu0 %v2894
      %v3417 = vpop.f32.mrb[0].mxu0
      %v3418 = vadd.f32 %v3345, %v3417
      %v3419 = vpop.f32.mrb[0].mxu0
      %v3420 = vadd.f32 %v3347, %v3419
      %v3421 = vpop.f32.mrb[0].mxu0
      %v3422 = vadd.f32 %v3349, %v3421
      %v3423 = vpop.f32.mrb[0].mxu0
      %v3424 = vadd.f32 %v3351, %v3423
      %3425 = vmatprep.mubr.bf16.mxu0 %v3302
      %3426 = vmatmul.mubr.bf16.gmra.mrb[0].mxu0 %v2898
      %v3427 = vpop.f32.mrb[0].mxu0
      %v3428 = vadd.f32 %v3355, %v3427
      %v3429 = vpop.f32.mrb[0].mxu0
      %v3430 = vadd.f32 %v3357, %v3429
      %v3431 = vpop.f32.mrb[0].mxu0
      %v3432 = vadd.f32 %v3359, %v3431
      %v3433 = vpop.f32.mrb[0].mxu0
      %v3434 = vadd.f32 %v3361, %v3433
      %3435 = vmatprep.mubr.bf16.mxu0 %v3305
      %3436 = vmatmul.mubr.bf16.gmra.mrb[0].mxu0 %v2902
      %v3437 = vpop.f32.mrb[0].mxu0
      %v3438 = vadd.f32 %v3365, %v3437
      %v3439 = vpop.f32.mrb[0].mxu0
      %v3440 = vadd.f32 %v3367, %v3439
      %v3441 = vpop.f32.mrb[0].mxu0
      %v3442 = vadd.f32 %v3369, %v3441
      %v3443 = vpop.f32.mrb[0].mxu0
      %v3444 = vadd.f32 %v3371, %v3443
      %3445 = vmatprep.mubr.bf16.mxu0 %v3308
      %3446 = vmatmul.mubr.bf16.gmra.mrb[0].mxu0 %v2906
      %v3447 = vpop.f32.mrb[0].mxu0
      %v3448 = vadd.f32 %v3375, %v3447
      %v3449 = vpop.f32.mrb[0].mxu0
      %v3450 = vadd.f32 %v3377, %v3449
      %v3451 = vpop.f32.mrb[0].mxu0
      %v3452 = vadd.f32 %v3379, %v3451
      %v3453 = vpop.f32.mrb[0].mxu0
      %v3454 = vadd.f32 %v3381, %v3453
      %3455 = vdwg.mxu0
      %3456 = vmatprep.subr.bf16.mxu0 0
      %3457 = vmatpush1.bf16.msra.mxu0 %v3138
      %3458 = vmatprep.subr.bf16.mxu0 0
      %3459 = vmatpush1.bf16.msra.mxu0 %v3141
      %3460 = vmatprep.subr.bf16.mxu0 0
      %3461 = vmatpush1.bf16.msra.mxu0 %v3144
      %3462 = vmatprep.subr.bf16.mxu0 0
      %3463 = vmatpush1.bf16.msra.mxu0 %v3147
      %3464 = vmatprep.subr.bf16.mxu0 0
      %3465 = vmatpush1.bf16.msra.mxu0 %v3150
      %3466 = vmatprep.subr.bf16.mxu0 0
      %3467 = vmatpush1.bf16.msra.mxu0 %v3153
      %3468 = vmatprep.subr.bf16.mxu0 0
      %3469 = vmatpush1.bf16.msra.mxu0 %v3156
      %3470 = vmatprep.subr.bf16.mxu0 0
      %3471 = vmatpush1.bf16.msra.mxu0 %v3159
      %3472 = vmatprep.subr.bf16.mxu0 0
      %3473 = vmatpush1.bf16.msra.mxu0 %v3162
      %3474 = vmatprep.subr.bf16.mxu0 0
      %3475 = vmatpush1.bf16.msra.mxu0 %v3165
      %3476 = vmatprep.subr.bf16.mxu0 0
      %3477 = vmatpush1.bf16.msra.mxu0 %v3168
      %3478 = vmatprep.subr.bf16.mxu0 0
      %3479 = vmatpush1.bf16.msra.mxu0 %v3171
      %3480 = vmatprep.subr.bf16.mxu0 0
      %3481 = vmatpush1.bf16.msra.mxu0 %v3174
      %3482 = vmatprep.subr.bf16.mxu0 0
      %3483 = vmatpush1.bf16.msra.mxu0 %v3177
      %3484 = vmatprep.subr.bf16.mxu0 0
      %3485 = vmatpush1.bf16.msra.mxu0 %v3180
      %3486 = vmatprep.subr.bf16.mxu0 0
      %3487 = vmatpush1.bf16.msra.mxu0 %v3183
      %3488 = vmatprep.mubr.bf16.mxu0 %v2893
      %3489 = vmatmul.mubr.bf16.gmra.mrb[0].mxu0 %v2892
      %v3490 = vpop.f32.mrb[0].mxu0
      %v3491 = vadd.f32 %v2807, %v3490
      %v3492 = vpop.f32.mrb[0].mxu0
      %v3493 = vpop.f32.mrb[0].mxu0
      %v3494 = vadd.f32 %v2812, %v3493
      %v3495 = vpop.f32.mrb[0].mxu0
      %3496 = vmatprep.mubr.bf16.mxu0 %v2897
      %3497 = vmatmul.mubr.bf16.gmra.mrb[0].mxu0 %v2896
      %v3498 = vpop.f32.mrb[0].mxu0
      %v3499 = vadd.f32 %v2817, %v3498
      %v3500 = vpop.f32.mrb[0].mxu0
      %v3501 = vpop.f32.mrb[0].mxu0
      %v3502 = vadd.f32 %v2822, %v3501
      %v3503 = vpop.f32.mrb[0].mxu0
      %3504 = vmatprep.mubr.bf16.mxu0 %v2901
      %3505 = vmatmul.mubr.bf16.gmra.mrb[0].mxu0 %v2900
      %v3506 = vpop.f32.mrb[0].mxu0
      %v3507 = vadd.f32 %v2827, %v3506
      %v3508 = vpop.f32.mrb[0].mxu0
      %v3509 = vpop.f32.mrb[0].mxu0
      %v3510 = vadd.f32 %v2832, %v3509
      %v3511 = vpop.f32.mrb[0].mxu0
      %3512 = vmatprep.mubr.bf16.mxu0 %v2905
      %3513 = vmatmul.mubr.bf16.gmra.mrb[0].mxu0 %v2904
      %v3514 = vpop.f32.mrb[0].mxu0
      %v3515 = vadd.f32 %v2837, %v3514
      %v3516 = vpop.f32.mrb[0].mxu0
      %v3517 = vpop.f32.mrb[0].mxu0
      %v3518 = vadd.f32 %v2842, %v3517
      %v3519 = vpop.f32.mrb[0].mxu0
      %3520 = vdwg.mxu0
      %3521 = vmatprep.subr.bf16.mxu0 0
      %3522 = vmatpush1.bf16.msra.mxu0 %v3186
      %3523 = vmatprep.subr.bf16.mxu0 0
      %3524 = vmatpush1.bf16.msra.mxu0 %v3189
      %3525 = vmatprep.subr.bf16.mxu0 0
      %3526 = vmatpush1.bf16.msra.mxu0 %v3192
      %3527 = vmatprep.subr.bf16.mxu0 0
      %3528 = vmatpush1.bf16.msra.mxu0 %v3195
      %3529 = vmatprep.subr.bf16.mxu0 0
      %3530 = vmatpush1.bf16.msra.mxu0 %v3198
      %3531 = vmatprep.subr.bf16.mxu0 0
      %3532 = vmatpush1.bf16.msra.mxu0 %v3201
      %3533 = vmatprep.subr.bf16.mxu0 0
      %3534 = vmatpush1.bf16.msra.mxu0 %v3204
      %3535 = vmatprep.subr.bf16.mxu0 0
      %3536 = vmatpush1.bf16.msra.mxu0 %v3207
      %3537 = vmatprep.subr.bf16.mxu0 0
      %3538 = vmatpush1.bf16.msra.mxu0 %v3210
      %3539 = vmatprep.subr.bf16.mxu0 0
      %3540 = vmatpush1.bf16.msra.mxu0 %v3213
      %3541 = vmatprep.subr.bf16.mxu0 0
      %3542 = vmatpush1.bf16.msra.mxu0 %v3216
      %3543 = vmatprep.subr.bf16.mxu0 0
      %3544 = vmatpush1.bf16.msra.mxu0 0
      %3545 = vmatprep.subr.bf16.mxu0 0
      %3546 = vmatpush1.bf16.msra.mxu0 0
      %3547 = vmatprep.subr.bf16.mxu0 0
      %3548 = vmatpush1.bf16.msra.mxu0 0
      %3549 = vmatprep.subr.bf16.mxu0 0
      %3550 = vmatpush1.bf16.msra.mxu0 0
      %3551 = vmatprep.subr.bf16.mxu0 0
      %3552 = vmatpush1.bf16.msra.mxu0 0
      %3553 = vmatprep.mubr.bf16.mxu0 %v3299
      %3554 = vmatmul.mubr.bf16.gmra.mrb[0].mxu0 %v2894
      %v3555 = vpop.f32.mrb[0].mxu0
      %v3556 = vadd.f32 %v3491, %v3555
      %v3557 = vpop.f32.mrb[0].mxu0
      %v3558 = vpop.f32.mrb[0].mxu0
      %v3559 = vadd.f32 %v3494, %v3558
      %v3560 = vpop.f32.mrb[0].mxu0
      %3561 = vmatprep.mubr.bf16.mxu0 %v3302
      %3562 = vmatmul.mubr.bf16.gmra.mrb[0].mxu0 %v2898
      %v3563 = vpop.f32.mrb[0].mxu0
      %v3564 = vadd.f32 %v3499, %v3563
      %v3565 = vpop.f32.mrb[0].mxu0
      %v3566 = vpop.f32.mrb[0].mxu0
      %v3567 = vadd.f32 %v3502, %v3566
      %v3568 = vpop.f32.mrb[0].mxu0
      %3569 = vmatprep.mubr.bf16.mxu0 %v3305
      %3570 = vmatmul.mubr.bf16.gmra.mrb[0].mxu0 %v2902
      %v3571 = vpop.f32.mrb[0].mxu0
      %v3572 = vadd.f32 %v3507, %v3571
      %v3573 = vpop.f32.mrb[0].mxu0
      %v3574 = vpop.f32.mrb[0].mxu0
      %v3575 = vadd.f32 %v3510, %v3574
      %v3576 = vpop.f32.mrb[0].mxu0
      %3577 = vmatprep.mubr.bf16.mxu0 %v3308
      %3578 = vmatmul.mubr.bf16.gmra.mrb[0].mxu0 %v2906
      %v3579 = vpop.f32.mrb[0].mxu0
      %v3580 = vadd.f32 %v3515, %v3579
      %v3581 = vpop.f32.mrb[0].mxu0
      %v3582 = vpop.f32.mrb[0].mxu0
      %v3583 = vadd.f32 %v3518, %v3582
      %v3584 = vpop.f32.mrb[0].mxu0
      %3585 = vdwg.mxu0
      %v3586 = vmax.f32 %v3418, 0.0
      %v3587 = vmax.f32 %v3420, 0.0
      %v3588 = vmax.f32 %v3556, 0.0
      %v3589 = vmax.f32 %v3422, 0.0
      %v3590 = vmax.f32 %v3424, 0.0
      %v3591 = vmax.f32 %v3559, 0.0
      %v3592 = vmax.f32 %v3428, 0.0
      %v3593 = vmax.f32 %v3430, 0.0
      %v3594 = vmax.f32 %v3564, 0.0
      %v3595 = vmax.f32 %v3432, 0.0
      %v3596 = vmax.f32 %v3434, 0.0
      %v3597 = vmax.f32 %v3567, 0.0
      %v3598 = vmax.f32 %v3438, 0.0
      %v3599 = vmax.f32 %v3440, 0.0
      %v3600 = vmax.f32 %v3572, 0.0
      %v3601 = vmax.f32 %v3442, 0.0
      %v3602 = vmax.f32 %v3444, 0.0
      %v3603 = vmax.f32 %v3575, 0.0
      %v3604 = vmax.f32 %v3448, 0.0
      %v3605 = vmax.f32 %v3450, 0.0
      %v3606 = vmax.f32 %v3580, 0.0
      %v3607 = vmax.f32 %v3452, 0.0
      %v3608 = vmax.f32 %v3454, 0.0
      %v3609 = vmax.f32 %v3583, 0.0
      %s3610 = scalar_lea.vmem %s8, 8
      %v3611 = vld [vmem:[%s3610] sm:$0xf]
      %v3612 = vld [vmem:[%s3610 + $0x4] sm:$0xf]
      %v3613 = vpack.c.bf16 %v3589, %v3586
      %v3614 = vpack.c.bf16 %v3590, %v3587
      %v3615 = vpack.c.bf16 %v3591, %v3588
      %v3616 = vpack.c.bf16 %v3595, %v3592
      %v3617 = vpack.c.bf16 %v3596, %v3593
      %v3618 = vpack.c.bf16 %v3597, %v3594
      %v3619 = vpack.c.bf16 %v3601, %v3598
      %v3620 = vpack.c.bf16 %v3602, %v3599
      %v3621 = vpack.c.bf16 %v3603, %v3600
      %v3622 = vpack.c.bf16 %v3607, %v3604
      %v3623 = vpack.c.bf16 %v3608, %v3605
      %v3624 = vpack.c.bf16 %v3609, %v3606
      %s3625 = scalar_lea.vmem %s9, 16
      %v3626 = vld [vmem:[%s3625] sm:$0xff]
      %v3627 = vld [vmem:[%s3625 + $0x8] sm:$0xff]
      %3629 = vset.pattern.permute.xlu0 0
      %3630 = vperm.xlu0 %3629, %v3626
      %v3631 = vpop.permute.xlu0 %3630
      %3634 = vset.pattern.permute.xlu0 0
      %3635 = vperm.xlu0 %3634, %v3627
      %v3636 = vpop.permute.xlu0 %3635
      %v3640 = vunpack.c.l.b16 %v3611
      %v3641 = vunpack.c.l.b16 %v3612
      %v3642 = vpack.c.b16 %v3641, %v3640
      %v3644 = vsel %vm2375, %v3642, 0
      %3646 = vmatprep.subr.bf16.mxu0 %v3614
      %3647 = vmatpush1.bf16.msra.mxu0 %v3613
      %3648 = vmatprep.subr.bf16.mxu0 %v3617
      %3649 = vmatpush1.bf16.msra.mxu0 %v3616
      %3650 = vmatprep.subr.bf16.mxu0 %v3620
      %3651 = vmatpush1.bf16.msra.mxu0 %v3619
      %3652 = vmatprep.subr.bf16.mxu0 %v3623
      %3653 = vmatpush1.bf16.msra.mxu0 %v3622
      %3654 = vmatprep.subr.bf16.mxu0 0
      %3655 = vmatpush1.bf16.msra.mxu0 0
      %3656 = vmatprep.subr.bf16.mxu0 0
      %3657 = vmatpush1.bf16.msra.mxu0 0
      %3658 = vmatprep.subr.bf16.mxu0 0
      %3659 = vmatpush1.bf16.msra.mxu0 0
      %3660 = vmatprep.subr.bf16.mxu0 0
      %3661 = vmatpush1.bf16.msra.mxu0 0
      %3662 = vmatprep.subr.bf16.mxu0 0
      %3663 = vmatpush1.bf16.msra.mxu0 0
      %3664 = vmatprep.subr.bf16.mxu0 0
      %3665 = vmatpush1.bf16.msra.mxu0 0
      %3666 = vmatprep.subr.bf16.mxu0 0
      %3667 = vmatpush1.bf16.msra.mxu0 0
      %3668 = vmatprep.subr.bf16.mxu0 0
      %3669 = vmatpush1.bf16.msra.mxu0 0
      %3670 = vmatprep.subr.bf16.mxu0 0
      %3671 = vmatpush1.bf16.msra.mxu0 0
      %3672 = vmatprep.subr.bf16.mxu0 0
      %3673 = vmatpush1.bf16.msra.mxu0 0
      %3674 = vmatprep.subr.bf16.mxu0 0
      %3675 = vmatpush1.bf16.msra.mxu0 0
      %3676 = vmatprep.subr.bf16.mxu0 0
      %3677 = vmatpush1.bf16.msra.mxu0 0
      %3678 = vmatprep.mubr.bf16.mxu0 0
      %3679 = vmatmul.mubr.bf16.gmra.mrb[0].mxu0 %v3644
      %v3680 = vpop.f32.mrb[0].mxu0
      %v3681 = vadd.f32 %v3631, %v3680
      %v3682 = vpop.f32.mrb[0].mxu0
      %v3683 = vadd.f32 %v3631, %v3682
      %v3684 = vpop.f32.mrb[0].mxu0
      %v3685 = vadd.f32 %v3636, %v3684
      %v3686 = vpop.f32.mrb[0].mxu0
      %v3687 = vadd.f32 %v3636, %v3686
      %3688 = vdwg.mxu0
      %3689 = vmatprep.subr.bf16.mxu0 0
      %3690 = vmatpush1.bf16.msra.mxu0 %v3615
      %3691 = vmatprep.subr.bf16.mxu0 0
      %3692 = vmatpush1.bf16.msra.mxu0 %v3618
      %3693 = vmatprep.subr.bf16.mxu0 0
      %3694 = vmatpush1.bf16.msra.mxu0 %v3621
      %3695 = vmatprep.subr.bf16.mxu0 0
      %3696 = vmatpush1.bf16.msra.mxu0 %v3624
      %3697 = vmatprep.subr.bf16.mxu0 0
      %3698 = vmatpush1.bf16.msra.mxu0 0
      %3699 = vmatprep.subr.bf16.mxu0 0
      %3700 = vmatpush1.bf16.msra.mxu0 0
      %3701 = vmatprep.subr.bf16.mxu0 0
      %3702 = vmatpush1.bf16.msra.mxu0 0
      %3703 = vmatprep.subr.bf16.mxu0 0
      %3704 = vmatpush1.bf16.msra.mxu0 0
      %3705 = vmatprep.subr.bf16.mxu0 0
      %3706 = vmatpush1.bf16.msra.mxu0 0
      %3707 = vmatprep.subr.bf16.mxu0 0
      %3708 = vmatpush1.bf16.msra.mxu0 0
      %3709 = vmatprep.subr.bf16.mxu0 0
      %3710 = vmatpush1.bf16.msra.mxu0 0
      %3711 = vmatprep.subr.bf16.mxu0 0
      %3712 = vmatpush1.bf16.msra.mxu0 0
      %3713 = vmatprep.subr.bf16.mxu0 0
      %3714 = vmatpush1.bf16.msra.mxu0 0
      %3715 = vmatprep.subr.bf16.mxu0 0
      %3716 = vmatpush1.bf16.msra.mxu0 0
      %3717 = vmatprep.subr.bf16.mxu0 0
      %3718 = vmatpush1.bf16.msra.mxu0 0
      %3719 = vmatprep.subr.bf16.mxu0 0
      %3720 = vmatpush1.bf16.msra.mxu0 0
      %3721 = vmatprep.mubr.bf16.mxu0 0
      %3722 = vmatmul.mubr.bf16.gmra.mrb[0].mxu0 %v3644
      %v3723 = vpop.f32.mrb[0].mxu0
      %v3724 = vadd.f32 %v3631, %v3723
      %v3725 = vpop.f32.mrb[0].mxu0
      %v3726 = vpop.f32.mrb[0].mxu0
      %v3727 = vadd.f32 %v3636, %v3726
      %v3728 = vpop.f32.mrb[0].mxu0
      %3729 = vdwg.mxu0
      %v3730 = vmul.f32 %v3681, %v775
      %v3731 = vmul.f32 %v3683, %v779
      %v3732 = vmul.f32 %v3724, %v783
      %v3733 = vmul.f32 %v3685, %v775
      %v3734 = vmul.f32 %v3687, %v779
      %v3735 = vmul.f32 %v3727, %v783
      %v3736 = vpack.c.bf16 %v3733, %v3730
      %v3737 = vpack.c.bf16 %v3734, %v3731
      %v3738 = vpack.c.bf16 %v3735, %v3732
      %3739 = vst [vmem:[#allocation2 + $0x8] sm:$0xff] %v3736
      %3740 = vst [vmem:[#allocation2 + $0x10] sm:$0xff] %v3737
      %3741 = vst [vmem:[#allocation2 + $0x18] sm:$0xff] %v3738
      %v3742 = vld [vmem:[#allocation2] sm:$0xff]
      %v3743 = vld [vmem:[#allocation2 + $0x8] sm:$0xff]
      %v3744 = vld [vmem:[#allocation2 + $0x10] sm:$0xff]
      %v3745 = vld [vmem:[#allocation2 + $0x18] sm:$0xff]
      %v3746 = vld [vmem:[#allocation2 + $0x28] sm:$0xff]
      %v3747 = vld [vmem:[#allocation2 + $0x30] sm:$0xff]
      %v3748 = vld [vmem:[#allocation2 + $0x38] sm:$0xff]
      %v3749 = vld [vmem:[#allocation2 + $0x40] sm:$0xff]
      %v3750 = vld [vmem:[#allocation2 + $0x50] sm:$0xff]
      %v3751 = vld [vmem:[#allocation2 + $0x58] sm:$0xff]
      %v3752 = vld [vmem:[#allocation2 + $0x60] sm:$0xff]
      %v3753 = vld [vmem:[#allocation2 + $0x68] sm:$0xff]
      %v3754 = vld [vmem:[#allocation2 + $0x8] sm:$0xff]
      %v3755 = vld [vmem:[#allocation2 + $0x10] sm:$0xff]
      %v3756 = vld [vmem:[#allocation2 + $0x18] sm:$0xff]
      %v3757 = vld [vmem:[#allocation2 + $0x20] sm:$0xff]
      %v3758 = vld [vmem:[#allocation2 + $0x30] sm:$0xff]
      %v3759 = vld [vmem:[#allocation2 + $0x38] sm:$0xff]
      %v3760 = vld [vmem:[#allocation2 + $0x40] sm:$0xff]
      %v3761 = vld [vmem:[#allocation2 + $0x48] sm:$0xff]
      %v3762 = vld [vmem:[#allocation2 + $0x58] sm:$0xff]
      %v3763 = vld [vmem:[#allocation2 + $0x60] sm:$0xff]
      %v3764 = vld [vmem:[#allocation2 + $0x68] sm:$0xff]
      %v3765 = vld [vmem:[#allocation2 + $0x70] sm:$0xff]
      %3778 = vrot.lane.b32.xlu0 %v3742, 127
      %v3779 = vpop.permute.xlu0 %3778
      %3780 = vrot.lane.b32.xlu0 %v3743, 127
      %v3781 = vpop.permute.xlu0 %3780
      %3782 = vrot.lane.b32.xlu0 %v3744, 127
      %v3783 = vpop.permute.xlu0 %3782
      %3784 = vrot.lane.b32.xlu0 %v3745, 127
      %v3785 = vpop.permute.xlu0 %3784
      %3786 = vrot.lane.b32.xlu0 %v3746, 127
      %v3787 = vpop.permute.xlu0 %3786
      %3788 = vrot.lane.b32.xlu0 %v3747, 127
      %v3789 = vpop.permute.xlu0 %3788
      %3790 = vrot.lane.b32.xlu0 %v3748, 127
      %v3791 = vpop.permute.xlu0 %3790
      %3792 = vrot.lane.b32.xlu0 %v3749, 127
      %v3793 = vpop.permute.xlu0 %3792
      %3794 = vrot.lane.b32.xlu0 %v3750, 127
      %v3795 = vpop.permute.xlu0 %3794
      %3796 = vrot.lane.b32.xlu0 %v3751, 127
      %v3797 = vpop.permute.xlu0 %3796
      %3798 = vrot.lane.b32.xlu0 %v3752, 127
      %v3799 = vpop.permute.xlu0 %3798
      %3800 = vrot.lane.b32.xlu0 %v3753, 127
      %v3801 = vpop.permute.xlu0 %3800
      %v3802 = vsel %vm413, %v3779, %v3781
      %v3803 = vsel %vm413, %v3781, %v3783
      %v3804 = vsel %vm413, %v3783, %v3785
      %v3805 = vsel %vm413, %v3787, %v3789
      %v3806 = vsel %vm413, %v3789, %v3791
      %v3807 = vsel %vm413, %v3791, %v3793
      %v3808 = vsel %vm413, %v3795, %v3797
      %v3809 = vsel %vm413, %v3797, %v3799
      %v3810 = vsel %vm413, %v3799, %v3801
      %3811 = vrot.lane.b32.xlu0 %v3742, 126
      %v3812 = vpop.permute.xlu0 %3811
      %3813 = vrot.lane.b32.xlu0 %v3743, 126
      %v3814 = vpop.permute.xlu0 %3813
      %3815 = vrot.lane.b32.xlu0 %v3744, 126
      %v3816 = vpop.permute.xlu0 %3815
      %3817 = vrot.lane.b32.xlu0 %v3745, 126
      %v3818 = vpop.permute.xlu0 %3817
      %3819 = vrot.lane.b32.xlu0 %v3746, 126
      %v3820 = vpop.permute.xlu0 %3819
      %3821 = vrot.lane.b32.xlu0 %v3747, 126
      %v3822 = vpop.permute.xlu0 %3821
      %3823 = vrot.lane.b32.xlu0 %v3748, 126
      %v3824 = vpop.permute.xlu0 %3823
      %3825 = vrot.lane.b32.xlu0 %v3749, 126
      %v3826 = vpop.permute.xlu0 %3825
      %3827 = vrot.lane.b32.xlu0 %v3750, 126
      %v3828 = vpop.permute.xlu0 %3827
      %3829 = vrot.lane.b32.xlu0 %v3751, 126
      %v3830 = vpop.permute.xlu0 %3829
      %3831 = vrot.lane.b32.xlu0 %v3752, 126
      %v3832 = vpop.permute.xlu0 %3831
      %3833 = vrot.lane.b32.xlu0 %v3753, 126
      %v3834 = vpop.permute.xlu0 %3833
      %v3835 = vsel %vm425, %v3812, %v3814
      %v3836 = vsel %vm425, %v3814, %v3816
      %v3837 = vsel %vm425, %v3816, %v3818
      %v3838 = vsel %vm425, %v3820, %v3822
      %v3839 = vsel %vm425, %v3822, %v3824
      %v3840 = vsel %vm425, %v3824, %v3826
      %v3841 = vsel %vm425, %v3828, %v3830
      %v3842 = vsel %vm425, %v3830, %v3832
      %v3843 = vsel %vm425, %v3832, %v3834
      %3844 = vrot.lane.b32.xlu0 %v3742, 110
      %v3845 = vpop.permute.xlu0 %3844
      %3846 = vrot.lane.b32.xlu0 %v3743, 110
      %v3847 = vpop.permute.xlu0 %3846
      %3848 = vrot.lane.b32.xlu0 %v3744, 110
      %v3849 = vpop.permute.xlu0 %3848
      %3850 = vrot.lane.b32.xlu0 %v3745, 110
      %v3851 = vpop.permute.xlu0 %3850
      %3852 = vrot.lane.b32.xlu0 %v3746, 110
      %v3853 = vpop.permute.xlu0 %3852
      %3854 = vrot.lane.b32.xlu0 %v3747, 110
      %v3855 = vpop.permute.xlu0 %3854
      %3856 = vrot.lane.b32.xlu0 %v3748, 110
      %v3857 = vpop.permute.xlu0 %3856
      %3858 = vrot.lane.b32.xlu0 %v3749, 110
      %v3859 = vpop.permute.xlu0 %3858
      %3860 = vrot.lane.b32.xlu0 %v3750, 110
      %v3861 = vpop.permute.xlu0 %3860
      %3862 = vrot.lane.b32.xlu0 %v3751, 110
      %v3863 = vpop.permute.xlu0 %3862
      %3864 = vrot.lane.b32.xlu0 %v3752, 110
      %v3865 = vpop.permute.xlu0 %3864
      %3866 = vrot.lane.b32.xlu0 %v3753, 110
      %v3867 = vpop.permute.xlu0 %3866
      %v3868 = vsel %vm437, %v3845, %v3847
      %v3869 = vsel %vm437, %v3847, %v3849
      %v3870 = vsel %vm437, %v3849, %v3851
      %v3871 = vsel %vm437, %v3853, %v3855
      %v3872 = vsel %vm437, %v3855, %v3857
      %v3873 = vsel %vm437, %v3857, %v3859
      %v3874 = vsel %vm437, %v3861, %v3863
      %v3875 = vsel %vm437, %v3863, %v3865
      %v3876 = vsel %vm437, %v3865, %v3867
      %3877 = vrot.lane.b32.xlu0 %v3743, 109
      %v3878 = vpop.permute.xlu0 %3877
      %3879 = vrot.lane.b32.xlu0 %v3744, 109
      %v3880 = vpop.permute.xlu0 %3879
      %3881 = vrot.lane.b32.xlu0 %v3745, 109
      %v3882 = vpop.permute.xlu0 %3881
      %3883 = vrot.lane.b32.xlu0 %v3747, 109
      %v3884 = vpop.permute.xlu0 %3883
      %3885 = vrot.lane.b32.xlu0 %v3748, 109
      %v3886 = vpop.permute.xlu0 %3885
      %3887 = vrot.lane.b32.xlu0 %v3749, 109
      %v3888 = vpop.permute.xlu0 %3887
      %3889 = vrot.lane.b32.xlu0 %v3751, 109
      %v3890 = vpop.permute.xlu0 %3889
      %3891 = vrot.lane.b32.xlu0 %v3752, 109
      %v3892 = vpop.permute.xlu0 %3891
      %3893 = vrot.lane.b32.xlu0 %v3753, 109
      %v3894 = vpop.permute.xlu0 %3893
      %v3895 = vsel %vm460, %v3878, %v3880
      %v3896 = vsel %vm460, %v3880, %v3882
      %v3897 = vsel %vm460, %v3884, %v3886
      %v3898 = vsel %vm460, %v3886, %v3888
      %v3899 = vsel %vm460, %v3890, %v3892
      %v3900 = vsel %vm460, %v3892, %v3894
      %3913 = vrot.lane.b32.xlu0 %v3754, 108
      %v3914 = vpop.permute.xlu0 %3913
      %3915 = vrot.lane.b32.xlu0 %v3755, 108
      %v3916 = vpop.permute.xlu0 %3915
      %3917 = vrot.lane.b32.xlu0 %v3756, 108
      %v3918 = vpop.permute.xlu0 %3917
      %3919 = vrot.lane.b32.xlu0 %v3757, 108
      %v3920 = vpop.permute.xlu0 %3919
      %3921 = vrot.lane.b32.xlu0 %v3758, 108
      %v3922 = vpop.permute.xlu0 %3921
      %3923 = vrot.lane.b32.xlu0 %v3759, 108
      %v3924 = vpop.permute.xlu0 %3923
      %3925 = vrot.lane.b32.xlu0 %v3760, 108
      %v3926 = vpop.permute.xlu0 %3925
      %3927 = vrot.lane.b32.xlu0 %v3761, 108
      %v3928 = vpop.permute.xlu0 %3927
      %3929 = vrot.lane.b32.xlu0 %v3762, 108
      %v3930 = vpop.permute.xlu0 %3929
      %3931 = vrot.lane.b32.xlu0 %v3763, 108
      %v3932 = vpop.permute.xlu0 %3931
      %3933 = vrot.lane.b32.xlu0 %v3764, 108
      %v3934 = vpop.permute.xlu0 %3933
      %3935 = vrot.lane.b32.xlu0 %v3765, 108
      %v3936 = vpop.permute.xlu0 %3935
      %v3937 = vsel %vm487, %v3914, %v3916
      %v3938 = vsel %vm487, %v3916, %v3918
      %v3939 = vsel %vm487, %v3918, %v3920
      %v3940 = vsel %vm487, %v3922, %v3924
      %v3941 = vsel %vm487, %v3924, %v3926
      %v3942 = vsel %vm487, %v3926, %v3928
      %v3943 = vsel %vm487, %v3930, %v3932
      %v3944 = vsel %vm487, %v3932, %v3934
      %v3945 = vsel %vm487, %v3934, %v3936
      %3946 = vrot.lane.b32.xlu0 %v3754, 92
      %v3947 = vpop.permute.xlu0 %3946
      %3948 = vrot.lane.b32.xlu0 %v3755, 92
      %v3949 = vpop.permute.xlu0 %3948
      %3950 = vrot.lane.b32.xlu0 %v3756, 92
      %v3951 = vpop.permute.xlu0 %3950
      %3952 = vrot.lane.b32.xlu0 %v3757, 92
      %v3953 = vpop.permute.xlu0 %3952
      %3954 = vrot.lane.b32.xlu0 %v3758, 92
      %v3955 = vpop.permute.xlu0 %3954
      %3956 = vrot.lane.b32.xlu0 %v3759, 92
      %v3957 = vpop.permute.xlu0 %3956
      %3958 = vrot.lane.b32.xlu0 %v3760, 92
      %v3959 = vpop.permute.xlu0 %3958
      %3960 = vrot.lane.b32.xlu0 %v3761, 92
      %v3961 = vpop.permute.xlu0 %3960
      %3962 = vrot.lane.b32.xlu0 %v3762, 92
      %v3963 = vpop.permute.xlu0 %3962
      %3964 = vrot.lane.b32.xlu0 %v3763, 92
      %v3965 = vpop.permute.xlu0 %3964
      %3966 = vrot.lane.b32.xlu0 %v3764, 92
      %v3967 = vpop.permute.xlu0 %3966
      %3968 = vrot.lane.b32.xlu0 %v3765, 92
      %v3969 = vpop.permute.xlu0 %3968
      %v3970 = vsel %vm499, %v3947, %v3949
      %v3971 = vsel %vm499, %v3949, %v3951
      %v3972 = vsel %vm499, %v3951, %v3953
      %v3973 = vsel %vm499, %v3955, %v3957
      %v3974 = vsel %vm499, %v3957, %v3959
      %v3975 = vsel %vm499, %v3959, %v3961
      %v3976 = vsel %vm499, %v3963, %v3965
      %v3977 = vsel %vm499, %v3965, %v3967
      %v3978 = vsel %vm499, %v3967, %v3969
      %3979 = vrot.lane.b32.xlu0 %v3754, 91
      %v3980 = vpop.permute.xlu0 %3979
      %3981 = vrot.lane.b32.xlu0 %v3755, 91
      %v3982 = vpop.permute.xlu0 %3981
      %3983 = vrot.lane.b32.xlu0 %v3756, 91
      %v3984 = vpop.permute.xlu0 %3983
      %3985 = vrot.lane.b32.xlu0 %v3757, 91
      %v3986 = vpop.permute.xlu0 %3985
      %3987 = vrot.lane.b32.xlu0 %v3758, 91
      %v3988 = vpop.permute.xlu0 %3987
      %3989 = vrot.lane.b32.xlu0 %v3759, 91
      %v3990 = vpop.permute.xlu0 %3989
      %3991 = vrot.lane.b32.xlu0 %v3760, 91
      %v3992 = vpop.permute.xlu0 %3991
      %3993 = vrot.lane.b32.xlu0 %v3761, 91
      %v3994 = vpop.permute.xlu0 %3993
      %3995 = vrot.lane.b32.xlu0 %v3762, 91
      %v3996 = vpop.permute.xlu0 %3995
      %3997 = vrot.lane.b32.xlu0 %v3763, 91
      %v3998 = vpop.permute.xlu0 %3997
      %3999 = vrot.lane.b32.xlu0 %v3764, 91
      %v4000 = vpop.permute.xlu0 %3999
      %4001 = vrot.lane.b32.xlu0 %v3765, 91
      %v4002 = vpop.permute.xlu0 %4001
      %v4003 = vsel %vm511, %v3980, %v3982
      %v4004 = vsel %vm511, %v3982, %v3984
      %v4005 = vsel %vm511, %v3984, %v3986
      %v4006 = vsel %vm511, %v3988, %v3990
      %v4007 = vsel %vm511, %v3990, %v3992
      %v4008 = vsel %vm511, %v3992, %v3994
      %v4009 = vsel %vm511, %v3996, %v3998
      %v4010 = vsel %vm511, %v3998, %v4000
      %v4011 = vsel %vm511, %v4000, %v4002
      %4012 = vrot.lane.b32.xlu0 %v3754, 90
      %v4013 = vpop.permute.xlu0 %4012
      %4014 = vrot.lane.b32.xlu0 %v3755, 90
      %v4015 = vpop.permute.xlu0 %4014
      %4016 = vrot.lane.b32.xlu0 %v3756, 90
      %v4017 = vpop.permute.xlu0 %4016
      %4018 = vrot.lane.b32.xlu0 %v3757, 90
      %v4019 = vpop.permute.xlu0 %4018
      %4020 = vrot.lane.b32.xlu0 %v3758, 90
      %v4021 = vpop.permute.xlu0 %4020
      %4022 = vrot.lane.b32.xlu0 %v3759, 90
      %v4023 = vpop.permute.xlu0 %4022
      %4024 = vrot.lane.b32.xlu0 %v3760, 90
      %v4025 = vpop.permute.xlu0 %4024
      %4026 = vrot.lane.b32.xlu0 %v3761, 90
      %v4027 = vpop.permute.xlu0 %4026
      %4028 = vrot.lane.b32.xlu0 %v3762, 90
      %v4029 = vpop.permute.xlu0 %4028
      %4030 = vrot.lane.b32.xlu0 %v3763, 90
      %v4031 = vpop.permute.xlu0 %4030
      %4032 = vrot.lane.b32.xlu0 %v3764, 90
      %v4033 = vpop.permute.xlu0 %4032
      %4034 = vrot.lane.b32.xlu0 %v3765, 90
      %v4035 = vpop.permute.xlu0 %4034
      %v4036 = vsel %vm523, %v4013, %v4015
      %v4037 = vsel %vm523, %v4015, %v4017
      %v4038 = vsel %vm523, %v4017, %v4019
      %v4039 = vsel %vm523, %v4021, %v4023
      %v4040 = vsel %vm523, %v4023, %v4025
      %v4041 = vsel %vm523, %v4025, %v4027
      %v4042 = vsel %vm523, %v4029, %v4031
      %v4043 = vsel %vm523, %v4031, %v4033
      %v4044 = vsel %vm523, %v4033, %v4035
      %s4045 = scalar_lea.vmem %s6, 256
      %v4046 = vld [vmem:[%s4045] sm:$0xff]
      %v4047 = vld [vmem:[%s4045 + $0x8] sm:$0xff]
      %v4048 = vld [vmem:[%s4045 + $0x10] sm:$0xff]
      %v4049 = vld [vmem:[%s4045 + $0x18] sm:$0xff]
      %v4050 = vld [vmem:[%s4045 + $0x20] sm:$0xff]
      %v4051 = vld [vmem:[%s4045 + $0x28] sm:$0xff]
      %v4052 = vld [vmem:[%s4045 + $0x30] sm:$0xff]
      %v4053 = vld [vmem:[%s4045 + $0x38] sm:$0xff]
      %v4054 = vld [vmem:[%s4045 + $0x40] sm:$0xff]
      %v4055 = vld [vmem:[%s4045 + $0x48] sm:$0xff]
      %v4056 = vld [vmem:[%s4045 + $0x50] sm:$0xff]
      %v4057 = vld [vmem:[%s4045 + $0x58] sm:$0xff]
      %v4058 = vld [vmem:[%s4045 + $0x60] sm:$0xff]
      %v4059 = vld [vmem:[%s4045 + $0x68] sm:$0xff]
      %v4060 = vld [vmem:[%s4045 + $0x70] sm:$0xff]
      %v4061 = vld [vmem:[%s4045 + $0x78] sm:$0xff]
      %s4062 = scalar_lea.vmem %s7, 128
      %v4063 = vld [vmem:[%s4062] sm:$0xff]
      %v4064 = vld [vmem:[%s4062 + $0x8] sm:$0xff]
      %v4065 = vld [vmem:[%s4062 + $0x10] sm:$0xff]
      %v4066 = vld [vmem:[%s4062 + $0x18] sm:$0xff]
      %v4067 = vld [vmem:[%s4062 + $0x20] sm:$0xff]
      %v4068 = vld [vmem:[%s4062 + $0x28] sm:$0xff]
      %v4069 = vld [vmem:[%s4062 + $0x30] sm:$0xff]
      %v4070 = vld [vmem:[%s4062 + $0x38] sm:$0xff]
      %4072 = vset.pattern.permute.xlu0 0
      %4073 = vperm.xlu0 %4072, %v4063
      %v4074 = vpop.permute.xlu0 %4073
      %4077 = vset.pattern.permute.xlu0 0
      %4078 = vperm.xlu0 %4077, %v4064
      %v4079 = vpop.permute.xlu0 %4078
      %4082 = vset.pattern.permute.xlu0 0
      %4083 = vperm.xlu0 %4082, %v4065
      %v4084 = vpop.permute.xlu0 %4083
      %4087 = vset.pattern.permute.xlu0 0
      %4088 = vperm.xlu0 %4087, %v4066
      %v4089 = vpop.permute.xlu0 %4088
      %4092 = vset.pattern.permute.xlu0 0
      %4093 = vperm.xlu0 %4092, %v4067
      %v4094 = vpop.permute.xlu0 %4093
      %4097 = vset.pattern.permute.xlu0 0
      %4098 = vperm.xlu0 %4097, %v4068
      %v4099 = vpop.permute.xlu0 %4098
      %4102 = vset.pattern.permute.xlu0 0
      %4103 = vperm.xlu0 %4102, %v4069
      %v4104 = vpop.permute.xlu0 %4103
      %4107 = vset.pattern.permute.xlu0 0
      %4108 = vperm.xlu0 %4107, %v4070
      %v4109 = vpop.permute.xlu0 %4108
      %v4127 = vunpack.c.l.b16 %v4046
      %v4128 = vunpack.c.h.b16 %v4046
      %v4129 = vunpack.c.l.b16 %v4047
      %v4130 = vunpack.c.h.b16 %v4047
      %v4131 = vunpack.c.l.b16 %v4048
      %v4132 = vunpack.c.h.b16 %v4048
      %v4133 = vunpack.c.l.b16 %v4049
      %v4134 = vunpack.c.h.b16 %v4049
      %v4135 = vunpack.c.l.b16 %v4050
      %v4136 = vunpack.c.h.b16 %v4050
      %v4137 = vunpack.c.l.b16 %v4051
      %v4138 = vunpack.c.h.b16 %v4051
      %v4139 = vunpack.c.l.b16 %v4052
      %v4140 = vunpack.c.h.b16 %v4052
      %v4141 = vunpack.c.l.b16 %v4053
      %v4142 = vunpack.c.h.b16 %v4053
      %v4143 = vunpack.c.l.b16 %v4054
      %v4144 = vunpack.c.h.b16 %v4054
      %v4145 = vunpack.c.l.b16 %v4055
      %v4146 = vunpack.c.h.b16 %v4055
      %v4147 = vunpack.c.l.b16 %v4056
      %v4148 = vunpack.c.h.b16 %v4056
      %v4149 = vunpack.c.l.b16 %v4057
      %v4150 = vunpack.c.h.b16 %v4057
      %v4151 = vunpack.c.l.b16 %v4058
      %v4152 = vunpack.c.h.b16 %v4058
      %v4153 = vunpack.c.l.b16 %v4059
      %v4154 = vunpack.c.h.b16 %v4059
      %v4155 = vunpack.c.l.b16 %v4060
      %v4156 = vunpack.c.h.b16 %v4060
      %v4157 = vunpack.c.l.b16 %v4061
      %v4158 = vunpack.c.h.b16 %v4061
      %v4159 = vpack.c.b16 %v4131, %v4127
      %v4160 = vpack.c.b16 %v4132, %v4128
      %v4161 = vpack.c.b16 %v4133, %v4129
      %v4162 = vpack.c.b16 %v4134, %v4130
      %v4163 = vpack.c.b16 %v4139, %v4135
      %v4164 = vpack.c.b16 %v4140, %v4136
      %v4165 = vpack.c.b16 %v4141, %v4137
      %v4166 = vpack.c.b16 %v4142, %v4138
      %v4167 = vpack.c.b16 %v4147, %v4143
      %v4168 = vpack.c.b16 %v4148, %v4144
      %v4169 = vpack.c.b16 %v4149, %v4145
      %v4170 = vpack.c.b16 %v4150, %v4146
      %v4171 = vpack.c.b16 %v4155, %v4151
      %v4172 = vpack.c.b16 %v4156, %v4152
      %v4173 = vpack.c.b16 %v4157, %v4153
      %v4174 = vpack.c.b16 %v4158, %v4154
      %4187 = vrot.lane.b32.xlu0 %v3742, 19
      %v4188 = vpop.permute.xlu0 %4187
      %4189 = vrot.lane.b32.xlu0 %v3743, 19
      %v4190 = vpop.permute.xlu0 %4189
      %4191 = vrot.lane.b32.xlu0 %v3744, 19
      %v4192 = vpop.permute.xlu0 %4191
      %4193 = vrot.lane.b32.xlu0 %v3745, 19
      %v4194 = vpop.permute.xlu0 %4193
      %4195 = vrot.lane.b32.xlu0 %v3746, 19
      %v4196 = vpop.permute.xlu0 %4195
      %4197 = vrot.lane.b32.xlu0 %v3747, 19
      %v4198 = vpop.permute.xlu0 %4197
      %4199 = vrot.lane.b32.xlu0 %v3748, 19
      %v4200 = vpop.permute.xlu0 %4199
      %4201 = vrot.lane.b32.xlu0 %v3749, 19
      %v4202 = vpop.permute.xlu0 %4201
      %4203 = vrot.lane.b32.xlu0 %v3750, 19
      %v4204 = vpop.permute.xlu0 %4203
      %4205 = vrot.lane.b32.xlu0 %v3751, 19
      %v4206 = vpop.permute.xlu0 %4205
      %4207 = vrot.lane.b32.xlu0 %v3752, 19
      %v4208 = vpop.permute.xlu0 %4207
      %4209 = vrot.lane.b32.xlu0 %v3753, 19
      %v4210 = vpop.permute.xlu0 %4209
      %4211 = vrot.lane.b32.xlu0 %v3802, 19
      %v4212 = vpop.permute.xlu0 %4211
      %4213 = vrot.lane.b32.xlu0 %v3803, 19
      %v4214 = vpop.permute.xlu0 %4213
      %4215 = vrot.lane.b32.xlu0 %v3804, 19
      %v4216 = vpop.permute.xlu0 %4215
      %4217 = vrot.lane.b32.xlu0 %v3785, 19
      %v4218 = vpop.permute.xlu0 %4217
      %4219 = vrot.lane.b32.xlu0 %v3805, 19
      %v4220 = vpop.permute.xlu0 %4219
      %4221 = vrot.lane.b32.xlu0 %v3806, 19
      %v4222 = vpop.permute.xlu0 %4221
      %4223 = vrot.lane.b32.xlu0 %v3807, 19
      %v4224 = vpop.permute.xlu0 %4223
      %4225 = vrot.lane.b32.xlu0 %v3793, 19
      %v4226 = vpop.permute.xlu0 %4225
      %4227 = vrot.lane.b32.xlu0 %v3808, 19
      %v4228 = vpop.permute.xlu0 %4227
      %4229 = vrot.lane.b32.xlu0 %v3809, 19
      %v4230 = vpop.permute.xlu0 %4229
      %4231 = vrot.lane.b32.xlu0 %v3810, 19
      %v4232 = vpop.permute.xlu0 %4231
      %4233 = vrot.lane.b32.xlu0 %v3801, 19
      %v4234 = vpop.permute.xlu0 %4233
      %4235 = vrot.lane.b32.xlu0 %v3835, 19
      %v4236 = vpop.permute.xlu0 %4235
      %4237 = vrot.lane.b32.xlu0 %v3836, 19
      %v4238 = vpop.permute.xlu0 %4237
      %4239 = vrot.lane.b32.xlu0 %v3837, 19
      %v4240 = vpop.permute.xlu0 %4239
      %4241 = vrot.lane.b32.xlu0 %v3818, 19
      %v4242 = vpop.permute.xlu0 %4241
      %4243 = vrot.lane.b32.xlu0 %v3838, 19
      %v4244 = vpop.permute.xlu0 %4243
      %4245 = vrot.lane.b32.xlu0 %v3839, 19
      %v4246 = vpop.permute.xlu0 %4245
      %4247 = vrot.lane.b32.xlu0 %v3840, 19
      %v4248 = vpop.permute.xlu0 %4247
      %4249 = vrot.lane.b32.xlu0 %v3826, 19
      %v4250 = vpop.permute.xlu0 %4249
      %4251 = vrot.lane.b32.xlu0 %v3841, 19
      %v4252 = vpop.permute.xlu0 %4251
      %4253 = vrot.lane.b32.xlu0 %v3842, 19
      %v4254 = vpop.permute.xlu0 %4253
      %4255 = vrot.lane.b32.xlu0 %v3843, 19
      %v4256 = vpop.permute.xlu0 %4255
      %4257 = vrot.lane.b32.xlu0 %v3834, 19
      %v4258 = vpop.permute.xlu0 %4257
      %4259 = vrot.lane.b32.xlu0 %v3868, 19
      %v4260 = vpop.permute.xlu0 %4259
      %4261 = vrot.lane.b32.xlu0 %v3869, 19
      %v4262 = vpop.permute.xlu0 %4261
      %4263 = vrot.lane.b32.xlu0 %v3870, 19
      %v4264 = vpop.permute.xlu0 %4263
      %4265 = vrot.lane.b32.xlu0 %v3851, 19
      %v4266 = vpop.permute.xlu0 %4265
      %4267 = vrot.lane.b32.xlu0 %v3871, 19
      %v4268 = vpop.permute.xlu0 %4267
      %4269 = vrot.lane.b32.xlu0 %v3872, 19
      %v4270 = vpop.permute.xlu0 %4269
      %4271 = vrot.lane.b32.xlu0 %v3873, 19
      %v4272 = vpop.permute.xlu0 %4271
      %4273 = vrot.lane.b32.xlu0 %v3859, 19
      %v4274 = vpop.permute.xlu0 %4273
      %4275 = vrot.lane.b32.xlu0 %v3874, 19
      %v4276 = vpop.permute.xlu0 %4275
      %4277 = vrot.lane.b32.xlu0 %v3875, 19
      %v4278 = vpop.permute.xlu0 %4277
      %4279 = vrot.lane.b32.xlu0 %v3876, 19
      %v4280 = vpop.permute.xlu0 %4279
      %4281 = vrot.lane.b32.xlu0 %v3867, 19
      %v4282 = vpop.permute.xlu0 %4281
      %4283 = vrot.lane.b32.xlu0 %v3878, 19
      %v4284 = vpop.permute.xlu0 %4283
      %4285 = vrot.lane.b32.xlu0 %v3895, 19
      %v4286 = vpop.permute.xlu0 %4285
      %4287 = vrot.lane.b32.xlu0 %v3896, 19
      %v4288 = vpop.permute.xlu0 %4287
      %4289 = vrot.lane.b32.xlu0 %v3882, 19
      %v4290 = vpop.permute.xlu0 %4289
      %4291 = vrot.lane.b32.xlu0 %v3884, 19
      %v4292 = vpop.permute.xlu0 %4291
      %4293 = vrot.lane.b32.xlu0 %v3897, 19
      %v4294 = vpop.permute.xlu0 %4293
      %4295 = vrot.lane.b32.xlu0 %v3898, 19
      %v4296 = vpop.permute.xlu0 %4295
      %4297 = vrot.lane.b32.xlu0 %v3888, 19
      %v4298 = vpop.permute.xlu0 %4297
      %4299 = vrot.lane.b32.xlu0 %v3890, 19
      %v4300 = vpop.permute.xlu0 %4299
      %4301 = vrot.lane.b32.xlu0 %v3899, 19
      %v4302 = vpop.permute.xlu0 %4301
      %4303 = vrot.lane.b32.xlu0 %v3900, 19
      %v4304 = vpop.permute.xlu0 %4303
      %4305 = vrot.lane.b32.xlu0 %v3894, 19
      %v4306 = vpop.permute.xlu0 %4305
      %4307 = vrot.lane.b32.xlu0 %v3914, 19
      %v4308 = vpop.permute.xlu0 %4307
      %4309 = vrot.lane.b32.xlu0 %v3937, 19
      %v4310 = vpop.permute.xlu0 %4309
      %4311 = vrot.lane.b32.xlu0 %v3938, 19
      %v4312 = vpop.permute.xlu0 %4311
      %4313 = vrot.lane.b32.xlu0 %v3939, 19
      %v4314 = vpop.permute.xlu0 %4313
      %4315 = vrot.lane.b32.xlu0 %v3922, 19
      %v4316 = vpop.permute.xlu0 %4315
      %4317 = vrot.lane.b32.xlu0 %v3940, 19
      %v4318 = vpop.permute.xlu0 %4317
      %4319 = vrot.lane.b32.xlu0 %v3941, 19
      %v4320 = vpop.permute.xlu0 %4319
      %4321 = vrot.lane.b32.xlu0 %v3942, 19
      %v4322 = vpop.permute.xlu0 %4321
      %4323 = vrot.lane.b32.xlu0 %v3930, 19
      %v4324 = vpop.permute.xlu0 %4323
      %4325 = vrot.lane.b32.xlu0 %v3943, 19
      %v4326 = vpop.permute.xlu0 %4325
      %4327 = vrot.lane.b32.xlu0 %v3944, 19
      %v4328 = vpop.permute.xlu0 %4327
      %4329 = vrot.lane.b32.xlu0 %v3945, 19
      %v4330 = vpop.permute.xlu0 %4329
      %4331 = vrot.lane.b32.xlu0 %v3947, 19
      %v4332 = vpop.permute.xlu0 %4331
      %4333 = vrot.lane.b32.xlu0 %v3970, 19
      %v4334 = vpop.permute.xlu0 %4333
      %4335 = vrot.lane.b32.xlu0 %v3971, 19
      %v4336 = vpop.permute.xlu0 %4335
      %4337 = vrot.lane.b32.xlu0 %v3972, 19
      %v4338 = vpop.permute.xlu0 %4337
      %4339 = vrot.lane.b32.xlu0 %v3955, 19
      %v4340 = vpop.permute.xlu0 %4339
      %4341 = vrot.lane.b32.xlu0 %v3973, 19
      %v4342 = vpop.permute.xlu0 %4341
      %4343 = vrot.lane.b32.xlu0 %v3974, 19
      %v4344 = vpop.permute.xlu0 %4343
      %4345 = vrot.lane.b32.xlu0 %v3975, 19
      %v4346 = vpop.permute.xlu0 %4345
      %4347 = vrot.lane.b32.xlu0 %v3963, 19
      %v4348 = vpop.permute.xlu0 %4347
      %4349 = vrot.lane.b32.xlu0 %v3976, 19
      %v4350 = vpop.permute.xlu0 %4349
      %4351 = vrot.lane.b32.xlu0 %v3977, 19
      %v4352 = vpop.permute.xlu0 %4351
      %4353 = vrot.lane.b32.xlu0 %v3978, 19
      %v4354 = vpop.permute.xlu0 %4353
      %4355 = vrot.lane.b32.xlu0 %v3980, 19
      %v4356 = vpop.permute.xlu0 %4355
      %4357 = vrot.lane.b32.xlu0 %v4003, 19
      %v4358 = vpop.permute.xlu0 %4357
      %4359 = vrot.lane.b32.xlu0 %v4004, 19
      %v4360 = vpop.permute.xlu0 %4359
      %4361 = vrot.lane.b32.xlu0 %v4005, 19
      %v4362 = vpop.permute.xlu0 %4361
      %4363 = vrot.lane.b32.xlu0 %v3988, 19
      %v4364 = vpop.permute.xlu0 %4363
      %4365 = vrot.lane.b32.xlu0 %v4006, 19
      %v4366 = vpop.permute.xlu0 %4365
      %4367 = vrot.lane.b32.xlu0 %v4007, 19
      %v4368 = vpop.permute.xlu0 %4367
      %4369 = vrot.lane.b32.xlu0 %v4008, 19
      %v4370 = vpop.permute.xlu0 %4369
      %4371 = vrot.lane.b32.xlu0 %v3996, 19
      %v4372 = vpop.permute.xlu0 %4371
      %4373 = vrot.lane.b32.xlu0 %v4009, 19
      %v4374 = vpop.permute.xlu0 %4373
      %4375 = vrot.lane.b32.xlu0 %v4010, 19
      %v4376 = vpop.permute.xlu0 %4375
      %4377 = vrot.lane.b32.xlu0 %v4011, 19
      %v4378 = vpop.permute.xlu0 %4377
      %4379 = vrot.lane.b32.xlu0 %v4013, 19
      %v4380 = vpop.permute.xlu0 %4379
      %4381 = vrot.lane.b32.xlu0 %v4036, 19
      %v4382 = vpop.permute.xlu0 %4381
      %4383 = vrot.lane.b32.xlu0 %v4037, 19
      %v4384 = vpop.permute.xlu0 %4383
      %4385 = vrot.lane.b32.xlu0 %v4038, 19
      %v4386 = vpop.permute.xlu0 %4385
      %4387 = vrot.lane.b32.xlu0 %v4021, 19
      %v4388 = vpop.permute.xlu0 %4387
      %4389 = vrot.lane.b32.xlu0 %v4039, 19
      %v4390 = vpop.permute.xlu0 %4389
      %4391 = vrot.lane.b32.xlu0 %v4040, 19
      %v4392 = vpop.permute.xlu0 %4391
      %4393 = vrot.lane.b32.xlu0 %v4041, 19
      %v4394 = vpop.permute.xlu0 %4393
      %4395 = vrot.lane.b32.xlu0 %v4029, 19
      %v4396 = vpop.permute.xlu0 %4395
      %4397 = vrot.lane.b32.xlu0 %v4042, 19
      %v4398 = vpop.permute.xlu0 %4397
      %4399 = vrot.lane.b32.xlu0 %v4043, 19
      %v4400 = vpop.permute.xlu0 %4399
      %4401 = vrot.lane.b32.xlu0 %v4044, 19
      %v4402 = vpop.permute.xlu0 %4401
      %v4403 = vsel %vm622, %v4188, %v4190
      %v4404 = vsel %vm622, %v4190, %v4192
      %v4405 = vsel %vm622, %v4192, %v4194
      %v4406 = vsel %vm622, %v4196, %v4198
      %v4407 = vsel %vm622, %v4198, %v4200
      %v4408 = vsel %vm622, %v4200, %v4202
      %v4409 = vsel %vm622, %v4204, %v4206
      %v4410 = vsel %vm622, %v4206, %v4208
      %v4411 = vsel %vm622, %v4208, %v4210
      %v4412 = vsel %vm622, %v4212, %v4214
      %v4413 = vsel %vm622, %v4214, %v4216
      %v4414 = vsel %vm622, %v4216, %v4218
      %v4415 = vsel %vm622, %v4220, %v4222
      %v4416 = vsel %vm622, %v4222, %v4224
      %v4417 = vsel %vm622, %v4224, %v4226
      %v4418 = vsel %vm622, %v4228, %v4230
      %v4419 = vsel %vm622, %v4230, %v4232
      %v4420 = vsel %vm622, %v4232, %v4234
      %v4421 = vsel %vm622, %v4236, %v4238
      %v4422 = vsel %vm622, %v4238, %v4240
      %v4423 = vsel %vm622, %v4240, %v4242
      %v4424 = vsel %vm622, %v4244, %v4246
      %v4425 = vsel %vm622, %v4246, %v4248
      %v4426 = vsel %vm622, %v4248, %v4250
      %v4427 = vsel %vm622, %v4252, %v4254
      %v4428 = vsel %vm622, %v4254, %v4256
      %v4429 = vsel %vm622, %v4256, %v4258
      %v4430 = vsel %vm622, %v4260, %v4262
      %v4431 = vsel %vm622, %v4262, %v4264
      %v4432 = vsel %vm622, %v4264, %v4266
      %v4433 = vsel %vm622, %v4268, %v4270
      %v4434 = vsel %vm622, %v4270, %v4272
      %v4435 = vsel %vm622, %v4272, %v4274
      %v4436 = vsel %vm622, %v4276, %v4278
      %v4437 = vsel %vm622, %v4278, %v4280
      %v4438 = vsel %vm622, %v4280, %v4282
      %v4439 = vsel %vm622, %v4284, %v4286
      %v4440 = vsel %vm622, %v4286, %v4288
      %v4441 = vsel %vm622, %v4288, %v4290
      %v4442 = vsel %vm622, %v4292, %v4294
      %v4443 = vsel %vm622, %v4294, %v4296
      %v4444 = vsel %vm622, %v4296, %v4298
      %v4445 = vsel %vm622, %v4300, %v4302
      %v4446 = vsel %vm622, %v4302, %v4304
      %v4447 = vsel %vm622, %v4304, %v4306
      %v4448 = vsel %vm622, %v4308, %v4310
      %v4449 = vsel %vm622, %v4310, %v4312
      %v4450 = vsel %vm622, %v4312, %v4314
      %v4451 = vsel %vm622, %v4316, %v4318
      %v4452 = vsel %vm622, %v4318, %v4320
      %v4453 = vsel %vm622, %v4320, %v4322
      %v4454 = vsel %vm622, %v4324, %v4326
      %v4455 = vsel %vm622, %v4326, %v4328
      %v4456 = vsel %vm622, %v4328, %v4330
      %v4457 = vsel %vm622, %v4332, %v4334
      %v4458 = vsel %vm622, %v4334, %v4336
      %v4459 = vsel %vm622, %v4336, %v4338
      %v4460 = vsel %vm622, %v4340, %v4342
      %v4461 = vsel %vm622, %v4342, %v4344
      %v4462 = vsel %vm622, %v4344, %v4346
      %v4463 = vsel %vm622, %v4348, %v4350
      %v4464 = vsel %vm622, %v4350, %v4352
      %v4465 = vsel %vm622, %v4352, %v4354
      %v4466 = vsel %vm622, %v4356, %v4358
      %v4467 = vsel %vm622, %v4358, %v4360
      %v4468 = vsel %vm622, %v4360, %v4362
      %v4469 = vsel %vm622, %v4364, %v4366
      %v4470 = vsel %vm622, %v4366, %v4368
      %v4471 = vsel %vm622, %v4368, %v4370
      %v4472 = vsel %vm622, %v4372, %v4374
      %v4473 = vsel %vm622, %v4374, %v4376
      %v4474 = vsel %vm622, %v4376, %v4378
      %v4475 = vsel %vm622, %v4380, %v4382
      %v4476 = vsel %vm622, %v4382, %v4384
      %v4477 = vsel %vm622, %v4384, %v4386
      %v4478 = vsel %vm622, %v4388, %v4390
      %v4479 = vsel %vm622, %v4390, %v4392
      %v4480 = vsel %vm622, %v4392, %v4394
      %v4481 = vsel %vm622, %v4396, %v4398
      %v4482 = vsel %vm622, %v4398, %v4400
      %v4483 = vsel %vm622, %v4400, %v4402
      %v4566 = vsel %vm2031, %v4162, 0
      %v4569 = vsel %vm2031, %v4166, 0
      %v4572 = vsel %vm2031, %v4170, 0
      %v4575 = vsel %vm2031, %v4174, 0
      %4577 = vmatprep.subr.bf16.mxu0 %v4404
      %4578 = vmatpush1.bf16.msra.mxu0 %v4403
      %4579 = vmatprep.subr.bf16.mxu0 %v4407
      %4580 = vmatpush1.bf16.msra.mxu0 %v4406
      %4581 = vmatprep.subr.bf16.mxu0 %v4410
      %4582 = vmatpush1.bf16.msra.mxu0 %v4409
      %4583 = vmatprep.subr.bf16.mxu0 %v4413
      %4584 = vmatpush1.bf16.msra.mxu0 %v4412
      %4585 = vmatprep.subr.bf16.mxu0 %v4416
      %4586 = vmatpush1.bf16.msra.mxu0 %v4415
      %4587 = vmatprep.subr.bf16.mxu0 %v4419
      %4588 = vmatpush1.bf16.msra.mxu0 %v4418
      %4589 = vmatprep.subr.bf16.mxu0 %v4422
      %4590 = vmatpush1.bf16.msra.mxu0 %v4421
      %4591 = vmatprep.subr.bf16.mxu0 %v4425
      %4592 = vmatpush1.bf16.msra.mxu0 %v4424
      %4593 = vmatprep.subr.bf16.mxu0 %v4428
      %4594 = vmatpush1.bf16.msra.mxu0 %v4427
      %4595 = vmatprep.subr.bf16.mxu0 %v4431
      %4596 = vmatpush1.bf16.msra.mxu0 %v4430
      %4597 = vmatprep.subr.bf16.mxu0 %v4434
      %4598 = vmatpush1.bf16.msra.mxu0 %v4433
      %4599 = vmatprep.subr.bf16.mxu0 %v4437
      %4600 = vmatpush1.bf16.msra.mxu0 %v4436
      %4601 = vmatprep.subr.bf16.mxu0 %v4440
      %4602 = vmatpush1.bf16.msra.mxu0 %v4439
      %4603 = vmatprep.subr.bf16.mxu0 %v4443
      %4604 = vmatpush1.bf16.msra.mxu0 %v4442
      %4605 = vmatprep.subr.bf16.mxu0 %v4446
      %4606 = vmatpush1.bf16.msra.mxu0 %v4445
      %4607 = vmatprep.subr.bf16.mxu0 %v4449
      %4608 = vmatpush1.bf16.msra.mxu0 %v4448
      %4609 = vmatprep.mubr.bf16.mxu0 %v4160
      %4610 = vmatmul.mubr.bf16.gmra.mrb[0].mxu0 %v4159
      %v4611 = vpop.f32.mrb[0].mxu0
      %v4612 = vadd.f32 %v4074, %v4611
      %v4613 = vpop.f32.mrb[0].mxu0
      %v4614 = vadd.f32 %v4074, %v4613
      %v4615 = vpop.f32.mrb[0].mxu0
      %v4616 = vadd.f32 %v4079, %v4615
      %v4617 = vpop.f32.mrb[0].mxu0
      %v4618 = vadd.f32 %v4079, %v4617
      %4619 = vmatprep.mubr.bf16.mxu0 %v4164
      %4620 = vmatmul.mubr.bf16.gmra.mrb[0].mxu0 %v4163
      %v4621 = vpop.f32.mrb[0].mxu0
      %v4622 = vadd.f32 %v4084, %v4621
      %v4623 = vpop.f32.mrb[0].mxu0
      %v4624 = vadd.f32 %v4084, %v4623
      %v4625 = vpop.f32.mrb[0].mxu0
      %v4626 = vadd.f32 %v4089, %v4625
      %v4627 = vpop.f32.mrb[0].mxu0
      %v4628 = vadd.f32 %v4089, %v4627
      %4629 = vmatprep.mubr.bf16.mxu0 %v4168
      %4630 = vmatmul.mubr.bf16.gmra.mrb[0].mxu0 %v4167
      %v4631 = vpop.f32.mrb[0].mxu0
      %v4632 = vadd.f32 %v4094, %v4631
      %v4633 = vpop.f32.mrb[0].mxu0
      %v4634 = vadd.f32 %v4094, %v4633
      %v4635 = vpop.f32.mrb[0].mxu0
      %v4636 = vadd.f32 %v4099, %v4635
      %v4637 = vpop.f32.mrb[0].mxu0
      %v4638 = vadd.f32 %v4099, %v4637
      %4639 = vmatprep.mubr.bf16.mxu0 %v4172
      %4640 = vmatmul.mubr.bf16.gmra.mrb[0].mxu0 %v4171
      %v4641 = vpop.f32.mrb[0].mxu0
      %v4642 = vadd.f32 %v4104, %v4641
      %v4643 = vpop.f32.mrb[0].mxu0
      %v4644 = vadd.f32 %v4104, %v4643
      %v4645 = vpop.f32.mrb[0].mxu0
      %v4646 = vadd.f32 %v4109, %v4645
      %v4647 = vpop.f32.mrb[0].mxu0
      %v4648 = vadd.f32 %v4109, %v4647
      %4649 = vdwg.mxu0
      %4650 = vmatprep.subr.bf16.mxu0 %v4452
      %4651 = vmatpush1.bf16.msra.mxu0 %v4451
      %4652 = vmatprep.subr.bf16.mxu0 %v4455
      %4653 = vmatpush1.bf16.msra.mxu0 %v4454
      %4654 = vmatprep.subr.bf16.mxu0 %v4458
      %4655 = vmatpush1.bf16.msra.mxu0 %v4457
      %4656 = vmatprep.subr.bf16.mxu0 %v4461
      %4657 = vmatpush1.bf16.msra.mxu0 %v4460
      %4658 = vmatprep.subr.bf16.mxu0 %v4464
      %4659 = vmatpush1.bf16.msra.mxu0 %v4463
      %4660 = vmatprep.subr.bf16.mxu0 %v4467
      %4661 = vmatpush1.bf16.msra.mxu0 %v4466
      %4662 = vmatprep.subr.bf16.mxu0 %v4470
      %4663 = vmatpush1.bf16.msra.mxu0 %v4469
      %4664 = vmatprep.subr.bf16.mxu0 %v4473
      %4665 = vmatpush1.bf16.msra.mxu0 %v4472
      %4666 = vmatprep.subr.bf16.mxu0 %v4476
      %4667 = vmatpush1.bf16.msra.mxu0 %v4475
      %4668 = vmatprep.subr.bf16.mxu0 %v4479
      %4669 = vmatpush1.bf16.msra.mxu0 %v4478
      %4670 = vmatprep.subr.bf16.mxu0 %v4482
      %4671 = vmatpush1.bf16.msra.mxu0 %v4481
      %4672 = vmatprep.subr.bf16.mxu0 0
      %4673 = vmatpush1.bf16.msra.mxu0 0
      %4674 = vmatprep.subr.bf16.mxu0 0
      %4675 = vmatpush1.bf16.msra.mxu0 0
      %4676 = vmatprep.subr.bf16.mxu0 0
      %4677 = vmatpush1.bf16.msra.mxu0 0
      %4678 = vmatprep.subr.bf16.mxu0 0
      %4679 = vmatpush1.bf16.msra.mxu0 0
      %4680 = vmatprep.subr.bf16.mxu0 0
      %4681 = vmatpush1.bf16.msra.mxu0 0
      %4682 = vmatprep.mubr.bf16.mxu0 %v4566
      %4683 = vmatmul.mubr.bf16.gmra.mrb[0].mxu0 %v4161
      %v4684 = vpop.f32.mrb[0].mxu0
      %v4685 = vadd.f32 %v4612, %v4684
      %v4686 = vpop.f32.mrb[0].mxu0
      %v4687 = vadd.f32 %v4614, %v4686
      %v4688 = vpop.f32.mrb[0].mxu0
      %v4689 = vadd.f32 %v4616, %v4688
      %v4690 = vpop.f32.mrb[0].mxu0
      %v4691 = vadd.f32 %v4618, %v4690
      %4692 = vmatprep.mubr.bf16.mxu0 %v4569
      %4693 = vmatmul.mubr.bf16.gmra.mrb[0].mxu0 %v4165
      %v4694 = vpop.f32.mrb[0].mxu0
      %v4695 = vadd.f32 %v4622, %v4694
      %v4696 = vpop.f32.mrb[0].mxu0
      %v4697 = vadd.f32 %v4624, %v4696
      %v4698 = vpop.f32.mrb[0].mxu0
      %v4699 = vadd.f32 %v4626, %v4698
      %v4700 = vpop.f32.mrb[0].mxu0
      %v4701 = vadd.f32 %v4628, %v4700
      %4702 = vmatprep.mubr.bf16.mxu0 %v4572
      %4703 = vmatmul.mubr.bf16.gmra.mrb[0].mxu0 %v4169
      %v4704 = vpop.f32.mrb[0].mxu0
      %v4705 = vadd.f32 %v4632, %v4704
      %v4706 = vpop.f32.mrb[0].mxu0
      %v4707 = vadd.f32 %v4634, %v4706
      %v4708 = vpop.f32.mrb[0].mxu0
      %v4709 = vadd.f32 %v4636, %v4708
      %v4710 = vpop.f32.mrb[0].mxu0
      %v4711 = vadd.f32 %v4638, %v4710
      %4712 = vmatprep.mubr.bf16.mxu0 %v4575
      %4713 = vmatmul.mubr.bf16.gmra.mrb[0].mxu0 %v4173
      %v4714 = vpop.f32.mrb[0].mxu0
      %v4715 = vadd.f32 %v4642, %v4714
      %v4716 = vpop.f32.mrb[0].mxu0
      %v4717 = vadd.f32 %v4644, %v4716
      %v4718 = vpop.f32.mrb[0].mxu0
      %v4719 = vadd.f32 %v4646, %v4718
      %v4720 = vpop.f32.mrb[0].mxu0
      %v4721 = vadd.f32 %v4648, %v4720
      %4722 = vdwg.mxu0
      %4723 = vmatprep.subr.bf16.mxu0 0
      %4724 = vmatpush1.bf16.msra.mxu0 %v4405
      %4725 = vmatprep.subr.bf16.mxu0 0
      %4726 = vmatpush1.bf16.msra.mxu0 %v4408
      %4727 = vmatprep.subr.bf16.mxu0 0
      %4728 = vmatpush1.bf16.msra.mxu0 %v4411
      %4729 = vmatprep.subr.bf16.mxu0 0
      %4730 = vmatpush1.bf16.msra.mxu0 %v4414
      %4731 = vmatprep.subr.bf16.mxu0 0
      %4732 = vmatpush1.bf16.msra.mxu0 %v4417
      %4733 = vmatprep.subr.bf16.mxu0 0
      %4734 = vmatpush1.bf16.msra.mxu0 %v4420
      %4735 = vmatprep.subr.bf16.mxu0 0
      %4736 = vmatpush1.bf16.msra.mxu0 %v4423
      %4737 = vmatprep.subr.bf16.mxu0 0
      %4738 = vmatpush1.bf16.msra.mxu0 %v4426
      %4739 = vmatprep.subr.bf16.mxu0 0
      %4740 = vmatpush1.bf16.msra.mxu0 %v4429
      %4741 = vmatprep.subr.bf16.mxu0 0
      %4742 = vmatpush1.bf16.msra.mxu0 %v4432
      %4743 = vmatprep.subr.bf16.mxu0 0
      %4744 = vmatpush1.bf16.msra.mxu0 %v4435
      %4745 = vmatprep.subr.bf16.mxu0 0
      %4746 = vmatpush1.bf16.msra.mxu0 %v4438
      %4747 = vmatprep.subr.bf16.mxu0 0
      %4748 = vmatpush1.bf16.msra.mxu0 %v4441
      %4749 = vmatprep.subr.bf16.mxu0 0
      %4750 = vmatpush1.bf16.msra.mxu0 %v4444
      %4751 = vmatprep.subr.bf16.mxu0 0
      %4752 = vmatpush1.bf16.msra.mxu0 %v4447
      %4753 = vmatprep.subr.bf16.mxu0 0
      %4754 = vmatpush1.bf16.msra.mxu0 %v4450
      %4755 = vmatprep.mubr.bf16.mxu0 %v4160
      %4756 = vmatmul.mubr.bf16.gmra.mrb[0].mxu0 %v4159
      %v4757 = vpop.f32.mrb[0].mxu0
      %v4758 = vadd.f32 %v4074, %v4757
      %v4759 = vpop.f32.mrb[0].mxu0
      %v4760 = vpop.f32.mrb[0].mxu0
      %v4761 = vadd.f32 %v4079, %v4760
      %v4762 = vpop.f32.mrb[0].mxu0
      %4763 = vmatprep.mubr.bf16.mxu0 %v4164
      %4764 = vmatmul.mubr.bf16.gmra.mrb[0].mxu0 %v4163
      %v4765 = vpop.f32.mrb[0].mxu0
      %v4766 = vadd.f32 %v4084, %v4765
      %v4767 = vpop.f32.mrb[0].mxu0
      %v4768 = vpop.f32.mrb[0].mxu0
      %v4769 = vadd.f32 %v4089, %v4768
      %v4770 = vpop.f32.mrb[0].mxu0
      %4771 = vmatprep.mubr.bf16.mxu0 %v4168
      %4772 = vmatmul.mubr.bf16.gmra.mrb[0].mxu0 %v4167
      %v4773 = vpop.f32.mrb[0].mxu0
      %v4774 = vadd.f32 %v4094, %v4773
      %v4775 = vpop.f32.mrb[0].mxu0
      %v4776 = vpop.f32.mrb[0].mxu0
      %v4777 = vadd.f32 %v4099, %v4776
      %v4778 = vpop.f32.mrb[0].mxu0
      %4779 = vmatprep.mubr.bf16.mxu0 %v4172
      %4780 = vmatmul.mubr.bf16.gmra.mrb[0].mxu0 %v4171
      %v4781 = vpop.f32.mrb[0].mxu0
      %v4782 = vadd.f32 %v4104, %v4781
      %v4783 = vpop.f32.mrb[0].mxu0
      %v4784 = vpop.f32.mrb[0].mxu0
      %v4785 = vadd.f32 %v4109, %v4784
      %v4786 = vpop.f32.mrb[0].mxu0
      %4787 = vdwg.mxu0
      %4788 = vmatprep.subr.bf16.mxu0 0
      %4789 = vmatpush1.bf16.msra.mxu0 %v4453
      %4790 = vmatprep.subr.bf16.mxu0 0
      %4791 = vmatpush1.bf16.msra.mxu0 %v4456
      %4792 = vmatprep.subr.bf16.mxu0 0
      %4793 = vmatpush1.bf16.msra.mxu0 %v4459
      %4794 = vmatprep.subr.bf16.mxu0 0
      %4795 = vmatpush1.bf16.msra.mxu0 %v4462
      %4796 = vmatprep.subr.bf16.mxu0 0
      %4797 = vmatpush1.bf16.msra.mxu0 %v4465
      %4798 = vmatprep.subr.bf16.mxu0 0
      %4799 = vmatpush1.bf16.msra.mxu0 %v4468
      %4800 = vmatprep.subr.bf16.mxu0 0
      %4801 = vmatpush1.bf16.msra.mxu0 %v4471
      %4802 = vmatprep.subr.bf16.mxu0 0
      %4803 = vmatpush1.bf16.msra.mxu0 %v4474
      %4804 = vmatprep.subr.bf16.mxu0 0
      %4805 = vmatpush1.bf16.msra.mxu0 %v4477
      %4806 = vmatprep.subr.bf16.mxu0 0
      %4807 = vmatpush1.bf16.msra.mxu0 %v4480
      %4808 = vmatprep.subr.bf16.mxu0 0
      %4809 = vmatpush1.bf16.msra.mxu0 %v4483
      %4810 = vmatprep.subr.bf16.mxu0 0
      %4811 = vmatpush1.bf16.msra.mxu0 0
      %4812 = vmatprep.subr.bf16.mxu0 0
      %4813 = vmatpush1.bf16.msra.mxu0 0
      %4814 = vmatprep.subr.bf16.mxu0 0
      %4815 = vmatpush1.bf16.msra.mxu0 0
      %4816 = vmatprep.subr.bf16.mxu0 0
      %4817 = vmatpush1.bf16.msra.mxu0 0
      %4818 = vmatprep.subr.bf16.mxu0 0
      %4819 = vmatpush1.bf16.msra.mxu0 0
      %4820 = vmatprep.mubr.bf16.mxu0 %v4566
      %4821 = vmatmul.mubr.bf16.gmra.mrb[0].mxu0 %v4161
      %v4822 = vpop.f32.mrb[0].mxu0
      %v4823 = vadd.f32 %v4758, %v4822
      %v4824 = vpop.f32.mrb[0].mxu0
      %v4825 = vpop.f32.mrb[0].mxu0
      %v4826 = vadd.f32 %v4761, %v4825
      %v4827 = vpop.f32.mrb[0].mxu0
      %4828 = vmatprep.mubr.bf16.mxu0 %v4569
      %4829 = vmatmul.mubr.bf16.gmra.mrb[0].mxu0 %v4165
      %v4830 = vpop.f32.mrb[0].mxu0
      %v4831 = vadd.f32 %v4766, %v4830
      %v4832 = vpop.f32.mrb[0].mxu0
      %v4833 = vpop.f32.mrb[0].mxu0
      %v4834 = vadd.f32 %v4769, %v4833
      %v4835 = vpop.f32.mrb[0].mxu0
      %4836 = vmatprep.mubr.bf16.mxu0 %v4572
      %4837 = vmatmul.mubr.bf16.gmra.mrb[0].mxu0 %v4169
      %v4838 = vpop.f32.mrb[0].mxu0
      %v4839 = vadd.f32 %v4774, %v4838
      %v4840 = vpop.f32.mrb[0].mxu0
      %v4841 = vpop.f32.mrb[0].mxu0
      %v4842 = vadd.f32 %v4777, %v4841
      %v4843 = vpop.f32.mrb[0].mxu0
      %4844 = vmatprep.mubr.bf16.mxu0 %v4575
      %4845 = vmatmul.mubr.bf16.gmra.mrb[0].mxu0 %v4173
      %v4846 = vpop.f32.mrb[0].mxu0
      %v4847 = vadd.f32 %v4782, %v4846
      %v4848 = vpop.f32.mrb[0].mxu0
      %v4849 = vpop.f32.mrb[0].mxu0
      %v4850 = vadd.f32 %v4785, %v4849
      %v4851 = vpop.f32.mrb[0].mxu0
      %4852 = vdwg.mxu0
      %v4853 = vmax.f32 %v4685, 0.0
      %v4854 = vmax.f32 %v4687, 0.0
      %v4855 = vmax.f32 %v4823, 0.0
      %v4856 = vmax.f32 %v4689, 0.0
      %v4857 = vmax.f32 %v4691, 0.0
      %v4858 = vmax.f32 %v4826, 0.0
      %v4859 = vmax.f32 %v4695, 0.0
      %v4860 = vmax.f32 %v4697, 0.0
      %v4861 = vmax.f32 %v4831, 0.0
      %v4862 = vmax.f32 %v4699, 0.0
      %v4863 = vmax.f32 %v4701, 0.0
      %v4864 = vmax.f32 %v4834, 0.0
      %v4865 = vmax.f32 %v4705, 0.0
      %v4866 = vmax.f32 %v4707, 0.0
      %v4867 = vmax.f32 %v4839, 0.0
      %v4868 = vmax.f32 %v4709, 0.0
      %v4869 = vmax.f32 %v4711, 0.0
      %v4870 = vmax.f32 %v4842, 0.0
      %v4871 = vmax.f32 %v4715, 0.0
      %v4872 = vmax.f32 %v4717, 0.0
      %v4873 = vmax.f32 %v4847, 0.0
      %v4874 = vmax.f32 %v4719, 0.0
      %v4875 = vmax.f32 %v4721, 0.0
      %v4876 = vmax.f32 %v4850, 0.0
      %s4877 = scalar_lea.vmem %s8, 16
      %v4878 = vld [vmem:[%s4877] sm:$0xf]
      %v4879 = vld [vmem:[%s4877 + $0x4] sm:$0xf]
      %v4880 = vpack.c.bf16 %v4856, %v4853
      %v4881 = vpack.c.bf16 %v4857, %v4854
      %v4882 = vpack.c.bf16 %v4858, %v4855
      %v4883 = vpack.c.bf16 %v4862, %v4859
      %v4884 = vpack.c.bf16 %v4863, %v4860
      %v4885 = vpack.c.bf16 %v4864, %v4861
      %v4886 = vpack.c.bf16 %v4868, %v4865
      %v4887 = vpack.c.bf16 %v4869, %v4866
      %v4888 = vpack.c.bf16 %v4870, %v4867
      %v4889 = vpack.c.bf16 %v4874, %v4871
      %v4890 = vpack.c.bf16 %v4875, %v4872
      %v4891 = vpack.c.bf16 %v4876, %v4873
      %s4892 = scalar_lea.vmem %s9, 32
      %v4893 = vld [vmem:[%s4892] sm:$0xff]
      %v4894 = vld [vmem:[%s4892 + $0x8] sm:$0xff]
      %4896 = vset.pattern.permute.xlu0 0
      %4897 = vperm.xlu0 %4896, %v4893
      %v4898 = vpop.permute.xlu0 %4897
      %4901 = vset.pattern.permute.xlu0 0
      %4902 = vperm.xlu0 %4901, %v4894
      %v4903 = vpop.permute.xlu0 %4902
      %v4907 = vunpack.c.l.b16 %v4878
      %v4908 = vunpack.c.l.b16 %v4879
      %v4909 = vpack.c.b16 %v4908, %v4907
      %v4911 = vsel %vm2375, %v4909, 0
      %4913 = vmatprep.subr.bf16.mxu0 %v4881
      %4914 = vmatpush1.bf16.msra.mxu0 %v4880
      %4915 = vmatprep.subr.bf16.mxu0 %v4884
      %4916 = vmatpush1.bf16.msra.mxu0 %v4883
      %4917 = vmatprep.subr.bf16.mxu0 %v4887
      %4918 = vmatpush1.bf16.msra.mxu0 %v4886
      %4919 = vmatprep.subr.bf16.mxu0 %v4890
      %4920 = vmatpush1.bf16.msra.mxu0 %v4889
      %4921 = vmatprep.subr.bf16.mxu0 0
      %4922 = vmatpush1.bf16.msra.mxu0 0
      %4923 = vmatprep.subr.bf16.mxu0 0
      %4924 = vmatpush1.bf16.msra.mxu0 0
      %4925 = vmatprep.subr.bf16.mxu0 0
      %4926 = vmatpush1.bf16.msra.mxu0 0
      %4927 = vmatprep.subr.bf16.mxu0 0
      %4928 = vmatpush1.bf16.msra.mxu0 0
      %4929 = vmatprep.subr.bf16.mxu0 0
      %4930 = vmatpush1.bf16.msra.mxu0 0
      %4931 = vmatprep.subr.bf16.mxu0 0
      %4932 = vmatpush1.bf16.msra.mxu0 0
      %4933 = vmatprep.subr.bf16.mxu0 0
      %4934 = vmatpush1.bf16.msra.mxu0 0
      %4935 = vmatprep.subr.bf16.mxu0 0
      %4936 = vmatpush1.bf16.msra.mxu0 0
      %4937 = vmatprep.subr.bf16.mxu0 0
      %4938 = vmatpush1.bf16.msra.mxu0 0
      %4939 = vmatprep.subr.bf16.mxu0 0
      %4940 = vmatpush1.bf16.msra.mxu0 0
      %4941 = vmatprep.subr.bf16.mxu0 0
      %4942 = vmatpush1.bf16.msra.mxu0 0
      %4943 = vmatprep.subr.bf16.mxu0 0
      %4944 = vmatpush1.bf16.msra.mxu0 0
      %4945 = vmatprep.mubr.bf16.mxu0 0
      %4946 = vmatmul.mubr.bf16.gmra.mrb[0].mxu0 %v4911
      %v4947 = vpop.f32.mrb[0].mxu0
      %v4948 = vadd.f32 %v4898, %v4947
      %v4949 = vpop.f32.mrb[0].mxu0
      %v4950 = vadd.f32 %v4898, %v4949
      %v4951 = vpop.f32.mrb[0].mxu0
      %v4952 = vadd.f32 %v4903, %v4951
      %v4953 = vpop.f32.mrb[0].mxu0
      %v4954 = vadd.f32 %v4903, %v4953
      %4955 = vdwg.mxu0
      %4956 = vmatprep.subr.bf16.mxu0 0
      %4957 = vmatpush1.bf16.msra.mxu0 %v4882
      %4958 = vmatprep.subr.bf16.mxu0 0
      %4959 = vmatpush1.bf16.msra.mxu0 %v4885
      %4960 = vmatprep.subr.bf16.mxu0 0
      %4961 = vmatpush1.bf16.msra.mxu0 %v4888
      %4962 = vmatprep.subr.bf16.mxu0 0
      %4963 = vmatpush1.bf16.msra.mxu0 %v4891
      %4964 = vmatprep.subr.bf16.mxu0 0
      %4965 = vmatpush1.bf16.msra.mxu0 0
      %4966 = vmatprep.subr.bf16.mxu0 0
      %4967 = vmatpush1.bf16.msra.mxu0 0
      %4968 = vmatprep.subr.bf16.mxu0 0
      %4969 = vmatpush1.bf16.msra.mxu0 0
      %4970 = vmatprep.subr.bf16.mxu0 0
      %4971 = vmatpush1.bf16.msra.mxu0 0
      %4972 = vmatprep.subr.bf16.mxu0 0
      %4973 = vmatpush1.bf16.msra.mxu0 0
      %4974 = vmatprep.subr.bf16.mxu0 0
      %4975 = vmatpush1.bf16.msra.mxu0 0
      %4976 = vmatprep.subr.bf16.mxu0 0
      %4977 = vmatpush1.bf16.msra.mxu0 0
      %4978 = vmatprep.subr.bf16.mxu0 0
      %4979 = vmatpush1.bf16.msra.mxu0 0
      %4980 = vmatprep.subr.bf16.mxu0 0
      %4981 = vmatpush1.bf16.msra.mxu0 0
      %4982 = vmatprep.subr.bf16.mxu0 0
      %4983 = vmatpush1.bf16.msra.mxu0 0
      %4984 = vmatprep.subr.bf16.mxu0 0
      %4985 = vmatpush1.bf16.msra.mxu0 0
      %4986 = vmatprep.subr.bf16.mxu0 0
      %4987 = vmatpush1.bf16.msra.mxu0 0
      %4988 = vmatprep.mubr.bf16.mxu0 0
      %4989 = vmatmul.mubr.bf16.gmra.mrb[0].mxu0 %v4911
      %v4990 = vpop.f32.mrb[0].mxu0
      %v4991 = vadd.f32 %v4898, %v4990
      %v4992 = vpop.f32.mrb[0].mxu0
      %v4993 = vpop.f32.mrb[0].mxu0
      %v4994 = vadd.f32 %v4903, %v4993
      %v4995 = vpop.f32.mrb[0].mxu0
      %4996 = vdwg.mxu0
      %v4997 = vmul.f32 %v4948, %v775
      %v4998 = vmul.f32 %v4950, %v779
      %v4999 = vmul.f32 %v4991, %v783
      %v5000 = vmul.f32 %v4952, %v775
      %v5001 = vmul.f32 %v4954, %v779
      %v5002 = vmul.f32 %v4994, %v783
      %v5003 = vpack.c.bf16 %v5000, %v4997
      %v5004 = vpack.c.bf16 %v5001, %v4998
      %v5005 = vpack.c.bf16 %v5002, %v4999
      %5006 = vst [vmem:[#allocation2 + $0x8] sm:$0xff] %v5003
      %5007 = vst [vmem:[#allocation2 + $0x10] sm:$0xff] %v5004
      %5008 = vst [vmem:[#allocation2 + $0x18] sm:$0xff] %v5005
      %v5009 = vld [vmem:[#allocation2] sm:$0xff]
      %v5010 = vld [vmem:[#allocation2 + $0x8] sm:$0xff]
      %v5011 = vld [vmem:[#allocation2 + $0x10] sm:$0xff]
      %v5012 = vld [vmem:[#allocation2 + $0x18] sm:$0xff]
      %v5013 = vld [vmem:[#allocation2 + $0x28] sm:$0xff]
      %v5014 = vld [vmem:[#allocation2 + $0x30] sm:$0xff]
      %v5015 = vld [vmem:[#allocation2 + $0x38] sm:$0xff]
      %v5016 = vld [vmem:[#allocation2 + $0x40] sm:$0xff]
      %v5017 = vld [vmem:[#allocation2 + $0x50] sm:$0xff]
      %v5018 = vld [vmem:[#allocation2 + $0x58] sm:$0xff]
      %v5019 = vld [vmem:[#allocation2 + $0x60] sm:$0xff]
      %v5020 = vld [vmem:[#allocation2 + $0x68] sm:$0xff]
      %v5021 = vld [vmem:[#allocation2 + $0x8] sm:$0xff]
      %v5022 = vld [vmem:[#allocation2 + $0x10] sm:$0xff]
      %v5023 = vld [vmem:[#allocation2 + $0x18] sm:$0xff]
      %v5024 = vld [vmem:[#allocation2 + $0x20] sm:$0xff]
      %v5025 = vld [vmem:[#allocation2 + $0x30] sm:$0xff]
      %v5026 = vld [vmem:[#allocation2 + $0x38] sm:$0xff]
      %v5027 = vld [vmem:[#allocation2 + $0x40] sm:$0xff]
      %v5028 = vld [vmem:[#allocation2 + $0x48] sm:$0xff]
      %v5029 = vld [vmem:[#allocation2 + $0x58] sm:$0xff]
      %v5030 = vld [vmem:[#allocation2 + $0x60] sm:$0xff]
      %v5031 = vld [vmem:[#allocation2 + $0x68] sm:$0xff]
      %v5032 = vld [vmem:[#allocation2 + $0x70] sm:$0xff]
      %5045 = vrot.lane.b32.xlu0 %v5009, 127
      %v5046 = vpop.permute.xlu0 %5045
      %5047 = vrot.lane.b32.xlu0 %v5010, 127
      %v5048 = vpop.permute.xlu0 %5047
      %5049 = vrot.lane.b32.xlu0 %v5011, 127
      %v5050 = vpop.permute.xlu0 %5049
      %5051 = vrot.lane.b32.xlu0 %v5012, 127
      %v5052 = vpop.permute.xlu0 %5051
      %5053 = vrot.lane.b32.xlu0 %v5013, 127
      %v5054 = vpop.permute.xlu0 %5053
      %5055 = vrot.lane.b32.xlu0 %v5014, 127
      %v5056 = vpop.permute.xlu0 %5055
      %5057 = vrot.lane.b32.xlu0 %v5015, 127
      %v5058 = vpop.permute.xlu0 %5057
      %5059 = vrot.lane.b32.xlu0 %v5016, 127
      %v5060 = vpop.permute.xlu0 %5059
      %5061 = vrot.lane.b32.xlu0 %v5017, 127
      %v5062 = vpop.permute.xlu0 %5061
      %5063 = vrot.lane.b32.xlu0 %v5018, 127
      %v5064 = vpop.permute.xlu0 %5063
      %5065 = vrot.lane.b32.xlu0 %v5019, 127
      %v5066 = vpop.permute.xlu0 %5065
      %5067 = vrot.lane.b32.xlu0 %v5020, 127
      %v5068 = vpop.permute.xlu0 %5067
      %v5069 = vsel %vm413, %v5046, %v5048
      %v5070 = vsel %vm413, %v5048, %v5050
      %v5071 = vsel %vm413, %v5050, %v5052
      %v5072 = vsel %vm413, %v5054, %v5056
      %v5073 = vsel %vm413, %v5056, %v5058
      %v5074 = vsel %vm413, %v5058, %v5060
      %v5075 = vsel %vm413, %v5062, %v5064
      %v5076 = vsel %vm413, %v5064, %v5066
      %v5077 = vsel %vm413, %v5066, %v5068
      %5078 = vrot.lane.b32.xlu0 %v5009, 126
      %v5079 = vpop.permute.xlu0 %5078
      %5080 = vrot.lane.b32.xlu0 %v5010, 126
      %v5081 = vpop.permute.xlu0 %5080
      %5082 = vrot.lane.b32.xlu0 %v5011, 126
      %v5083 = vpop.permute.xlu0 %5082
      %5084 = vrot.lane.b32.xlu0 %v5012, 126
      %v5085 = vpop.permute.xlu0 %5084
      %5086 = vrot.lane.b32.xlu0 %v5013, 126
      %v5087 = vpop.permute.xlu0 %5086
      %5088 = vrot.lane.b32.xlu0 %v5014, 126
      %v5089 = vpop.permute.xlu0 %5088
      %5090 = vrot.lane.b32.xlu0 %v5015, 126
      %v5091 = vpop.permute.xlu0 %5090
      %5092 = vrot.lane.b32.xlu0 %v5016, 126
      %v5093 = vpop.permute.xlu0 %5092
      %5094 = vrot.lane.b32.xlu0 %v5017, 126
      %v5095 = vpop.permute.xlu0 %5094
      %5096 = vrot.lane.b32.xlu0 %v5018, 126
      %v5097 = vpop.permute.xlu0 %5096
      %5098 = vrot.lane.b32.xlu0 %v5019, 126
      %v5099 = vpop.permute.xlu0 %5098
      %5100 = vrot.lane.b32.xlu0 %v5020, 126
      %v5101 = vpop.permute.xlu0 %5100
      %v5102 = vsel %vm425, %v5079, %v5081
      %v5103 = vsel %vm425, %v5081, %v5083
      %v5104 = vsel %vm425, %v5083, %v5085
      %v5105 = vsel %vm425, %v5087, %v5089
      %v5106 = vsel %vm425, %v5089, %v5091
      %v5107 = vsel %vm425, %v5091, %v5093
      %v5108 = vsel %vm425, %v5095, %v5097
      %v5109 = vsel %vm425, %v5097, %v5099
      %v5110 = vsel %vm425, %v5099, %v5101
      %5111 = vrot.lane.b32.xlu0 %v5009, 110
      %v5112 = vpop.permute.xlu0 %5111
      %5113 = vrot.lane.b32.xlu0 %v5010, 110
      %v5114 = vpop.permute.xlu0 %5113
      %5115 = vrot.lane.b32.xlu0 %v5011, 110
      %v5116 = vpop.permute.xlu0 %5115
      %5117 = vrot.lane.b32.xlu0 %v5012, 110
      %v5118 = vpop.permute.xlu0 %5117
      %5119 = vrot.lane.b32.xlu0 %v5013, 110
      %v5120 = vpop.permute.xlu0 %5119
      %5121 = vrot.lane.b32.xlu0 %v5014, 110
      %v5122 = vpop.permute.xlu0 %5121
      %5123 = vrot.lane.b32.xlu0 %v5015, 110
      %v5124 = vpop.permute.xlu0 %5123
      %5125 = vrot.lane.b32.xlu0 %v5016, 110
      %v5126 = vpop.permute.xlu0 %5125
      %5127 = vrot.lane.b32.xlu0 %v5017, 110
      %v5128 = vpop.permute.xlu0 %5127
      %5129 = vrot.lane.b32.xlu0 %v5018, 110
      %v5130 = vpop.permute.xlu0 %5129
      %5131 = vrot.lane.b32.xlu0 %v5019, 110
      %v5132 = vpop.permute.xlu0 %5131
      %5133 = vrot.lane.b32.xlu0 %v5020, 110
      %v5134 = vpop.permute.xlu0 %5133
      %v5135 = vsel %vm437, %v5112, %v5114
      %v5136 = vsel %vm437, %v5114, %v5116
      %v5137 = vsel %vm437, %v5116, %v5118
      %v5138 = vsel %vm437, %v5120, %v5122
      %v5139 = vsel %vm437, %v5122, %v5124
      %v5140 = vsel %vm437, %v5124, %v5126
      %v5141 = vsel %vm437, %v5128, %v5130
      %v5142 = vsel %vm437, %v5130, %v5132
      %v5143 = vsel %vm437, %v5132, %v5134
      %5144 = vrot.lane.b32.xlu0 %v5010, 109
      %v5145 = vpop.permute.xlu0 %5144
      %5146 = vrot.lane.b32.xlu0 %v5011, 109
      %v5147 = vpop.permute.xlu0 %5146
      %5148 = vrot.lane.b32.xlu0 %v5012, 109
      %v5149 = vpop.permute.xlu0 %5148
      %5150 = vrot.lane.b32.xlu0 %v5014, 109
      %v5151 = vpop.permute.xlu0 %5150
      %5152 = vrot.lane.b32.xlu0 %v5015, 109
      %v5153 = vpop.permute.xlu0 %5152
      %5154 = vrot.lane.b32.xlu0 %v5016, 109
      %v5155 = vpop.permute.xlu0 %5154
      %5156 = vrot.lane.b32.xlu0 %v5018, 109
      %v5157 = vpop.permute.xlu0 %5156
      %5158 = vrot.lane.b32.xlu0 %v5019, 109
      %v5159 = vpop.permute.xlu0 %5158
      %5160 = vrot.lane.b32.xlu0 %v5020, 109
      %v5161 = vpop.permute.xlu0 %5160
      %v5162 = vsel %vm460, %v5145, %v5147
      %v5163 = vsel %vm460, %v5147, %v5149
      %v5164 = vsel %vm460, %v5151, %v5153
      %v5165 = vsel %vm460, %v5153, %v5155
      %v5166 = vsel %vm460, %v5157, %v5159
      %v5167 = vsel %vm460, %v5159, %v5161
      %5180 = vrot.lane.b32.xlu0 %v5021, 108
      %v5181 = vpop.permute.xlu0 %5180
      %5182 = vrot.lane.b32.xlu0 %v5022, 108
      %v5183 = vpop.permute.xlu0 %5182
      %5184 = vrot.lane.b32.xlu0 %v5023, 108
      %v5185 = vpop.permute.xlu0 %5184
      %5186 = vrot.lane.b32.xlu0 %v5024, 108
      %v5187 = vpop.permute.xlu0 %5186
      %5188 = vrot.lane.b32.xlu0 %v5025, 108
      %v5189 = vpop.permute.xlu0 %5188
      %5190 = vrot.lane.b32.xlu0 %v5026, 108
      %v5191 = vpop.permute.xlu0 %5190
      %5192 = vrot.lane.b32.xlu0 %v5027, 108
      %v5193 = vpop.permute.xlu0 %5192
      %5194 = vrot.lane.b32.xlu0 %v5028, 108
      %v5195 = vpop.permute.xlu0 %5194
      %5196 = vrot.lane.b32.xlu0 %v5029, 108
      %v5197 = vpop.permute.xlu0 %5196
      %5198 = vrot.lane.b32.xlu0 %v5030, 108
      %v5199 = vpop.permute.xlu0 %5198
      %5200 = vrot.lane.b32.xlu0 %v5031, 108
      %v5201 = vpop.permute.xlu0 %5200
      %5202 = vrot.lane.b32.xlu0 %v5032, 108
      %v5203 = vpop.permute.xlu0 %5202
      %v5204 = vsel %vm487, %v5181, %v5183
      %v5205 = vsel %vm487, %v5183, %v5185
      %v5206 = vsel %vm487, %v5185, %v5187
      %v5207 = vsel %vm487, %v5189, %v5191
      %v5208 = vsel %vm487, %v5191, %v5193
      %v5209 = vsel %vm487, %v5193, %v5195
      %v5210 = vsel %vm487, %v5197, %v5199
      %v5211 = vsel %vm487, %v5199, %v5201
      %v5212 = vsel %vm487, %v5201, %v5203
      %5213 = vrot.lane.b32.xlu0 %v5021, 92
      %v5214 = vpop.permute.xlu0 %5213
      %5215 = vrot.lane.b32.xlu0 %v5022, 92
      %v5216 = vpop.permute.xlu0 %5215
      %5217 = vrot.lane.b32.xlu0 %v5023, 92
      %v5218 = vpop.permute.xlu0 %5217
      %5219 = vrot.lane.b32.xlu0 %v5024, 92
      %v5220 = vpop.permute.xlu0 %5219
      %5221 = vrot.lane.b32.xlu0 %v5025, 92
      %v5222 = vpop.permute.xlu0 %5221
      %5223 = vrot.lane.b32.xlu0 %v5026, 92
      %v5224 = vpop.permute.xlu0 %5223
      %5225 = vrot.lane.b32.xlu0 %v5027, 92
      %v5226 = vpop.permute.xlu0 %5225
      %5227 = vrot.lane.b32.xlu0 %v5028, 92
      %v5228 = vpop.permute.xlu0 %5227
      %5229 = vrot.lane.b32.xlu0 %v5029, 92
      %v5230 = vpop.permute.xlu0 %5229
      %5231 = vrot.lane.b32.xlu0 %v5030, 92
      %v5232 = vpop.permute.xlu0 %5231
      %5233 = vrot.lane.b32.xlu0 %v5031, 92
      %v5234 = vpop.permute.xlu0 %5233
      %5235 = vrot.lane.b32.xlu0 %v5032, 92
      %v5236 = vpop.permute.xlu0 %5235
      %v5237 = vsel %vm499, %v5214, %v5216
      %v5238 = vsel %vm499, %v5216, %v5218
      %v5239 = vsel %vm499, %v5218, %v5220
      %v5240 = vsel %vm499, %v5222, %v5224
      %v5241 = vsel %vm499, %v5224, %v5226
      %v5242 = vsel %vm499, %v5226, %v5228
      %v5243 = vsel %vm499, %v5230, %v5232
      %v5244 = vsel %vm499, %v5232, %v5234
      %v5245 = vsel %vm499, %v5234, %v5236
      %5246 = vrot.lane.b32.xlu0 %v5021, 91
      %v5247 = vpop.permute.xlu0 %5246
      %5248 = vrot.lane.b32.xlu0 %v5022, 91
      %v5249 = vpop.permute.xlu0 %5248
      %5250 = vrot.lane.b32.xlu0 %v5023, 91
      %v5251 = vpop.permute.xlu0 %5250
      %5252 = vrot.lane.b32.xlu0 %v5024, 91
      %v5253 = vpop.permute.xlu0 %5252
      %5254 = vrot.lane.b32.xlu0 %v5025, 91
      %v5255 = vpop.permute.xlu0 %5254
      %5256 = vrot.lane.b32.xlu0 %v5026, 91
      %v5257 = vpop.permute.xlu0 %5256
      %5258 = vrot.lane.b32.xlu0 %v5027, 91
      %v5259 = vpop.permute.xlu0 %5258
      %5260 = vrot.lane.b32.xlu0 %v5028, 91
      %v5261 = vpop.permute.xlu0 %5260
      %5262 = vrot.lane.b32.xlu0 %v5029, 91
      %v5263 = vpop.permute.xlu0 %5262
      %5264 = vrot.lane.b32.xlu0 %v5030, 91
      %v5265 = vpop.permute.xlu0 %5264
      %5266 = vrot.lane.b32.xlu0 %v5031, 91
      %v5267 = vpop.permute.xlu0 %5266
      %5268 = vrot.lane.b32.xlu0 %v5032, 91
      %v5269 = vpop.permute.xlu0 %5268
      %v5270 = vsel %vm511, %v5247, %v5249
      %v5271 = vsel %vm511, %v5249, %v5251
      %v5272 = vsel %vm511, %v5251, %v5253
      %v5273 = vsel %vm511, %v5255, %v5257
      %v5274 = vsel %vm511, %v5257, %v5259
      %v5275 = vsel %vm511, %v5259, %v5261
      %v5276 = vsel %vm511, %v5263, %v5265
      %v5277 = vsel %vm511, %v5265, %v5267
      %v5278 = vsel %vm511, %v5267, %v5269
      %5279 = vrot.lane.b32.xlu0 %v5021, 90
      %v5280 = vpop.permute.xlu0 %5279
      %5281 = vrot.lane.b32.xlu0 %v5022, 90
      %v5282 = vpop.permute.xlu0 %5281
      %5283 = vrot.lane.b32.xlu0 %v5023, 90
      %v5284 = vpop.permute.xlu0 %5283
      %5285 = vrot.lane.b32.xlu0 %v5024, 90
      %v5286 = vpop.permute.xlu0 %5285
      %5287 = vrot.lane.b32.xlu0 %v5025, 90
      %v5288 = vpop.permute.xlu0 %5287
      %5289 = vrot.lane.b32.xlu0 %v5026, 90
      %v5290 = vpop.permute.xlu0 %5289
      %5291 = vrot.lane.b32.xlu0 %v5027, 90
      %v5292 = vpop.permute.xlu0 %5291
      %5293 = vrot.lane.b32.xlu0 %v5028, 90
      %v5294 = vpop.permute.xlu0 %5293
      %5295 = vrot.lane.b32.xlu0 %v5029, 90
      %v5296 = vpop.permute.xlu0 %5295
      %5297 = vrot.lane.b32.xlu0 %v5030, 90
      %v5298 = vpop.permute.xlu0 %5297
      %5299 = vrot.lane.b32.xlu0 %v5031, 90
      %v5300 = vpop.permute.xlu0 %5299
      %5301 = vrot.lane.b32.xlu0 %v5032, 90
      %v5302 = vpop.permute.xlu0 %5301
      %v5303 = vsel %vm523, %v5280, %v5282
      %v5304 = vsel %vm523, %v5282, %v5284
      %v5305 = vsel %vm523, %v5284, %v5286
      %v5306 = vsel %vm523, %v5288, %v5290
      %v5307 = vsel %vm523, %v5290, %v5292
      %v5308 = vsel %vm523, %v5292, %v5294
      %v5309 = vsel %vm523, %v5296, %v5298
      %v5310 = vsel %vm523, %v5298, %v5300
      %v5311 = vsel %vm523, %v5300, %v5302
      %s5312 = scalar_lea.vmem %s6, 384
      %v5313 = vld [vmem:[%s5312] sm:$0xff]
      %v5314 = vld [vmem:[%s5312 + $0x8] sm:$0xff]
      %v5315 = vld [vmem:[%s5312 + $0x10] sm:$0xff]
      %v5316 = vld [vmem:[%s5312 + $0x18] sm:$0xff]
      %v5317 = vld [vmem:[%s5312 + $0x20] sm:$0xff]
      %v5318 = vld [vmem:[%s5312 + $0x28] sm:$0xff]
      %v5319 = vld [vmem:[%s5312 + $0x30] sm:$0xff]
      %v5320 = vld [vmem:[%s5312 + $0x38] sm:$0xff]
      %v5321 = vld [vmem:[%s5312 + $0x40] sm:$0xff]
      %v5322 = vld [vmem:[%s5312 + $0x48] sm:$0xff]
      %v5323 = vld [vmem:[%s5312 + $0x50] sm:$0xff]
      %v5324 = vld [vmem:[%s5312 + $0x58] sm:$0xff]
      %v5325 = vld [vmem:[%s5312 + $0x60] sm:$0xff]
      %v5326 = vld [vmem:[%s5312 + $0x68] sm:$0xff]
      %v5327 = vld [vmem:[%s5312 + $0x70] sm:$0xff]
      %v5328 = vld [vmem:[%s5312 + $0x78] sm:$0xff]
      %s5329 = scalar_lea.vmem %s7, 192
      %v5330 = vld [vmem:[%s5329] sm:$0xff]
      %v5331 = vld [vmem:[%s5329 + $0x8] sm:$0xff]
      %v5332 = vld [vmem:[%s5329 + $0x10] sm:$0xff]
      %v5333 = vld [vmem:[%s5329 + $0x18] sm:$0xff]
      %v5334 = vld [vmem:[%s5329 + $0x20] sm:$0xff]
      %v5335 = vld [vmem:[%s5329 + $0x28] sm:$0xff]
      %v5336 = vld [vmem:[%s5329 + $0x30] sm:$0xff]
      %v5337 = vld [vmem:[%s5329 + $0x38] sm:$0xff]
      %5339 = vset.pattern.permute.xlu0 0
      %5340 = vperm.xlu0 %5339, %v5330
      %v5341 = vpop.permute.xlu0 %5340
      %5344 = vset.pattern.permute.xlu0 0
      %5345 = vperm.xlu0 %5344, %v5331
      %v5346 = vpop.permute.xlu0 %5345
      %5349 = vset.pattern.permute.xlu0 0
      %5350 = vperm.xlu0 %5349, %v5332
      %v5351 = vpop.permute.xlu0 %5350
      %5354 = vset.pattern.permute.xlu0 0
      %5355 = vperm.xlu0 %5354, %v5333
      %v5356 = vpop.permute.xlu0 %5355
      %5359 = vset.pattern.permute.xlu0 0
      %5360 = vperm.xlu0 %5359, %v5334
      %v5361 = vpop.permute.xlu0 %5360
      %5364 = vset.pattern.permute.xlu0 0
      %5365 = vperm.xlu0 %5364, %v5335
      %v5366 = vpop.permute.xlu0 %5365
      %5369 = vset.pattern.permute.xlu0 0
      %5370 = vperm.xlu0 %5369, %v5336
      %v5371 = vpop.permute.xlu0 %5370
      %5374 = vset.pattern.permute.xlu0 0
      %5375 = vperm.xlu0 %5374, %v5337
      %v5376 = vpop.permute.xlu0 %5375
      %v5394 = vunpack.c.l.b16 %v5313
      %v5395 = vunpack.c.h.b16 %v5313
      %v5396 = vunpack.c.l.b16 %v5314
      %v5397 = vunpack.c.h.b16 %v5314
      %v5398 = vunpack.c.l.b16 %v5315
      %v5399 = vunpack.c.h.b16 %v5315
      %v5400 = vunpack.c.l.b16 %v5316
      %v5401 = vunpack.c.h.b16 %v5316
      %v5402 = vunpack.c.l.b16 %v5317
      %v5403 = vunpack.c.h.b16 %v5317
      %v5404 = vunpack.c.l.b16 %v5318
      %v5405 = vunpack.c.h.b16 %v5318
      %v5406 = vunpack.c.l.b16 %v5319
      %v5407 = vunpack.c.h.b16 %v5319
      %v5408 = vunpack.c.l.b16 %v5320
      %v5409 = vunpack.c.h.b16 %v5320
      %v5410 = vunpack.c.l.b16 %v5321
      %v5411 = vunpack.c.h.b16 %v5321
      %v5412 = vunpack.c.l.b16 %v5322
      %v5413 = vunpack.c.h.b16 %v5322
      %v5414 = vunpack.c.l.b16 %v5323
      %v5415 = vunpack.c.h.b16 %v5323
      %v5416 = vunpack.c.l.b16 %v5324
      %v5417 = vunpack.c.h.b16 %v5324
      %v5418 = vunpack.c.l.b16 %v5325
      %v5419 = vunpack.c.h.b16 %v5325
      %v5420 = vunpack.c.l.b16 %v5326
      %v5421 = vunpack.c.h.b16 %v5326
      %v5422 = vunpack.c.l.b16 %v5327
      %v5423 = vunpack.c.h.b16 %v5327
      %v5424 = vunpack.c.l.b16 %v5328
      %v5425 = vunpack.c.h.b16 %v5328
      %v5426 = vpack.c.b16 %v5398, %v5394
      %v5427 = vpack.c.b16 %v5399, %v5395
      %v5428 = vpack.c.b16 %v5400, %v5396
      %v5429 = vpack.c.b16 %v5401, %v5397
      %v5430 = vpack.c.b16 %v5406, %v5402
      %v5431 = vpack.c.b16 %v5407, %v5403
      %v5432 = vpack.c.b16 %v5408, %v5404
      %v5433 = vpack.c.b16 %v5409, %v5405
      %v5434 = vpack.c.b16 %v5414, %v5410
      %v5435 = vpack.c.b16 %v5415, %v5411
      %v5436 = vpack.c.b16 %v5416, %v5412
      %v5437 = vpack.c.b16 %v5417, %v5413
      %v5438 = vpack.c.b16 %v5422, %v5418
      %v5439 = vpack.c.b16 %v5423, %v5419
      %v5440 = vpack.c.b16 %v5424, %v5420
      %v5441 = vpack.c.b16 %v5425, %v5421
      %5454 = vrot.lane.b32.xlu0 %v5009, 19
      %v5455 = vpop.permute.xlu0 %5454
      %5456 = vrot.lane.b32.xlu0 %v5010, 19
      %v5457 = vpop.permute.xlu0 %5456
      %5458 = vrot.lane.b32.xlu0 %v5011, 19
      %v5459 = vpop.permute.xlu0 %5458
      %5460 = vrot.lane.b32.xlu0 %v5012, 19
      %v5461 = vpop.permute.xlu0 %5460
      %5462 = vrot.lane.b32.xlu0 %v5013, 19
      %v5463 = vpop.permute.xlu0 %5462
      %5464 = vrot.lane.b32.xlu0 %v5014, 19
      %v5465 = vpop.permute.xlu0 %5464
      %5466 = vrot.lane.b32.xlu0 %v5015, 19
      %v5467 = vpop.permute.xlu0 %5466
      %5468 = vrot.lane.b32.xlu0 %v5016, 19
      %v5469 = vpop.permute.xlu0 %5468
      %5470 = vrot.lane.b32.xlu0 %v5017, 19
      %v5471 = vpop.permute.xlu0 %5470
      %5472 = vrot.lane.b32.xlu0 %v5018, 19
      %v5473 = vpop.permute.xlu0 %5472
      %5474 = vrot.lane.b32.xlu0 %v5019, 19
      %v5475 = vpop.permute.xlu0 %5474
      %5476 = vrot.lane.b32.xlu0 %v5020, 19
      %v5477 = vpop.permute.xlu0 %5476
      %5478 = vrot.lane.b32.xlu0 %v5069, 19
      %v5479 = vpop.permute.xlu0 %5478
      %5480 = vrot.lane.b32.xlu0 %v5070, 19
      %v5481 = vpop.permute.xlu0 %5480
      %5482 = vrot.lane.b32.xlu0 %v5071, 19
      %v5483 = vpop.permute.xlu0 %5482
      %5484 = vrot.lane.b32.xlu0 %v5052, 19
      %v5485 = vpop.permute.xlu0 %5484
      %5486 = vrot.lane.b32.xlu0 %v5072, 19
      %v5487 = vpop.permute.xlu0 %5486
      %5488 = vrot.lane.b32.xlu0 %v5073, 19
      %v5489 = vpop.permute.xlu0 %5488
      %5490 = vrot.lane.b32.xlu0 %v5074, 19
      %v5491 = vpop.permute.xlu0 %5490
      %5492 = vrot.lane.b32.xlu0 %v5060, 19
      %v5493 = vpop.permute.xlu0 %5492
      %5494 = vrot.lane.b32.xlu0 %v5075, 19
      %v5495 = vpop.permute.xlu0 %5494
      %5496 = vrot.lane.b32.xlu0 %v5076, 19
      %v5497 = vpop.permute.xlu0 %5496
      %5498 = vrot.lane.b32.xlu0 %v5077, 19
      %v5499 = vpop.permute.xlu0 %5498
      %5500 = vrot.lane.b32.xlu0 %v5068, 19
      %v5501 = vpop.permute.xlu0 %5500
      %5502 = vrot.lane.b32.xlu0 %v5102, 19
      %v5503 = vpop.permute.xlu0 %5502
      %5504 = vrot.lane.b32.xlu0 %v5103, 19
      %v5505 = vpop.permute.xlu0 %5504
      %5506 = vrot.lane.b32.xlu0 %v5104, 19
      %v5507 = vpop.permute.xlu0 %5506
      %5508 = vrot.lane.b32.xlu0 %v5085, 19
      %v5509 = vpop.permute.xlu0 %5508
      %5510 = vrot.lane.b32.xlu0 %v5105, 19
      %v5511 = vpop.permute.xlu0 %5510
      %5512 = vrot.lane.b32.xlu0 %v5106, 19
      %v5513 = vpop.permute.xlu0 %5512
      %5514 = vrot.lane.b32.xlu0 %v5107, 19
      %v5515 = vpop.permute.xlu0 %5514
      %5516 = vrot.lane.b32.xlu0 %v5093, 19
      %v5517 = vpop.permute.xlu0 %5516
      %5518 = vrot.lane.b32.xlu0 %v5108, 19
      %v5519 = vpop.permute.xlu0 %5518
      %5520 = vrot.lane.b32.xlu0 %v5109, 19
      %v5521 = vpop.permute.xlu0 %5520
      %5522 = vrot.lane.b32.xlu0 %v5110, 19
      %v5523 = vpop.permute.xlu0 %5522
      %5524 = vrot.lane.b32.xlu0 %v5101, 19
      %v5525 = vpop.permute.xlu0 %5524
      %5526 = vrot.lane.b32.xlu0 %v5135, 19
      %v5527 = vpop.permute.xlu0 %5526
      %5528 = vrot.lane.b32.xlu0 %v5136, 19
      %v5529 = vpop.permute.xlu0 %5528
      %5530 = vrot.lane.b32.xlu0 %v5137, 19
      %v5531 = vpop.permute.xlu0 %5530
      %5532 = vrot.lane.b32.xlu0 %v5118, 19
      %v5533 = vpop.permute.xlu0 %5532
      %5534 = vrot.lane.b32.xlu0 %v5138, 19
      %v5535 = vpop.permute.xlu0 %5534
      %5536 = vrot.lane.b32.xlu0 %v5139, 19
      %v5537 = vpop.permute.xlu0 %5536
      %5538 = vrot.lane.b32.xlu0 %v5140, 19
      %v5539 = vpop.permute.xlu0 %5538
      %5540 = vrot.lane.b32.xlu0 %v5126, 19
      %v5541 = vpop.permute.xlu0 %5540
      %5542 = vrot.lane.b32.xlu0 %v5141, 19
      %v5543 = vpop.permute.xlu0 %5542
      %5544 = vrot.lane.b32.xlu0 %v5142, 19
      %v5545 = vpop.permute.xlu0 %5544
      %5546 = vrot.lane.b32.xlu0 %v5143, 19
      %v5547 = vpop.permute.xlu0 %5546
      %5548 = vrot.lane.b32.xlu0 %v5134, 19
      %v5549 = vpop.permute.xlu0 %5548
      %5550 = vrot.lane.b32.xlu0 %v5145, 19
      %v5551 = vpop.permute.xlu0 %5550
      %5552 = vrot.lane.b32.xlu0 %v5162, 19
      %v5553 = vpop.permute.xlu0 %5552
      %5554 = vrot.lane.b32.xlu0 %v5163, 19
      %v5555 = vpop.permute.xlu0 %5554
      %5556 = vrot.lane.b32.xlu0 %v5149, 19
      %v5557 = vpop.permute.xlu0 %5556
      %5558 = vrot.lane.b32.xlu0 %v5151, 19
      %v5559 = vpop.permute.xlu0 %5558
      %5560 = vrot.lane.b32.xlu0 %v5164, 19
      %v5561 = vpop.permute.xlu0 %5560
      %5562 = vrot.lane.b32.xlu0 %v5165, 19
      %v5563 = vpop.permute.xlu0 %5562
      %5564 = vrot.lane.b32.xlu0 %v5155, 19
      %v5565 = vpop.permute.xlu0 %5564
      %5566 = vrot.lane.b32.xlu0 %v5157, 19
      %v5567 = vpop.permute.xlu0 %5566
      %5568 = vrot.lane.b32.xlu0 %v5166, 19
      %v5569 = vpop.permute.xlu0 %5568
      %5570 = vrot.lane.b32.xlu0 %v5167, 19
      %v5571 = vpop.permute.xlu0 %5570
      %5572 = vrot.lane.b32.xlu0 %v5161, 19
      %v5573 = vpop.permute.xlu0 %5572
      %5574 = vrot.lane.b32.xlu0 %v5181, 19
      %v5575 = vpop.permute.xlu0 %5574
      %5576 = vrot.lane.b32.xlu0 %v5204, 19
      %v5577 = vpop.permute.xlu0 %5576
      %5578 = vrot.lane.b32.xlu0 %v5205, 19
      %v5579 = vpop.permute.xlu0 %5578
      %5580 = vrot.lane.b32.xlu0 %v5206, 19
      %v5581 = vpop.permute.xlu0 %5580
      %5582 = vrot.lane.b32.xlu0 %v5189, 19
      %v5583 = vpop.permute.xlu0 %5582
      %5584 = vrot.lane.b32.xlu0 %v5207, 19
      %v5585 = vpop.permute.xlu0 %5584
      %5586 = vrot.lane.b32.xlu0 %v5208, 19
      %v5587 = vpop.permute.xlu0 %5586
      %5588 = vrot.lane.b32.xlu0 %v5209, 19
      %v5589 = vpop.permute.xlu0 %5588
      %5590 = vrot.lane.b32.xlu0 %v5197, 19
      %v5591 = vpop.permute.xlu0 %5590
      %5592 = vrot.lane.b32.xlu0 %v5210, 19
      %v5593 = vpop.permute.xlu0 %5592
      %5594 = vrot.lane.b32.xlu0 %v5211, 19
      %v5595 = vpop.permute.xlu0 %5594
      %5596 = vrot.lane.b32.xlu0 %v5212, 19
      %v5597 = vpop.permute.xlu0 %5596
      %5598 = vrot.lane.b32.xlu0 %v5214, 19
      %v5599 = vpop.permute.xlu0 %5598
      %5600 = vrot.lane.b32.xlu0 %v5237, 19
      %v5601 = vpop.permute.xlu0 %5600
      %5602 = vrot.lane.b32.xlu0 %v5238, 19
      %v5603 = vpop.permute.xlu0 %5602
      %5604 = vrot.lane.b32.xlu0 %v5239, 19
      %v5605 = vpop.permute.xlu0 %5604
      %5606 = vrot.lane.b32.xlu0 %v5222, 19
      %v5607 = vpop.permute.xlu0 %5606
      %5608 = vrot.lane.b32.xlu0 %v5240, 19
      %v5609 = vpop.permute.xlu0 %5608
      %5610 = vrot.lane.b32.xlu0 %v5241, 19
      %v5611 = vpop.permute.xlu0 %5610
      %5612 = vrot.lane.b32.xlu0 %v5242, 19
      %v5613 = vpop.permute.xlu0 %5612
      %5614 = vrot.lane.b32.xlu0 %v5230, 19
      %v5615 = vpop.permute.xlu0 %5614
      %5616 = vrot.lane.b32.xlu0 %v5243, 19
      %v5617 = vpop.permute.xlu0 %5616
      %5618 = vrot.lane.b32.xlu0 %v5244, 19
      %v5619 = vpop.permute.xlu0 %5618
      %5620 = vrot.lane.b32.xlu0 %v5245, 19
      %v5621 = vpop.permute.xlu0 %5620
      %5622 = vrot.lane.b32.xlu0 %v5247, 19
      %v5623 = vpop.permute.xlu0 %5622
      %5624 = vrot.lane.b32.xlu0 %v5270, 19
      %v5625 = vpop.permute.xlu0 %5624
      %5626 = vrot.lane.b32.xlu0 %v5271, 19
      %v5627 = vpop.permute.xlu0 %5626
      %5628 = vrot.lane.b32.xlu0 %v5272, 19
      %v5629 = vpop.permute.xlu0 %5628
      %5630 = vrot.lane.b32.xlu0 %v5255, 19
      %v5631 = vpop.permute.xlu0 %5630
      %5632 = vrot.lane.b32.xlu0 %v5273, 19
      %v5633 = vpop.permute.xlu0 %5632
      %5634 = vrot.lane.b32.xlu0 %v5274, 19
      %v5635 = vpop.permute.xlu0 %5634
      %5636 = vrot.lane.b32.xlu0 %v5275, 19
      %v5637 = vpop.permute.xlu0 %5636
      %5638 = vrot.lane.b32.xlu0 %v5263, 19
      %v5639 = vpop.permute.xlu0 %5638
      %5640 = vrot.lane.b32.xlu0 %v5276, 19
      %v5641 = vpop.permute.xlu0 %5640
      %5642 = vrot.lane.b32.xlu0 %v5277, 19
      %v5643 = vpop.permute.xlu0 %5642
      %5644 = vrot.lane.b32.xlu0 %v5278, 19
      %v5645 = vpop.permute.xlu0 %5644
      %5646 = vrot.lane.b32.xlu0 %v5280, 19
      %v5647 = vpop.permute.xlu0 %5646
      %5648 = vrot.lane.b32.xlu0 %v5303, 19
      %v5649 = vpop.permute.xlu0 %5648
      %5650 = vrot.lane.b32.xlu0 %v5304, 19
      %v5651 = vpop.permute.xlu0 %5650
      %5652 = vrot.lane.b32.xlu0 %v5305, 19
      %v5653 = vpop.permute.xlu0 %5652
      %5654 = vrot.lane.b32.xlu0 %v5288, 19
      %v5655 = vpop.permute.xlu0 %5654
      %5656 = vrot.lane.b32.xlu0 %v5306, 19
      %v5657 = vpop.permute.xlu0 %5656
      %5658 = vrot.lane.b32.xlu0 %v5307, 19
      %v5659 = vpop.permute.xlu0 %5658
      %5660 = vrot.lane.b32.xlu0 %v5308, 19
      %v5661 = vpop.permute.xlu0 %5660
      %5662 = vrot.lane.b32.xlu0 %v5296, 19
      %v5663 = vpop.permute.xlu0 %5662
      %5664 = vrot.lane.b32.xlu0 %v5309, 19
      %v5665 = vpop.permute.xlu0 %5664
      %5666 = vrot.lane.b32.xlu0 %v5310, 19
      %v5667 = vpop.permute.xlu0 %5666
      %5668 = vrot.lane.b32.xlu0 %v5311, 19
      %v5669 = vpop.permute.xlu0 %5668
      %v5670 = vsel %vm622, %v5455, %v5457
      %v5671 = vsel %vm622, %v5457, %v5459
      %v5672 = vsel %vm622, %v5459, %v5461
      %v5673 = vsel %vm622, %v5463, %v5465
      %v5674 = vsel %vm622, %v5465, %v5467
      %v5675 = vsel %vm622, %v5467, %v5469
      %v5676 = vsel %vm622, %v5471, %v5473
      %v5677 = vsel %vm622, %v5473, %v5475
      %v5678 = vsel %vm622, %v5475, %v5477
      %v5679 = vsel %vm622, %v5479, %v5481
      %v5680 = vsel %vm622, %v5481, %v5483
      %v5681 = vsel %vm622, %v5483, %v5485
      %v5682 = vsel %vm622, %v5487, %v5489
      %v5683 = vsel %vm622, %v5489, %v5491
      %v5684 = vsel %vm622, %v5491, %v5493
      %v5685 = vsel %vm622, %v5495, %v5497
      %v5686 = vsel %vm622, %v5497, %v5499
      %v5687 = vsel %vm622, %v5499, %v5501
      %v5688 = vsel %vm622, %v5503, %v5505
      %v5689 = vsel %vm622, %v5505, %v5507
      %v5690 = vsel %vm622, %v5507, %v5509
      %v5691 = vsel %vm622, %v5511, %v5513
      %v5692 = vsel %vm622, %v5513, %v5515
      %v5693 = vsel %vm622, %v5515, %v5517
      %v5694 = vsel %vm622, %v5519, %v5521
      %v5695 = vsel %vm622, %v5521, %v5523
      %v5696 = vsel %vm622, %v5523, %v5525
      %v5697 = vsel %vm622, %v5527, %v5529
      %v5698 = vsel %vm622, %v5529, %v5531
      %v5699 = vsel %vm622, %v5531, %v5533
      %v5700 = vsel %vm622, %v5535, %v5537
      %v5701 = vsel %vm622, %v5537, %v5539
      %v5702 = vsel %vm622, %v5539, %v5541
      %v5703 = vsel %vm622, %v5543, %v5545
      %v5704 = vsel %vm622, %v5545, %v5547
      %v5705 = vsel %vm622, %v5547, %v5549
      %v5706 = vsel %vm622, %v5551, %v5553
      %v5707 = vsel %vm622, %v5553, %v5555
      %v5708 = vsel %vm622, %v5555, %v5557
      %v5709 = vsel %vm622, %v5559, %v5561
      %v5710 = vsel %vm622, %v5561, %v5563
      %v5711 = vsel %vm622, %v5563, %v5565
      %v5712 = vsel %vm622, %v5567, %v5569
      %v5713 = vsel %vm622, %v5569, %v5571
      %v5714 = vsel %vm622, %v5571, %v5573
      %v5715 = vsel %vm622, %v5575, %v5577
      %v5716 = vsel %vm622, %v5577, %v5579
      %v5717 = vsel %vm622, %v5579, %v5581
      %v5718 = vsel %vm622, %v5583, %v5585
      %v5719 = vsel %vm622, %v5585, %v5587
      %v5720 = vsel %vm622, %v5587, %v5589
      %v5721 = vsel %vm622, %v5591, %v5593
      %v5722 = vsel %vm622, %v5593, %v5595
      %v5723 = vsel %vm622, %v5595, %v5597
      %v5724 = vsel %vm622, %v5599, %v5601
      %v5725 = vsel %vm622, %v5601, %v5603
      %v5726 = vsel %vm622, %v5603, %v5605
      %v5727 = vsel %vm622, %v5607, %v5609
      %v5728 = vsel %vm622, %v5609, %v5611
      %v5729 = vsel %vm622, %v5611, %v5613
      %v5730 = vsel %vm622, %v5615, %v5617
      %v5731 = vsel %vm622, %v5617, %v5619
      %v5732 = vsel %vm622, %v5619, %v5621
      %v5733 = vsel %vm622, %v5623, %v5625
      %v5734 = vsel %vm622, %v5625, %v5627
      %v5735 = vsel %vm622, %v5627, %v5629
      %v5736 = vsel %vm622, %v5631, %v5633
      %v5737 = vsel %vm622, %v5633, %v5635
      %v5738 = vsel %vm622, %v5635, %v5637
      %v5739 = vsel %vm622, %v5639, %v5641
      %v5740 = vsel %vm622, %v5641, %v5643
      %v5741 = vsel %vm622, %v5643, %v5645
      %v5742 = vsel %vm622, %v5647, %v5649
      %v5743 = vsel %vm622, %v5649, %v5651
      %v5744 = vsel %vm622, %v5651, %v5653
      %v5745 = vsel %vm622, %v5655, %v5657
      %v5746 = vsel %vm622, %v5657, %v5659
      %v5747 = vsel %vm622, %v5659, %v5661
      %v5748 = vsel %vm622, %v5663, %v5665
      %v5749 = vsel %vm622, %v5665, %v5667
      %v5750 = vsel %vm622, %v5667, %v5669
      %v5833 = vsel %vm2031, %v5429, 0
      %v5836 = vsel %vm2031, %v5433, 0
      %v5839 = vsel %vm2031, %v5437, 0
      %v5842 = vsel %vm2031, %v5441, 0
      %5844 = vmatprep.subr.bf16.mxu0 %v5671
      %5845 = vmatpush1.bf16.msra.mxu0 %v5670
      %5846 = vmatprep.subr.bf16.mxu0 %v5674
      %5847 = vmatpush1.bf16.msra.mxu0 %v5673
      %5848 = vmatprep.subr.bf16.mxu0 %v5677
      %5849 = vmatpush1.bf16.msra.mxu0 %v5676
      %5850 = vmatprep.subr.bf16.mxu0 %v5680
      %5851 = vmatpush1.bf16.msra.mxu0 %v5679
      %5852 = vmatprep.subr.bf16.mxu0 %v5683
      %5853 = vmatpush1.bf16.msra.mxu0 %v5682
      %5854 = vmatprep.subr.bf16.mxu0 %v5686
      %5855 = vmatpush1.bf16.msra.mxu0 %v5685
      %5856 = vmatprep.subr.bf16.mxu0 %v5689
      %5857 = vmatpush1.bf16.msra.mxu0 %v5688
      %5858 = vmatprep.subr.bf16.mxu0 %v5692
      %5859 = vmatpush1.bf16.msra.mxu0 %v5691
      %5860 = vmatprep.subr.bf16.mxu0 %v5695
      %5861 = vmatpush1.bf16.msra.mxu0 %v5694
      %5862 = vmatprep.subr.bf16.mxu0 %v5698
      %5863 = vmatpush1.bf16.msra.mxu0 %v5697
      %5864 = vmatprep.subr.bf16.mxu0 %v5701
      %5865 = vmatpush1.bf16.msra.mxu0 %v5700
      %5866 = vmatprep.subr.bf16.mxu0 %v5704
      %5867 = vmatpush1.bf16.msra.mxu0 %v5703
      %5868 = vmatprep.subr.bf16.mxu0 %v5707
      %5869 = vmatpush1.bf16.msra.mxu0 %v5706
      %5870 = vmatprep.subr.bf16.mxu0 %v5710
      %5871 = vmatpush1.bf16.msra.mxu0 %v5709
      %5872 = vmatprep.subr.bf16.mxu0 %v5713
      %5873 = vmatpush1.bf16.msra.mxu0 %v5712
      %5874 = vmatprep.subr.bf16.mxu0 %v5716
      %5875 = vmatpush1.bf16.msra.mxu0 %v5715
      %5876 = vmatprep.mubr.bf16.mxu0 %v5427
      %5877 = vmatmul.mubr.bf16.gmra.mrb[0].mxu0 %v5426
      %v5878 = vpop.f32.mrb[0].mxu0
      %v5879 = vadd.f32 %v5341, %v5878
      %v5880 = vpop.f32.mrb[0].mxu0
      %v5881 = vadd.f32 %v5341, %v5880
      %v5882 = vpop.f32.mrb[0].mxu0
      %v5883 = vadd.f32 %v5346, %v5882
      %v5884 = vpop.f32.mrb[0].mxu0
      %v5885 = vadd.f32 %v5346, %v5884
      %5886 = vmatprep.mubr.bf16.mxu0 %v5431
      %5887 = vmatmul.mubr.bf16.gmra.mrb[0].mxu0 %v5430
      %v5888 = vpop.f32.mrb[0].mxu0
      %v5889 = vadd.f32 %v5351, %v5888
      %v5890 = vpop.f32.mrb[0].mxu0
      %v5891 = vadd.f32 %v5351, %v5890
      %v5892 = vpop.f32.mrb[0].mxu0
      %v5893 = vadd.f32 %v5356, %v5892
      %v5894 = vpop.f32.mrb[0].mxu0
      %v5895 = vadd.f32 %v5356, %v5894
      %5896 = vmatprep.mubr.bf16.mxu0 %v5435
      %5897 = vmatmul.mubr.bf16.gmra.mrb[0].mxu0 %v5434
      %v5898 = vpop.f32.mrb[0].mxu0
      %v5899 = vadd.f32 %v5361, %v5898
      %v5900 = vpop.f32.mrb[0].mxu0
      %v5901 = vadd.f32 %v5361, %v5900
      %v5902 = vpop.f32.mrb[0].mxu0
      %v5903 = vadd.f32 %v5366, %v5902
      %v5904 = vpop.f32.mrb[0].mxu0
      %v5905 = vadd.f32 %v5366, %v5904
      %5906 = vmatprep.mubr.bf16.mxu0 %v5439
      %5907 = vmatmul.mubr.bf16.gmra.mrb[0].mxu0 %v5438
      %v5908 = vpop.f32.mrb[0].mxu0
      %v5909 = vadd.f32 %v5371, %v5908
      %v5910 = vpop.f32.mrb[0].mxu0
      %v5911 = vadd.f32 %v5371, %v5910
      %v5912 = vpop.f32.mrb[0].mxu0
      %v5913 = vadd.f32 %v5376, %v5912
      %v5914 = vpop.f32.mrb[0].mxu0
      %v5915 = vadd.f32 %v5376, %v5914
      %5916 = vdwg.mxu0
      %5917 = vmatprep.subr.bf16.mxu0 %v5719
      %5918 = vmatpush1.bf16.msra.mxu0 %v5718
      %5919 = vmatprep.subr.bf16.mxu0 %v5722
      %5920 = vmatpush1.bf16.msra.mxu0 %v5721
      %5921 = vmatprep.subr.bf16.mxu0 %v5725
      %5922 = vmatpush1.bf16.msra.mxu0 %v5724
      %5923 = vmatprep.subr.bf16.mxu0 %v5728
      %5924 = vmatpush1.bf16.msra.mxu0 %v5727
      %5925 = vmatprep.subr.bf16.mxu0 %v5731
      %5926 = vmatpush1.bf16.msra.mxu0 %v5730
      %5927 = vmatprep.subr.bf16.mxu0 %v5734
      %5928 = vmatpush1.bf16.msra.mxu0 %v5733
      %5929 = vmatprep.subr.bf16.mxu0 %v5737
      %5930 = vmatpush1.bf16.msra.mxu0 %v5736
      %5931 = vmatprep.subr.bf16.mxu0 %v5740
      %5932 = vmatpush1.bf16.msra.mxu0 %v5739
      %5933 = vmatprep.subr.bf16.mxu0 %v5743
      %5934 = vmatpush1.bf16.msra.mxu0 %v5742
      %5935 = vmatprep.subr.bf16.mxu0 %v5746
      %5936 = vmatpush1.bf16.msra.mxu0 %v5745
      %5937 = vmatprep.subr.bf16.mxu0 %v5749
      %5938 = vmatpush1.bf16.msra.mxu0 %v5748
      %5939 = vmatprep.subr.bf16.mxu0 0
      %5940 = vmatpush1.bf16.msra.mxu0 0
      %5941 = vmatprep.subr.bf16.mxu0 0
      %5942 = vmatpush1.bf16.msra.mxu0 0
      %5943 = vmatprep.subr.bf16.mxu0 0
      %5944 = vmatpush1.bf16.msra.mxu0 0
      %5945 = vmatprep.subr.bf16.mxu0 0
      %5946 = vmatpush1.bf16.msra.mxu0 0
      %5947 = vmatprep.subr.bf16.mxu0 0
      %5948 = vmatpush1.bf16.msra.mxu0 0
      %5949 = vmatprep.mubr.bf16.mxu0 %v5833
      %5950 = vmatmul.mubr.bf16.gmra.mrb[0].mxu0 %v5428
      %v5951 = vpop.f32.mrb[0].mxu0
      %v5952 = vadd.f32 %v5879, %v5951
      %v5953 = vpop.f32.mrb[0].mxu0
      %v5954 = vadd.f32 %v5881, %v5953
      %v5955 = vpop.f32.mrb[0].mxu0
      %v5956 = vadd.f32 %v5883, %v5955
      %v5957 = vpop.f32.mrb[0].mxu0
      %v5958 = vadd.f32 %v5885, %v5957
      %5959 = vmatprep.mubr.bf16.mxu0 %v5836
      %5960 = vmatmul.mubr.bf16.gmra.mrb[0].mxu0 %v5432
      %v5961 = vpop.f32.mrb[0].mxu0
      %v5962 = vadd.f32 %v5889, %v5961
      %v5963 = vpop.f32.mrb[0].mxu0
      %v5964 = vadd.f32 %v5891, %v5963
      %v5965 = vpop.f32.mrb[0].mxu0
      %v5966 = vadd.f32 %v5893, %v5965
      %v5967 = vpop.f32.mrb[0].mxu0
      %v5968 = vadd.f32 %v5895, %v5967
      %5969 = vmatprep.mubr.bf16.mxu0 %v5839
      %5970 = vmatmul.mubr.bf16.gmra.mrb[0].mxu0 %v5436
      %v5971 = vpop.f32.mrb[0].mxu0
      %v5972 = vadd.f32 %v5899, %v5971
      %v5973 = vpop.f32.mrb[0].mxu0
      %v5974 = vadd.f32 %v5901, %v5973
      %v5975 = vpop.f32.mrb[0].mxu0
      %v5976 = vadd.f32 %v5903, %v5975
      %v5977 = vpop.f32.mrb[0].mxu0
      %v5978 = vadd.f32 %v5905, %v5977
      %5979 = vmatprep.mubr.bf16.mxu0 %v5842
      %5980 = vmatmul.mubr.bf16.gmra.mrb[0].mxu0 %v5440
      %v5981 = vpop.f32.mrb[0].mxu0
      %v5982 = vadd.f32 %v5909, %v5981
      %v5983 = vpop.f32.mrb[0].mxu0
      %v5984 = vadd.f32 %v5911, %v5983
      %v5985 = vpop.f32.mrb[0].mxu0
      %v5986 = vadd.f32 %v5913, %v5985
      %v5987 = vpop.f32.mrb[0].mxu0
      %v5988 = vadd.f32 %v5915, %v5987
      %5989 = vdwg.mxu0
      %5990 = vmatprep.subr.bf16.mxu0 0
      %5991 = vmatpush1.bf16.msra.mxu0 %v5672
      %5992 = vmatprep.subr.bf16.mxu0 0
      %5993 = vmatpush1.bf16.msra.mxu0 %v5675
      %5994 = vmatprep.subr.bf16.mxu0 0
      %5995 = vmatpush1.bf16.msra.mxu0 %v5678
      %5996 = vmatprep.subr.bf16.mxu0 0
      %5997 = vmatpush1.bf16.msra.mxu0 %v5681
      %5998 = vmatprep.subr.bf16.mxu0 0
      %5999 = vmatpush1.bf16.msra.mxu0 %v5684
      %6000 = vmatprep.subr.bf16.mxu0 0
      %6001 = vmatpush1.bf16.msra.mxu0 %v5687
      %6002 = vmatprep.subr.bf16.mxu0 0
      %6003 = vmatpush1.bf16.msra.mxu0 %v5690
      %6004 = vmatprep.subr.bf16.mxu0 0
      %6005 = vmatpush1.bf16.msra.mxu0 %v5693
      %6006 = vmatprep.subr.bf16.mxu0 0
      %6007 = vmatpush1.bf16.msra.mxu0 %v5696
      %6008 = vmatprep.subr.bf16.mxu0 0
      %6009 = vmatpush1.bf16.msra.mxu0 %v5699
      %6010 = vmatprep.subr.bf16.mxu0 0
      %6011 = vmatpush1.bf16.msra.mxu0 %v5702
      %6012 = vmatprep.subr.bf16.mxu0 0
      %6013 = vmatpush1.bf16.msra.mxu0 %v5705
      %6014 = vmatprep.subr.bf16.mxu0 0
      %6015 = vmatpush1.bf16.msra.mxu0 %v5708
      %6016 = vmatprep.subr.bf16.mxu0 0
      %6017 = vmatpush1.bf16.msra.mxu0 %v5711
      %6018 = vmatprep.subr.bf16.mxu0 0
      %6019 = vmatpush1.bf16.msra.mxu0 %v5714
      %6020 = vmatprep.subr.bf16.mxu0 0
      %6021 = vmatpush1.bf16.msra.mxu0 %v5717
      %6022 = vmatprep.mubr.bf16.mxu0 %v5427
      %6023 = vmatmul.mubr.bf16.gmra.mrb[0].mxu0 %v5426
      %v6024 = vpop.f32.mrb[0].mxu0
      %v6025 = vadd.f32 %v5341, %v6024
      %v6026 = vpop.f32.mrb[0].mxu0
      %v6027 = vpop.f32.mrb[0].mxu0
      %v6028 = vadd.f32 %v5346, %v6027
      %v6029 = vpop.f32.mrb[0].mxu0
      %6030 = vmatprep.mubr.bf16.mxu0 %v5431
      %6031 = vmatmul.mubr.bf16.gmra.mrb[0].mxu0 %v5430
      %v6032 = vpop.f32.mrb[0].mxu0
      %v6033 = vadd.f32 %v5351, %v6032
      %v6034 = vpop.f32.mrb[0].mxu0
      %v6035 = vpop.f32.mrb[0].mxu0
      %v6036 = vadd.f32 %v5356, %v6035
      %v6037 = vpop.f32.mrb[0].mxu0
      %6038 = vmatprep.mubr.bf16.mxu0 %v5435
      %6039 = vmatmul.mubr.bf16.gmra.mrb[0].mxu0 %v5434
      %v6040 = vpop.f32.mrb[0].mxu0
      %v6041 = vadd.f32 %v5361, %v6040
      %v6042 = vpop.f32.mrb[0].mxu0
      %v6043 = vpop.f32.mrb[0].mxu0
      %v6044 = vadd.f32 %v5366, %v6043
      %v6045 = vpop.f32.mrb[0].mxu0
      %6046 = vmatprep.mubr.bf16.mxu0 %v5439
      %6047 = vmatmul.mubr.bf16.gmra.mrb[0].mxu0 %v5438
      %v6048 = vpop.f32.mrb[0].mxu0
      %v6049 = vadd.f32 %v5371, %v6048
      %v6050 = vpop.f32.mrb[0].mxu0
      %v6051 = vpop.f32.mrb[0].mxu0
      %v6052 = vadd.f32 %v5376, %v6051
      %v6053 = vpop.f32.mrb[0].mxu0
      %6054 = vdwg.mxu0
      %6055 = vmatprep.subr.bf16.mxu0 0
      %6056 = vmatpush1.bf16.msra.mxu0 %v5720
      %6057 = vmatprep.subr.bf16.mxu0 0
      %6058 = vmatpush1.bf16.msra.mxu0 %v5723
      %6059 = vmatprep.subr.bf16.mxu0 0
      %6060 = vmatpush1.bf16.msra.mxu0 %v5726
      %6061 = vmatprep.subr.bf16.mxu0 0
      %6062 = vmatpush1.bf16.msra.mxu0 %v5729
      %6063 = vmatprep.subr.bf16.mxu0 0
      %6064 = vmatpush1.bf16.msra.mxu0 %v5732
      %6065 = vmatprep.subr.bf16.mxu0 0
      %6066 = vmatpush1.bf16.msra.mxu0 %v5735
      %6067 = vmatprep.subr.bf16.mxu0 0
      %6068 = vmatpush1.bf16.msra.mxu0 %v5738
      %6069 = vmatprep.subr.bf16.mxu0 0
      %6070 = vmatpush1.bf16.msra.mxu0 %v5741
      %6071 = vmatprep.subr.bf16.mxu0 0
      %6072 = vmatpush1.bf16.msra.mxu0 %v5744
      %6073 = vmatprep.subr.bf16.mxu0 0
      %6074 = vmatpush1.bf16.msra.mxu0 %v5747
      %6075 = vmatprep.subr.bf16.mxu0 0
      %6076 = vmatpush1.bf16.msra.mxu0 %v5750
      %6077 = vmatprep.subr.bf16.mxu0 0
      %6078 = vmatpush1.bf16.msra.mxu0 0
      %6079 = vmatprep.subr.bf16.mxu0 0
      %6080 = vmatpush1.bf16.msra.mxu0 0
      %6081 = vmatprep.subr.bf16.mxu0 0
      %6082 = vmatpush1.bf16.msra.mxu0 0
      %6083 = vmatprep.subr.bf16.mxu0 0
      %6084 = vmatpush1.bf16.msra.mxu0 0
      %6085 = vmatprep.subr.bf16.mxu0 0
      %6086 = vmatpush1.bf16.msra.mxu0 0
      %6087 = vmatprep.mubr.bf16.mxu0 %v5833
      %6088 = vmatmul.mubr.bf16.gmra.mrb[0].mxu0 %v5428
      %v6089 = vpop.f32.mrb[0].mxu0
      %v6090 = vadd.f32 %v6025, %v6089
      %v6091 = vpop.f32.mrb[0].mxu0
      %v6092 = vpop.f32.mrb[0].mxu0
      %v6093 = vadd.f32 %v6028, %v6092
      %v6094 = vpop.f32.mrb[0].mxu0
      %6095 = vmatprep.mubr.bf16.mxu0 %v5836
      %6096 = vmatmul.mubr.bf16.gmra.mrb[0].mxu0 %v5432
      %v6097 = vpop.f32.mrb[0].mxu0
      %v6098 = vadd.f32 %v6033, %v6097
      %v6099 = vpop.f32.mrb[0].mxu0
      %v6100 = vpop.f32.mrb[0].mxu0
      %v6101 = vadd.f32 %v6036, %v6100
      %v6102 = vpop.f32.mrb[0].mxu0
      %6103 = vmatprep.mubr.bf16.mxu0 %v5839
      %6104 = vmatmul.mubr.bf16.gmra.mrb[0].mxu0 %v5436
      %v6105 = vpop.f32.mrb[0].mxu0
      %v6106 = vadd.f32 %v6041, %v6105
      %v6107 = vpop.f32.mrb[0].mxu0
      %v6108 = vpop.f32.mrb[0].mxu0
      %v6109 = vadd.f32 %v6044, %v6108
      %v6110 = vpop.f32.mrb[0].mxu0
      %6111 = vmatprep.mubr.bf16.mxu0 %v5842
      %6112 = vmatmul.mubr.bf16.gmra.mrb[0].mxu0 %v5440
      %v6113 = vpop.f32.mrb[0].mxu0
      %v6114 = vadd.f32 %v6049, %v6113
      %v6115 = vpop.f32.mrb[0].mxu0
      %v6116 = vpop.f32.mrb[0].mxu0
      %v6117 = vadd.f32 %v6052, %v6116
      %v6118 = vpop.f32.mrb[0].mxu0
      %6119 = vdwg.mxu0
      %v6120 = vmax.f32 %v5952, 0.0
      %v6121 = vmax.f32 %v5954, 0.0
      %v6122 = vmax.f32 %v6090, 0.0
      %v6123 = vmax.f32 %v5956, 0.0
      %v6124 = vmax.f32 %v5958, 0.0
      %v6125 = vmax.f32 %v6093, 0.0
      %v6126 = vmax.f32 %v5962, 0.0
      %v6127 = vmax.f32 %v5964, 0.0
      %v6128 = vmax.f32 %v6098, 0.0
      %v6129 = vmax.f32 %v5966, 0.0
      %v6130 = vmax.f32 %v5968, 0.0
      %v6131 = vmax.f32 %v6101, 0.0
      %v6132 = vmax.f32 %v5972, 0.0
      %v6133 = vmax.f32 %v5974, 0.0
      %v6134 = vmax.f32 %v6106, 0.0
      %v6135 = vmax.f32 %v5976, 0.0
      %v6136 = vmax.f32 %v5978, 0.0
      %v6137 = vmax.f32 %v6109, 0.0
      %v6138 = vmax.f32 %v5982, 0.0
      %v6139 = vmax.f32 %v5984, 0.0
      %v6140 = vmax.f32 %v6114, 0.0
      %v6141 = vmax.f32 %v5986, 0.0
      %v6142 = vmax.f32 %v5988, 0.0
      %v6143 = vmax.f32 %v6117, 0.0
      %s6144 = scalar_lea.vmem %s8, 24
      %v6145 = vld [vmem:[%s6144] sm:$0xf]
      %v6146 = vld [vmem:[%s6144 + $0x4] sm:$0xf]
      %v6147 = vpack.c.bf16 %v6123, %v6120
      %v6148 = vpack.c.bf16 %v6124, %v6121
      %v6149 = vpack.c.bf16 %v6125, %v6122
      %v6150 = vpack.c.bf16 %v6129, %v6126
      %v6151 = vpack.c.bf16 %v6130, %v6127
      %v6152 = vpack.c.bf16 %v6131, %v6128
      %v6153 = vpack.c.bf16 %v6135, %v6132
      %v6154 = vpack.c.bf16 %v6136, %v6133
      %v6155 = vpack.c.bf16 %v6137, %v6134
      %v6156 = vpack.c.bf16 %v6141, %v6138
      %v6157 = vpack.c.bf16 %v6142, %v6139
      %v6158 = vpack.c.bf16 %v6143, %v6140
      %s6159 = scalar_lea.vmem %s9, 48
      %v6160 = vld [vmem:[%s6159] sm:$0xff]
      %v6161 = vld [vmem:[%s6159 + $0x8] sm:$0xff]
      %6163 = vset.pattern.permute.xlu0 0
      %6164 = vperm.xlu0 %6163, %v6160
      %v6165 = vpop.permute.xlu0 %6164
      %6168 = vset.pattern.permute.xlu0 0
      %6169 = vperm.xlu0 %6168, %v6161
      %v6170 = vpop.permute.xlu0 %6169
      %v6174 = vunpack.c.l.b16 %v6145
      %v6175 = vunpack.c.l.b16 %v6146
      %v6176 = vpack.c.b16 %v6175, %v6174
      %v6178 = vsel %vm2375, %v6176, 0
      %6180 = vmatprep.subr.bf16.mxu0 %v6148
      %6181 = vmatpush1.bf16.msra.mxu0 %v6147
      %6182 = vmatprep.subr.bf16.mxu0 %v6151
      %6183 = vmatpush1.bf16.msra.mxu0 %v6150
      %6184 = vmatprep.subr.bf16.mxu0 %v6154
      %6185 = vmatpush1.bf16.msra.mxu0 %v6153
      %6186 = vmatprep.subr.bf16.mxu0 %v6157
      %6187 = vmatpush1.bf16.msra.mxu0 %v6156
      %6188 = vmatprep.subr.bf16.mxu0 0
      %6189 = vmatpush1.bf16.msra.mxu0 0
      %6190 = vmatprep.subr.bf16.mxu0 0
      %6191 = vmatpush1.bf16.msra.mxu0 0
      %6192 = vmatprep.subr.bf16.mxu0 0
      %6193 = vmatpush1.bf16.msra.mxu0 0
      %6194 = vmatprep.subr.bf16.mxu0 0
      %6195 = vmatpush1.bf16.msra.mxu0 0
      %6196 = vmatprep.subr.bf16.mxu0 0
      %6197 = vmatpush1.bf16.msra.mxu0 0
      %6198 = vmatprep.subr.bf16.mxu0 0
      %6199 = vmatpush1.bf16.msra.mxu0 0
      %6200 = vmatprep.subr.bf16.mxu0 0
      %6201 = vmatpush1.bf16.msra.mxu0 0
      %6202 = vmatprep.subr.bf16.mxu0 0
      %6203 = vmatpush1.bf16.msra.mxu0 0
      %6204 = vmatprep.subr.bf16.mxu0 0
      %6205 = vmatpush1.bf16.msra.mxu0 0
      %6206 = vmatprep.subr.bf16.mxu0 0
      %6207 = vmatpush1.bf16.msra.mxu0 0
      %6208 = vmatprep.subr.bf16.mxu0 0
      %6209 = vmatpush1.bf16.msra.mxu0 0
      %6210 = vmatprep.subr.bf16.mxu0 0
      %6211 = vmatpush1.bf16.msra.mxu0 0
      %6212 = vmatprep.mubr.bf16.mxu0 0
      %6213 = vmatmul.mubr.bf16.gmra.mrb[0].mxu0 %v6178
      %v6214 = vpop.f32.mrb[0].mxu0
      %v6215 = vadd.f32 %v6165, %v6214
      %v6216 = vpop.f32.mrb[0].mxu0
      %v6217 = vadd.f32 %v6165, %v6216
      %v6218 = vpop.f32.mrb[0].mxu0
      %v6219 = vadd.f32 %v6170, %v6218
      %v6220 = vpop.f32.mrb[0].mxu0
      %v6221 = vadd.f32 %v6170, %v6220
      %6222 = vdwg.mxu0
      %6223 = vmatprep.subr.bf16.mxu0 0
      %6224 = vmatpush1.bf16.msra.mxu0 %v6149
      %6225 = vmatprep.subr.bf16.mxu0 0
      %6226 = vmatpush1.bf16.msra.mxu0 %v6152
      %6227 = vmatprep.subr.bf16.mxu0 0
      %6228 = vmatpush1.bf16.msra.mxu0 %v6155
      %6229 = vmatprep.subr.bf16.mxu0 0
      %6230 = vmatpush1.bf16.msra.mxu0 %v6158
      %6231 = vmatprep.subr.bf16.mxu0 0
      %6232 = vmatpush1.bf16.msra.mxu0 0
      %6233 = vmatprep.subr.bf16.mxu0 0
      %6234 = vmatpush1.bf16.msra.mxu0 0
      %6235 = vmatprep.subr.bf16.mxu0 0
      %6236 = vmatpush1.bf16.msra.mxu0 0
      %6237 = vmatprep.subr.bf16.mxu0 0
      %6238 = vmatpush1.bf16.msra.mxu0 0
      %6239 = vmatprep.subr.bf16.mxu0 0
      %6240 = vmatpush1.bf16.msra.mxu0 0
      %6241 = vmatprep.subr.bf16.mxu0 0
      %6242 = vmatpush1.bf16.msra.mxu0 0
      %6243 = vmatprep.subr.bf16.mxu0 0
      %6244 = vmatpush1.bf16.msra.mxu0 0
      %6245 = vmatprep.subr.bf16.mxu0 0
      %6246 = vmatpush1.bf16.msra.mxu0 0
      %6247 = vmatprep.subr.bf16.mxu0 0
      %6248 = vmatpush1.bf16.msra.mxu0 0
      %6249 = vmatprep.subr.bf16.mxu0 0
      %6250 = vmatpush1.bf16.msra.mxu0 0
      %6251 = vmatprep.subr.bf16.mxu0 0
      %6252 = vmatpush1.bf16.msra.mxu0 0
      %6253 = vmatprep.subr.bf16.mxu0 0
      %6254 = vmatpush1.bf16.msra.mxu0 0
      %6255 = vmatprep.mubr.bf16.mxu0 0
      %6256 = vmatmul.mubr.bf16.gmra.mrb[0].mxu0 %v6178
      %v6257 = vpop.f32.mrb[0].mxu0
      %v6258 = vadd.f32 %v6165, %v6257
      %v6259 = vpop.f32.mrb[0].mxu0
      %v6260 = vpop.f32.mrb[0].mxu0
      %v6261 = vadd.f32 %v6170, %v6260
      %v6262 = vpop.f32.mrb[0].mxu0
      %6263 = vdwg.mxu0
      %v6264 = vmul.f32 %v6215, %v775
      %v6265 = vmul.f32 %v6217, %v779
      %v6266 = vmul.f32 %v6258, %v783
      %v6267 = vmul.f32 %v6219, %v775
      %v6268 = vmul.f32 %v6221, %v779
      %v6269 = vmul.f32 %v6261, %v783
      %v6270 = vpack.c.bf16 %v6267, %v6264
      %v6271 = vpack.c.bf16 %v6268, %v6265
      %v6272 = vpack.c.bf16 %v6269, %v6266
      %6273 = vst [vmem:[#allocation2 + $0x8] sm:$0xff] %v6270
      %6274 = vst [vmem:[#allocation2 + $0x10] sm:$0xff] %v6271
      %6275 = vst [vmem:[#allocation2 + $0x18] sm:$0xff] %v6272
      %v6276 = vld [vmem:[#allocation2] sm:$0xff]
      %v6277 = vld [vmem:[#allocation2 + $0x8] sm:$0xff]
      %v6278 = vld [vmem:[#allocation2 + $0x10] sm:$0xff]
      %v6279 = vld [vmem:[#allocation2 + $0x18] sm:$0xff]
      %v6280 = vld [vmem:[#allocation2 + $0x28] sm:$0xff]
      %v6281 = vld [vmem:[#allocation2 + $0x30] sm:$0xff]
      %v6282 = vld [vmem:[#allocation2 + $0x38] sm:$0xff]
      %v6283 = vld [vmem:[#allocation2 + $0x40] sm:$0xff]
      %v6284 = vld [vmem:[#allocation2 + $0x50] sm:$0xff]
      %v6285 = vld [vmem:[#allocation2 + $0x58] sm:$0xff]
      %v6286 = vld [vmem:[#allocation2 + $0x60] sm:$0xff]
      %v6287 = vld [vmem:[#allocation2 + $0x68] sm:$0xff]
      %v6288 = vld [vmem:[#allocation2 + $0x8] sm:$0xff]
      %v6289 = vld [vmem:[#allocation2 + $0x10] sm:$0xff]
      %v6290 = vld [vmem:[#allocation2 + $0x18] sm:$0xff]
      %v6291 = vld [vmem:[#allocation2 + $0x20] sm:$0xff]
      %v6292 = vld [vmem:[#allocation2 + $0x30] sm:$0xff]
      %v6293 = vld [vmem:[#allocation2 + $0x38] sm:$0xff]
      %v6294 = vld [vmem:[#allocation2 + $0x40] sm:$0xff]
      %v6295 = vld [vmem:[#allocation2 + $0x48] sm:$0xff]
      %v6296 = vld [vmem:[#allocation2 + $0x58] sm:$0xff]
      %v6297 = vld [vmem:[#allocation2 + $0x60] sm:$0xff]
      %v6298 = vld [vmem:[#allocation2 + $0x68] sm:$0xff]
      %v6299 = vld [vmem:[#allocation2 + $0x70] sm:$0xff]
      %6312 = vrot.lane.b32.xlu0 %v6276, 127
      %v6313 = vpop.permute.xlu0 %6312
      %6314 = vrot.lane.b32.xlu0 %v6277, 127
      %v6315 = vpop.permute.xlu0 %6314
      %6316 = vrot.lane.b32.xlu0 %v6278, 127
      %v6317 = vpop.permute.xlu0 %6316
      %6318 = vrot.lane.b32.xlu0 %v6279, 127
      %v6319 = vpop.permute.xlu0 %6318
      %6320 = vrot.lane.b32.xlu0 %v6280, 127
      %v6321 = vpop.permute.xlu0 %6320
      %6322 = vrot.lane.b32.xlu0 %v6281, 127
      %v6323 = vpop.permute.xlu0 %6322
      %6324 = vrot.lane.b32.xlu0 %v6282, 127
      %v6325 = vpop.permute.xlu0 %6324
      %6326 = vrot.lane.b32.xlu0 %v6283, 127
      %v6327 = vpop.permute.xlu0 %6326
      %6328 = vrot.lane.b32.xlu0 %v6284, 127
      %v6329 = vpop.permute.xlu0 %6328
      %6330 = vrot.lane.b32.xlu0 %v6285, 127
      %v6331 = vpop.permute.xlu0 %6330
      %6332 = vrot.lane.b32.xlu0 %v6286, 127
      %v6333 = vpop.permute.xlu0 %6332
      %6334 = vrot.lane.b32.xlu0 %v6287, 127
      %v6335 = vpop.permute.xlu0 %6334
      %v6336 = vsel %vm413, %v6313, %v6315
      %v6337 = vsel %vm413, %v6315, %v6317
      %v6338 = vsel %vm413, %v6317, %v6319
      %v6339 = vsel %vm413, %v6321, %v6323
      %v6340 = vsel %vm413, %v6323, %v6325
      %v6341 = vsel %vm413, %v6325, %v6327
      %v6342 = vsel %vm413, %v6329, %v6331
      %v6343 = vsel %vm413, %v6331, %v6333
      %v6344 = vsel %vm413, %v6333, %v6335
      %6345 = vrot.lane.b32.xlu0 %v6276, 126
      %v6346 = vpop.permute.xlu0 %6345
      %6347 = vrot.lane.b32.xlu0 %v6277, 126
      %v6348 = vpop.permute.xlu0 %6347
      %6349 = vrot.lane.b32.xlu0 %v6278, 126
      %v6350 = vpop.permute.xlu0 %6349
      %6351 = vrot.lane.b32.xlu0 %v6279, 126
      %v6352 = vpop.permute.xlu0 %6351
      %6353 = vrot.lane.b32.xlu0 %v6280, 126
      %v6354 = vpop.permute.xlu0 %6353
      %6355 = vrot.lane.b32.xlu0 %v6281, 126
      %v6356 = vpop.permute.xlu0 %6355
      %6357 = vrot.lane.b32.xlu0 %v6282, 126
      %v6358 = vpop.permute.xlu0 %6357
      %6359 = vrot.lane.b32.xlu0 %v6283, 126
      %v6360 = vpop.permute.xlu0 %6359
      %6361 = vrot.lane.b32.xlu0 %v6284, 126
      %v6362 = vpop.permute.xlu0 %6361
      %6363 = vrot.lane.b32.xlu0 %v6285, 126
      %v6364 = vpop.permute.xlu0 %6363
      %6365 = vrot.lane.b32.xlu0 %v6286, 126
      %v6366 = vpop.permute.xlu0 %6365
      %6367 = vrot.lane.b32.xlu0 %v6287, 126
      %v6368 = vpop.permute.xlu0 %6367
      %v6369 = vsel %vm425, %v6346, %v6348
      %v6370 = vsel %vm425, %v6348, %v6350
      %v6371 = vsel %vm425, %v6350, %v6352
      %v6372 = vsel %vm425, %v6354, %v6356
      %v6373 = vsel %vm425, %v6356, %v6358
      %v6374 = vsel %vm425, %v6358, %v6360
      %v6375 = vsel %vm425, %v6362, %v6364
      %v6376 = vsel %vm425, %v6364, %v6366
      %v6377 = vsel %vm425, %v6366, %v6368
      %6378 = vrot.lane.b32.xlu0 %v6276, 110
      %v6379 = vpop.permute.xlu0 %6378
      %6380 = vrot.lane.b32.xlu0 %v6277, 110
      %v6381 = vpop.permute.xlu0 %6380
      %6382 = vrot.lane.b32.xlu0 %v6278, 110
      %v6383 = vpop.permute.xlu0 %6382
      %6384 = vrot.lane.b32.xlu0 %v6279, 110
      %v6385 = vpop.permute.xlu0 %6384
      %6386 = vrot.lane.b32.xlu0 %v6280, 110
      %v6387 = vpop.permute.xlu0 %6386
      %6388 = vrot.lane.b32.xlu0 %v6281, 110
      %v6389 = vpop.permute.xlu0 %6388
      %6390 = vrot.lane.b32.xlu0 %v6282, 110
      %v6391 = vpop.permute.xlu0 %6390
      %6392 = vrot.lane.b32.xlu0 %v6283, 110
      %v6393 = vpop.permute.xlu0 %6392
      %6394 = vrot.lane.b32.xlu0 %v6284, 110
      %v6395 = vpop.permute.xlu0 %6394
      %6396 = vrot.lane.b32.xlu0 %v6285, 110
      %v6397 = vpop.permute.xlu0 %6396
      %6398 = vrot.lane.b32.xlu0 %v6286, 110
      %v6399 = vpop.permute.xlu0 %6398
      %6400 = vrot.lane.b32.xlu0 %v6287, 110
      %v6401 = vpop.permute.xlu0 %6400
      %v6402 = vsel %vm437, %v6379, %v6381
      %v6403 = vsel %vm437, %v6381, %v6383
      %v6404 = vsel %vm437, %v6383, %v6385
      %v6405 = vsel %vm437, %v6387, %v6389
      %v6406 = vsel %vm437, %v6389, %v6391
      %v6407 = vsel %vm437, %v6391, %v6393
      %v6408 = vsel %vm437, %v6395, %v6397
      %v6409 = vsel %vm437, %v6397, %v6399
      %v6410 = vsel %vm437, %v6399, %v6401
      %6411 = vrot.lane.b32.xlu0 %v6277, 109
      %v6412 = vpop.permute.xlu0 %6411
      %6413 = vrot.lane.b32.xlu0 %v6278, 109
      %v6414 = vpop.permute.xlu0 %6413
      %6415 = vrot.lane.b32.xlu0 %v6279, 109
      %v6416 = vpop.permute.xlu0 %6415
      %6417 = vrot.lane.b32.xlu0 %v6281, 109
      %v6418 = vpop.permute.xlu0 %6417
      %6419 = vrot.lane.b32.xlu0 %v6282, 109
      %v6420 = vpop.permute.xlu0 %6419
      %6421 = vrot.lane.b32.xlu0 %v6283, 109
      %v6422 = vpop.permute.xlu0 %6421
      %6423 = vrot.lane.b32.xlu0 %v6285, 109
      %v6424 = vpop.permute.xlu0 %6423
      %6425 = vrot.lane.b32.xlu0 %v6286, 109
      %v6426 = vpop.permute.xlu0 %6425
      %6427 = vrot.lane.b32.xlu0 %v6287, 109
      %v6428 = vpop.permute.xlu0 %6427
      %v6429 = vsel %vm460, %v6412, %v6414
      %v6430 = vsel %vm460, %v6414, %v6416
      %v6431 = vsel %vm460, %v6418, %v6420
      %v6432 = vsel %vm460, %v6420, %v6422
      %v6433 = vsel %vm460, %v6424, %v6426
      %v6434 = vsel %vm460, %v6426, %v6428
      %6447 = vrot.lane.b32.xlu0 %v6288, 108
      %v6448 = vpop.permute.xlu0 %6447
      %6449 = vrot.lane.b32.xlu0 %v6289, 108
      %v6450 = vpop.permute.xlu0 %6449
      %6451 = vrot.lane.b32.xlu0 %v6290, 108
      %v6452 = vpop.permute.xlu0 %6451
      %6453 = vrot.lane.b32.xlu0 %v6291, 108
      %v6454 = vpop.permute.xlu0 %6453
      %6455 = vrot.lane.b32.xlu0 %v6292, 108
      %v6456 = vpop.permute.xlu0 %6455
      %6457 = vrot.lane.b32.xlu0 %v6293, 108
      %v6458 = vpop.permute.xlu0 %6457
      %6459 = vrot.lane.b32.xlu0 %v6294, 108
      %v6460 = vpop.permute.xlu0 %6459
      %6461 = vrot.lane.b32.xlu0 %v6295, 108
      %v6462 = vpop.permute.xlu0 %6461
      %6463 = vrot.lane.b32.xlu0 %v6296, 108
      %v6464 = vpop.permute.xlu0 %6463
      %6465 = vrot.lane.b32.xlu0 %v6297, 108
      %v6466 = vpop.permute.xlu0 %6465
      %6467 = vrot.lane.b32.xlu0 %v6298, 108
      %v6468 = vpop.permute.xlu0 %6467
      %6469 = vrot.lane.b32.xlu0 %v6299, 108
      %v6470 = vpop.permute.xlu0 %6469
      %v6471 = vsel %vm487, %v6448, %v6450
      %v6472 = vsel %vm487, %v6450, %v6452
      %v6473 = vsel %vm487, %v6452, %v6454
      %v6474 = vsel %vm487, %v6456, %v6458
      %v6475 = vsel %vm487, %v6458, %v6460
      %v6476 = vsel %vm487, %v6460, %v6462
      %v6477 = vsel %vm487, %v6464, %v6466
      %v6478 = vsel %vm487, %v6466, %v6468
      %v6479 = vsel %vm487, %v6468, %v6470
      %6480 = vrot.lane.b32.xlu0 %v6288, 92
      %v6481 = vpop.permute.xlu0 %6480
      %6482 = vrot.lane.b32.xlu0 %v6289, 92
      %v6483 = vpop.permute.xlu0 %6482
      %6484 = vrot.lane.b32.xlu0 %v6290, 92
      %v6485 = vpop.permute.xlu0 %6484
      %6486 = vrot.lane.b32.xlu0 %v6291, 92
      %v6487 = vpop.permute.xlu0 %6486
      %6488 = vrot.lane.b32.xlu0 %v6292, 92
      %v6489 = vpop.permute.xlu0 %6488
      %6490 = vrot.lane.b32.xlu0 %v6293, 92
      %v6491 = vpop.permute.xlu0 %6490
      %6492 = vrot.lane.b32.xlu0 %v6294, 92
      %v6493 = vpop.permute.xlu0 %6492
      %6494 = vrot.lane.b32.xlu0 %v6295, 92
      %v6495 = vpop.permute.xlu0 %6494
      %6496 = vrot.lane.b32.xlu0 %v6296, 92
      %v6497 = vpop.permute.xlu0 %6496
      %6498 = vrot.lane.b32.xlu0 %v6297, 92
      %v6499 = vpop.permute.xlu0 %6498
      %6500 = vrot.lane.b32.xlu0 %v6298, 92
      %v6501 = vpop.permute.xlu0 %6500
      %6502 = vrot.lane.b32.xlu0 %v6299, 92
      %v6503 = vpop.permute.xlu0 %6502
      %v6504 = vsel %vm499, %v6481, %v6483
      %v6505 = vsel %vm499, %v6483, %v6485
      %v6506 = vsel %vm499, %v6485, %v6487
      %v6507 = vsel %vm499, %v6489, %v6491
      %v6508 = vsel %vm499, %v6491, %v6493
      %v6509 = vsel %vm499, %v6493, %v6495
      %v6510 = vsel %vm499, %v6497, %v6499
      %v6511 = vsel %vm499, %v6499, %v6501
      %v6512 = vsel %vm499, %v6501, %v6503
      %6513 = vrot.lane.b32.xlu0 %v6288, 91
      %v6514 = vpop.permute.xlu0 %6513
      %6515 = vrot.lane.b32.xlu0 %v6289, 91
      %v6516 = vpop.permute.xlu0 %6515
      %6517 = vrot.lane.b32.xlu0 %v6290, 91
      %v6518 = vpop.permute.xlu0 %6517
      %6519 = vrot.lane.b32.xlu0 %v6291, 91
      %v6520 = vpop.permute.xlu0 %6519
      %6521 = vrot.lane.b32.xlu0 %v6292, 91
      %v6522 = vpop.permute.xlu0 %6521
      %6523 = vrot.lane.b32.xlu0 %v6293, 91
      %v6524 = vpop.permute.xlu0 %6523
      %6525 = vrot.lane.b32.xlu0 %v6294, 91
      %v6526 = vpop.permute.xlu0 %6525
      %6527 = vrot.lane.b32.xlu0 %v6295, 91
      %v6528 = vpop.permute.xlu0 %6527
      %6529 = vrot.lane.b32.xlu0 %v6296, 91
      %v6530 = vpop.permute.xlu0 %6529
      %6531 = vrot.lane.b32.xlu0 %v6297, 91
      %v6532 = vpop.permute.xlu0 %6531
      %6533 = vrot.lane.b32.xlu0 %v6298, 91
      %v6534 = vpop.permute.xlu0 %6533
      %6535 = vrot.lane.b32.xlu0 %v6299, 91
      %v6536 = vpop.permute.xlu0 %6535
      %v6537 = vsel %vm511, %v6514, %v6516
      %v6538 = vsel %vm511, %v6516, %v6518
      %v6539 = vsel %vm511, %v6518, %v6520
      %v6540 = vsel %vm511, %v6522, %v6524
      %v6541 = vsel %vm511, %v6524, %v6526
      %v6542 = vsel %vm511, %v6526, %v6528
      %v6543 = vsel %vm511, %v6530, %v6532
      %v6544 = vsel %vm511, %v6532, %v6534
      %v6545 = vsel %vm511, %v6534, %v6536
      %6546 = vrot.lane.b32.xlu0 %v6288, 90
      %v6547 = vpop.permute.xlu0 %6546
      %6548 = vrot.lane.b32.xlu0 %v6289, 90
      %v6549 = vpop.permute.xlu0 %6548
      %6550 = vrot.lane.b32.xlu0 %v6290, 90
      %v6551 = vpop.permute.xlu0 %6550
      %6552 = vrot.lane.b32.xlu0 %v6291, 90
      %v6553 = vpop.permute.xlu0 %6552
      %6554 = vrot.lane.b32.xlu0 %v6292, 90
      %v6555 = vpop.permute.xlu0 %6554
      %6556 = vrot.lane.b32.xlu0 %v6293, 90
      %v6557 = vpop.permute.xlu0 %6556
      %6558 = vrot.lane.b32.xlu0 %v6294, 90
      %v6559 = vpop.permute.xlu0 %6558
      %6560 = vrot.lane.b32.xlu0 %v6295, 90
      %v6561 = vpop.permute.xlu0 %6560
      %6562 = vrot.lane.b32.xlu0 %v6296, 90
      %v6563 = vpop.permute.xlu0 %6562
      %6564 = vrot.lane.b32.xlu0 %v6297, 90
      %v6565 = vpop.permute.xlu0 %6564
      %6566 = vrot.lane.b32.xlu0 %v6298, 90
      %v6567 = vpop.permute.xlu0 %6566
      %6568 = vrot.lane.b32.xlu0 %v6299, 90
      %v6569 = vpop.permute.xlu0 %6568
      %v6570 = vsel %vm523, %v6547, %v6549
      %v6571 = vsel %vm523, %v6549, %v6551
      %v6572 = vsel %vm523, %v6551, %v6553
      %v6573 = vsel %vm523, %v6555, %v6557
      %v6574 = vsel %vm523, %v6557, %v6559
      %v6575 = vsel %vm523, %v6559, %v6561
      %v6576 = vsel %vm523, %v6563, %v6565
      %v6577 = vsel %vm523, %v6565, %v6567
      %v6578 = vsel %vm523, %v6567, %v6569
      %s6579 = scalar_lea.vmem %s6, 512
      %v6580 = vld [vmem:[%s6579] sm:$0xff]
      %v6581 = vld [vmem:[%s6579 + $0x8] sm:$0xff]
      %v6582 = vld [vmem:[%s6579 + $0x10] sm:$0xff]
      %v6583 = vld [vmem:[%s6579 + $0x18] sm:$0xff]
      %v6584 = vld [vmem:[%s6579 + $0x20] sm:$0xff]
      %v6585 = vld [vmem:[%s6579 + $0x28] sm:$0xff]
      %v6586 = vld [vmem:[%s6579 + $0x30] sm:$0xff]
      %v6587 = vld [vmem:[%s6579 + $0x38] sm:$0xff]
      %v6588 = vld [vmem:[%s6579 + $0x40] sm:$0xff]
      %v6589 = vld [vmem:[%s6579 + $0x48] sm:$0xff]
      %v6590 = vld [vmem:[%s6579 + $0x50] sm:$0xff]
      %v6591 = vld [vmem:[%s6579 + $0x58] sm:$0xff]
      %v6592 = vld [vmem:[%s6579 + $0x60] sm:$0xff]
      %v6593 = vld [vmem:[%s6579 + $0x68] sm:$0xff]
      %v6594 = vld [vmem:[%s6579 + $0x70] sm:$0xff]
      %v6595 = vld [vmem:[%s6579 + $0x78] sm:$0xff]
      %s6596 = scalar_lea.vmem %s7, 256
      %v6597 = vld [vmem:[%s6596] sm:$0xff]
      %v6598 = vld [vmem:[%s6596 + $0x8] sm:$0xff]
      %v6599 = vld [vmem:[%s6596 + $0x10] sm:$0xff]
      %v6600 = vld [vmem:[%s6596 + $0x18] sm:$0xff]
      %v6601 = vld [vmem:[%s6596 + $0x20] sm:$0xff]
      %v6602 = vld [vmem:[%s6596 + $0x28] sm:$0xff]
      %v6603 = vld [vmem:[%s6596 + $0x30] sm:$0xff]
      %v6604 = vld [vmem:[%s6596 + $0x38] sm:$0xff]
      %6606 = vset.pattern.permute.xlu0 0
      %6607 = vperm.xlu0 %6606, %v6597
      %v6608 = vpop.permute.xlu0 %6607
      %6611 = vset.pattern.permute.xlu0 0
      %6612 = vperm.xlu0 %6611, %v6598
      %v6613 = vpop.permute.xlu0 %6612
      %6616 = vset.pattern.permute.xlu0 0
      %6617 = vperm.xlu0 %6616, %v6599
      %v6618 = vpop.permute.xlu0 %6617
      %6621 = vset.pattern.permute.xlu0 0
      %6622 = vperm.xlu0 %6621, %v6600
      %v6623 = vpop.permute.xlu0 %6622
      %6626 = vset.pattern.permute.xlu0 0
      %6627 = vperm.xlu0 %6626, %v6601
      %v6628 = vpop.permute.xlu0 %6627
      %6631 = vset.pattern.permute.xlu0 0
      %6632 = vperm.xlu0 %6631, %v6602
      %v6633 = vpop.permute.xlu0 %6632
      %6636 = vset.pattern.permute.xlu0 0
      %6637 = vperm.xlu0 %6636, %v6603
      %v6638 = vpop.permute.xlu0 %6637
      %6641 = vset.pattern.permute.xlu0 0
      %6642 = vperm.xlu0 %6641, %v6604
      %v6643 = vpop.permute.xlu0 %6642
      %v6661 = vunpack.c.l.b16 %v6580
      %v6662 = vunpack.c.h.b16 %v6580
      %v6663 = vunpack.c.l.b16 %v6581
      %v6664 = vunpack.c.h.b16 %v6581
      %v6665 = vunpack.c.l.b16 %v6582
      %v6666 = vunpack.c.h.b16 %v6582
      %v6667 = vunpack.c.l.b16 %v6583
      %v6668 = vunpack.c.h.b16 %v6583
      %v6669 = vunpack.c.l.b16 %v6584
      %v6670 = vunpack.c.h.b16 %v6584
      %v6671 = vunpack.c.l.b16 %v6585
      %v6672 = vunpack.c.h.b16 %v6585
      %v6673 = vunpack.c.l.b16 %v6586
      %v6674 = vunpack.c.h.b16 %v6586
      %v6675 = vunpack.c.l.b16 %v6587
      %v6676 = vunpack.c.h.b16 %v6587
      %v6677 = vunpack.c.l.b16 %v6588
      %v6678 = vunpack.c.h.b16 %v6588
      %v6679 = vunpack.c.l.b16 %v6589
      %v6680 = vunpack.c.h.b16 %v6589
      %v6681 = vunpack.c.l.b16 %v6590
      %v6682 = vunpack.c.h.b16 %v6590
      %v6683 = vunpack.c.l.b16 %v6591
      %v6684 = vunpack.c.h.b16 %v6591
      %v6685 = vunpack.c.l.b16 %v6592
      %v6686 = vunpack.c.h.b16 %v6592
      %v6687 = vunpack.c.l.b16 %v6593
      %v6688 = vunpack.c.h.b16 %v6593
      %v6689 = vunpack.c.l.b16 %v6594
      %v6690 = vunpack.c.h.b16 %v6594
      %v6691 = vunpack.c.l.b16 %v6595
      %v6692 = vunpack.c.h.b16 %v6595
      %v6693 = vpack.c.b16 %v6665, %v6661
      %v6694 = vpack.c.b16 %v6666, %v6662
      %v6695 = vpack.c.b16 %v6667, %v6663
      %v6696 = vpack.c.b16 %v6668, %v6664
      %v6697 = vpack.c.b16 %v6673, %v6669
      %v6698 = vpack.c.b16 %v6674, %v6670
      %v6699 = vpack.c.b16 %v6675, %v6671
      %v6700 = vpack.c.b16 %v6676, %v6672
      %v6701 = vpack.c.b16 %v6681, %v6677
      %v6702 = vpack.c.b16 %v6682, %v6678
      %v6703 = vpack.c.b16 %v6683, %v6679
      %v6704 = vpack.c.b16 %v6684, %v6680
      %v6705 = vpack.c.b16 %v6689, %v6685
      %v6706 = vpack.c.b16 %v6690, %v6686
      %v6707 = vpack.c.b16 %v6691, %v6687
      %v6708 = vpack.c.b16 %v6692, %v6688
      %6721 = vrot.lane.b32.xlu0 %v6276, 19
      %v6722 = vpop.permute.xlu0 %6721
      %6723 = vrot.lane.b32.xlu0 %v6277, 19
      %v6724 = vpop.permute.xlu0 %6723
      %6725 = vrot.lane.b32.xlu0 %v6278, 19
      %v6726 = vpop.permute.xlu0 %6725
      %6727 = vrot.lane.b32.xlu0 %v6279, 19
      %v6728 = vpop.permute.xlu0 %6727
      %6729 = vrot.lane.b32.xlu0 %v6280, 19
      %v6730 = vpop.permute.xlu0 %6729
      %6731 = vrot.lane.b32.xlu0 %v6281, 19
      %v6732 = vpop.permute.xlu0 %6731
      %6733 = vrot.lane.b32.xlu0 %v6282, 19
      %v6734 = vpop.permute.xlu0 %6733
      %6735 = vrot.lane.b32.xlu0 %v6283, 19
      %v6736 = vpop.permute.xlu0 %6735
      %6737 = vrot.lane.b32.xlu0 %v6284, 19
      %v6738 = vpop.permute.xlu0 %6737
      %6739 = vrot.lane.b32.xlu0 %v6285, 19
      %v6740 = vpop.permute.xlu0 %6739
      %6741 = vrot.lane.b32.xlu0 %v6286, 19
      %v6742 = vpop.permute.xlu0 %6741
      %6743 = vrot.lane.b32.xlu0 %v6287, 19
      %v6744 = vpop.permute.xlu0 %6743
      %6745 = vrot.lane.b32.xlu0 %v6336, 19
      %v6746 = vpop.permute.xlu0 %6745
      %6747 = vrot.lane.b32.xlu0 %v6337, 19
      %v6748 = vpop.permute.xlu0 %6747
      %6749 = vrot.lane.b32.xlu0 %v6338, 19
      %v6750 = vpop.permute.xlu0 %6749
      %6751 = vrot.lane.b32.xlu0 %v6319, 19
      %v6752 = vpop.permute.xlu0 %6751
      %6753 = vrot.lane.b32.xlu0 %v6339, 19
      %v6754 = vpop.permute.xlu0 %6753
      %6755 = vrot.lane.b32.xlu0 %v6340, 19
      %v6756 = vpop.permute.xlu0 %6755
      %6757 = vrot.lane.b32.xlu0 %v6341, 19
      %v6758 = vpop.permute.xlu0 %6757
      %6759 = vrot.lane.b32.xlu0 %v6327, 19
      %v6760 = vpop.permute.xlu0 %6759
      %6761 = vrot.lane.b32.xlu0 %v6342, 19
      %v6762 = vpop.permute.xlu0 %6761
      %6763 = vrot.lane.b32.xlu0 %v6343, 19
      %v6764 = vpop.permute.xlu0 %6763
      %6765 = vrot.lane.b32.xlu0 %v6344, 19
      %v6766 = vpop.permute.xlu0 %6765
      %6767 = vrot.lane.b32.xlu0 %v6335, 19
      %v6768 = vpop.permute.xlu0 %6767
      %6769 = vrot.lane.b32.xlu0 %v6369, 19
      %v6770 = vpop.permute.xlu0 %6769
      %6771 = vrot.lane.b32.xlu0 %v6370, 19
      %v6772 = vpop.permute.xlu0 %6771
      %6773 = vrot.lane.b32.xlu0 %v6371, 19
      %v6774 = vpop.permute.xlu0 %6773
      %6775 = vrot.lane.b32.xlu0 %v6352, 19
      %v6776 = vpop.permute.xlu0 %6775
      %6777 = vrot.lane.b32.xlu0 %v6372, 19
      %v6778 = vpop.permute.xlu0 %6777
      %6779 = vrot.lane.b32.xlu0 %v6373, 19
      %v6780 = vpop.permute.xlu0 %6779
      %6781 = vrot.lane.b32.xlu0 %v6374, 19
      %v6782 = vpop.permute.xlu0 %6781
      %6783 = vrot.lane.b32.xlu0 %v6360, 19
      %v6784 = vpop.permute.xlu0 %6783
      %6785 = vrot.lane.b32.xlu0 %v6375, 19
      %v6786 = vpop.permute.xlu0 %6785
      %6787 = vrot.lane.b32.xlu0 %v6376, 19
      %v6788 = vpop.permute.xlu0 %6787
      %6789 = vrot.lane.b32.xlu0 %v6377, 19
      %v6790 = vpop.permute.xlu0 %6789
      %6791 = vrot.lane.b32.xlu0 %v6368, 19
      %v6792 = vpop.permute.xlu0 %6791
      %6793 = vrot.lane.b32.xlu0 %v6402, 19
      %v6794 = vpop.permute.xlu0 %6793
      %6795 = vrot.lane.b32.xlu0 %v6403, 19
      %v6796 = vpop.permute.xlu0 %6795
      %6797 = vrot.lane.b32.xlu0 %v6404, 19
      %v6798 = vpop.permute.xlu0 %6797
      %6799 = vrot.lane.b32.xlu0 %v6385, 19
      %v6800 = vpop.permute.xlu0 %6799
      %6801 = vrot.lane.b32.xlu0 %v6405, 19
      %v6802 = vpop.permute.xlu0 %6801
      %6803 = vrot.lane.b32.xlu0 %v6406, 19
      %v6804 = vpop.permute.xlu0 %6803
      %6805 = vrot.lane.b32.xlu0 %v6407, 19
      %v6806 = vpop.permute.xlu0 %6805
      %6807 = vrot.lane.b32.xlu0 %v6393, 19
      %v6808 = vpop.permute.xlu0 %6807
      %6809 = vrot.lane.b32.xlu0 %v6408, 19
      %v6810 = vpop.permute.xlu0 %6809
      %6811 = vrot.lane.b32.xlu0 %v6409, 19
      %v6812 = vpop.permute.xlu0 %6811
      %6813 = vrot.lane.b32.xlu0 %v6410, 19
      %v6814 = vpop.permute.xlu0 %6813
      %6815 = vrot.lane.b32.xlu0 %v6401, 19
      %v6816 = vpop.permute.xlu0 %6815
      %6817 = vrot.lane.b32.xlu0 %v6412, 19
      %v6818 = vpop.permute.xlu0 %6817
      %6819 = vrot.lane.b32.xlu0 %v6429, 19
      %v6820 = vpop.permute.xlu0 %6819
      %6821 = vrot.lane.b32.xlu0 %v6430, 19
      %v6822 = vpop.permute.xlu0 %6821
      %6823 = vrot.lane.b32.xlu0 %v6416, 19
      %v6824 = vpop.permute.xlu0 %6823
      %6825 = vrot.lane.b32.xlu0 %v6418, 19
      %v6826 = vpop.permute.xlu0 %6825
      %6827 = vrot.lane.b32.xlu0 %v6431, 19
      %v6828 = vpop.permute.xlu0 %6827
      %6829 = vrot.lane.b32.xlu0 %v6432, 19
      %v6830 = vpop.permute.xlu0 %6829
      %6831 = vrot.lane.b32.xlu0 %v6422, 19
      %v6832 = vpop.permute.xlu0 %6831
      %6833 = vrot.lane.b32.xlu0 %v6424, 19
      %v6834 = vpop.permute.xlu0 %6833
      %6835 = vrot.lane.b32.xlu0 %v6433, 19
      %v6836 = vpop.permute.xlu0 %6835
      %6837 = vrot.lane.b32.xlu0 %v6434, 19
      %v6838 = vpop.permute.xlu0 %6837
      %6839 = vrot.lane.b32.xlu0 %v6428, 19
      %v6840 = vpop.permute.xlu0 %6839
      %6841 = vrot.lane.b32.xlu0 %v6448, 19
      %v6842 = vpop.permute.xlu0 %6841
      %6843 = vrot.lane.b32.xlu0 %v6471, 19
      %v6844 = vpop.permute.xlu0 %6843
      %6845 = vrot.lane.b32.xlu0 %v6472, 19
      %v6846 = vpop.permute.xlu0 %6845
      %6847 = vrot.lane.b32.xlu0 %v6473, 19
      %v6848 = vpop.permute.xlu0 %6847
      %6849 = vrot.lane.b32.xlu0 %v6456, 19
      %v6850 = vpop.permute.xlu0 %6849
      %6851 = vrot.lane.b32.xlu0 %v6474, 19
      %v6852 = vpop.permute.xlu0 %6851
      %6853 = vrot.lane.b32.xlu0 %v6475, 19
      %v6854 = vpop.permute.xlu0 %6853
      %6855 = vrot.lane.b32.xlu0 %v6476, 19
      %v6856 = vpop.permute.xlu0 %6855
      %6857 = vrot.lane.b32.xlu0 %v6464, 19
      %v6858 = vpop.permute.xlu0 %6857
      %6859 = vrot.lane.b32.xlu0 %v6477, 19
      %v6860 = vpop.permute.xlu0 %6859
      %6861 = vrot.lane.b32.xlu0 %v6478, 19
      %v6862 = vpop.permute.xlu0 %6861
      %6863 = vrot.lane.b32.xlu0 %v6479, 19
      %v6864 = vpop.permute.xlu0 %6863
      %6865 = vrot.lane.b32.xlu0 %v6481, 19
      %v6866 = vpop.permute.xlu0 %6865
      %6867 = vrot.lane.b32.xlu0 %v6504, 19
      %v6868 = vpop.permute.xlu0 %6867
      %6869 = vrot.lane.b32.xlu0 %v6505, 19
      %v6870 = vpop.permute.xlu0 %6869
      %6871 = vrot.lane.b32.xlu0 %v6506, 19
      %v6872 = vpop.permute.xlu0 %6871
      %6873 = vrot.lane.b32.xlu0 %v6489, 19
      %v6874 = vpop.permute.xlu0 %6873
      %6875 = vrot.lane.b32.xlu0 %v6507, 19
      %v6876 = vpop.permute.xlu0 %6875
      %6877 = vrot.lane.b32.xlu0 %v6508, 19
      %v6878 = vpop.permute.xlu0 %6877
      %6879 = vrot.lane.b32.xlu0 %v6509, 19
      %v6880 = vpop.permute.xlu0 %6879
      %6881 = vrot.lane.b32.xlu0 %v6497, 19
      %v6882 = vpop.permute.xlu0 %6881
      %6883 = vrot.lane.b32.xlu0 %v6510, 19
      %v6884 = vpop.permute.xlu0 %6883
      %6885 = vrot.lane.b32.xlu0 %v6511, 19
      %v6886 = vpop.permute.xlu0 %6885
      %6887 = vrot.lane.b32.xlu0 %v6512, 19
      %v6888 = vpop.permute.xlu0 %6887
      %6889 = vrot.lane.b32.xlu0 %v6514, 19
      %v6890 = vpop.permute.xlu0 %6889
      %6891 = vrot.lane.b32.xlu0 %v6537, 19
      %v6892 = vpop.permute.xlu0 %6891
      %6893 = vrot.lane.b32.xlu0 %v6538, 19
      %v6894 = vpop.permute.xlu0 %6893
      %6895 = vrot.lane.b32.xlu0 %v6539, 19
      %v6896 = vpop.permute.xlu0 %6895
      %6897 = vrot.lane.b32.xlu0 %v6522, 19
      %v6898 = vpop.permute.xlu0 %6897
      %6899 = vrot.lane.b32.xlu0 %v6540, 19
      %v6900 = vpop.permute.xlu0 %6899
      %6901 = vrot.lane.b32.xlu0 %v6541, 19
      %v6902 = vpop.permute.xlu0 %6901
      %6903 = vrot.lane.b32.xlu0 %v6542, 19
      %v6904 = vpop.permute.xlu0 %6903
      %6905 = vrot.lane.b32.xlu0 %v6530, 19
      %v6906 = vpop.permute.xlu0 %6905
      %6907 = vrot.lane.b32.xlu0 %v6543, 19
      %v6908 = vpop.permute.xlu0 %6907
      %6909 = vrot.lane.b32.xlu0 %v6544, 19
      %v6910 = vpop.permute.xlu0 %6909
      %6911 = vrot.lane.b32.xlu0 %v6545, 19
      %v6912 = vpop.permute.xlu0 %6911
      %6913 = vrot.lane.b32.xlu0 %v6547, 19
      %v6914 = vpop.permute.xlu0 %6913
      %6915 = vrot.lane.b32.xlu0 %v6570, 19
      %v6916 = vpop.permute.xlu0 %6915
      %6917 = vrot.lane.b32.xlu0 %v6571, 19
      %v6918 = vpop.permute.xlu0 %6917
      %6919 = vrot.lane.b32.xlu0 %v6572, 19
      %v6920 = vpop.permute.xlu0 %6919
      %6921 = vrot.lane.b32.xlu0 %v6555, 19
      %v6922 = vpop.permute.xlu0 %6921
      %6923 = vrot.lane.b32.xlu0 %v6573, 19
      %v6924 = vpop.permute.xlu0 %6923
      %6925 = vrot.lane.b32.xlu0 %v6574, 19
      %v6926 = vpop.permute.xlu0 %6925
      %6927 = vrot.lane.b32.xlu0 %v6575, 19
      %v6928 = vpop.permute.xlu0 %6927
      %6929 = vrot.lane.b32.xlu0 %v6563, 19
      %v6930 = vpop.permute.xlu0 %6929
      %6931 = vrot.lane.b32.xlu0 %v6576, 19
      %v6932 = vpop.permute.xlu0 %6931
      %6933 = vrot.lane.b32.xlu0 %v6577, 19
      %v6934 = vpop.permute.xlu0 %6933
      %6935 = vrot.lane.b32.xlu0 %v6578, 19
      %v6936 = vpop.permute.xlu0 %6935
      %v6937 = vsel %vm622, %v6722, %v6724
      %v6938 = vsel %vm622, %v6724, %v6726
      %v6939 = vsel %vm622, %v6726, %v6728
      %v6940 = vsel %vm622, %v6730, %v6732
      %v6941 = vsel %vm622, %v6732, %v6734
      %v6942 = vsel %vm622, %v6734, %v6736
      %v6943 = vsel %vm622, %v6738, %v6740
      %v6944 = vsel %vm622, %v6740, %v6742
      %v6945 = vsel %vm622, %v6742, %v6744
      %v6946 = vsel %vm622, %v6746, %v6748
      %v6947 = vsel %vm622, %v6748, %v6750
      %v6948 = vsel %vm622, %v6750, %v6752
      %v6949 = vsel %vm622, %v6754, %v6756
      %v6950 = vsel %vm622, %v6756, %v6758
      %v6951 = vsel %vm622, %v6758, %v6760
      %v6952 = vsel %vm622, %v6762, %v6764
      %v6953 = vsel %vm622, %v6764, %v6766
      %v6954 = vsel %vm622, %v6766, %v6768
      %v6955 = vsel %vm622, %v6770, %v6772
      %v6956 = vsel %vm622, %v6772, %v6774
      %v6957 = vsel %vm622, %v6774, %v6776
      %v6958 = vsel %vm622, %v6778, %v6780
      %v6959 = vsel %vm622, %v6780, %v6782
      %v6960 = vsel %vm622, %v6782, %v6784
      %v6961 = vsel %vm622, %v6786, %v6788
      %v6962 = vsel %vm622, %v6788, %v6790
      %v6963 = vsel %vm622, %v6790, %v6792
      %v6964 = vsel %vm622, %v6794, %v6796
      %v6965 = vsel %vm622, %v6796, %v6798
      %v6966 = vsel %vm622, %v6798, %v6800
      %v6967 = vsel %vm622, %v6802, %v6804
      %v6968 = vsel %vm622, %v6804, %v6806
      %v6969 = vsel %vm622, %v6806, %v6808
      %v6970 = vsel %vm622, %v6810, %v6812
      %v6971 = vsel %vm622, %v6812, %v6814
      %v6972 = vsel %vm622, %v6814, %v6816
      %v6973 = vsel %vm622, %v6818, %v6820
      %v6974 = vsel %vm622, %v6820, %v6822
      %v6975 = vsel %vm622, %v6822, %v6824
      %v6976 = vsel %vm622, %v6826, %v6828
      %v6977 = vsel %vm622, %v6828, %v6830
      %v6978 = vsel %vm622, %v6830, %v6832
      %v6979 = vsel %vm622, %v6834, %v6836
      %v6980 = vsel %vm622, %v6836, %v6838
      %v6981 = vsel %vm622, %v6838, %v6840
      %v6982 = vsel %vm622, %v6842, %v6844
      %v6983 = vsel %vm622, %v6844, %v6846
      %v6984 = vsel %vm622, %v6846, %v6848
      %v6985 = vsel %vm622, %v6850, %v6852
      %v6986 = vsel %vm622, %v6852, %v6854
      %v6987 = vsel %vm622, %v6854, %v6856
      %v6988 = vsel %vm622, %v6858, %v6860
      %v6989 = vsel %vm622, %v6860, %v6862
      %v6990 = vsel %vm622, %v6862, %v6864
      %v6991 = vsel %vm622, %v6866, %v6868
      %v6992 = vsel %vm622, %v6868, %v6870
      %v6993 = vsel %vm622, %v6870, %v6872
      %v6994 = vsel %vm622, %v6874, %v6876
      %v6995 = vsel %vm622, %v6876, %v6878
      %v6996 = vsel %vm622, %v6878, %v6880
      %v6997 = vsel %vm622, %v6882, %v6884
      %v6998 = vsel %vm622, %v6884, %v6886
      %v6999 = vsel %vm622, %v6886, %v6888
      %v7000 = vsel %vm622, %v6890, %v6892
      %v7001 = vsel %vm622, %v6892, %v6894
      %v7002 = vsel %vm622, %v6894, %v6896
      %v7003 = vsel %vm622, %v6898, %v6900
      %v7004 = vsel %vm622, %v6900, %v6902
      %v7005 = vsel %vm622, %v6902, %v6904
      %v7006 = vsel %vm622, %v6906, %v6908
      %v7007 = vsel %vm622, %v6908, %v6910
      %v7008 = vsel %vm622, %v6910, %v6912
      %v7009 = vsel %vm622, %v6914, %v6916
      %v7010 = vsel %vm622, %v6916, %v6918
      %v7011 = vsel %vm622, %v6918, %v6920
      %v7012 = vsel %vm622, %v6922, %v6924
      %v7013 = vsel %vm622, %v6924, %v6926
      %v7014 = vsel %vm622, %v6926, %v6928
      %v7015 = vsel %vm622, %v6930, %v6932
      %v7016 = vsel %vm622, %v6932, %v6934
      %v7017 = vsel %vm622, %v6934, %v6936
      %v7100 = vsel %vm2031, %v6696, 0
      %v7103 = vsel %vm2031, %v6700, 0
      %v7106 = vsel %vm2031, %v6704, 0
      %v7109 = vsel %vm2031, %v6708, 0
      %7111 = vmatprep.subr.bf16.mxu0 %v6938
      %7112 = vmatpush1.bf16.msra.mxu0 %v6937
      %7113 = vmatprep.subr.bf16.mxu0 %v6941
      %7114 = vmatpush1.bf16.msra.mxu0 %v6940
      %7115 = vmatprep.subr.bf16.mxu0 %v6944
      %7116 = vmatpush1.bf16.msra.mxu0 %v6943
      %7117 = vmatprep.subr.bf16.mxu0 %v6947
      %7118 = vmatpush1.bf16.msra.mxu0 %v6946
      %7119 = vmatprep.subr.bf16.mxu0 %v6950
      %7120 = vmatpush1.bf16.msra.mxu0 %v6949
      %7121 = vmatprep.subr.bf16.mxu0 %v6953
      %7122 = vmatpush1.bf16.msra.mxu0 %v6952
      %7123 = vmatprep.subr.bf16.mxu0 %v6956
      %7124 = vmatpush1.bf16.msra.mxu0 %v6955
      %7125 = vmatprep.subr.bf16.mxu0 %v6959
      %7126 = vmatpush1.bf16.msra.mxu0 %v6958
      %7127 = vmatprep.subr.bf16.mxu0 %v6962
      %7128 = vmatpush1.bf16.msra.mxu0 %v6961
      %7129 = vmatprep.subr.bf16.mxu0 %v6965
      %7130 = vmatpush1.bf16.msra.mxu0 %v6964
      %7131 = vmatprep.subr.bf16.mxu0 %v6968
      %7132 = vmatpush1.bf16.msra.mxu0 %v6967
      %7133 = vmatprep.subr.bf16.mxu0 %v6971
      %7134 = vmatpush1.bf16.msra.mxu0 %v6970
      %7135 = vmatprep.subr.bf16.mxu0 %v6974
      %7136 = vmatpush1.bf16.msra.mxu0 %v6973
      %7137 = vmatprep.subr.bf16.mxu0 %v6977
      %7138 = vmatpush1.bf16.msra.mxu0 %v6976
      %7139 = vmatprep.subr.bf16.mxu0 %v6980
      %7140 = vmatpush1.bf16.msra.mxu0 %v6979
      %7141 = vmatprep.subr.bf16.mxu0 %v6983
      %7142 = vmatpush1.bf16.msra.mxu0 %v6982
      %7143 = vmatprep.mubr.bf16.mxu0 %v6694
      %7144 = vmatmul.mubr.bf16.gmra.mrb[0].mxu0 %v6693
      %v7145 = vpop.f32.mrb[0].mxu0
      %v7146 = vadd.f32 %v6608, %v7145
      %v7147 = vpop.f32.mrb[0].mxu0
      %v7148 = vadd.f32 %v6608, %v7147
      %v7149 = vpop.f32.mrb[0].mxu0
      %v7150 = vadd.f32 %v6613, %v7149
      %v7151 = vpop.f32.mrb[0].mxu0
      %v7152 = vadd.f32 %v6613, %v7151
      %7153 = vmatprep.mubr.bf16.mxu0 %v6698
      %7154 = vmatmul.mubr.bf16.gmra.mrb[0].mxu0 %v6697
      %v7155 = vpop.f32.mrb[0].mxu0
      %v7156 = vadd.f32 %v6618, %v7155
      %v7157 = vpop.f32.mrb[0].mxu0
      %v7158 = vadd.f32 %v6618, %v7157
      %v7159 = vpop.f32.mrb[0].mxu0
      %v7160 = vadd.f32 %v6623, %v7159
      %v7161 = vpop.f32.mrb[0].mxu0
      %v7162 = vadd.f32 %v6623, %v7161
      %7163 = vmatprep.mubr.bf16.mxu0 %v6702
      %7164 = vmatmul.mubr.bf16.gmra.mrb[0].mxu0 %v6701
      %v7165 = vpop.f32.mrb[0].mxu0
      %v7166 = vadd.f32 %v6628, %v7165
      %v7167 = vpop.f32.mrb[0].mxu0
      %v7168 = vadd.f32 %v6628, %v7167
      %v7169 = vpop.f32.mrb[0].mxu0
      %v7170 = vadd.f32 %v6633, %v7169
      %v7171 = vpop.f32.mrb[0].mxu0
      %v7172 = vadd.f32 %v6633, %v7171
      %7173 = vmatprep.mubr.bf16.mxu0 %v6706
      %7174 = vmatmul.mubr.bf16.gmra.mrb[0].mxu0 %v6705
      %v7175 = vpop.f32.mrb[0].mxu0
      %v7176 = vadd.f32 %v6638, %v7175
      %v7177 = vpop.f32.mrb[0].mxu0
      %v7178 = vadd.f32 %v6638, %v7177
      %v7179 = vpop.f32.mrb[0].mxu0
      %v7180 = vadd.f32 %v6643, %v7179
      %v7181 = vpop.f32.mrb[0].mxu0
      %v7182 = vadd.f32 %v6643, %v7181
      %7183 = vdwg.mxu0
      %7184 = vmatprep.subr.bf16.mxu0 %v6986
      %7185 = vmatpush1.bf16.msra.mxu0 %v6985
      %7186 = vmatprep.subr.bf16.mxu0 %v6989
      %7187 = vmatpush1.bf16.msra.mxu0 %v6988
      %7188 = vmatprep.subr.bf16.mxu0 %v6992
      %7189 = vmatpush1.bf16.msra.mxu0 %v6991
      %7190 = vmatprep.subr.bf16.mxu0 %v6995
      %7191 = vmatpush1.bf16.msra.mxu0 %v6994
      %7192 = vmatprep.subr.bf16.mxu0 %v6998
      %7193 = vmatpush1.bf16.msra.mxu0 %v6997
      %7194 = vmatprep.subr.bf16.mxu0 %v7001
      %7195 = vmatpush1.bf16.msra.mxu0 %v7000
      %7196 = vmatprep.subr.bf16.mxu0 %v7004
      %7197 = vmatpush1.bf16.msra.mxu0 %v7003
      %7198 = vmatprep.subr.bf16.mxu0 %v7007
      %7199 = vmatpush1.bf16.msra.mxu0 %v7006
      %7200 = vmatprep.subr.bf16.mxu0 %v7010
      %7201 = vmatpush1.bf16.msra.mxu0 %v7009
      %7202 = vmatprep.subr.bf16.mxu0 %v7013
      %7203 = vmatpush1.bf16.msra.mxu0 %v7012
      %7204 = vmatprep.subr.bf16.mxu0 %v7016
      %7205 = vmatpush1.bf16.msra.mxu0 %v7015
      %7206 = vmatprep.subr.bf16.mxu0 0
      %7207 = vmatpush1.bf16.msra.mxu0 0
      %7208 = vmatprep.subr.bf16.mxu0 0
      %7209 = vmatpush1.bf16.msra.mxu0 0
      %7210 = vmatprep.subr.bf16.mxu0 0
      %7211 = vmatpush1.bf16.msra.mxu0 0
      %7212 = vmatprep.subr.bf16.mxu0 0
      %7213 = vmatpush1.bf16.msra.mxu0 0
      %7214 = vmatprep.subr.bf16.mxu0 0
      %7215 = vmatpush1.bf16.msra.mxu0 0
      %7216 = vmatprep.mubr.bf16.mxu0 %v7100
      %7217 = vmatmul.mubr.bf16.gmra.mrb[0].mxu0 %v6695
      %v7218 = vpop.f32.mrb[0].mxu0
      %v7219 = vadd.f32 %v7146, %v7218
      %v7220 = vpop.f32.mrb[0].mxu0
      %v7221 = vadd.f32 %v7148, %v7220
      %v7222 = vpop.f32.mrb[0].mxu0
      %v7223 = vadd.f32 %v7150, %v7222
      %v7224 = vpop.f32.mrb[0].mxu0
      %v7225 = vadd.f32 %v7152, %v7224
      %7226 = vmatprep.mubr.bf16.mxu0 %v7103
      %7227 = vmatmul.mubr.bf16.gmra.mrb[0].mxu0 %v6699
      %v7228 = vpop.f32.mrb[0].mxu0
      %v7229 = vadd.f32 %v7156, %v7228
      %v7230 = vpop.f32.mrb[0].mxu0
      %v7231 = vadd.f32 %v7158, %v7230
      %v7232 = vpop.f32.mrb[0].mxu0
      %v7233 = vadd.f32 %v7160, %v7232
      %v7234 = vpop.f32.mrb[0].mxu0
      %v7235 = vadd.f32 %v7162, %v7234
      %7236 = vmatprep.mubr.bf16.mxu0 %v7106
      %7237 = vmatmul.mubr.bf16.gmra.mrb[0].mxu0 %v6703
      %v7238 = vpop.f32.mrb[0].mxu0
      %v7239 = vadd.f32 %v7166, %v7238
      %v7240 = vpop.f32.mrb[0].mxu0
      %v7241 = vadd.f32 %v7168, %v7240
      %v7242 = vpop.f32.mrb[0].mxu0
      %v7243 = vadd.f32 %v7170, %v7242
      %v7244 = vpop.f32.mrb[0].mxu0
      %v7245 = vadd.f32 %v7172, %v7244
      %7246 = vmatprep.mubr.bf16.mxu0 %v7109
      %7247 = vmatmul.mubr.bf16.gmra.mrb[0].mxu0 %v6707
      %v7248 = vpop.f32.mrb[0].mxu0
      %v7249 = vadd.f32 %v7176, %v7248
      %v7250 = vpop.f32.mrb[0].mxu0
      %v7251 = vadd.f32 %v7178, %v7250
      %v7252 = vpop.f32.mrb[0].mxu0
      %v7253 = vadd.f32 %v7180, %v7252
      %v7254 = vpop.f32.mrb[0].mxu0
      %v7255 = vadd.f32 %v7182, %v7254
      %7256 = vdwg.mxu0
      %7257 = vmatprep.subr.bf16.mxu0 0
      %7258 = vmatpush1.bf16.msra.mxu0 %v6939
      %7259 = vmatprep.subr.bf16.mxu0 0
      %7260 = vmatpush1.bf16.msra.mxu0 %v6942
      %7261 = vmatprep.subr.bf16.mxu0 0
      %7262 = vmatpush1.bf16.msra.mxu0 %v6945
      %7263 = vmatprep.subr.bf16.mxu0 0
      %7264 = vmatpush1.bf16.msra.mxu0 %v6948
      %7265 = vmatprep.subr.bf16.mxu0 0
      %7266 = vmatpush1.bf16.msra.mxu0 %v6951
      %7267 = vmatprep.subr.bf16.mxu0 0
      %7268 = vmatpush1.bf16.msra.mxu0 %v6954
      %7269 = vmatprep.subr.bf16.mxu0 0
      %7270 = vmatpush1.bf16.msra.mxu0 %v6957
      %7271 = vmatprep.subr.bf16.mxu0 0
      %7272 = vmatpush1.bf16.msra.mxu0 %v6960
      %7273 = vmatprep.subr.bf16.mxu0 0
      %7274 = vmatpush1.bf16.msra.mxu0 %v6963
      %7275 = vmatprep.subr.bf16.mxu0 0
      %7276 = vmatpush1.bf16.msra.mxu0 %v6966
      %7277 = vmatprep.subr.bf16.mxu0 0
      %7278 = vmatpush1.bf16.msra.mxu0 %v6969
      %7279 = vmatprep.subr.bf16.mxu0 0
      %7280 = vmatpush1.bf16.msra.mxu0 %v6972
      %7281 = vmatprep.subr.bf16.mxu0 0
      %7282 = vmatpush1.bf16.msra.mxu0 %v6975
      %7283 = vmatprep.subr.bf16.mxu0 0
      %7284 = vmatpush1.bf16.msra.mxu0 %v6978
      %7285 = vmatprep.subr.bf16.mxu0 0
      %7286 = vmatpush1.bf16.msra.mxu0 %v6981
      %7287 = vmatprep.subr.bf16.mxu0 0
      %7288 = vmatpush1.bf16.msra.mxu0 %v6984
      %7289 = vmatprep.mubr.bf16.mxu0 %v6694
      %7290 = vmatmul.mubr.bf16.gmra.mrb[0].mxu0 %v6693
      %v7291 = vpop.f32.mrb[0].mxu0
      %v7292 = vadd.f32 %v6608, %v7291
      %v7293 = vpop.f32.mrb[0].mxu0
      %v7294 = vpop.f32.mrb[0].mxu0
      %v7295 = vadd.f32 %v6613, %v7294
      %v7296 = vpop.f32.mrb[0].mxu0
      %7297 = vmatprep.mubr.bf16.mxu0 %v6698
      %7298 = vmatmul.mubr.bf16.gmra.mrb[0].mxu0 %v6697
      %v7299 = vpop.f32.mrb[0].mxu0
      %v7300 = vadd.f32 %v6618, %v7299
      %v7301 = vpop.f32.mrb[0].mxu0
      %v7302 = vpop.f32.mrb[0].mxu0
      %v7303 = vadd.f32 %v6623, %v7302
      %v7304 = vpop.f32.mrb[0].mxu0
      %7305 = vmatprep.mubr.bf16.mxu0 %v6702
      %7306 = vmatmul.mubr.bf16.gmra.mrb[0].mxu0 %v6701
      %v7307 = vpop.f32.mrb[0].mxu0
      %v7308 = vadd.f32 %v6628, %v7307
      %v7309 = vpop.f32.mrb[0].mxu0
      %v7310 = vpop.f32.mrb[0].mxu0
      %v7311 = vadd.f32 %v6633, %v7310
      %v7312 = vpop.f32.mrb[0].mxu0
      %7313 = vmatprep.mubr.bf16.mxu0 %v6706
      %7314 = vmatmul.mubr.bf16.gmra.mrb[0].mxu0 %v6705
      %v7315 = vpop.f32.mrb[0].mxu0
      %v7316 = vadd.f32 %v6638, %v7315
      %v7317 = vpop.f32.mrb[0].mxu0
      %v7318 = vpop.f32.mrb[0].mxu0
      %v7319 = vadd.f32 %v6643, %v7318
      %v7320 = vpop.f32.mrb[0].mxu0
      %7321 = vdwg.mxu0
      %7322 = vmatprep.subr.bf16.mxu0 0
      %7323 = vmatpush1.bf16.msra.mxu0 %v6987
      %7324 = vmatprep.subr.bf16.mxu0 0
      %7325 = vmatpush1.bf16.msra.mxu0 %v6990
      %7326 = vmatprep.subr.bf16.mxu0 0
      %7327 = vmatpush1.bf16.msra.mxu0 %v6993
      %7328 = vmatprep.subr.bf16.mxu0 0
      %7329 = vmatpush1.bf16.msra.mxu0 %v6996
      %7330 = vmatprep.subr.bf16.mxu0 0
      %7331 = vmatpush1.bf16.msra.mxu0 %v6999
      %7332 = vmatprep.subr.bf16.mxu0 0
      %7333 = vmatpush1.bf16.msra.mxu0 %v7002
      %7334 = vmatprep.subr.bf16.mxu0 0
      %7335 = vmatpush1.bf16.msra.mxu0 %v7005
      %7336 = vmatprep.subr.bf16.mxu0 0
      %7337 = vmatpush1.bf16.msra.mxu0 %v7008
      %7338 = vmatprep.subr.bf16.mxu0 0
      %7339 = vmatpush1.bf16.msra.mxu0 %v7011
      %7340 = vmatprep.subr.bf16.mxu0 0
      %7341 = vmatpush1.bf16.msra.mxu0 %v7014
      %7342 = vmatprep.subr.bf16.mxu0 0
      %7343 = vmatpush1.bf16.msra.mxu0 %v7017
      %7344 = vmatprep.subr.bf16.mxu0 0
      %7345 = vmatpush1.bf16.msra.mxu0 0
      %7346 = vmatprep.subr.bf16.mxu0 0
      %7347 = vmatpush1.bf16.msra.mxu0 0
      %7348 = vmatprep.subr.bf16.mxu0 0
      %7349 = vmatpush1.bf16.msra.mxu0 0
      %7350 = vmatprep.subr.bf16.mxu0 0
      %7351 = vmatpush1.bf16.msra.mxu0 0
      %7352 = vmatprep.subr.bf16.mxu0 0
      %7353 = vmatpush1.bf16.msra.mxu0 0
      %7354 = vmatprep.mubr.bf16.mxu0 %v7100
      %7355 = vmatmul.mubr.bf16.gmra.mrb[0].mxu0 %v6695
      %v7356 = vpop.f32.mrb[0].mxu0
      %v7357 = vadd.f32 %v7292, %v7356
      %v7358 = vpop.f32.mrb[0].mxu0
      %v7359 = vpop.f32.mrb[0].mxu0
      %v7360 = vadd.f32 %v7295, %v7359
      %v7361 = vpop.f32.mrb[0].mxu0
      %7362 = vmatprep.mubr.bf16.mxu0 %v7103
      %7363 = vmatmul.mubr.bf16.gmra.mrb[0].mxu0 %v6699
      %v7364 = vpop.f32.mrb[0].mxu0
      %v7365 = vadd.f32 %v7300, %v7364
      %v7366 = vpop.f32.mrb[0].mxu0
      %v7367 = vpop.f32.mrb[0].mxu0
      %v7368 = vadd.f32 %v7303, %v7367
      %v7369 = vpop.f32.mrb[0].mxu0
      %7370 = vmatprep.mubr.bf16.mxu0 %v7106
      %7371 = vmatmul.mubr.bf16.gmra.mrb[0].mxu0 %v6703
      %v7372 = vpop.f32.mrb[0].mxu0
      %v7373 = vadd.f32 %v7308, %v7372
      %v7374 = vpop.f32.mrb[0].mxu0
      %v7375 = vpop.f32.mrb[0].mxu0
      %v7376 = vadd.f32 %v7311, %v7375
      %v7377 = vpop.f32.mrb[0].mxu0
      %7378 = vmatprep.mubr.bf16.mxu0 %v7109
      %7379 = vmatmul.mubr.bf16.gmra.mrb[0].mxu0 %v6707
      %v7380 = vpop.f32.mrb[0].mxu0
      %v7381 = vadd.f32 %v7316, %v7380
      %v7382 = vpop.f32.mrb[0].mxu0
      %v7383 = vpop.f32.mrb[0].mxu0
      %v7384 = vadd.f32 %v7319, %v7383
      %v7385 = vpop.f32.mrb[0].mxu0
      %7386 = vdwg.mxu0
      %v7387 = vmax.f32 %v7219, 0.0
      %v7388 = vmax.f32 %v7221, 0.0
      %v7389 = vmax.f32 %v7357, 0.0
      %v7390 = vmax.f32 %v7223, 0.0
      %v7391 = vmax.f32 %v7225, 0.0
      %v7392 = vmax.f32 %v7360, 0.0
      %v7393 = vmax.f32 %v7229, 0.0
      %v7394 = vmax.f32 %v7231, 0.0
      %v7395 = vmax.f32 %v7365, 0.0
      %v7396 = vmax.f32 %v7233, 0.0
      %v7397 = vmax.f32 %v7235, 0.0
      %v7398 = vmax.f32 %v7368, 0.0
      %v7399 = vmax.f32 %v7239, 0.0
      %v7400 = vmax.f32 %v7241, 0.0
      %v7401 = vmax.f32 %v7373, 0.0
      %v7402 = vmax.f32 %v7243, 0.0
      %v7403 = vmax.f32 %v7245, 0.0
      %v7404 = vmax.f32 %v7376, 0.0
      %v7405 = vmax.f32 %v7249, 0.0
      %v7406 = vmax.f32 %v7251, 0.0
      %v7407 = vmax.f32 %v7381, 0.0
      %v7408 = vmax.f32 %v7253, 0.0
      %v7409 = vmax.f32 %v7255, 0.0
      %v7410 = vmax.f32 %v7384, 0.0
      %s7411 = scalar_lea.vmem %s8, 32
      %v7412 = vld [vmem:[%s7411] sm:$0xf]
      %v7413 = vld [vmem:[%s7411 + $0x4] sm:$0xf]
      %v7414 = vpack.c.bf16 %v7390, %v7387
      %v7415 = vpack.c.bf16 %v7391, %v7388
      %v7416 = vpack.c.bf16 %v7392, %v7389
      %v7417 = vpack.c.bf16 %v7396, %v7393
      %v7418 = vpack.c.bf16 %v7397, %v7394
      %v7419 = vpack.c.bf16 %v7398, %v7395
      %v7420 = vpack.c.bf16 %v7402, %v7399
      %v7421 = vpack.c.bf16 %v7403, %v7400
      %v7422 = vpack.c.bf16 %v7404, %v7401
      %v7423 = vpack.c.bf16 %v7408, %v7405
      %v7424 = vpack.c.bf16 %v7409, %v7406
      %v7425 = vpack.c.bf16 %v7410, %v7407
      %s7426 = scalar_lea.vmem %s9, 64
      %v7427 = vld [vmem:[%s7426] sm:$0xff]
      %v7428 = vld [vmem:[%s7426 + $0x8] sm:$0xff]
      %7430 = vset.pattern.permute.xlu0 0
      %7431 = vperm.xlu0 %7430, %v7427
      %v7432 = vpop.permute.xlu0 %7431
      %7435 = vset.pattern.permute.xlu0 0
      %7436 = vperm.xlu0 %7435, %v7428
      %v7437 = vpop.permute.xlu0 %7436
      %v7441 = vunpack.c.l.b16 %v7412
      %v7442 = vunpack.c.l.b16 %v7413
      %v7443 = vpack.c.b16 %v7442, %v7441
      %v7445 = vsel %vm2375, %v7443, 0
      %7447 = vmatprep.subr.bf16.mxu0 %v7415
      %7448 = vmatpush1.bf16.msra.mxu0 %v7414
      %7449 = vmatprep.subr.bf16.mxu0 %v7418
      %7450 = vmatpush1.bf16.msra.mxu0 %v7417
      %7451 = vmatprep.subr.bf16.mxu0 %v7421
      %7452 = vmatpush1.bf16.msra.mxu0 %v7420
      %7453 = vmatprep.subr.bf16.mxu0 %v7424
      %7454 = vmatpush1.bf16.msra.mxu0 %v7423
      %7455 = vmatprep.subr.bf16.mxu0 0
      %7456 = vmatpush1.bf16.msra.mxu0 0
      %7457 = vmatprep.subr.bf16.mxu0 0
      %7458 = vmatpush1.bf16.msra.mxu0 0
      %7459 = vmatprep.subr.bf16.mxu0 0
      %7460 = vmatpush1.bf16.msra.mxu0 0
      %7461 = vmatprep.subr.bf16.mxu0 0
      %7462 = vmatpush1.bf16.msra.mxu0 0
      %7463 = vmatprep.subr.bf16.mxu0 0
      %7464 = vmatpush1.bf16.msra.mxu0 0
      %7465 = vmatprep.subr.bf16.mxu0 0
      %7466 = vmatpush1.bf16.msra.mxu0 0
      %7467 = vmatprep.subr.bf16.mxu0 0
      %7468 = vmatpush1.bf16.msra.mxu0 0
      %7469 = vmatprep.subr.bf16.mxu0 0
      %7470 = vmatpush1.bf16.msra.mxu0 0
      %7471 = vmatprep.subr.bf16.mxu0 0
      %7472 = vmatpush1.bf16.msra.mxu0 0
      %7473 = vmatprep.subr.bf16.mxu0 0
      %7474 = vmatpush1.bf16.msra.mxu0 0
      %7475 = vmatprep.subr.bf16.mxu0 0
      %7476 = vmatpush1.bf16.msra.mxu0 0
      %7477 = vmatprep.subr.bf16.mxu0 0
      %7478 = vmatpush1.bf16.msra.mxu0 0
      %7479 = vmatprep.mubr.bf16.mxu0 0
      %7480 = vmatmul.mubr.bf16.gmra.mrb[0].mxu0 %v7445
      %v7481 = vpop.f32.mrb[0].mxu0
      %v7482 = vadd.f32 %v7432, %v7481
      %v7483 = vpop.f32.mrb[0].mxu0
      %v7484 = vadd.f32 %v7432, %v7483
      %v7485 = vpop.f32.mrb[0].mxu0
      %v7486 = vadd.f32 %v7437, %v7485
      %v7487 = vpop.f32.mrb[0].mxu0
      %v7488 = vadd.f32 %v7437, %v7487
      %7489 = vdwg.mxu0
      %7490 = vmatprep.subr.bf16.mxu0 0
      %7491 = vmatpush1.bf16.msra.mxu0 %v7416
      %7492 = vmatprep.subr.bf16.mxu0 0
      %7493 = vmatpush1.bf16.msra.mxu0 %v7419
      %7494 = vmatprep.subr.bf16.mxu0 0
      %7495 = vmatpush1.bf16.msra.mxu0 %v7422
      %7496 = vmatprep.subr.bf16.mxu0 0
      %7497 = vmatpush1.bf16.msra.mxu0 %v7425
      %7498 = vmatprep.subr.bf16.mxu0 0
      %7499 = vmatpush1.bf16.msra.mxu0 0
      %7500 = vmatprep.subr.bf16.mxu0 0
      %7501 = vmatpush1.bf16.msra.mxu0 0
      %7502 = vmatprep.subr.bf16.mxu0 0
      %7503 = vmatpush1.bf16.msra.mxu0 0
      %7504 = vmatprep.subr.bf16.mxu0 0
      %7505 = vmatpush1.bf16.msra.mxu0 0
      %7506 = vmatprep.subr.bf16.mxu0 0
      %7507 = vmatpush1.bf16.msra.mxu0 0
      %7508 = vmatprep.subr.bf16.mxu0 0
      %7509 = vmatpush1.bf16.msra.mxu0 0
      %7510 = vmatprep.subr.bf16.mxu0 0
      %7511 = vmatpush1.bf16.msra.mxu0 0
      %7512 = vmatprep.subr.bf16.mxu0 0
      %7513 = vmatpush1.bf16.msra.mxu0 0
      %7514 = vmatprep.subr.bf16.mxu0 0
      %7515 = vmatpush1.bf16.msra.mxu0 0
      %7516 = vmatprep.subr.bf16.mxu0 0
      %7517 = vmatpush1.bf16.msra.mxu0 0
      %7518 = vmatprep.subr.bf16.mxu0 0
      %7519 = vmatpush1.bf16.msra.mxu0 0
      %7520 = vmatprep.subr.bf16.mxu0 0
      %7521 = vmatpush1.bf16.msra.mxu0 0
      %7522 = vmatprep.mubr.bf16.mxu0 0
      %7523 = vmatmul.mubr.bf16.gmra.mrb[0].mxu0 %v7445
      %v7524 = vpop.f32.mrb[0].mxu0
      %v7525 = vadd.f32 %v7432, %v7524
      %v7526 = vpop.f32.mrb[0].mxu0
      %v7527 = vpop.f32.mrb[0].mxu0
      %v7528 = vadd.f32 %v7437, %v7527
      %v7529 = vpop.f32.mrb[0].mxu0
      %7530 = vdwg.mxu0
      %v7531 = vmul.f32 %v7482, %v775
      %v7532 = vmul.f32 %v7484, %v779
      %v7533 = vmul.f32 %v7525, %v783
      %v7534 = vmul.f32 %v7486, %v775
      %v7535 = vmul.f32 %v7488, %v779
      %v7536 = vmul.f32 %v7528, %v783
      %v7537 = vpack.c.bf16 %v7534, %v7531
      %v7538 = vpack.c.bf16 %v7535, %v7532
      %v7539 = vpack.c.bf16 %v7536, %v7533
      %7540 = vst [vmem:[#allocation2 + $0x8] sm:$0xff] %v7537
      %7541 = vst [vmem:[#allocation2 + $0x10] sm:$0xff] %v7538
      %7542 = vst [vmem:[#allocation2 + $0x18] sm:$0xff] %v7539
      %v7543 = vld [vmem:[#allocation2] sm:$0xff]
      %v7544 = vld [vmem:[#allocation2 + $0x8] sm:$0xff]
      %v7545 = vld [vmem:[#allocation2 + $0x10] sm:$0xff]
      %v7546 = vld [vmem:[#allocation2 + $0x18] sm:$0xff]
      %v7547 = vld [vmem:[#allocation2 + $0x28] sm:$0xff]
      %v7548 = vld [vmem:[#allocation2 + $0x30] sm:$0xff]
      %v7549 = vld [vmem:[#allocation2 + $0x38] sm:$0xff]
      %v7550 = vld [vmem:[#allocation2 + $0x40] sm:$0xff]
      %v7551 = vld [vmem:[#allocation2 + $0x50] sm:$0xff]
      %v7552 = vld [vmem:[#allocation2 + $0x58] sm:$0xff]
      %v7553 = vld [vmem:[#allocation2 + $0x60] sm:$0xff]
      %v7554 = vld [vmem:[#allocation2 + $0x68] sm:$0xff]
      %v7555 = vld [vmem:[#allocation2 + $0x8] sm:$0xff]
      %v7556 = vld [vmem:[#allocation2 + $0x10] sm:$0xff]
      %v7557 = vld [vmem:[#allocation2 + $0x18] sm:$0xff]
      %v7558 = vld [vmem:[#allocation2 + $0x20] sm:$0xff]
      %v7559 = vld [vmem:[#allocation2 + $0x30] sm:$0xff]
      %v7560 = vld [vmem:[#allocation2 + $0x38] sm:$0xff]
      %v7561 = vld [vmem:[#allocation2 + $0x40] sm:$0xff]
      %v7562 = vld [vmem:[#allocation2 + $0x48] sm:$0xff]
      %v7563 = vld [vmem:[#allocation2 + $0x58] sm:$0xff]
      %v7564 = vld [vmem:[#allocation2 + $0x60] sm:$0xff]
      %v7565 = vld [vmem:[#allocation2 + $0x68] sm:$0xff]
      %v7566 = vld [vmem:[#allocation2 + $0x70] sm:$0xff]
      %7579 = vrot.lane.b32.xlu0 %v7543, 127
      %v7580 = vpop.permute.xlu0 %7579
      %7581 = vrot.lane.b32.xlu0 %v7544, 127
      %v7582 = vpop.permute.xlu0 %7581
      %7583 = vrot.lane.b32.xlu0 %v7545, 127
      %v7584 = vpop.permute.xlu0 %7583
      %7585 = vrot.lane.b32.xlu0 %v7546, 127
      %v7586 = vpop.permute.xlu0 %7585
      %7587 = vrot.lane.b32.xlu0 %v7547, 127
      %v7588 = vpop.permute.xlu0 %7587
      %7589 = vrot.lane.b32.xlu0 %v7548, 127
      %v7590 = vpop.permute.xlu0 %7589
      %7591 = vrot.lane.b32.xlu0 %v7549, 127
      %v7592 = vpop.permute.xlu0 %7591
      %7593 = vrot.lane.b32.xlu0 %v7550, 127
      %v7594 = vpop.permute.xlu0 %7593
      %7595 = vrot.lane.b32.xlu0 %v7551, 127
      %v7596 = vpop.permute.xlu0 %7595
      %7597 = vrot.lane.b32.xlu0 %v7552, 127
      %v7598 = vpop.permute.xlu0 %7597
      %7599 = vrot.lane.b32.xlu0 %v7553, 127
      %v7600 = vpop.permute.xlu0 %7599
      %7601 = vrot.lane.b32.xlu0 %v7554, 127
      %v7602 = vpop.permute.xlu0 %7601
      %v7603 = vsel %vm413, %v7580, %v7582
      %v7604 = vsel %vm413, %v7582, %v7584
      %v7605 = vsel %vm413, %v7584, %v7586
      %v7606 = vsel %vm413, %v7588, %v7590
      %v7607 = vsel %vm413, %v7590, %v7592
      %v7608 = vsel %vm413, %v7592, %v7594
      %v7609 = vsel %vm413, %v7596, %v7598
      %v7610 = vsel %vm413, %v7598, %v7600
      %v7611 = vsel %vm413, %v7600, %v7602
      %7612 = vrot.lane.b32.xlu0 %v7543, 126
      %v7613 = vpop.permute.xlu0 %7612
      %7614 = vrot.lane.b32.xlu0 %v7544, 126
      %v7615 = vpop.permute.xlu0 %7614
      %7616 = vrot.lane.b32.xlu0 %v7545, 126
      %v7617 = vpop.permute.xlu0 %7616
      %7618 = vrot.lane.b32.xlu0 %v7546, 126
      %v7619 = vpop.permute.xlu0 %7618
      %7620 = vrot.lane.b32.xlu0 %v7547, 126
      %v7621 = vpop.permute.xlu0 %7620
      %7622 = vrot.lane.b32.xlu0 %v7548, 126
      %v7623 = vpop.permute.xlu0 %7622
      %7624 = vrot.lane.b32.xlu0 %v7549, 126
      %v7625 = vpop.permute.xlu0 %7624
      %7626 = vrot.lane.b32.xlu0 %v7550, 126
      %v7627 = vpop.permute.xlu0 %7626
      %7628 = vrot.lane.b32.xlu0 %v7551, 126
      %v7629 = vpop.permute.xlu0 %7628
      %7630 = vrot.lane.b32.xlu0 %v7552, 126
      %v7631 = vpop.permute.xlu0 %7630
      %7632 = vrot.lane.b32.xlu0 %v7553, 126
      %v7633 = vpop.permute.xlu0 %7632
      %7634 = vrot.lane.b32.xlu0 %v7554, 126
      %v7635 = vpop.permute.xlu0 %7634
      %v7636 = vsel %vm425, %v7613, %v7615
      %v7637 = vsel %vm425, %v7615, %v7617
      %v7638 = vsel %vm425, %v7617, %v7619
      %v7639 = vsel %vm425, %v7621, %v7623
      %v7640 = vsel %vm425, %v7623, %v7625
      %v7641 = vsel %vm425, %v7625, %v7627
      %v7642 = vsel %vm425, %v7629, %v7631
      %v7643 = vsel %vm425, %v7631, %v7633
      %v7644 = vsel %vm425, %v7633, %v7635
      %7645 = vrot.lane.b32.xlu0 %v7543, 110
      %v7646 = vpop.permute.xlu0 %7645
      %7647 = vrot.lane.b32.xlu0 %v7544, 110
      %v7648 = vpop.permute.xlu0 %7647
      %7649 = vrot.lane.b32.xlu0 %v7545, 110
      %v7650 = vpop.permute.xlu0 %7649
      %7651 = vrot.lane.b32.xlu0 %v7546, 110
      %v7652 = vpop.permute.xlu0 %7651
      %7653 = vrot.lane.b32.xlu0 %v7547, 110
      %v7654 = vpop.permute.xlu0 %7653
      %7655 = vrot.lane.b32.xlu0 %v7548, 110
      %v7656 = vpop.permute.xlu0 %7655
      %7657 = vrot.lane.b32.xlu0 %v7549, 110
      %v7658 = vpop.permute.xlu0 %7657
      %7659 = vrot.lane.b32.xlu0 %v7550, 110
      %v7660 = vpop.permute.xlu0 %7659
      %7661 = vrot.lane.b32.xlu0 %v7551, 110
      %v7662 = vpop.permute.xlu0 %7661
      %7663 = vrot.lane.b32.xlu0 %v7552, 110
      %v7664 = vpop.permute.xlu0 %7663
      %7665 = vrot.lane.b32.xlu0 %v7553, 110
      %v7666 = vpop.permute.xlu0 %7665
      %7667 = vrot.lane.b32.xlu0 %v7554, 110
      %v7668 = vpop.permute.xlu0 %7667
      %v7669 = vsel %vm437, %v7646, %v7648
      %v7670 = vsel %vm437, %v7648, %v7650
      %v7671 = vsel %vm437, %v7650, %v7652
      %v7672 = vsel %vm437, %v7654, %v7656
      %v7673 = vsel %vm437, %v7656, %v7658
      %v7674 = vsel %vm437, %v7658, %v7660
      %v7675 = vsel %vm437, %v7662, %v7664
      %v7676 = vsel %vm437, %v7664, %v7666
      %v7677 = vsel %vm437, %v7666, %v7668
      %7678 = vrot.lane.b32.xlu0 %v7544, 109
      %v7679 = vpop.permute.xlu0 %7678
      %7680 = vrot.lane.b32.xlu0 %v7545, 109
      %v7681 = vpop.permute.xlu0 %7680
      %7682 = vrot.lane.b32.xlu0 %v7546, 109
      %v7683 = vpop.permute.xlu0 %7682
      %7684 = vrot.lane.b32.xlu0 %v7548, 109
      %v7685 = vpop.permute.xlu0 %7684
      %7686 = vrot.lane.b32.xlu0 %v7549, 109
      %v7687 = vpop.permute.xlu0 %7686
      %7688 = vrot.lane.b32.xlu0 %v7550, 109
      %v7689 = vpop.permute.xlu0 %7688
      %7690 = vrot.lane.b32.xlu0 %v7552, 109
      %v7691 = vpop.permute.xlu0 %7690
      %7692 = vrot.lane.b32.xlu0 %v7553, 109
      %v7693 = vpop.permute.xlu0 %7692
      %7694 = vrot.lane.b32.xlu0 %v7554, 109
      %v7695 = vpop.permute.xlu0 %7694
      %v7696 = vsel %vm460, %v7679, %v7681
      %v7697 = vsel %vm460, %v7681, %v7683
      %v7698 = vsel %vm460, %v7685, %v7687
      %v7699 = vsel %vm460, %v7687, %v7689
      %v7700 = vsel %vm460, %v7691, %v7693
      %v7701 = vsel %vm460, %v7693, %v7695
      %7714 = vrot.lane.b32.xlu0 %v7555, 108
      %v7715 = vpop.permute.xlu0 %7714
      %7716 = vrot.lane.b32.xlu0 %v7556, 108
      %v7717 = vpop.permute.xlu0 %7716
      %7718 = vrot.lane.b32.xlu0 %v7557, 108
      %v7719 = vpop.permute.xlu0 %7718
      %7720 = vrot.lane.b32.xlu0 %v7558, 108
      %v7721 = vpop.permute.xlu0 %7720
      %7722 = vrot.lane.b32.xlu0 %v7559, 108
      %v7723 = vpop.permute.xlu0 %7722
      %7724 = vrot.lane.b32.xlu0 %v7560, 108
      %v7725 = vpop.permute.xlu0 %7724
      %7726 = vrot.lane.b32.xlu0 %v7561, 108
      %v7727 = vpop.permute.xlu0 %7726
      %7728 = vrot.lane.b32.xlu0 %v7562, 108
      %v7729 = vpop.permute.xlu0 %7728
      %7730 = vrot.lane.b32.xlu0 %v7563, 108
      %v7731 = vpop.permute.xlu0 %7730
      %7732 = vrot.lane.b32.xlu0 %v7564, 108
      %v7733 = vpop.permute.xlu0 %7732
      %7734 = vrot.lane.b32.xlu0 %v7565, 108
      %v7735 = vpop.permute.xlu0 %7734
      %7736 = vrot.lane.b32.xlu0 %v7566, 108
      %v7737 = vpop.permute.xlu0 %7736
      %v7738 = vsel %vm487, %v7715, %v7717
      %v7739 = vsel %vm487, %v7717, %v7719
      %v7740 = vsel %vm487, %v7719, %v7721
      %v7741 = vsel %vm487, %v7723, %v7725
      %v7742 = vsel %vm487, %v7725, %v7727
      %v7743 = vsel %vm487, %v7727, %v7729
      %v7744 = vsel %vm487, %v7731, %v7733
      %v7745 = vsel %vm487, %v7733, %v7735
      %v7746 = vsel %vm487, %v7735, %v7737
      %7747 = vrot.lane.b32.xlu0 %v7555, 92
      %v7748 = vpop.permute.xlu0 %7747
      %7749 = vrot.lane.b32.xlu0 %v7556, 92
      %v7750 = vpop.permute.xlu0 %7749
      %7751 = vrot.lane.b32.xlu0 %v7557, 92
      %v7752 = vpop.permute.xlu0 %7751
      %7753 = vrot.lane.b32.xlu0 %v7558, 92
      %v7754 = vpop.permute.xlu0 %7753
      %7755 = vrot.lane.b32.xlu0 %v7559, 92
      %v7756 = vpop.permute.xlu0 %7755
      %7757 = vrot.lane.b32.xlu0 %v7560, 92
      %v7758 = vpop.permute.xlu0 %7757
      %7759 = vrot.lane.b32.xlu0 %v7561, 92
      %v7760 = vpop.permute.xlu0 %7759
      %7761 = vrot.lane.b32.xlu0 %v7562, 92
      %v7762 = vpop.permute.xlu0 %7761
      %7763 = vrot.lane.b32.xlu0 %v7563, 92
      %v7764 = vpop.permute.xlu0 %7763
      %7765 = vrot.lane.b32.xlu0 %v7564, 92
      %v7766 = vpop.permute.xlu0 %7765
      %7767 = vrot.lane.b32.xlu0 %v7565, 92
      %v7768 = vpop.permute.xlu0 %7767
      %7769 = vrot.lane.b32.xlu0 %v7566, 92
      %v7770 = vpop.permute.xlu0 %7769
      %v7771 = vsel %vm499, %v7748, %v7750
      %v7772 = vsel %vm499, %v7750, %v7752
      %v7773 = vsel %vm499, %v7752, %v7754
      %v7774 = vsel %vm499, %v7756, %v7758
      %v7775 = vsel %vm499, %v7758, %v7760
      %v7776 = vsel %vm499, %v7760, %v7762
      %v7777 = vsel %vm499, %v7764, %v7766
      %v7778 = vsel %vm499, %v7766, %v7768
      %v7779 = vsel %vm499, %v7768, %v7770
      %7780 = vrot.lane.b32.xlu0 %v7555, 91
      %v7781 = vpop.permute.xlu0 %7780
      %7782 = vrot.lane.b32.xlu0 %v7556, 91
      %v7783 = vpop.permute.xlu0 %7782
      %7784 = vrot.lane.b32.xlu0 %v7557, 91
      %v7785 = vpop.permute.xlu0 %7784
      %7786 = vrot.lane.b32.xlu0 %v7558, 91
      %v7787 = vpop.permute.xlu0 %7786
      %7788 = vrot.lane.b32.xlu0 %v7559, 91
      %v7789 = vpop.permute.xlu0 %7788
      %7790 = vrot.lane.b32.xlu0 %v7560, 91
      %v7791 = vpop.permute.xlu0 %7790
      %7792 = vrot.lane.b32.xlu0 %v7561, 91
      %v7793 = vpop.permute.xlu0 %7792
      %7794 = vrot.lane.b32.xlu0 %v7562, 91
      %v7795 = vpop.permute.xlu0 %7794
      %7796 = vrot.lane.b32.xlu0 %v7563, 91
      %v7797 = vpop.permute.xlu0 %7796
      %7798 = vrot.lane.b32.xlu0 %v7564, 91
      %v7799 = vpop.permute.xlu0 %7798
      %7800 = vrot.lane.b32.xlu0 %v7565, 91
      %v7801 = vpop.permute.xlu0 %7800
      %7802 = vrot.lane.b32.xlu0 %v7566, 91
      %v7803 = vpop.permute.xlu0 %7802
      %v7804 = vsel %vm511, %v7781, %v7783
      %v7805 = vsel %vm511, %v7783, %v7785
      %v7806 = vsel %vm511, %v7785, %v7787
      %v7807 = vsel %vm511, %v7789, %v7791
      %v7808 = vsel %vm511, %v7791, %v7793
      %v7809 = vsel %vm511, %v7793, %v7795
      %v7810 = vsel %vm511, %v7797, %v7799
      %v7811 = vsel %vm511, %v7799, %v7801
      %v7812 = vsel %vm511, %v7801, %v7803
      %7813 = vrot.lane.b32.xlu0 %v7555, 90
      %v7814 = vpop.permute.xlu0 %7813
      %7815 = vrot.lane.b32.xlu0 %v7556, 90
      %v7816 = vpop.permute.xlu0 %7815
      %7817 = vrot.lane.b32.xlu0 %v7557, 90
      %v7818 = vpop.permute.xlu0 %7817
      %7819 = vrot.lane.b32.xlu0 %v7558, 90
      %v7820 = vpop.permute.xlu0 %7819
      %7821 = vrot.lane.b32.xlu0 %v7559, 90
      %v7822 = vpop.permute.xlu0 %7821
      %7823 = vrot.lane.b32.xlu0 %v7560, 90
      %v7824 = vpop.permute.xlu0 %7823
      %7825 = vrot.lane.b32.xlu0 %v7561, 90
      %v7826 = vpop.permute.xlu0 %7825
      %7827 = vrot.lane.b32.xlu0 %v7562, 90
      %v7828 = vpop.permute.xlu0 %7827
      %7829 = vrot.lane.b32.xlu0 %v7563, 90
      %v7830 = vpop.permute.xlu0 %7829
      %7831 = vrot.lane.b32.xlu0 %v7564, 90
      %v7832 = vpop.permute.xlu0 %7831
      %7833 = vrot.lane.b32.xlu0 %v7565, 90
      %v7834 = vpop.permute.xlu0 %7833
      %7835 = vrot.lane.b32.xlu0 %v7566, 90
      %v7836 = vpop.permute.xlu0 %7835
      %v7837 = vsel %vm523, %v7814, %v7816
      %v7838 = vsel %vm523, %v7816, %v7818
      %v7839 = vsel %vm523, %v7818, %v7820
      %v7840 = vsel %vm523, %v7822, %v7824
      %v7841 = vsel %vm523, %v7824, %v7826
      %v7842 = vsel %vm523, %v7826, %v7828
      %v7843 = vsel %vm523, %v7830, %v7832
      %v7844 = vsel %vm523, %v7832, %v7834
      %v7845 = vsel %vm523, %v7834, %v7836
      %s7846 = scalar_lea.vmem %s6, 640
      %v7847 = vld [vmem:[%s7846] sm:$0xff]
      %v7848 = vld [vmem:[%s7846 + $0x8] sm:$0xff]
      %v7849 = vld [vmem:[%s7846 + $0x10] sm:$0xff]
      %v7850 = vld [vmem:[%s7846 + $0x18] sm:$0xff]
      %v7851 = vld [vmem:[%s7846 + $0x20] sm:$0xff]
      %v7852 = vld [vmem:[%s7846 + $0x28] sm:$0xff]
      %v7853 = vld [vmem:[%s7846 + $0x30] sm:$0xff]
      %v7854 = vld [vmem:[%s7846 + $0x38] sm:$0xff]
      %v7855 = vld [vmem:[%s7846 + $0x40] sm:$0xff]
      %v7856 = vld [vmem:[%s7846 + $0x48] sm:$0xff]
      %v7857 = vld [vmem:[%s7846 + $0x50] sm:$0xff]
      %v7858 = vld [vmem:[%s7846 + $0x58] sm:$0xff]
      %v7859 = vld [vmem:[%s7846 + $0x60] sm:$0xff]
      %v7860 = vld [vmem:[%s7846 + $0x68] sm:$0xff]
      %v7861 = vld [vmem:[%s7846 + $0x70] sm:$0xff]
      %v7862 = vld [vmem:[%s7846 + $0x78] sm:$0xff]
      %s7863 = scalar_lea.vmem %s7, 320
      %v7864 = vld [vmem:[%s7863] sm:$0xff]
      %v7865 = vld [vmem:[%s7863 + $0x8] sm:$0xff]
      %v7866 = vld [vmem:[%s7863 + $0x10] sm:$0xff]
      %v7867 = vld [vmem:[%s7863 + $0x18] sm:$0xff]
      %v7868 = vld [vmem:[%s7863 + $0x20] sm:$0xff]
      %v7869 = vld [vmem:[%s7863 + $0x28] sm:$0xff]
      %v7870 = vld [vmem:[%s7863 + $0x30] sm:$0xff]
      %v7871 = vld [vmem:[%s7863 + $0x38] sm:$0xff]
      %7873 = vset.pattern.permute.xlu0 0
      %7874 = vperm.xlu0 %7873, %v7864
      %v7875 = vpop.permute.xlu0 %7874
      %7878 = vset.pattern.permute.xlu0 0
      %7879 = vperm.xlu0 %7878, %v7865
      %v7880 = vpop.permute.xlu0 %7879
      %7883 = vset.pattern.permute.xlu0 0
      %7884 = vperm.xlu0 %7883, %v7866
      %v7885 = vpop.permute.xlu0 %7884
      %7888 = vset.pattern.permute.xlu0 0
      %7889 = vperm.xlu0 %7888, %v7867
      %v7890 = vpop.permute.xlu0 %7889
      %7893 = vset.pattern.permute.xlu0 0
      %7894 = vperm.xlu0 %7893, %v7868
      %v7895 = vpop.permute.xlu0 %7894
      %7898 = vset.pattern.permute.xlu0 0
      %7899 = vperm.xlu0 %7898, %v7869
      %v7900 = vpop.permute.xlu0 %7899
      %7903 = vset.pattern.permute.xlu0 0
      %7904 = vperm.xlu0 %7903, %v7870
      %v7905 = vpop.permute.xlu0 %7904
      %7908 = vset.pattern.permute.xlu0 0
      %7909 = vperm.xlu0 %7908, %v7871
      %v7910 = vpop.permute.xlu0 %7909
      %v7928 = vunpack.c.l.b16 %v7847
      %v7929 = vunpack.c.h.b16 %v7847
      %v7930 = vunpack.c.l.b16 %v7848
      %v7931 = vunpack.c.h.b16 %v7848
      %v7932 = vunpack.c.l.b16 %v7849
      %v7933 = vunpack.c.h.b16 %v7849
      %v7934 = vunpack.c.l.b16 %v7850
      %v7935 = vunpack.c.h.b16 %v7850
      %v7936 = vunpack.c.l.b16 %v7851
      %v7937 = vunpack.c.h.b16 %v7851
      %v7938 = vunpack.c.l.b16 %v7852
      %v7939 = vunpack.c.h.b16 %v7852
      %v7940 = vunpack.c.l.b16 %v7853
      %v7941 = vunpack.c.h.b16 %v7853
      %v7942 = vunpack.c.l.b16 %v7854
      %v7943 = vunpack.c.h.b16 %v7854
      %v7944 = vunpack.c.l.b16 %v7855
      %v7945 = vunpack.c.h.b16 %v7855
      %v7946 = vunpack.c.l.b16 %v7856
      %v7947 = vunpack.c.h.b16 %v7856
      %v7948 = vunpack.c.l.b16 %v7857
      %v7949 = vunpack.c.h.b16 %v7857
      %v7950 = vunpack.c.l.b16 %v7858
      %v7951 = vunpack.c.h.b16 %v7858
      %v7952 = vunpack.c.l.b16 %v7859
      %v7953 = vunpack.c.h.b16 %v7859
      %v7954 = vunpack.c.l.b16 %v7860
      %v7955 = vunpack.c.h.b16 %v7860
      %v7956 = vunpack.c.l.b16 %v7861
      %v7957 = vunpack.c.h.b16 %v7861
      %v7958 = vunpack.c.l.b16 %v7862
      %v7959 = vunpack.c.h.b16 %v7862
      %v7960 = vpack.c.b16 %v7932, %v7928
      %v7961 = vpack.c.b16 %v7933, %v7929
      %v7962 = vpack.c.b16 %v7934, %v7930
      %v7963 = vpack.c.b16 %v7935, %v7931
      %v7964 = vpack.c.b16 %v7940, %v7936
      %v7965 = vpack.c.b16 %v7941, %v7937
      %v7966 = vpack.c.b16 %v7942, %v7938
      %v7967 = vpack.c.b16 %v7943, %v7939
      %v7968 = vpack.c.b16 %v7948, %v7944
      %v7969 = vpack.c.b16 %v7949, %v7945
      %v7970 = vpack.c.b16 %v7950, %v7946
      %v7971 = vpack.c.b16 %v7951, %v7947
      %v7972 = vpack.c.b16 %v7956, %v7952
      %v7973 = vpack.c.b16 %v7957, %v7953
      %v7974 = vpack.c.b16 %v7958, %v7954
      %v7975 = vpack.c.b16 %v7959, %v7955
      %7988 = vrot.lane.b32.xlu0 %v7543, 19
      %v7989 = vpop.permute.xlu0 %7988
      %7990 = vrot.lane.b32.xlu0 %v7544, 19
      %v7991 = vpop.permute.xlu0 %7990
      %7992 = vrot.lane.b32.xlu0 %v7545, 19
      %v7993 = vpop.permute.xlu0 %7992
      %7994 = vrot.lane.b32.xlu0 %v7546, 19
      %v7995 = vpop.permute.xlu0 %7994
      %7996 = vrot.lane.b32.xlu0 %v7547, 19
      %v7997 = vpop.permute.xlu0 %7996
      %7998 = vrot.lane.b32.xlu0 %v7548, 19
      %v7999 = vpop.permute.xlu0 %7998
      %8000 = vrot.lane.b32.xlu0 %v7549, 19
      %v8001 = vpop.permute.xlu0 %8000
      %8002 = vrot.lane.b32.xlu0 %v7550, 19
      %v8003 = vpop.permute.xlu0 %8002
      %8004 = vrot.lane.b32.xlu0 %v7551, 19
      %v8005 = vpop.permute.xlu0 %8004
      %8006 = vrot.lane.b32.xlu0 %v7552, 19
      %v8007 = vpop.permute.xlu0 %8006
      %8008 = vrot.lane.b32.xlu0 %v7553, 19
      %v8009 = vpop.permute.xlu0 %8008
      %8010 = vrot.lane.b32.xlu0 %v7554, 19
      %v8011 = vpop.permute.xlu0 %8010
      %8012 = vrot.lane.b32.xlu0 %v7603, 19
      %v8013 = vpop.permute.xlu0 %8012
      %8014 = vrot.lane.b32.xlu0 %v7604, 19
      %v8015 = vpop.permute.xlu0 %8014
      %8016 = vrot.lane.b32.xlu0 %v7605, 19
      %v8017 = vpop.permute.xlu0 %8016
      %8018 = vrot.lane.b32.xlu0 %v7586, 19
      %v8019 = vpop.permute.xlu0 %8018
      %8020 = vrot.lane.b32.xlu0 %v7606, 19
      %v8021 = vpop.permute.xlu0 %8020
      %8022 = vrot.lane.b32.xlu0 %v7607, 19
      %v8023 = vpop.permute.xlu0 %8022
      %8024 = vrot.lane.b32.xlu0 %v7608, 19
      %v8025 = vpop.permute.xlu0 %8024
      %8026 = vrot.lane.b32.xlu0 %v7594, 19
      %v8027 = vpop.permute.xlu0 %8026
      %8028 = vrot.lane.b32.xlu0 %v7609, 19
      %v8029 = vpop.permute.xlu0 %8028
      %8030 = vrot.lane.b32.xlu0 %v7610, 19
      %v8031 = vpop.permute.xlu0 %8030
      %8032 = vrot.lane.b32.xlu0 %v7611, 19
      %v8033 = vpop.permute.xlu0 %8032
      %8034 = vrot.lane.b32.xlu0 %v7602, 19
      %v8035 = vpop.permute.xlu0 %8034
      %8036 = vrot.lane.b32.xlu0 %v7636, 19
      %v8037 = vpop.permute.xlu0 %8036
      %8038 = vrot.lane.b32.xlu0 %v7637, 19
      %v8039 = vpop.permute.xlu0 %8038
      %8040 = vrot.lane.b32.xlu0 %v7638, 19
      %v8041 = vpop.permute.xlu0 %8040
      %8042 = vrot.lane.b32.xlu0 %v7619, 19
      %v8043 = vpop.permute.xlu0 %8042
      %8044 = vrot.lane.b32.xlu0 %v7639, 19
      %v8045 = vpop.permute.xlu0 %8044
      %8046 = vrot.lane.b32.xlu0 %v7640, 19
      %v8047 = vpop.permute.xlu0 %8046
      %8048 = vrot.lane.b32.xlu0 %v7641, 19
      %v8049 = vpop.permute.xlu0 %8048
      %8050 = vrot.lane.b32.xlu0 %v7627, 19
      %v8051 = vpop.permute.xlu0 %8050
      %8052 = vrot.lane.b32.xlu0 %v7642, 19
      %v8053 = vpop.permute.xlu0 %8052
      %8054 = vrot.lane.b32.xlu0 %v7643, 19
      %v8055 = vpop.permute.xlu0 %8054
      %8056 = vrot.lane.b32.xlu0 %v7644, 19
      %v8057 = vpop.permute.xlu0 %8056
      %8058 = vrot.lane.b32.xlu0 %v7635, 19
      %v8059 = vpop.permute.xlu0 %8058
      %8060 = vrot.lane.b32.xlu0 %v7669, 19
      %v8061 = vpop.permute.xlu0 %8060
      %8062 = vrot.lane.b32.xlu0 %v7670, 19
      %v8063 = vpop.permute.xlu0 %8062
      %8064 = vrot.lane.b32.xlu0 %v7671, 19
      %v8065 = vpop.permute.xlu0 %8064
      %8066 = vrot.lane.b32.xlu0 %v7652, 19
      %v8067 = vpop.permute.xlu0 %8066
      %8068 = vrot.lane.b32.xlu0 %v7672, 19
      %v8069 = vpop.permute.xlu0 %8068
      %8070 = vrot.lane.b32.xlu0 %v7673, 19
      %v8071 = vpop.permute.xlu0 %8070
      %8072 = vrot.lane.b32.xlu0 %v7674, 19
      %v8073 = vpop.permute.xlu0 %8072
      %8074 = vrot.lane.b32.xlu0 %v7660, 19
      %v8075 = vpop.permute.xlu0 %8074
      %8076 = vrot.lane.b32.xlu0 %v7675, 19
      %v8077 = vpop.permute.xlu0 %8076
      %8078 = vrot.lane.b32.xlu0 %v7676, 19
      %v8079 = vpop.permute.xlu0 %8078
      %8080 = vrot.lane.b32.xlu0 %v7677, 19
      %v8081 = vpop.permute.xlu0 %8080
      %8082 = vrot.lane.b32.xlu0 %v7668, 19
      %v8083 = vpop.permute.xlu0 %8082
      %8084 = vrot.lane.b32.xlu0 %v7679, 19
      %v8085 = vpop.permute.xlu0 %8084
      %8086 = vrot.lane.b32.xlu0 %v7696, 19
      %v8087 = vpop.permute.xlu0 %8086
      %8088 = vrot.lane.b32.xlu0 %v7697, 19
      %v8089 = vpop.permute.xlu0 %8088
      %8090 = vrot.lane.b32.xlu0 %v7683, 19
      %v8091 = vpop.permute.xlu0 %8090
      %8092 = vrot.lane.b32.xlu0 %v7685, 19
      %v8093 = vpop.permute.xlu0 %8092
      %8094 = vrot.lane.b32.xlu0 %v7698, 19
      %v8095 = vpop.permute.xlu0 %8094
      %8096 = vrot.lane.b32.xlu0 %v7699, 19
      %v8097 = vpop.permute.xlu0 %8096
      %8098 = vrot.lane.b32.xlu0 %v7689, 19
      %v8099 = vpop.permute.xlu0 %8098
      %8100 = vrot.lane.b32.xlu0 %v7691, 19
      %v8101 = vpop.permute.xlu0 %8100
      %8102 = vrot.lane.b32.xlu0 %v7700, 19
      %v8103 = vpop.permute.xlu0 %8102
      %8104 = vrot.lane.b32.xlu0 %v7701, 19
      %v8105 = vpop.permute.xlu0 %8104
      %8106 = vrot.lane.b32.xlu0 %v7695, 19
      %v8107 = vpop.permute.xlu0 %8106
      %8108 = vrot.lane.b32.xlu0 %v7715, 19
      %v8109 = vpop.permute.xlu0 %8108
      %8110 = vrot.lane.b32.xlu0 %v7738, 19
      %v8111 = vpop.permute.xlu0 %8110
      %8112 = vrot.lane.b32.xlu0 %v7739, 19
      %v8113 = vpop.permute.xlu0 %8112
      %8114 = vrot.lane.b32.xlu0 %v7740, 19
      %v8115 = vpop.permute.xlu0 %8114
      %8116 = vrot.lane.b32.xlu0 %v7723, 19
      %v8117 = vpop.permute.xlu0 %8116
      %8118 = vrot.lane.b32.xlu0 %v7741, 19
      %v8119 = vpop.permute.xlu0 %8118
      %8120 = vrot.lane.b32.xlu0 %v7742, 19
      %v8121 = vpop.permute.xlu0 %8120
      %8122 = vrot.lane.b32.xlu0 %v7743, 19
      %v8123 = vpop.permute.xlu0 %8122
      %8124 = vrot.lane.b32.xlu0 %v7731, 19
      %v8125 = vpop.permute.xlu0 %8124
      %8126 = vrot.lane.b32.xlu0 %v7744, 19
      %v8127 = vpop.permute.xlu0 %8126
      %8128 = vrot.lane.b32.xlu0 %v7745, 19
      %v8129 = vpop.permute.xlu0 %8128
      %8130 = vrot.lane.b32.xlu0 %v7746, 19
      %v8131 = vpop.permute.xlu0 %8130
      %8132 = vrot.lane.b32.xlu0 %v7748, 19
      %v8133 = vpop.permute.xlu0 %8132
      %8134 = vrot.lane.b32.xlu0 %v7771, 19
      %v8135 = vpop.permute.xlu0 %8134
      %8136 = vrot.lane.b32.xlu0 %v7772, 19
      %v8137 = vpop.permute.xlu0 %8136
      %8138 = vrot.lane.b32.xlu0 %v7773, 19
      %v8139 = vpop.permute.xlu0 %8138
      %8140 = vrot.lane.b32.xlu0 %v7756, 19
      %v8141 = vpop.permute.xlu0 %8140
      %8142 = vrot.lane.b32.xlu0 %v7774, 19
      %v8143 = vpop.permute.xlu0 %8142
      %8144 = vrot.lane.b32.xlu0 %v7775, 19
      %v8145 = vpop.permute.xlu0 %8144
      %8146 = vrot.lane.b32.xlu0 %v7776, 19
      %v8147 = vpop.permute.xlu0 %8146
      %8148 = vrot.lane.b32.xlu0 %v7764, 19
      %v8149 = vpop.permute.xlu0 %8148
      %8150 = vrot.lane.b32.xlu0 %v7777, 19
      %v8151 = vpop.permute.xlu0 %8150
      %8152 = vrot.lane.b32.xlu0 %v7778, 19
      %v8153 = vpop.permute.xlu0 %8152
      %8154 = vrot.lane.b32.xlu0 %v7779, 19
      %v8155 = vpop.permute.xlu0 %8154
      %8156 = vrot.lane.b32.xlu0 %v7781, 19
      %v8157 = vpop.permute.xlu0 %8156
      %8158 = vrot.lane.b32.xlu0 %v7804, 19
      %v8159 = vpop.permute.xlu0 %8158
      %8160 = vrot.lane.b32.xlu0 %v7805, 19
      %v8161 = vpop.permute.xlu0 %8160
      %8162 = vrot.lane.b32.xlu0 %v7806, 19
      %v8163 = vpop.permute.xlu0 %8162
      %8164 = vrot.lane.b32.xlu0 %v7789, 19
      %v8165 = vpop.permute.xlu0 %8164
      %8166 = vrot.lane.b32.xlu0 %v7807, 19
      %v8167 = vpop.permute.xlu0 %8166
      %8168 = vrot.lane.b32.xlu0 %v7808, 19
      %v8169 = vpop.permute.xlu0 %8168
      %8170 = vrot.lane.b32.xlu0 %v7809, 19
      %v8171 = vpop.permute.xlu0 %8170
      %8172 = vrot.lane.b32.xlu0 %v7797, 19
      %v8173 = vpop.permute.xlu0 %8172
      %8174 = vrot.lane.b32.xlu0 %v7810, 19
      %v8175 = vpop.permute.xlu0 %8174
      %8176 = vrot.lane.b32.xlu0 %v7811, 19
      %v8177 = vpop.permute.xlu0 %8176
      %8178 = vrot.lane.b32.xlu0 %v7812, 19
      %v8179 = vpop.permute.xlu0 %8178
      %8180 = vrot.lane.b32.xlu0 %v7814, 19
      %v8181 = vpop.permute.xlu0 %8180
      %8182 = vrot.lane.b32.xlu0 %v7837, 19
      %v8183 = vpop.permute.xlu0 %8182
      %8184 = vrot.lane.b32.xlu0 %v7838, 19
      %v8185 = vpop.permute.xlu0 %8184
      %8186 = vrot.lane.b32.xlu0 %v7839, 19
      %v8187 = vpop.permute.xlu0 %8186
      %8188 = vrot.lane.b32.xlu0 %v7822, 19
      %v8189 = vpop.permute.xlu0 %8188
      %8190 = vrot.lane.b32.xlu0 %v7840, 19
      %v8191 = vpop.permute.xlu0 %8190
      %8192 = vrot.lane.b32.xlu0 %v7841, 19
      %v8193 = vpop.permute.xlu0 %8192
      %8194 = vrot.lane.b32.xlu0 %v7842, 19
      %v8195 = vpop.permute.xlu0 %8194
      %8196 = vrot.lane.b32.xlu0 %v7830, 19
      %v8197 = vpop.permute.xlu0 %8196
      %8198 = vrot.lane.b32.xlu0 %v7843, 19
      %v8199 = vpop.permute.xlu0 %8198
      %8200 = vrot.lane.b32.xlu0 %v7844, 19
      %v8201 = vpop.permute.xlu0 %8200
      %8202 = vrot.lane.b32.xlu0 %v7845, 19
      %v8203 = vpop.permute.xlu0 %8202
      %v8204 = vsel %vm622, %v7989, %v7991
      %v8205 = vsel %vm622, %v7991, %v7993
      %v8206 = vsel %vm622, %v7993, %v7995
      %v8207 = vsel %vm622, %v7997, %v7999
      %v8208 = vsel %vm622, %v7999, %v8001
      %v8209 = vsel %vm622, %v8001, %v8003
      %v8210 = vsel %vm622, %v8005, %v8007
      %v8211 = vsel %vm622, %v8007, %v8009
      %v8212 = vsel %vm622, %v8009, %v8011
      %v8213 = vsel %vm622, %v8013, %v8015
      %v8214 = vsel %vm622, %v8015, %v8017
      %v8215 = vsel %vm622, %v8017, %v8019
      %v8216 = vsel %vm622, %v8021, %v8023
      %v8217 = vsel %vm622, %v8023, %v8025
      %v8218 = vsel %vm622, %v8025, %v8027
      %v8219 = vsel %vm622, %v8029, %v8031
      %v8220 = vsel %vm622, %v8031, %v8033
      %v8221 = vsel %vm622, %v8033, %v8035
      %v8222 = vsel %vm622, %v8037, %v8039
      %v8223 = vsel %vm622, %v8039, %v8041
      %v8224 = vsel %vm622, %v8041, %v8043
      %v8225 = vsel %vm622, %v8045, %v8047
      %v8226 = vsel %vm622, %v8047, %v8049
      %v8227 = vsel %vm622, %v8049, %v8051
      %v8228 = vsel %vm622, %v8053, %v8055
      %v8229 = vsel %vm622, %v8055, %v8057
      %v8230 = vsel %vm622, %v8057, %v8059
      %v8231 = vsel %vm622, %v8061, %v8063
      %v8232 = vsel %vm622, %v8063, %v8065
      %v8233 = vsel %vm622, %v8065, %v8067
      %v8234 = vsel %vm622, %v8069, %v8071
      %v8235 = vsel %vm622, %v8071, %v8073
      %v8236 = vsel %vm622, %v8073, %v8075
      %v8237 = vsel %vm622, %v8077, %v8079
      %v8238 = vsel %vm622, %v8079, %v8081
      %v8239 = vsel %vm622, %v8081, %v8083
      %v8240 = vsel %vm622, %v8085, %v8087
      %v8241 = vsel %vm622, %v8087, %v8089
      %v8242 = vsel %vm622, %v8089, %v8091
      %v8243 = vsel %vm622, %v8093, %v8095
      %v8244 = vsel %vm622, %v8095, %v8097
      %v8245 = vsel %vm622, %v8097, %v8099
      %v8246 = vsel %vm622, %v8101, %v8103
      %v8247 = vsel %vm622, %v8103, %v8105
      %v8248 = vsel %vm622, %v8105, %v8107
      %v8249 = vsel %vm622, %v8109, %v8111
      %v8250 = vsel %vm622, %v8111, %v8113
      %v8251 = vsel %vm622, %v8113, %v8115
      %v8252 = vsel %vm622, %v8117, %v8119
      %v8253 = vsel %vm622, %v8119, %v8121
      %v8254 = vsel %vm622, %v8121, %v8123
      %v8255 = vsel %vm622, %v8125, %v8127
      %v8256 = vsel %vm622, %v8127, %v8129
      %v8257 = vsel %vm622, %v8129, %v8131
      %v8258 = vsel %vm622, %v8133, %v8135
      %v8259 = vsel %vm622, %v8135, %v8137
      %v8260 = vsel %vm622, %v8137, %v8139
      %v8261 = vsel %vm622, %v8141, %v8143
      %v8262 = vsel %vm622, %v8143, %v8145
      %v8263 = vsel %vm622, %v8145, %v8147
      %v8264 = vsel %vm622, %v8149, %v8151
      %v8265 = vsel %vm622, %v8151, %v8153
      %v8266 = vsel %vm622, %v8153, %v8155
      %v8267 = vsel %vm622, %v8157, %v8159
      %v8268 = vsel %vm622, %v8159, %v8161
      %v8269 = vsel %vm622, %v8161, %v8163
      %v8270 = vsel %vm622, %v8165, %v8167
      %v8271 = vsel %vm622, %v8167, %v8169
      %v8272 = vsel %vm622, %v8169, %v8171
      %v8273 = vsel %vm622, %v8173, %v8175
      %v8274 = vsel %vm622, %v8175, %v8177
      %v8275 = vsel %vm622, %v8177, %v8179
      %v8276 = vsel %vm622, %v8181, %v8183
      %v8277 = vsel %vm622, %v8183, %v8185
      %v8278 = vsel %vm622, %v8185, %v8187
      %v8279 = vsel %vm622, %v8189, %v8191
      %v8280 = vsel %vm622, %v8191, %v8193
      %v8281 = vsel %vm622, %v8193, %v8195
      %v8282 = vsel %vm622, %v8197, %v8199
      %v8283 = vsel %vm622, %v8199, %v8201
      %v8284 = vsel %vm622, %v8201, %v8203
      %v8367 = vsel %vm2031, %v7963, 0
      %v8370 = vsel %vm2031, %v7967, 0
      %v8373 = vsel %vm2031, %v7971, 0
      %v8376 = vsel %vm2031, %v7975, 0
      %8378 = vmatprep.subr.bf16.mxu0 %v8205
      %8379 = vmatpush1.bf16.msra.mxu0 %v8204
      %8380 = vmatprep.subr.bf16.mxu0 %v8208
      %8381 = vmatpush1.bf16.msra.mxu0 %v8207
      %8382 = vmatprep.subr.bf16.mxu0 %v8211
      %8383 = vmatpush1.bf16.msra.mxu0 %v8210
      %8384 = vmatprep.subr.bf16.mxu0 %v8214
      %8385 = vmatpush1.bf16.msra.mxu0 %v8213
      %8386 = vmatprep.subr.bf16.mxu0 %v8217
      %8387 = vmatpush1.bf16.msra.mxu0 %v8216
      %8388 = vmatprep.subr.bf16.mxu0 %v8220
      %8389 = vmatpush1.bf16.msra.mxu0 %v8219
      %8390 = vmatprep.subr.bf16.mxu0 %v8223
      %8391 = vmatpush1.bf16.msra.mxu0 %v8222
      %8392 = vmatprep.subr.bf16.mxu0 %v8226
      %8393 = vmatpush1.bf16.msra.mxu0 %v8225
      %8394 = vmatprep.subr.bf16.mxu0 %v8229
      %8395 = vmatpush1.bf16.msra.mxu0 %v8228
      %8396 = vmatprep.subr.bf16.mxu0 %v8232
      %8397 = vmatpush1.bf16.msra.mxu0 %v8231
      %8398 = vmatprep.subr.bf16.mxu0 %v8235
      %8399 = vmatpush1.bf16.msra.mxu0 %v8234
      %8400 = vmatprep.subr.bf16.mxu0 %v8238
      %8401 = vmatpush1.bf16.msra.mxu0 %v8237
      %8402 = vmatprep.subr.bf16.mxu0 %v8241
      %8403 = vmatpush1.bf16.msra.mxu0 %v8240
      %8404 = vmatprep.subr.bf16.mxu0 %v8244
      %8405 = vmatpush1.bf16.msra.mxu0 %v8243
      %8406 = vmatprep.subr.bf16.mxu0 %v8247
      %8407 = vmatpush1.bf16.msra.mxu0 %v8246
      %8408 = vmatprep.subr.bf16.mxu0 %v8250
      %8409 = vmatpush1.bf16.msra.mxu0 %v8249
      %8410 = vmatprep.mubr.bf16.mxu0 %v7961
      %8411 = vmatmul.mubr.bf16.gmra.mrb[0].mxu0 %v7960
      %v8412 = vpop.f32.mrb[0].mxu0
      %v8413 = vadd.f32 %v7875, %v8412
      %v8414 = vpop.f32.mrb[0].mxu0
      %v8415 = vadd.f32 %v7875, %v8414
      %v8416 = vpop.f32.mrb[0].mxu0
      %v8417 = vadd.f32 %v7880, %v8416
      %v8418 = vpop.f32.mrb[0].mxu0
      %v8419 = vadd.f32 %v7880, %v8418
      %8420 = vmatprep.mubr.bf16.mxu0 %v7965
      %8421 = vmatmul.mubr.bf16.gmra.mrb[0].mxu0 %v7964
      %v8422 = vpop.f32.mrb[0].mxu0
      %v8423 = vadd.f32 %v7885, %v8422
      %v8424 = vpop.f32.mrb[0].mxu0
      %v8425 = vadd.f32 %v7885, %v8424
      %v8426 = vpop.f32.mrb[0].mxu0
      %v8427 = vadd.f32 %v7890, %v8426
      %v8428 = vpop.f32.mrb[0].mxu0
      %v8429 = vadd.f32 %v7890, %v8428
      %8430 = vmatprep.mubr.bf16.mxu0 %v7969
      %8431 = vmatmul.mubr.bf16.gmra.mrb[0].mxu0 %v7968
      %v8432 = vpop.f32.mrb[0].mxu0
      %v8433 = vadd.f32 %v7895, %v8432
      %v8434 = vpop.f32.mrb[0].mxu0
      %v8435 = vadd.f32 %v7895, %v8434
      %v8436 = vpop.f32.mrb[0].mxu0
      %v8437 = vadd.f32 %v7900, %v8436
      %v8438 = vpop.f32.mrb[0].mxu0
      %v8439 = vadd.f32 %v7900, %v8438
      %8440 = vmatprep.mubr.bf16.mxu0 %v7973
      %8441 = vmatmul.mubr.bf16.gmra.mrb[0].mxu0 %v7972
      %v8442 = vpop.f32.mrb[0].mxu0
      %v8443 = vadd.f32 %v7905, %v8442
      %v8444 = vpop.f32.mrb[0].mxu0
      %v8445 = vadd.f32 %v7905, %v8444
      %v8446 = vpop.f32.mrb[0].mxu0
      %v8447 = vadd.f32 %v7910, %v8446
      %v8448 = vpop.f32.mrb[0].mxu0
      %v8449 = vadd.f32 %v7910, %v8448
      %8450 = vdwg.mxu0
      %8451 = vmatprep.subr.bf16.mxu0 %v8253
      %8452 = vmatpush1.bf16.msra.mxu0 %v8252
      %8453 = vmatprep.subr.bf16.mxu0 %v8256
      %8454 = vmatpush1.bf16.msra.mxu0 %v8255
      %8455 = vmatprep.subr.bf16.mxu0 %v8259
      %8456 = vmatpush1.bf16.msra.mxu0 %v8258
      %8457 = vmatprep.subr.bf16.mxu0 %v8262
      %8458 = vmatpush1.bf16.msra.mxu0 %v8261
      %8459 = vmatprep.subr.bf16.mxu0 %v8265
      %8460 = vmatpush1.bf16.msra.mxu0 %v8264
      %8461 = vmatprep.subr.bf16.mxu0 %v8268
      %8462 = vmatpush1.bf16.msra.mxu0 %v8267
      %8463 = vmatprep.subr.bf16.mxu0 %v8271
      %8464 = vmatpush1.bf16.msra.mxu0 %v8270
      %8465 = vmatprep.subr.bf16.mxu0 %v8274
      %8466 = vmatpush1.bf16.msra.mxu0 %v8273
      %8467 = vmatprep.subr.bf16.mxu0 %v8277
      %8468 = vmatpush1.bf16.msra.mxu0 %v8276
      %8469 = vmatprep.subr.bf16.mxu0 %v8280
      %8470 = vmatpush1.bf16.msra.mxu0 %v8279
      %8471 = vmatprep.subr.bf16.mxu0 %v8283
      %8472 = vmatpush1.bf16.msra.mxu0 %v8282
      %8473 = vmatprep.subr.bf16.mxu0 0
      %8474 = vmatpush1.bf16.msra.mxu0 0
      %8475 = vmatprep.subr.bf16.mxu0 0
      %8476 = vmatpush1.bf16.msra.mxu0 0
      %8477 = vmatprep.subr.bf16.mxu0 0
      %8478 = vmatpush1.bf16.msra.mxu0 0
      %8479 = vmatprep.subr.bf16.mxu0 0
      %8480 = vmatpush1.bf16.msra.mxu0 0
      %8481 = vmatprep.subr.bf16.mxu0 0
      %8482 = vmatpush1.bf16.msra.mxu0 0
      %8483 = vmatprep.mubr.bf16.mxu0 %v8367
      %8484 = vmatmul.mubr.bf16.gmra.mrb[0].mxu0 %v7962
      %v8485 = vpop.f32.mrb[0].mxu0
      %v8486 = vadd.f32 %v8413, %v8485
      %v8487 = vpop.f32.mrb[0].mxu0
      %v8488 = vadd.f32 %v8415, %v8487
      %v8489 = vpop.f32.mrb[0].mxu0
      %v8490 = vadd.f32 %v8417, %v8489
      %v8491 = vpop.f32.mrb[0].mxu0
      %v8492 = vadd.f32 %v8419, %v8491
      %8493 = vmatprep.mubr.bf16.mxu0 %v8370
      %8494 = vmatmul.mubr.bf16.gmra.mrb[0].mxu0 %v7966
      %v8495 = vpop.f32.mrb[0].mxu0
      %v8496 = vadd.f32 %v8423, %v8495
      %v8497 = vpop.f32.mrb[0].mxu0
      %v8498 = vadd.f32 %v8425, %v8497
      %v8499 = vpop.f32.mrb[0].mxu0
      %v8500 = vadd.f32 %v8427, %v8499
      %v8501 = vpop.f32.mrb[0].mxu0
      %v8502 = vadd.f32 %v8429, %v8501
      %8503 = vmatprep.mubr.bf16.mxu0 %v8373
      %8504 = vmatmul.mubr.bf16.gmra.mrb[0].mxu0 %v7970
      %v8505 = vpop.f32.mrb[0].mxu0
      %v8506 = vadd.f32 %v8433, %v8505
      %v8507 = vpop.f32.mrb[0].mxu0
      %v8508 = vadd.f32 %v8435, %v8507
      %v8509 = vpop.f32.mrb[0].mxu0
      %v8510 = vadd.f32 %v8437, %v8509
      %v8511 = vpop.f32.mrb[0].mxu0
      %v8512 = vadd.f32 %v8439, %v8511
      %8513 = vmatprep.mubr.bf16.mxu0 %v8376
      %8514 = vmatmul.mubr.bf16.gmra.mrb[0].mxu0 %v7974
      %v8515 = vpop.f32.mrb[0].mxu0
      %v8516 = vadd.f32 %v8443, %v8515
      %v8517 = vpop.f32.mrb[0].mxu0
      %v8518 = vadd.f32 %v8445, %v8517
      %v8519 = vpop.f32.mrb[0].mxu0
      %v8520 = vadd.f32 %v8447, %v8519
      %v8521 = vpop.f32.mrb[0].mxu0
      %v8522 = vadd.f32 %v8449, %v8521
      %8523 = vdwg.mxu0
      %8524 = vmatprep.subr.bf16.mxu0 0
      %8525 = vmatpush1.bf16.msra.mxu0 %v8206
      %8526 = vmatprep.subr.bf16.mxu0 0
      %8527 = vmatpush1.bf16.msra.mxu0 %v8209
      %8528 = vmatprep.subr.bf16.mxu0 0
      %8529 = vmatpush1.bf16.msra.mxu0 %v8212
      %8530 = vmatprep.subr.bf16.mxu0 0
      %8531 = vmatpush1.bf16.msra.mxu0 %v8215
      %8532 = vmatprep.subr.bf16.mxu0 0
      %8533 = vmatpush1.bf16.msra.mxu0 %v8218
      %8534 = vmatprep.subr.bf16.mxu0 0
      %8535 = vmatpush1.bf16.msra.mxu0 %v8221
      %8536 = vmatprep.subr.bf16.mxu0 0
      %8537 = vmatpush1.bf16.msra.mxu0 %v8224
      %8538 = vmatprep.subr.bf16.mxu0 0
      %8539 = vmatpush1.bf16.msra.mxu0 %v8227
      %8540 = vmatprep.subr.bf16.mxu0 0
      %8541 = vmatpush1.bf16.msra.mxu0 %v8230
      %8542 = vmatprep.subr.bf16.mxu0 0
      %8543 = vmatpush1.bf16.msra.mxu0 %v8233
      %8544 = vmatprep.subr.bf16.mxu0 0
      %8545 = vmatpush1.bf16.msra.mxu0 %v8236
      %8546 = vmatprep.subr.bf16.mxu0 0
      %8547 = vmatpush1.bf16.msra.mxu0 %v8239
      %8548 = vmatprep.subr.bf16.mxu0 0
      %8549 = vmatpush1.bf16.msra.mxu0 %v8242
      %8550 = vmatprep.subr.bf16.mxu0 0
      %8551 = vmatpush1.bf16.msra.mxu0 %v8245
      %8552 = vmatprep.subr.bf16.mxu0 0
      %8553 = vmatpush1.bf16.msra.mxu0 %v8248
      %8554 = vmatprep.subr.bf16.mxu0 0
      %8555 = vmatpush1.bf16.msra.mxu0 %v8251
      %8556 = vmatprep.mubr.bf16.mxu0 %v7961
      %8557 = vmatmul.mubr.bf16.gmra.mrb[0].mxu0 %v7960
      %v8558 = vpop.f32.mrb[0].mxu0
      %v8559 = vadd.f32 %v7875, %v8558
      %v8560 = vpop.f32.mrb[0].mxu0
      %v8561 = vpop.f32.mrb[0].mxu0
      %v8562 = vadd.f32 %v7880, %v8561
      %v8563 = vpop.f32.mrb[0].mxu0
      %8564 = vmatprep.mubr.bf16.mxu0 %v7965
      %8565 = vmatmul.mubr.bf16.gmra.mrb[0].mxu0 %v7964
      %v8566 = vpop.f32.mrb[0].mxu0
      %v8567 = vadd.f32 %v7885, %v8566
      %v8568 = vpop.f32.mrb[0].mxu0
      %v8569 = vpop.f32.mrb[0].mxu0
      %v8570 = vadd.f32 %v7890, %v8569
      %v8571 = vpop.f32.mrb[0].mxu0
      %8572 = vmatprep.mubr.bf16.mxu0 %v7969
      %8573 = vmatmul.mubr.bf16.gmra.mrb[0].mxu0 %v7968
      %v8574 = vpop.f32.mrb[0].mxu0
      %v8575 = vadd.f32 %v7895, %v8574
      %v8576 = vpop.f32.mrb[0].mxu0
      %v8577 = vpop.f32.mrb[0].mxu0
      %v8578 = vadd.f32 %v7900, %v8577
      %v8579 = vpop.f32.mrb[0].mxu0
      %8580 = vmatprep.mubr.bf16.mxu0 %v7973
      %8581 = vmatmul.mubr.bf16.gmra.mrb[0].mxu0 %v7972
      %v8582 = vpop.f32.mrb[0].mxu0
      %v8583 = vadd.f32 %v7905, %v8582
      %v8584 = vpop.f32.mrb[0].mxu0
      %v8585 = vpop.f32.mrb[0].mxu0
      %v8586 = vadd.f32 %v7910, %v8585
      %v8587 = vpop.f32.mrb[0].mxu0
      %8588 = vdwg.mxu0
      %8589 = vmatprep.subr.bf16.mxu0 0
      %8590 = vmatpush1.bf16.msra.mxu0 %v8254
      %8591 = vmatprep.subr.bf16.mxu0 0
      %8592 = vmatpush1.bf16.msra.mxu0 %v8257
      %8593 = vmatprep.subr.bf16.mxu0 0
      %8594 = vmatpush1.bf16.msra.mxu0 %v8260
      %8595 = vmatprep.subr.bf16.mxu0 0
      %8596 = vmatpush1.bf16.msra.mxu0 %v8263
      %8597 = vmatprep.subr.bf16.mxu0 0
      %8598 = vmatpush1.bf16.msra.mxu0 %v8266
      %8599 = vmatprep.subr.bf16.mxu0 0
      %8600 = vmatpush1.bf16.msra.mxu0 %v8269
      %8601 = vmatprep.subr.bf16.mxu0 0
      %8602 = vmatpush1.bf16.msra.mxu0 %v8272
      %8603 = vmatprep.subr.bf16.mxu0 0
      %8604 = vmatpush1.bf16.msra.mxu0 %v8275
      %8605 = vmatprep.subr.bf16.mxu0 0
      %8606 = vmatpush1.bf16.msra.mxu0 %v8278
      %8607 = vmatprep.subr.bf16.mxu0 0
      %8608 = vmatpush1.bf16.msra.mxu0 %v8281
      %8609 = vmatprep.subr.bf16.mxu0 0
      %8610 = vmatpush1.bf16.msra.mxu0 %v8284
      %8611 = vmatprep.subr.bf16.mxu0 0
      %8612 = vmatpush1.bf16.msra.mxu0 0
      %8613 = vmatprep.subr.bf16.mxu0 0
      %8614 = vmatpush1.bf16.msra.mxu0 0
      %8615 = vmatprep.subr.bf16.mxu0 0
      %8616 = vmatpush1.bf16.msra.mxu0 0
      %8617 = vmatprep.subr.bf16.mxu0 0
      %8618 = vmatpush1.bf16.msra.mxu0 0
      %8619 = vmatprep.subr.bf16.mxu0 0
      %8620 = vmatpush1.bf16.msra.mxu0 0
      %8621 = vmatprep.mubr.bf16.mxu0 %v8367
      %8622 = vmatmul.mubr.bf16.gmra.mrb[0].mxu0 %v7962
      %v8623 = vpop.f32.mrb[0].mxu0
      %v8624 = vadd.f32 %v8559, %v8623
      %v8625 = vpop.f32.mrb[0].mxu0
      %v8626 = vpop.f32.mrb[0].mxu0
      %v8627 = vadd.f32 %v8562, %v8626
      %v8628 = vpop.f32.mrb[0].mxu0
      %8629 = vmatprep.mubr.bf16.mxu0 %v8370
      %8630 = vmatmul.mubr.bf16.gmra.mrb[0].mxu0 %v7966
      %v8631 = vpop.f32.mrb[0].mxu0
      %v8632 = vadd.f32 %v8567, %v8631
      %v8633 = vpop.f32.mrb[0].mxu0
      %v8634 = vpop.f32.mrb[0].mxu0
      %v8635 = vadd.f32 %v8570, %v8634
      %v8636 = vpop.f32.mrb[0].mxu0
      %8637 = vmatprep.mubr.bf16.mxu0 %v8373
      %8638 = vmatmul.mubr.bf16.gmra.mrb[0].mxu0 %v7970
      %v8639 = vpop.f32.mrb[0].mxu0
      %v8640 = vadd.f32 %v8575, %v8639
      %v8641 = vpop.f32.mrb[0].mxu0
      %v8642 = vpop.f32.mrb[0].mxu0
      %v8643 = vadd.f32 %v8578, %v8642
      %v8644 = vpop.f32.mrb[0].mxu0
      %8645 = vmatprep.mubr.bf16.mxu0 %v8376
      %8646 = vmatmul.mubr.bf16.gmra.mrb[0].mxu0 %v7974
      %v8647 = vpop.f32.mrb[0].mxu0
      %v8648 = vadd.f32 %v8583, %v8647
      %v8649 = vpop.f32.mrb[0].mxu0
      %v8650 = vpop.f32.mrb[0].mxu0
      %v8651 = vadd.f32 %v8586, %v8650
      %v8652 = vpop.f32.mrb[0].mxu0
      %8653 = vdwg.mxu0
      %v8654 = vmax.f32 %v8486, 0.0
      %v8655 = vmax.f32 %v8488, 0.0
      %v8656 = vmax.f32 %v8624, 0.0
      %v8657 = vmax.f32 %v8490, 0.0
      %v8658 = vmax.f32 %v8492, 0.0
      %v8659 = vmax.f32 %v8627, 0.0
      %v8660 = vmax.f32 %v8496, 0.0
      %v8661 = vmax.f32 %v8498, 0.0
      %v8662 = vmax.f32 %v8632, 0.0
      %v8663 = vmax.f32 %v8500, 0.0
      %v8664 = vmax.f32 %v8502, 0.0
      %v8665 = vmax.f32 %v8635, 0.0
      %v8666 = vmax.f32 %v8506, 0.0
      %v8667 = vmax.f32 %v8508, 0.0
      %v8668 = vmax.f32 %v8640, 0.0
      %v8669 = vmax.f32 %v8510, 0.0
      %v8670 = vmax.f32 %v8512, 0.0
      %v8671 = vmax.f32 %v8643, 0.0
      %v8672 = vmax.f32 %v8516, 0.0
      %v8673 = vmax.f32 %v8518, 0.0
      %v8674 = vmax.f32 %v8648, 0.0
      %v8675 = vmax.f32 %v8520, 0.0
      %v8676 = vmax.f32 %v8522, 0.0
      %v8677 = vmax.f32 %v8651, 0.0
      %s8678 = scalar_lea.vmem %s8, 40
      %v8679 = vld [vmem:[%s8678] sm:$0xf]
      %v8680 = vld [vmem:[%s8678 + $0x4] sm:$0xf]
      %v8681 = vpack.c.bf16 %v8657, %v8654
      %v8682 = vpack.c.bf16 %v8658, %v8655
      %v8683 = vpack.c.bf16 %v8659, %v8656
      %v8684 = vpack.c.bf16 %v8663, %v8660
      %v8685 = vpack.c.bf16 %v8664, %v8661
      %v8686 = vpack.c.bf16 %v8665, %v8662
      %v8687 = vpack.c.bf16 %v8669, %v8666
      %v8688 = vpack.c.bf16 %v8670, %v8667
      %v8689 = vpack.c.bf16 %v8671, %v8668
      %v8690 = vpack.c.bf16 %v8675, %v8672
      %v8691 = vpack.c.bf16 %v8676, %v8673
      %v8692 = vpack.c.bf16 %v8677, %v8674
      %s8693 = scalar_lea.vmem %s9, 80
      %v8694 = vld [vmem:[%s8693] sm:$0xff]
      %v8695 = vld [vmem:[%s8693 + $0x8] sm:$0xff]
      %8697 = vset.pattern.permute.xlu0 0
      %8698 = vperm.xlu0 %8697, %v8694
      %v8699 = vpop.permute.xlu0 %8698
      %8702 = vset.pattern.permute.xlu0 0
      %8703 = vperm.xlu0 %8702, %v8695
      %v8704 = vpop.permute.xlu0 %8703
      %v8708 = vunpack.c.l.b16 %v8679
      %v8709 = vunpack.c.l.b16 %v8680
      %v8710 = vpack.c.b16 %v8709, %v8708
      %v8712 = vsel %vm2375, %v8710, 0
      %8714 = vmatprep.subr.bf16.mxu0 %v8682
      %8715 = vmatpush1.bf16.msra.mxu0 %v8681
      %8716 = vmatprep.subr.bf16.mxu0 %v8685
      %8717 = vmatpush1.bf16.msra.mxu0 %v8684
      %8718 = vmatprep.subr.bf16.mxu0 %v8688
      %8719 = vmatpush1.bf16.msra.mxu0 %v8687
      %8720 = vmatprep.subr.bf16.mxu0 %v8691
      %8721 = vmatpush1.bf16.msra.mxu0 %v8690
      %8722 = vmatprep.subr.bf16.mxu0 0
      %8723 = vmatpush1.bf16.msra.mxu0 0
      %8724 = vmatprep.subr.bf16.mxu0 0
      %8725 = vmatpush1.bf16.msra.mxu0 0
      %8726 = vmatprep.subr.bf16.mxu0 0
      %8727 = vmatpush1.bf16.msra.mxu0 0
      %8728 = vmatprep.subr.bf16.mxu0 0
      %8729 = vmatpush1.bf16.msra.mxu0 0
      %8730 = vmatprep.subr.bf16.mxu0 0
      %8731 = vmatpush1.bf16.msra.mxu0 0
      %8732 = vmatprep.subr.bf16.mxu0 0
      %8733 = vmatpush1.bf16.msra.mxu0 0
      %8734 = vmatprep.subr.bf16.mxu0 0
      %8735 = vmatpush1.bf16.msra.mxu0 0
      %8736 = vmatprep.subr.bf16.mxu0 0
      %8737 = vmatpush1.bf16.msra.mxu0 0
      %8738 = vmatprep.subr.bf16.mxu0 0
      %8739 = vmatpush1.bf16.msra.mxu0 0
      %8740 = vmatprep.subr.bf16.mxu0 0
      %8741 = vmatpush1.bf16.msra.mxu0 0
      %8742 = vmatprep.subr.bf16.mxu0 0
      %8743 = vmatpush1.bf16.msra.mxu0 0
      %8744 = vmatprep.subr.bf16.mxu0 0
      %8745 = vmatpush1.bf16.msra.mxu0 0
      %8746 = vmatprep.mubr.bf16.mxu0 0
      %8747 = vmatmul.mubr.bf16.gmra.mrb[0].mxu0 %v8712
      %v8748 = vpop.f32.mrb[0].mxu0
      %v8749 = vadd.f32 %v8699, %v8748
      %v8750 = vpop.f32.mrb[0].mxu0
      %v8751 = vadd.f32 %v8699, %v8750
      %v8752 = vpop.f32.mrb[0].mxu0
      %v8753 = vadd.f32 %v8704, %v8752
      %v8754 = vpop.f32.mrb[0].mxu0
      %v8755 = vadd.f32 %v8704, %v8754
      %8756 = vdwg.mxu0
      %8757 = vmatprep.subr.bf16.mxu0 0
      %8758 = vmatpush1.bf16.msra.mxu0 %v8683
      %8759 = vmatprep.subr.bf16.mxu0 0
      %8760 = vmatpush1.bf16.msra.mxu0 %v8686
      %8761 = vmatprep.subr.bf16.mxu0 0
      %8762 = vmatpush1.bf16.msra.mxu0 %v8689
      %8763 = vmatprep.subr.bf16.mxu0 0
      %8764 = vmatpush1.bf16.msra.mxu0 %v8692
      %8765 = vmatprep.subr.bf16.mxu0 0
      %8766 = vmatpush1.bf16.msra.mxu0 0
      %8767 = vmatprep.subr.bf16.mxu0 0
      %8768 = vmatpush1.bf16.msra.mxu0 0
      %8769 = vmatprep.subr.bf16.mxu0 0
      %8770 = vmatpush1.bf16.msra.mxu0 0
      %8771 = vmatprep.subr.bf16.mxu0 0
      %8772 = vmatpush1.bf16.msra.mxu0 0
      %8773 = vmatprep.subr.bf16.mxu0 0
      %8774 = vmatpush1.bf16.msra.mxu0 0
      %8775 = vmatprep.subr.bf16.mxu0 0
      %8776 = vmatpush1.bf16.msra.mxu0 0
      %8777 = vmatprep.subr.bf16.mxu0 0
      %8778 = vmatpush1.bf16.msra.mxu0 0
      %8779 = vmatprep.subr.bf16.mxu0 0
      %8780 = vmatpush1.bf16.msra.mxu0 0
      %8781 = vmatprep.subr.bf16.mxu0 0
      %8782 = vmatpush1.bf16.msra.mxu0 0
      %8783 = vmatprep.subr.bf16.mxu0 0
      %8784 = vmatpush1.bf16.msra.mxu0 0
      %8785 = vmatprep.subr.bf16.mxu0 0
      %8786 = vmatpush1.bf16.msra.mxu0 0
      %8787 = vmatprep.subr.bf16.mxu0 0
      %8788 = vmatpush1.bf16.msra.mxu0 0
      %8789 = vmatprep.mubr.bf16.mxu0 0
      %8790 = vmatmul.mubr.bf16.gmra.mrb[0].mxu0 %v8712
      %v8791 = vpop.f32.mrb[0].mxu0
      %v8792 = vadd.f32 %v8699, %v8791
      %v8793 = vpop.f32.mrb[0].mxu0
      %v8794 = vpop.f32.mrb[0].mxu0
      %v8795 = vadd.f32 %v8704, %v8794
      %v8796 = vpop.f32.mrb[0].mxu0
      %8797 = vdwg.mxu0
      %v8798 = vmul.f32 %v8749, %v775
      %v8799 = vmul.f32 %v8751, %v779
      %v8800 = vmul.f32 %v8792, %v783
      %v8801 = vmul.f32 %v8753, %v775
      %v8802 = vmul.f32 %v8755, %v779
      %v8803 = vmul.f32 %v8795, %v783
      %8804 = vst [vmem:[%s359] sm:$0xff] %v8798
      %8805 = vst [vmem:[%s359 + $0x8] sm:$0xff] %v8799
      %8806 = vst [vmem:[%s359 + $0x10] sm:$0xff] %v8800
      %8807 = vst [vmem:[%s359 + $0x18] sm:$0xff] %v8801
      %8808 = vst [vmem:[%s359 + $0x20] sm:$0xff] %v8802
      %8809 = vst [vmem:[%s359 + $0x28] sm:$0xff] %v8803
      %p8810 = scmp.lt.s32.totalorder %s21, 1
      %s8811 = scalar_select %p8810, %s21, 1
      %s8812 = smul.addr %s8811, 6
      %s8813 = smul.addr %s8812, 8
      %s8814 = scalar_lea.vmem %s10, %s8813
      // Predicated region
      $region61: #{_lambda_.1} parent=59 // pred_check
        %p8815 = pneg %p254
      $region62: #{_lambda_.1} parent=59 // pred_check_branch
        %8817 = sbr.rel (%p8815) target = $region64
      $region63: #{_lambda_.1} parent=59 // pred_region
        _
      $region64: #{_lambda_.1} parent=59 // pred_fallthru
        _
    $region60: #{_lambda_.1} parent=5 // pred_fallthru
      _
    %p8818 = scmp.le.s32.totalorder 2, %s16
    // Predicated region
    $region65: #{_lambda_.1} parent=5 // pred_check
      %p8819 = pneg %p8818
    $region66: #{_lambda_.1} parent=5 // pred_check_branch
      %8821 = sbr.rel (%p8819) target = $region68
    $region67: #{_lambda_.1} parent=5 // pred_region
      %s8822 = ssub.s32 %s16, 2
      // Predicated region
      $region69: #{_lambda_.1} parent=67 // pred_check
        %p8823 = pneg %p260
      $region70: #{_lambda_.1} parent=67 // pred_check_branch
        %8825 = sbr.rel (%p8823) target = $region72
      $region71: #{_lambda_.1} parent=67 // pred_region
        %p8826 = scmp.lt.s32.totalorder %s22, 1
        %s8827 = scalar_select %p8826, %s22, 1
        %s8828 = smul.addr %s8827, 6
        %s8829 = smul.addr %s8828, 8
        %s8830 = scalar_lea.vmem %s10, %s8829
      $region72: #{_lambda_.1} parent=67 // pred_fallthru
        _
    $region68: #{_lambda_.1} parent=5 // pred_fallthru
      _
  $region6: #{_lambda_.1} parent=0 // loop_footer
    %s20 = sadd.s32 1, %s16
  $region7: #{_lambda_.1} parent=0 // loop_footer_branch
    %15 = sbr.rel target = $region3
  $region8: #{_lambda_.1} parent=0 // loop_exit
    _

</llo_original>
